<compile_context>
chip_gen: v7x
topology: tpu7x:2x2x1
jax: 0.10.0
libtpu: 0.0.40
codegen_flags: <defaults>
</compile_context>

<pallas_src>
import numpy as np
import jax
import jax.numpy as jnp
from jax.experimental import pallas as pl
from jax.experimental.pallas import tpu as pltpu


def _round_up(n, m):
    return ((n + m - 1) // m) * m


def _vmem_limit_bytes(T, B_pad, Din_pad, H_pad):
    bf16, f32 = 2, 4
    io = (T * B_pad * Din_pad * bf16          # x
          + 2 * Din_pad * 4 * H_pad * bf16    # W_ih fwd/bwd
          + 2 * H_pad * 4 * H_pad * bf16      # W_hh fwd/bwd
          + 2 * 4 * H_pad * f32               # biases
          + B_pad * 4                         # lens
          + T * B_pad * H_pad * f32)          # out (single, summed in-kernel)
    scratch = 2 * T * B_pad * 4 * H_pad * bf16  # gx_f + gx_b (bf16)
    need = 2 * io + scratch + (4 << 20)         # double-buffered I/O + headroom
    try:
        kind = jax.devices()[0].device_kind.lower()
    except Exception:
        kind = ""
    # v7x has 64 MiB VMEM per TensorCore; v5e/v6e have 128 MiB physical.
    phys = (64 << 20) if "7" in kind else (128 << 20)
    ceiling = phys - (8 << 20)                  # leave room for Mosaic scratch
    return int(min(max(need, 16 << 20), ceiling))


def _bilstm_fused_kernel(len_ref, x_ref, wihf_ref, wihb_ref, whhf_ref, whhb_ref,
                         bf_ref, bb_ref, out_ref, gxf_ref, gxb_ref):
    """Fused forward+backward LSTM; output = fwd + bwd accumulated in VMEM."""
    TB, Hp = out_ref.shape
    Bp = len_ref.shape[0]
    T = TB // Bp
    H4 = 4 * Hp

    lens = len_ref[...]                                  # (Bp, 1) int32
    # Hoist the bias broadcasts out of the loop (broadcast_in_dim is not CSE'd).
    bias_f = jnp.broadcast_to(bf_ref[...], (Bp, H4))
    bias_b = jnp.broadcast_to(bb_ref[...], (Bp, H4))

    # Output accumulator: both directions add (masked) into it.
    out_ref[...] = jnp.zeros_like(out_ref)

    # ---- chunked input projection interleaved with the recurrence ----------
    # Chunk of C timesteps; the NEXT chunk's projection matmuls are emitted at
    # the top of each chunk, independent of the serial h/c chain, so the
    # scheduler fills the MXU latency bubbles with them.
    C = max(1, min(8, (T + 1) // 2))
    n_chunks = (T + C - 1) // C

    def fwd_win(k):                      # forward consumes times front-to-back
        return k * C, min((k + 1) * C, T)

    def bwd_win(k):                      # backward consumes times back-to-front
        lo, hi = fwd_win(k)
        return T - hi, T - lo

    def project(gx_ref, wih_ref, t0, t1):
        r0, r1 = t0 * Bp, t1 * Bp        # static, sublane-aligned offsets
        gx_ref[r0:r1, :] = jnp.dot(
            x_ref[r0:r1, :], wih_ref[...],
            preferred_element_type=jnp.float32).astype(gx_ref.dtype)

    # prologue: project the first chunk for both directions
    project(gxf_ref, wihf_ref, *fwd_win(0))
    project(gxb_ref, wihb_ref, *bwd_win(0))

    def lstm_cell(gates, h, c, m):
        i_g = jax.nn.sigmoid(gates[:, 0 * Hp:1 * Hp])
        f_g = jax.nn.sigmoid(gates[:, 1 * Hp:2 * Hp])
        g_g = jnp.tanh(gates[:, 2 * Hp:3 * Hp])
        o_g = jax.nn.sigmoid(gates[:, 3 * Hp:4 * Hp])
        c_new = f_g * c + i_g * g_g
        h_new = o_g * jnp.tanh(c_new)
        h = jnp.where(m, h_new, h)       # packed-sequence: freeze past length
        c = jnp.where(m, c_new, c)
        return h, c

    zeros = jnp.zeros((Bp, Hp), jnp.float32)
    h_f, c_f, h_b, c_b = zeros, zeros, zeros, zeros

    # Fully static unroll (T is small here); all row offsets are constants.
    for k in range(n_chunks):
        if k + 1 < n_chunks:             # project the NEXT chunk (fills MXU bubbles)
            project(gxf_ref, wihf_ref, *fwd_win(k + 1))
            project(gxb_ref, wihb_ref, *bwd_win(k + 1))

        lo, hi = fwd_win(k)
        for s in range(lo, hi):
            tf, tb = s, T - 1 - s        # fwd / bwd time index (static)
            rf, rb = tf * Bp, tb * Bp    # static row offsets

            # Two independent hidden matmuls per step -> back-to-back MXU issue.
            g_f = (gxf_ref[rf:rf + Bp, :].astype(jnp.float32) + bias_f
                   + jnp.dot(h_f.astype(jnp.bfloat16), whhf_ref[...],
                             preferred_element_type=jnp.float32))
            g_b = (gxb_ref[rb:rb + Bp, :].astype(jnp.float32) + bias_b
                   + jnp.dot(h_b.astype(jnp.bfloat16), whhb_ref[...],
                             preferred_element_type=jnp.float32))

            h_f, c_f = lstm_cell(g_f, h_f, c_f, lens > tf)
            h_b, c_b = lstm_cell(g_b, h_b, c_b, lens > tb)

            # Masked in-VMEM accumulation of both directions (no wrapper-side
            # HBM sum pass).  Effects on out_ref are ordered in program order.
            out_ref[rf:rf + Bp, :] = (out_ref[rf:rf + Bp, :]
                                      + jnp.where(lens > tf, h_f, 0.0))
            out_ref[rb:rb + Bp, :] = (out_ref[rb:rb + Bp, :]
                                      + jnp.where(lens > tb, h_b, 0.0))


def _pack_direction(wih, whh, b, Din, H, Din_pad, H_pad):
    """Right-multiply PyTorch weights -> gate-block, lane-aligned padded form."""
    wih_p = jnp.zeros((Din_pad, 4 * H_pad), jnp.float32)
    whh_p = jnp.zeros((H_pad, 4 * H_pad), jnp.float32)
    b_p = jnp.zeros((1, 4 * H_pad), jnp.float32)
    for k in range(4):  # PyTorch gate order: i, f, g, o
        wih_p = wih_p.at[:Din, k * H_pad:k * H_pad + H].set(wih[:, k * H:(k + 1) * H])
        whh_p = whh_p.at[:H, k * H_pad:k * H_pad + H].set(whh[:, k * H:(k + 1) * H])
        b_p = b_p.at[:, k * H_pad:k * H_pad + H].set(b[:, k * H:(k + 1) * H])
    return wih_p.astype(jnp.bfloat16), whh_p.astype(jnp.bfloat16), b_p


def wrapper_lstm_forward(h, seq_lengths, max_length, params):
    """h: (n_seqs, max_length, input_size); seq_lengths: (n_seqs,) int.
    Returns (n_seqs, max_length, hidden_size) = fwd + bwd LSTM outputs."""
    B, T, Din = h.shape
    assert max_length == T, "glue assumes input already padded to max_length"
    H = params["whh_f"].shape[0]

    B_pad = _round_up(max(B, 8), 8)        # sublane-aligned batch
    Din_pad = _round_up(Din, 16)           # bf16 packing only — do NOT pad to 128
    H_pad = _round_up(H, 128)              # lane-aligned gate blocks / output

    wih_f, whh_f, b_f = _pack_direction(params["wih_f"], params["whh_f"],
                                        params["b_f"], Din, H, Din_pad, H_pad)
    wih_b, whh_b, b_b = _pack_direction(params["wih_b"], params["whh_b"],
                                        params["b_b"], Din, H, Din_pad, H_pad)

    # time-major, batch-padded, flattened to (T*B_pad, Din_pad), bf16 for MXU.
    x = jnp.transpose(h, (1, 0, 2)).astype(jnp.float32)     # (T, B, Din)
    x = jnp.pad(x, ((0, 0), (0, B_pad - B), (0, Din_pad - Din)))
    x = x.reshape(T * B_pad, Din_pad).astype(jnp.bfloat16)

    lens = jnp.zeros((B_pad, 1), jnp.int32).at[:B, 0].set(
        seq_lengths.astype(jnp.int32))

    def full(shape):
        return pl.BlockSpec(shape, lambda i: tuple(0 for _ in shape))

    out = pl.pallas_call(
        _bilstm_fused_kernel,
        out_shape=jax.ShapeDtypeStruct((T * B_pad, H_pad), jnp.float32),
        grid=(1,),
        in_specs=[
            full((B_pad, 1)),                 # lens
            full((T * B_pad, Din_pad)),       # x
            full((Din_pad, 4 * H_pad)),       # W_ih fwd
            full((Din_pad, 4 * H_pad)),       # W_ih bwd
            full((H_pad, 4 * H_pad)),         # W_hh fwd
            full((H_pad, 4 * H_pad)),         # W_hh bwd
            full((1, 4 * H_pad)),             # bias fwd
            full((1, 4 * H_pad)),             # bias bwd
        ],
        out_specs=full((T * B_pad, H_pad)),
        scratch_shapes=[pltpu.VMEM((T * B_pad, 4 * H_pad), jnp.bfloat16),
                        pltpu.VMEM((T * B_pad, 4 * H_pad), jnp.bfloat16)],
        compiler_params=pltpu.CompilerParams(
            dimension_semantics=("arbitrary",),
            vmem_limit_bytes=_vmem_limit_bytes(T, B_pad, Din_pad, H_pad)),
    )(lens, x, wih_f, wih_b, whh_f, whh_b, b_f, b_b)

    # drop batch/hidden padding, back to batch-major.
    out = out.reshape(T, B_pad, H_pad)[:, :B, :H]
    return jnp.transpose(out, (1, 0, 2))                     # (B, T, H)


def init_params(key, input_size, hidden_size):
    """Deterministic init mimicking nn.LSTM's U(-1/sqrt(H), 1/sqrt(H)) scheme.
    Weights stored pre-transposed: W_ih (Din, 4H), W_hh (H, 4H); the two PyTorch
    biases (bias_ih + bias_hh) are folded into a single (1, 4H) bias."""
    bound = 1.0 / np.sqrt(hidden_size)
    ks = jax.random.split(key, 12)

    def u(k, shape):
        return jax.random.uniform(k, shape, jnp.float32, -bound, bound)

    return {
        "wih_f": u(ks[0], (input_size, 4 * hidden_size)),
        "whh_f": u(ks[1], (hidden_size, 4 * hidden_size)),
        "b_f": u(ks[2], (1, 4 * hidden_size)) + u(ks[3], (1, 4 * hidden_size)),
        "wih_b": u(ks[4], (input_size, 4 * hidden_size)),
        "whh_b": u(ks[5], (hidden_size, 4 * hidden_size)),
        "b_b": u(ks[6], (1, 4 * hidden_size)) + u(ks[7], (1, 4 * hidden_size)),
    }


def ref_bilstm(h, seq_lengths, params):
    """Pure-JAX f32 reference (same math, lax.scan) for correctness checking."""
    B, T, Din = h.shape
    H = params["whh_f"].shape[0]
    x = jnp.transpose(h, (1, 0, 2)).astype(jnp.float32)       # (T, B, Din)
    lens = seq_lengths.astype(jnp.int32)
    mask = (lens[None, :] > jnp.arange(T)[:, None]).astype(jnp.float32)[:, :, None]

    def run(wih, whh, b, reverse):
        def step(carry, inp):
            hh, cc = carry
            x_t, m = inp
            gates = x_t @ wih + hh @ whh + b
            i = jax.nn.sigmoid(gates[:, :H])
            f = jax.nn.sigmoid(gates[:, H:2 * H])
            g = jnp.tanh(gates[:, 2 * H:3 * H])
            o = jax.nn.sigmoid(gates[:, 3 * H:])
            c_new = f * cc + i * g
            h_new = o * jnp.tanh(c_new)
            hh = m * h_new + (1.0 - m) * hh
            cc = m * c_new + (1.0 - m) * cc
            return (hh, cc), m * hh

        xs = (x, mask)
        if reverse:
            xs = jax.tree_util.tree_map(lambda a: a[::-1], xs)
        _, ys = jax.lax.scan(step, (jnp.zeros((B, H)), jnp.zeros((B, H))), xs)
        if reverse:
            ys = ys[::-1]
        return ys

    out = (run(params["wih_f"], params["whh_f"], params["b_f"], False)
           + run(params["wih_b"], params["whh_b"], params["b_b"], True))
    return jnp.transpose(out, (1, 0, 2))


if __name__ == "__main__":
    B, T, D_IN, H = 2, 8, 16, 32
    max_length = T

    key = jax.random.PRNGKey(0)
    k_x, k_p = jax.random.split(key)
    h_in = jax.random.normal(k_x, (B, T, D_IN), jnp.float32)
    seq_lengths = jnp.array([8, 5], dtype=jnp.int32)  # sorted desc (pack_padded default)
    params = init_params(k_p, D_IN, H)

    out = wrapper_lstm_forward(h_in, seq_lengths, max_length, params)
    out = jax.block_until_ready(out)
    assert out.shape == (B, max_length, H), out.shape

    ref = jax.block_until_ready(ref_bilstm(h_in, seq_lengths, params))
    # bf16 x/weights/gx inside the kernel -> slightly looser tolerance vs f32 ref.
    np.testing.assert_allclose(np.asarray(out), np.asarray(ref), rtol=1e-2, atol=1e-2)

    print("KERNEL_OK")
</pallas_src>

<mosaic_0001>
module attributes {stable_mosaic.version = 11 : i64} {
  func.func @_bilstm_fused_kernel(%arg0: i32, %arg1: memref<8x1xi32, #tpu.memory_space<vmem>>, %arg2: memref<64x16xbf16, #tpu.memory_space<vmem>>, %arg3: memref<16x512xbf16, #tpu.memory_space<vmem>>, %arg4: memref<16x512xbf16, #tpu.memory_space<vmem>>, %arg5: memref<128x512xbf16, #tpu.memory_space<vmem>>, %arg6: memref<128x512xbf16, #tpu.memory_space<vmem>>, %arg7: memref<1x512xf32, #tpu.memory_space<vmem>>, %arg8: memref<1x512xf32, #tpu.memory_space<vmem>>, %arg9: memref<64x128xf32, #tpu.memory_space<vmem>>, %arg10: memref<64x512xbf16, #tpu.memory_space<vmem>>, %arg11: memref<64x512xbf16, #tpu.memory_space<vmem>>) attributes {dimension_semantics = [#tpu.dimension_semantics<arbitrary>], iteration_bounds = array<i64: 1>, scalar_prefetch = 0 : i64, scratch_operands = 2 : i64, tpu.core_type = #tpu.core_type<tc>, window_params = [{pipeline_mode = #tpu.pipeline_mode<synchronous>, transform_indices = @transform_0, window_bounds = array<i64: 8, 1>}, {pipeline_mode = #tpu.pipeline_mode<synchronous>, transform_indices = @transform_1, window_bounds = array<i64: 64, 16>}, {pipeline_mode = #tpu.pipeline_mode<synchronous>, transform_indices = @transform_2, window_bounds = array<i64: 16, 512>}, {pipeline_mode = #tpu.pipeline_mode<synchronous>, transform_indices = @transform_3, window_bounds = array<i64: 16, 512>}, {pipeline_mode = #tpu.pipeline_mode<synchronous>, transform_indices = @transform_4, window_bounds = array<i64: 128, 512>}, {pipeline_mode = #tpu.pipeline_mode<synchronous>, transform_indices = @transform_5, window_bounds = array<i64: 128, 512>}, {pipeline_mode = #tpu.pipeline_mode<synchronous>, transform_indices = @transform_6, window_bounds = array<i64: 1, 512>}, {pipeline_mode = #tpu.pipeline_mode<synchronous>, transform_indices = @transform_7, window_bounds = array<i64: 1, 512>}, {pipeline_mode = #tpu.pipeline_mode<synchronous>, transform_indices = @transform_8, window_bounds = array<i64: 64, 128>}]} {
    %c0 = arith.constant 0 : index
    %c0_0 = arith.constant 0 : index
    %0 = vector.load %arg1[%c0, %c0_0] : memref<8x1xi32, #tpu.memory_space<vmem>>, vector<8x1xi32>
    %c0_1 = arith.constant 0 : index
    %c0_2 = arith.constant 0 : index
    %1 = vector.load %arg7[%c0_1, %c0_2] : memref<1x512xf32, #tpu.memory_space<vmem>>, vector<1x512xf32>
    %2 = vector.shape_cast %1 : vector<1x512xf32> to vector<1x512xf32>
    %3 = vector.broadcast %2 : vector<1x512xf32> to vector<8x512xf32>
    %c0_3 = arith.constant 0 : index
    %c0_4 = arith.constant 0 : index
    %4 = vector.load %arg8[%c0_3, %c0_4] : memref<1x512xf32, #tpu.memory_space<vmem>>, vector<1x512xf32>
    %5 = vector.shape_cast %4 : vector<1x512xf32> to vector<1x512xf32>
    %6 = vector.broadcast %5 : vector<1x512xf32> to vector<8x512xf32>
    %cst = arith.constant 0.000000e+00 : f32
    %7 = vector.broadcast %cst : f32 to vector<64x128xf32>
    %c0_5 = arith.constant 0 : index
    %c0_6 = arith.constant 0 : index
    %8 = vector.load %arg9[%c0_5, %c0_6] : memref<64x128xf32, #tpu.memory_space<vmem>>, vector<64x128xf32>
    tpu.vector_store %arg9[%c0_5, %c0_6], %7 {strides = array<i32>} : memref<64x128xf32, #tpu.memory_space<vmem>>, vector<64x128xf32>,
    %c0_7 = arith.constant 0 : index
    %c0_8 = arith.constant 0 : index
    %9 = vector.load %arg2[%c0_7, %c0_8] : memref<64x16xbf16, #tpu.memory_space<vmem>>, vector<32x16xbf16>
    %c0_9 = arith.constant 0 : index
    %c0_10 = arith.constant 0 : index
    %10 = vector.load %arg3[%c0_9, %c0_10] : memref<16x512xbf16, #tpu.memory_space<vmem>>, vector<16x512xbf16>
    %cst_11 = arith.constant dense<0.000000e+00> : vector<32x512xf32>
    %11 = tpu.matmul %9, %10, %cst_11 {dimension_numbers = #tpu.dot_dimension_numbers<[1], [0], [0], [1], [0, 0, 1, 1], [], []>} : vector<32x16xbf16>, vector<16x512xbf16>, vector<32x512xf32> -> vector<32x512xf32>
    %12 = arith.truncf %11 : vector<32x512xf32> to vector<32x512xbf16>
    %c0_12 = arith.constant 0 : index
    %c0_13 = arith.constant 0 : index
    %13 = vector.load %arg10[%c0_12, %c0_13] : memref<64x512xbf16, #tpu.memory_space<vmem>>, vector<32x512xbf16>
    tpu.vector_store %arg10[%c0_12, %c0_13], %12 {strides = array<i32>} : memref<64x512xbf16, #tpu.memory_space<vmem>>, vector<32x512xbf16>,
    %c32 = arith.constant 32 : index
    %c0_14 = arith.constant 0 : index
    %14 = vector.load %arg2[%c32, %c0_14] : memref<64x16xbf16, #tpu.memory_space<vmem>>, vector<32x16xbf16>
    %c0_15 = arith.constant 0 : index
    %c0_16 = arith.constant 0 : index
    %15 = vector.load %arg4[%c0_15, %c0_16] : memref<16x512xbf16, #tpu.memory_space<vmem>>, vector<16x512xbf16>
    %cst_17 = arith.constant dense<0.000000e+00> : vector<32x512xf32>
    %16 = tpu.matmul %14, %15, %cst_17 {dimension_numbers = #tpu.dot_dimension_numbers<[1], [0], [0], [1], [0, 0, 1, 1], [], []>} : vector<32x16xbf16>, vector<16x512xbf16>, vector<32x512xf32> -> vector<32x512xf32>
    %17 = arith.truncf %16 : vector<32x512xf32> to vector<32x512xbf16>
    %c32_18 = arith.constant 32 : index
    %c0_19 = arith.constant 0 : index
    %18 = vector.load %arg11[%c32_18, %c0_19] : memref<64x512xbf16, #tpu.memory_space<vmem>>, vector<32x512xbf16>
    tpu.vector_store %arg11[%c32_18, %c0_19], %17 {strides = array<i32>} : memref<64x512xbf16, #tpu.memory_space<vmem>>, vector<32x512xbf16>,
    %cst_20 = arith.constant 0.000000e+00 : f32
    %19 = vector.broadcast %cst_20 : f32 to vector<8x128xf32>
    %c32_21 = arith.constant 32 : index
    %c0_22 = arith.constant 0 : index
    %20 = vector.load %arg2[%c32_21, %c0_22] : memref<64x16xbf16, #tpu.memory_space<vmem>>, vector<32x16xbf16>
    %c0_23 = arith.constant 0 : index
    %c0_24 = arith.constant 0 : index
    %21 = vector.load %arg3[%c0_23, %c0_24] : memref<16x512xbf16, #tpu.memory_space<vmem>>, vector<16x512xbf16>
    %cst_25 = arith.constant dense<0.000000e+00> : vector<32x512xf32>
    %22 = tpu.matmul %20, %21, %cst_25 {dimension_numbers = #tpu.dot_dimension_numbers<[1], [0], [0], [1], [0, 0, 1, 1], [], []>} : vector<32x16xbf16>, vector<16x512xbf16>, vector<32x512xf32> -> vector<32x512xf32>
    %23 = arith.truncf %22 : vector<32x512xf32> to vector<32x512xbf16>
    %c32_26 = arith.constant 32 : index
    %c0_27 = arith.constant 0 : index
    %24 = vector.load %arg10[%c32_26, %c0_27] : memref<64x512xbf16, #tpu.memory_space<vmem>>, vector<32x512xbf16>
    tpu.vector_store %arg10[%c32_26, %c0_27], %23 {strides = array<i32>} : memref<64x512xbf16, #tpu.memory_space<vmem>>, vector<32x512xbf16>,
    %c0_28 = arith.constant 0 : index
    %c0_29 = arith.constant 0 : index
    %25 = vector.load %arg2[%c0_28, %c0_29] : memref<64x16xbf16, #tpu.memory_space<vmem>>, vector<32x16xbf16>
    %c0_30 = arith.constant 0 : index
    %c0_31 = arith.constant 0 : index
    %26 = vector.load %arg4[%c0_30, %c0_31] : memref<16x512xbf16, #tpu.memory_space<vmem>>, vector<16x512xbf16>
    %cst_32 = arith.constant dense<0.000000e+00> : vector<32x512xf32>
    %27 = tpu.matmul %25, %26, %cst_32 {dimension_numbers = #tpu.dot_dimension_numbers<[1], [0], [0], [1], [0, 0, 1, 1], [], []>} : vector<32x16xbf16>, vector<16x512xbf16>, vector<32x512xf32> -> vector<32x512xf32>
    %28 = arith.truncf %27 : vector<32x512xf32> to vector<32x512xbf16>
    %c0_33 = arith.constant 0 : index
    %c0_34 = arith.constant 0 : index
    %29 = vector.load %arg11[%c0_33, %c0_34] : memref<64x512xbf16, #tpu.memory_space<vmem>>, vector<32x512xbf16>
    tpu.vector_store %arg11[%c0_33, %c0_34], %28 {strides = array<i32>} : memref<64x512xbf16, #tpu.memory_space<vmem>>, vector<32x512xbf16>,
    %c0_35 = arith.constant 0 : index
    %c0_36 = arith.constant 0 : index
    %30 = vector.load %arg10[%c0_35, %c0_36] : memref<64x512xbf16, #tpu.memory_space<vmem>>, vector<8x512xbf16>
    %31 = arith.extf %30 : vector<8x512xbf16> to vector<8x512xf32>
    %32 = arith.addf %31, %3 : vector<8x512xf32>
    %33 = arith.truncf %19 : vector<8x128xf32> to vector<8x128xbf16>
    %c0_37 = arith.constant 0 : index
    %c0_38 = arith.constant 0 : index
    %34 = vector.load %arg5[%c0_37, %c0_38] : memref<128x512xbf16, #tpu.memory_space<vmem>>, vector<128x512xbf16>
    %cst_39 = arith.constant dense<0.000000e+00> : vector<8x512xf32>
    %35 = tpu.matmul %33, %34, %cst_39 {dimension_numbers = #tpu.dot_dimension_numbers<[1], [0], [0], [1], [0, 0, 1, 1], [], []>} : vector<8x128xbf16>, vector<128x512xbf16>, vector<8x512xf32> -> vector<8x512xf32>
    %36 = arith.addf %32, %35 : vector<8x512xf32>
    %c56 = arith.constant 56 : index
    %c0_40 = arith.constant 0 : index
    %37 = vector.load %arg11[%c56, %c0_40] : memref<64x512xbf16, #tpu.memory_space<vmem>>, vector<8x512xbf16>
    %38 = arith.extf %37 : vector<8x512xbf16> to vector<8x512xf32>
    %39 = arith.addf %38, %6 : vector<8x512xf32>
    %40 = arith.truncf %19 : vector<8x128xf32> to vector<8x128xbf16>
    %c0_41 = arith.constant 0 : index
    %c0_42 = arith.constant 0 : index
    %41 = vector.load %arg6[%c0_41, %c0_42] : memref<128x512xbf16, #tpu.memory_space<vmem>>, vector<128x512xbf16>
    %cst_43 = arith.constant dense<0.000000e+00> : vector<8x512xf32>
    %42 = tpu.matmul %40, %41, %cst_43 {dimension_numbers = #tpu.dot_dimension_numbers<[1], [0], [0], [1], [0, 0, 1, 1], [], []>} : vector<8x128xbf16>, vector<128x512xbf16>, vector<8x512xf32> -> vector<8x512xf32>
    %43 = arith.addf %39, %42 : vector<8x512xf32>
    %c0_i32 = arith.constant 0 : i32
    %44 = vector.broadcast %c0_i32 : i32 to vector<8x1xi32>
    %45 = arith.cmpi sgt, %0, %44 : vector<8x1xi32>
    %46 = vector.extract_strided_slice %36 {offsets = [0, 0], sizes = [8, 128], strides = [1, 1]} : vector<8x512xf32> to vector<8x128xf32>
    %47 = arith.negf %46 : vector<8x128xf32>
    %48 = math.exp %47 : vector<8x128xf32>
    %cst_44 = arith.constant 1.000000e+00 : f32
    %49 = vector.broadcast %cst_44 : f32 to vector<8x128xf32>
    %50 = arith.addf %49, %48 : vector<8x128xf32>
    %51 = arith.divf %49, %50 : vector<8x128xf32>
    %52 = vector.extract_strided_slice %36 {offsets = [0, 128], sizes = [8, 128], strides = [1, 1]} : vector<8x512xf32> to vector<8x128xf32>
    %53 = arith.negf %52 : vector<8x128xf32>
    %54 = math.exp %53 : vector<8x128xf32>
    %cst_45 = arith.constant 1.000000e+00 : f32
    %55 = vector.broadcast %cst_45 : f32 to vector<8x128xf32>
    %56 = arith.addf %55, %54 : vector<8x128xf32>
    %57 = arith.divf %55, %56 : vector<8x128xf32>
    %58 = vector.extract_strided_slice %36 {offsets = [0, 256], sizes = [8, 128], strides = [1, 1]} : vector<8x512xf32> to vector<8x128xf32>
    %59 = math.tanh %58 : vector<8x128xf32>
    %60 = vector.extract_strided_slice %36 {offsets = [0, 384], sizes = [8, 128], strides = [1, 1]} : vector<8x512xf32> to vector<8x128xf32>
    %61 = arith.negf %60 : vector<8x128xf32>
    %62 = math.exp %61 : vector<8x128xf32>
    %cst_46 = arith.constant 1.000000e+00 : f32
    %63 = vector.broadcast %cst_46 : f32 to vector<8x128xf32>
    %64 = arith.addf %63, %62 : vector<8x128xf32>
    %65 = arith.divf %63, %64 : vector<8x128xf32>
    %66 = arith.mulf %57, %19 : vector<8x128xf32>
    %67 = arith.mulf %51, %59 : vector<8x128xf32>
    %68 = arith.addf %66, %67 : vector<8x128xf32>
    %69 = math.tanh %68 : vector<8x128xf32>
    %70 = arith.mulf %65, %69 : vector<8x128xf32>
    %71 = vector.shape_cast %45 : vector<8x1xi1> to vector<8x1xi1>
    %72 = vector.broadcast %71 : vector<8x1xi1> to vector<8x128xi1>
    %73 = arith.select %72, %70, %19 : vector<8x128xi1>, vector<8x128xf32>
    %74 = vector.shape_cast %45 : vector<8x1xi1> to vector<8x1xi1>
    %75 = vector.broadcast %74 : vector<8x1xi1> to vector<8x128xi1>
    %76 = arith.select %75, %68, %19 : vector<8x128xi1>, vector<8x128xf32>
    %c7_i32 = arith.constant 7 : i32
    %77 = vector.broadcast %c7_i32 : i32 to vector<8x1xi32>
    %78 = arith.cmpi sgt, %0, %77 : vector<8x1xi32>
    %79 = vector.extract_strided_slice %43 {offsets = [0, 0], sizes = [8, 128], strides = [1, 1]} : vector<8x512xf32> to vector<8x128xf32>
    %80 = arith.negf %79 : vector<8x128xf32>
    %81 = math.exp %80 : vector<8x128xf32>
    %cst_47 = arith.constant 1.000000e+00 : f32
    %82 = vector.broadcast %cst_47 : f32 to vector<8x128xf32>
    %83 = arith.addf %82, %81 : vector<8x128xf32>
    %84 = arith.divf %82, %83 : vector<8x128xf32>
    %85 = vector.extract_strided_slice %43 {offsets = [0, 128], sizes = [8, 128], strides = [1, 1]} : vector<8x512xf32> to vector<8x128xf32>
    %86 = arith.negf %85 : vector<8x128xf32>
    %87 = math.exp %86 : vector<8x128xf32>
    %cst_48 = arith.constant 1.000000e+00 : f32
    %88 = vector.broadcast %cst_48 : f32 to vector<8x128xf32>
    %89 = arith.addf %88, %87 : vector<8x128xf32>
    %90 = arith.divf %88, %89 : vector<8x128xf32>
    %91 = vector.extract_strided_slice %43 {offsets = [0, 256], sizes = [8, 128], strides = [1, 1]} : vector<8x512xf32> to vector<8x128xf32>
    %92 = math.tanh %91 : vector<8x128xf32>
    %93 = vector.extract_strided_slice %43 {offsets = [0, 384], sizes = [8, 128], strides = [1, 1]} : vector<8x512xf32> to vector<8x128xf32>
    %94 = arith.negf %93 : vector<8x128xf32>
    %95 = math.exp %94 : vector<8x128xf32>
    %cst_49 = arith.constant 1.000000e+00 : f32
    %96 = vector.broadcast %cst_49 : f32 to vector<8x128xf32>
    %97 = arith.addf %96, %95 : vector<8x128xf32>
    %98 = arith.divf %96, %97 : vector<8x128xf32>
    %99 = arith.mulf %90, %19 : vector<8x128xf32>
    %100 = arith.mulf %84, %92 : vector<8x128xf32>
    %101 = arith.addf %99, %100 : vector<8x128xf32>
    %102 = math.tanh %101 : vector<8x128xf32>
    %103 = arith.mulf %98, %102 : vector<8x128xf32>
    %104 = vector.shape_cast %78 : vector<8x1xi1> to vector<8x1xi1>
    %105 = vector.broadcast %104 : vector<8x1xi1> to vector<8x128xi1>
    %106 = arith.select %105, %103, %19 : vector<8x128xi1>, vector<8x128xf32>
    %107 = vector.shape_cast %78 : vector<8x1xi1> to vector<8x1xi1>
    %108 = vector.broadcast %107 : vector<8x1xi1> to vector<8x128xi1>
    %109 = arith.select %108, %101, %19 : vector<8x128xi1>, vector<8x128xf32>
    %c0_50 = arith.constant 0 : index
    %c0_51 = arith.constant 0 : index
    %110 = vector.load %arg9[%c0_50, %c0_51] : memref<64x128xf32, #tpu.memory_space<vmem>>, vector<8x128xf32>
    %c0_i32_52 = arith.constant 0 : i32
    %111 = vector.broadcast %c0_i32_52 : i32 to vector<8x1xi32>
    %112 = arith.cmpi sgt, %0, %111 : vector<8x1xi32>
    %cst_53 = arith.constant 0.000000e+00 : f32
    %113 = vector.shape_cast %112 : vector<8x1xi1> to vector<8x1xi1>
    %114 = vector.broadcast %113 : vector<8x1xi1> to vector<8x128xi1>
    %115 = vector.broadcast %cst_53 : f32 to vector<8x128xf32>
    %116 = arith.select %114, %73, %115 : vector<8x128xi1>, vector<8x128xf32>
    %117 = arith.addf %110, %116 : vector<8x128xf32>
    %c0_54 = arith.constant 0 : index
    %c0_55 = arith.constant 0 : index
    %118 = vector.load %arg9[%c0_54, %c0_55] : memref<64x128xf32, #tpu.memory_space<vmem>>, vector<8x128xf32>
    tpu.vector_store %arg9[%c0_54, %c0_55], %117 {strides = array<i32>} : memref<64x128xf32, #tpu.memory_space<vmem>>, vector<8x128xf32>,
    %c56_56 = arith.constant 56 : index
    %c0_57 = arith.constant 0 : index
    %119 = vector.load %arg9[%c56_56, %c0_57] : memref<64x128xf32, #tpu.memory_space<vmem>>, vector<8x128xf32>
    %c7_i32_58 = arith.constant 7 : i32
    %120 = vector.broadcast %c7_i32_58 : i32 to vector<8x1xi32>
    %121 = arith.cmpi sgt, %0, %120 : vector<8x1xi32>
    %cst_59 = arith.constant 0.000000e+00 : f32
    %122 = vector.shape_cast %121 : vector<8x1xi1> to vector<8x1xi1>
    %123 = vector.broadcast %122 : vector<8x1xi1> to vector<8x128xi1>
    %124 = vector.broadcast %cst_59 : f32 to vector<8x128xf32>
    %125 = arith.select %123, %106, %124 : vector<8x128xi1>, vector<8x128xf32>
    %126 = arith.addf %119, %125 : vector<8x128xf32>
    %c56_60 = arith.constant 56 : index
    %c0_61 = arith.constant 0 : index
    %127 = vector.load %arg9[%c56_60, %c0_61] : memref<64x128xf32, #tpu.memory_space<vmem>>, vector<8x128xf32>
    tpu.vector_store %arg9[%c56_60, %c0_61], %126 {strides = array<i32>} : memref<64x128xf32, #tpu.memory_space<vmem>>, vector<8x128xf32>,
    %c8 = arith.constant 8 : index
    %c0_62 = arith.constant 0 : index
    %128 = vector.load %arg10[%c8, %c0_62] : memref<64x512xbf16, #tpu.memory_space<vmem>>, vector<8x512xbf16>
    %129 = arith.extf %128 : vector<8x512xbf16> to vector<8x512xf32>
    %130 = arith.addf %129, %3 : vector<8x512xf32>
    %131 = arith.truncf %73 : vector<8x128xf32> to vector<8x128xbf16>
    %c0_63 = arith.constant 0 : index
    %c0_64 = arith.constant 0 : index
    %132 = vector.load %arg5[%c0_63, %c0_64] : memref<128x512xbf16, #tpu.memory_space<vmem>>, vector<128x512xbf16>
    %cst_65 = arith.constant dense<0.000000e+00> : vector<8x512xf32>
    %133 = tpu.matmul %131, %132, %cst_65 {dimension_numbers = #tpu.dot_dimension_numbers<[1], [0], [0], [1], [0, 0, 1, 1], [], []>} : vector<8x128xbf16>, vector<128x512xbf16>, vector<8x512xf32> -> vector<8x512xf32>
    %134 = arith.addf %130, %133 : vector<8x512xf32>
    %c48 = arith.constant 48 : index
    %c0_66 = arith.constant 0 : index
    %135 = vector.load %arg11[%c48, %c0_66] : memref<64x512xbf16, #tpu.memory_space<vmem>>, vector<8x512xbf16>
    %136 = arith.extf %135 : vector<8x512xbf16> to vector<8x512xf32>
    %137 = arith.addf %136, %6 : vector<8x512xf32>
    %138 = arith.truncf %106 : vector<8x128xf32> to vector<8x128xbf16>
    %c0_67 = arith.constant 0 : index
    %c0_68 = arith.constant 0 : index
    %139 = vector.load %arg6[%c0_67, %c0_68] : memref<128x512xbf16, #tpu.memory_space<vmem>>, vector<128x512xbf16>
    %cst_69 = arith.constant dense<0.000000e+00> : vector<8x512xf32>
    %140 = tpu.matmul %138, %139, %cst_69 {dimension_numbers = #tpu.dot_dimension_numbers<[1], [0], [0], [1], [0, 0, 1, 1], [], []>} : vector<8x128xbf16>, vector<128x512xbf16>, vector<8x512xf32> -> vector<8x512xf32>
    %141 = arith.addf %137, %140 : vector<8x512xf32>
    %c1_i32 = arith.constant 1 : i32
    %142 = vector.broadcast %c1_i32 : i32 to vector<8x1xi32>
    %143 = arith.cmpi sgt, %0, %142 : vector<8x1xi32>
    %144 = vector.extract_strided_slice %134 {offsets = [0, 0], sizes = [8, 128], strides = [1, 1]} : vector<8x512xf32> to vector<8x128xf32>
    %145 = arith.negf %144 : vector<8x128xf32>
    %146 = math.exp %145 : vector<8x128xf32>
    %cst_70 = arith.constant 1.000000e+00 : f32
    %147 = vector.broadcast %cst_70 : f32 to vector<8x128xf32>
    %148 = arith.addf %147, %146 : vector<8x128xf32>
    %149 = arith.divf %147, %148 : vector<8x128xf32>
    %150 = vector.extract_strided_slice %134 {offsets = [0, 128], sizes = [8, 128], strides = [1, 1]} : vector<8x512xf32> to vector<8x128xf32>
    %151 = arith.negf %150 : vector<8x128xf32>
    %152 = math.exp %151 : vector<8x128xf32>
    %cst_71 = arith.constant 1.000000e+00 : f32
    %153 = vector.broadcast %cst_71 : f32 to vector<8x128xf32>
    %154 = arith.addf %153, %152 : vector<8x128xf32>
    %155 = arith.divf %153, %154 : vector<8x128xf32>
    %156 = vector.extract_strided_slice %134 {offsets = [0, 256], sizes = [8, 128], strides = [1, 1]} : vector<8x512xf32> to vector<8x128xf32>
    %157 = math.tanh %156 : vector<8x128xf32>
    %158 = vector.extract_strided_slice %134 {offsets = [0, 384], sizes = [8, 128], strides = [1, 1]} : vector<8x512xf32> to vector<8x128xf32>
    %159 = arith.negf %158 : vector<8x128xf32>
    %160 = math.exp %159 : vector<8x128xf32>
    %cst_72 = arith.constant 1.000000e+00 : f32
    %161 = vector.broadcast %cst_72 : f32 to vector<8x128xf32>
    %162 = arith.addf %161, %160 : vector<8x128xf32>
    %163 = arith.divf %161, %162 : vector<8x128xf32>
    %164 = arith.mulf %155, %76 : vector<8x128xf32>
    %165 = arith.mulf %149, %157 : vector<8x128xf32>
    %166 = arith.addf %164, %165 : vector<8x128xf32>
    %167 = math.tanh %166 : vector<8x128xf32>
    %168 = arith.mulf %163, %167 : vector<8x128xf32>
    %169 = vector.shape_cast %143 : vector<8x1xi1> to vector<8x1xi1>
    %170 = vector.broadcast %169 : vector<8x1xi1> to vector<8x128xi1>
    %171 = arith.select %170, %168, %73 : vector<8x128xi1>, vector<8x128xf32>
    %172 = vector.shape_cast %143 : vector<8x1xi1> to vector<8x1xi1>
    %173 = vector.broadcast %172 : vector<8x1xi1> to vector<8x128xi1>
    %174 = arith.select %173, %166, %76 : vector<8x128xi1>, vector<8x128xf32>
    %c6_i32 = arith.constant 6 : i32
    %175 = vector.broadcast %c6_i32 : i32 to vector<8x1xi32>
    %176 = arith.cmpi sgt, %0, %175 : vector<8x1xi32>
    %177 = vector.extract_strided_slice %141 {offsets = [0, 0], sizes = [8, 128], strides = [1, 1]} : vector<8x512xf32> to vector<8x128xf32>
    %178 = arith.negf %177 : vector<8x128xf32>
    %179 = math.exp %178 : vector<8x128xf32>
    %cst_73 = arith.constant 1.000000e+00 : f32
    %180 = vector.broadcast %cst_73 : f32 to vector<8x128xf32>
    %181 = arith.addf %180, %179 : vector<8x128xf32>
    %182 = arith.divf %180, %181 : vector<8x128xf32>
    %183 = vector.extract_strided_slice %141 {offsets = [0, 128], sizes = [8, 128], strides = [1, 1]} : vector<8x512xf32> to vector<8x128xf32>
    %184 = arith.negf %183 : vector<8x128xf32>
    %185 = math.exp %184 : vector<8x128xf32>
    %cst_74 = arith.constant 1.000000e+00 : f32
    %186 = vector.broadcast %cst_74 : f32 to vector<8x128xf32>
    %187 = arith.addf %186, %185 : vector<8x128xf32>
    %188 = arith.divf %186, %187 : vector<8x128xf32>
    %189 = vector.extract_strided_slice %141 {offsets = [0, 256], sizes = [8, 128], strides = [1, 1]} : vector<8x512xf32> to vector<8x128xf32>
    %190 = math.tanh %189 : vector<8x128xf32>
    %191 = vector.extract_strided_slice %141 {offsets = [0, 384], sizes = [8, 128], strides = [1, 1]} : vector<8x512xf32> to vector<8x128xf32>
    %192 = arith.negf %191 : vector<8x128xf32>
    %193 = math.exp %192 : vector<8x128xf32>
    %cst_75 = arith.constant 1.000000e+00 : f32
    %194 = vector.broadcast %cst_75 : f32 to vector<8x128xf32>
    %195 = arith.addf %194, %193 : vector<8x128xf32>
    %196 = arith.divf %194, %195 : vector<8x128xf32>
    %197 = arith.mulf %188, %109 : vector<8x128xf32>
    %198 = arith.mulf %182, %190 : vector<8x128xf32>
    %199 = arith.addf %197, %198 : vector<8x128xf32>
    %200 = math.tanh %199 : vector<8x128xf32>
    %201 = arith.mulf %196, %200 : vector<8x128xf32>
    %202 = vector.shape_cast %176 : vector<8x1xi1> to vector<8x1xi1>
    %203 = vector.broadcast %202 : vector<8x1xi1> to vector<8x128xi1>
    %204 = arith.select %203, %201, %106 : vector<8x128xi1>, vector<8x128xf32>
    %205 = vector.shape_cast %176 : vector<8x1xi1> to vector<8x1xi1>
    %206 = vector.broadcast %205 : vector<8x1xi1> to vector<8x128xi1>
    %207 = arith.select %206, %199, %109 : vector<8x128xi1>, vector<8x128xf32>
    %c8_76 = arith.constant 8 : index
    %c0_77 = arith.constant 0 : index
    %208 = vector.load %arg9[%c8_76, %c0_77] : memref<64x128xf32, #tpu.memory_space<vmem>>, vector<8x128xf32>
    %c1_i32_78 = arith.constant 1 : i32
    %209 = vector.broadcast %c1_i32_78 : i32 to vector<8x1xi32>
    %210 = arith.cmpi sgt, %0, %209 : vector<8x1xi32>
    %cst_79 = arith.constant 0.000000e+00 : f32
    %211 = vector.shape_cast %210 : vector<8x1xi1> to vector<8x1xi1>
    %212 = vector.broadcast %211 : vector<8x1xi1> to vector<8x128xi1>
    %213 = vector.broadcast %cst_79 : f32 to vector<8x128xf32>
    %214 = arith.select %212, %171, %213 : vector<8x128xi1>, vector<8x128xf32>
    %215 = arith.addf %208, %214 : vector<8x128xf32>
    %c8_80 = arith.constant 8 : index
    %c0_81 = arith.constant 0 : index
    %216 = vector.load %arg9[%c8_80, %c0_81] : memref<64x128xf32, #tpu.memory_space<vmem>>, vector<8x128xf32>
    tpu.vector_store %arg9[%c8_80, %c0_81], %215 {strides = array<i32>} : memref<64x128xf32, #tpu.memory_space<vmem>>, vector<8x128xf32>,
    %c48_82 = arith.constant 48 : index
    %c0_83 = arith.constant 0 : index
    %217 = vector.load %arg9[%c48_82, %c0_83] : memref<64x128xf32, #tpu.memory_space<vmem>>, vector<8x128xf32>
    %c6_i32_84 = arith.constant 6 : i32
    %218 = vector.broadcast %c6_i32_84 : i32 to vector<8x1xi32>
    %219 = arith.cmpi sgt, %0, %218 : vector<8x1xi32>
    %cst_85 = arith.constant 0.000000e+00 : f32
    %220 = vector.shape_cast %219 : vector<8x1xi1> to vector<8x1xi1>
    %221 = vector.broadcast %220 : vector<8x1xi1> to vector<8x128xi1>
    %222 = vector.broadcast %cst_85 : f32 to vector<8x128xf32>
    %223 = arith.select %221, %204, %222 : vector<8x128xi1>, vector<8x128xf32>
    %224 = arith.addf %217, %223 : vector<8x128xf32>
    %c48_86 = arith.constant 48 : index
    %c0_87 = arith.constant 0 : index
    %225 = vector.load %arg9[%c48_86, %c0_87] : memref<64x128xf32, #tpu.memory_space<vmem>>, vector<8x128xf32>
    tpu.vector_store %arg9[%c48_86, %c0_87], %224 {strides = array<i32>} : memref<64x128xf32, #tpu.memory_space<vmem>>, vector<8x128xf32>,
    %c16 = arith.constant 16 : index
    %c0_88 = arith.constant 0 : index
    %226 = vector.load %arg10[%c16, %c0_88] : memref<64x512xbf16, #tpu.memory_space<vmem>>, vector<8x512xbf16>
    %227 = arith.extf %226 : vector<8x512xbf16> to vector<8x512xf32>
    %228 = arith.addf %227, %3 : vector<8x512xf32>
    %229 = arith.truncf %171 : vector<8x128xf32> to vector<8x128xbf16>
    %c0_89 = arith.constant 0 : index
    %c0_90 = arith.constant 0 : index
    %230 = vector.load %arg5[%c0_89, %c0_90] : memref<128x512xbf16, #tpu.memory_space<vmem>>, vector<128x512xbf16>
    %cst_91 = arith.constant dense<0.000000e+00> : vector<8x512xf32>
    %231 = tpu.matmul %229, %230, %cst_91 {dimension_numbers = #tpu.dot_dimension_numbers<[1], [0], [0], [1], [0, 0, 1, 1], [], []>} : vector<8x128xbf16>, vector<128x512xbf16>, vector<8x512xf32> -> vector<8x512xf32>
    %232 = arith.addf %228, %231 : vector<8x512xf32>
    %c40 = arith.constant 40 : index
    %c0_92 = arith.constant 0 : index
    %233 = vector.load %arg11[%c40, %c0_92] : memref<64x512xbf16, #tpu.memory_space<vmem>>, vector<8x512xbf16>
    %234 = arith.extf %233 : vector<8x512xbf16> to vector<8x512xf32>
    %235 = arith.addf %234, %6 : vector<8x512xf32>
    %236 = arith.truncf %204 : vector<8x128xf32> to vector<8x128xbf16>
    %c0_93 = arith.constant 0 : index
    %c0_94 = arith.constant 0 : index
    %237 = vector.load %arg6[%c0_93, %c0_94] : memref<128x512xbf16, #tpu.memory_space<vmem>>, vector<128x512xbf16>
    %cst_95 = arith.constant dense<0.000000e+00> : vector<8x512xf32>
    %238 = tpu.matmul %236, %237, %cst_95 {dimension_numbers = #tpu.dot_dimension_numbers<[1], [0], [0], [1], [0, 0, 1, 1], [], []>} : vector<8x128xbf16>, vector<128x512xbf16>, vector<8x512xf32> -> vector<8x512xf32>
    %239 = arith.addf %235, %238 : vector<8x512xf32>
    %c2_i32 = arith.constant 2 : i32
    %240 = vector.broadcast %c2_i32 : i32 to vector<8x1xi32>
    %241 = arith.cmpi sgt, %0, %240 : vector<8x1xi32>
    %242 = vector.extract_strided_slice %232 {offsets = [0, 0], sizes = [8, 128], strides = [1, 1]} : vector<8x512xf32> to vector<8x128xf32>
    %243 = arith.negf %242 : vector<8x128xf32>
    %244 = math.exp %243 : vector<8x128xf32>
    %cst_96 = arith.constant 1.000000e+00 : f32
    %245 = vector.broadcast %cst_96 : f32 to vector<8x128xf32>
    %246 = arith.addf %245, %244 : vector<8x128xf32>
    %247 = arith.divf %245, %246 : vector<8x128xf32>
    %248 = vector.extract_strided_slice %232 {offsets = [0, 128], sizes = [8, 128], strides = [1, 1]} : vector<8x512xf32> to vector<8x128xf32>
    %249 = arith.negf %248 : vector<8x128xf32>
    %250 = math.exp %249 : vector<8x128xf32>
    %cst_97 = arith.constant 1.000000e+00 : f32
    %251 = vector.broadcast %cst_97 : f32 to vector<8x128xf32>
    %252 = arith.addf %251, %250 : vector<8x128xf32>
    %253 = arith.divf %251, %252 : vector<8x128xf32>
    %254 = vector.extract_strided_slice %232 {offsets = [0, 256], sizes = [8, 128], strides = [1, 1]} : vector<8x512xf32> to vector<8x128xf32>
    %255 = math.tanh %254 : vector<8x128xf32>
    %256 = vector.extract_strided_slice %232 {offsets = [0, 384], sizes = [8, 128], strides = [1, 1]} : vector<8x512xf32> to vector<8x128xf32>
    %257 = arith.negf %256 : vector<8x128xf32>
    %258 = math.exp %257 : vector<8x128xf32>
    %cst_98 = arith.constant 1.000000e+00 : f32
    %259 = vector.broadcast %cst_98 : f32 to vector<8x128xf32>
    %260 = arith.addf %259, %258 : vector<8x128xf32>
    %261 = arith.divf %259, %260 : vector<8x128xf32>
    %262 = arith.mulf %253, %174 : vector<8x128xf32>
    %263 = arith.mulf %247, %255 : vector<8x128xf32>
    %264 = arith.addf %262, %263 : vector<8x128xf32>
    %265 = math.tanh %264 : vector<8x128xf32>
    %266 = arith.mulf %261, %265 : vector<8x128xf32>
    %267 = vector.shape_cast %241 : vector<8x1xi1> to vector<8x1xi1>
    %268 = vector.broadcast %267 : vector<8x1xi1> to vector<8x128xi1>
    %269 = arith.select %268, %266, %171 : vector<8x128xi1>, vector<8x128xf32>
    %270 = vector.shape_cast %241 : vector<8x1xi1> to vector<8x1xi1>
    %271 = vector.broadcast %270 : vector<8x1xi1> to vector<8x128xi1>
    %272 = arith.select %271, %264, %174 : vector<8x128xi1>, vector<8x128xf32>
    %c5_i32 = arith.constant 5 : i32
    %273 = vector.broadcast %c5_i32 : i32 to vector<8x1xi32>
    %274 = arith.cmpi sgt, %0, %273 : vector<8x1xi32>
    %275 = vector.extract_strided_slice %239 {offsets = [0, 0], sizes = [8, 128], strides = [1, 1]} : vector<8x512xf32> to vector<8x128xf32>
    %276 = arith.negf %275 : vector<8x128xf32>
    %277 = math.exp %276 : vector<8x128xf32>
    %cst_99 = arith.constant 1.000000e+00 : f32
    %278 = vector.broadcast %cst_99 : f32 to vector<8x128xf32>
    %279 = arith.addf %278, %277 : vector<8x128xf32>
    %280 = arith.divf %278, %279 : vector<8x128xf32>
    %281 = vector.extract_strided_slice %239 {offsets = [0, 128], sizes = [8, 128], strides = [1, 1]} : vector<8x512xf32> to vector<8x128xf32>
    %282 = arith.negf %281 : vector<8x128xf32>
    %283 = math.exp %282 : vector<8x128xf32>
    %cst_100 = arith.constant 1.000000e+00 : f32
    %284 = vector.broadcast %cst_100 : f32 to vector<8x128xf32>
    %285 = arith.addf %284, %283 : vector<8x128xf32>
    %286 = arith.divf %284, %285 : vector<8x128xf32>
    %287 = vector.extract_strided_slice %239 {offsets = [0, 256], sizes = [8, 128], strides = [1, 1]} : vector<8x512xf32> to vector<8x128xf32>
    %288 = math.tanh %287 : vector<8x128xf32>
    %289 = vector.extract_strided_slice %239 {offsets = [0, 384], sizes = [8, 128], strides = [1, 1]} : vector<8x512xf32> to vector<8x128xf32>
    %290 = arith.negf %289 : vector<8x128xf32>
    %291 = math.exp %290 : vector<8x128xf32>
    %cst_101 = arith.constant 1.000000e+00 : f32
    %292 = vector.broadcast %cst_101 : f32 to vector<8x128xf32>
    %293 = arith.addf %292, %291 : vector<8x128xf32>
    %294 = arith.divf %292, %293 : vector<8x128xf32>
    %295 = arith.mulf %286, %207 : vector<8x128xf32>
    %296 = arith.mulf %280, %288 : vector<8x128xf32>
    %297 = arith.addf %295, %296 : vector<8x128xf32>
    %298 = math.tanh %297 : vector<8x128xf32>
    %299 = arith.mulf %294, %298 : vector<8x128xf32>
    %300 = vector.shape_cast %274 : vector<8x1xi1> to vector<8x1xi1>
    %301 = vector.broadcast %300 : vector<8x1xi1> to vector<8x128xi1>
    %302 = arith.select %301, %299, %204 : vector<8x128xi1>, vector<8x128xf32>
    %303 = vector.shape_cast %274 : vector<8x1xi1> to vector<8x1xi1>
    %304 = vector.broadcast %303 : vector<8x1xi1> to vector<8x128xi1>
    %305 = arith.select %304, %297, %207 : vector<8x128xi1>, vector<8x128xf32>
    %c16_102 = arith.constant 16 : index
    %c0_103 = arith.constant 0 : index
    %306 = vector.load %arg9[%c16_102, %c0_103] : memref<64x128xf32, #tpu.memory_space<vmem>>, vector<8x128xf32>
    %c2_i32_104 = arith.constant 2 : i32
    %307 = vector.broadcast %c2_i32_104 : i32 to vector<8x1xi32>
    %308 = arith.cmpi sgt, %0, %307 : vector<8x1xi32>
    %cst_105 = arith.constant 0.000000e+00 : f32
    %309 = vector.shape_cast %308 : vector<8x1xi1> to vector<8x1xi1>
    %310 = vector.broadcast %309 : vector<8x1xi1> to vector<8x128xi1>
    %311 = vector.broadcast %cst_105 : f32 to vector<8x128xf32>
    %312 = arith.select %310, %269, %311 : vector<8x128xi1>, vector<8x128xf32>
    %313 = arith.addf %306, %312 : vector<8x128xf32>
    %c16_106 = arith.constant 16 : index
    %c0_107 = arith.constant 0 : index
    %314 = vector.load %arg9[%c16_106, %c0_107] : memref<64x128xf32, #tpu.memory_space<vmem>>, vector<8x128xf32>
    tpu.vector_store %arg9[%c16_106, %c0_107], %313 {strides = array<i32>} : memref<64x128xf32, #tpu.memory_space<vmem>>, vector<8x128xf32>,
    %c40_108 = arith.constant 40 : index
    %c0_109 = arith.constant 0 : index
    %315 = vector.load %arg9[%c40_108, %c0_109] : memref<64x128xf32, #tpu.memory_space<vmem>>, vector<8x128xf32>
    %c5_i32_110 = arith.constant 5 : i32
    %316 = vector.broadcast %c5_i32_110 : i32 to vector<8x1xi32>
    %317 = arith.cmpi sgt, %0, %316 : vector<8x1xi32>
    %cst_111 = arith.constant 0.000000e+00 : f32
    %318 = vector.shape_cast %317 : vector<8x1xi1> to vector<8x1xi1>
    %319 = vector.broadcast %318 : vector<8x1xi1> to vector<8x128xi1>
    %320 = vector.broadcast %cst_111 : f32 to vector<8x128xf32>
    %321 = arith.select %319, %302, %320 : vector<8x128xi1>, vector<8x128xf32>
    %322 = arith.addf %315, %321 : vector<8x128xf32>
    %c40_112 = arith.constant 40 : index
    %c0_113 = arith.constant 0 : index
    %323 = vector.load %arg9[%c40_112, %c0_113] : memref<64x128xf32, #tpu.memory_space<vmem>>, vector<8x128xf32>
    tpu.vector_store %arg9[%c40_112, %c0_113], %322 {strides = array<i32>} : memref<64x128xf32, #tpu.memory_space<vmem>>, vector<8x128xf32>,
    %c24 = arith.constant 24 : index
    %c0_114 = arith.constant 0 : index
    %324 = vector.load %arg10[%c24, %c0_114] : memref<64x512xbf16, #tpu.memory_space<vmem>>, vector<8x512xbf16>
    %325 = arith.extf %324 : vector<8x512xbf16> to vector<8x512xf32>
    %326 = arith.addf %325, %3 : vector<8x512xf32>
    %327 = arith.truncf %269 : vector<8x128xf32> to vector<8x128xbf16>
    %c0_115 = arith.constant 0 : index
    %c0_116 = arith.constant 0 : index
    %328 = vector.load %arg5[%c0_115, %c0_116] : memref<128x512xbf16, #tpu.memory_space<vmem>>, vector<128x512xbf16>
    %cst_117 = arith.constant dense<0.000000e+00> : vector<8x512xf32>
    %329 = tpu.matmul %327, %328, %cst_117 {dimension_numbers = #tpu.dot_dimension_numbers<[1], [0], [0], [1], [0, 0, 1, 1], [], []>} : vector<8x128xbf16>, vector<128x512xbf16>, vector<8x512xf32> -> vector<8x512xf32>
    %330 = arith.addf %326, %329 : vector<8x512xf32>
    %c32_118 = arith.constant 32 : index
    %c0_119 = arith.constant 0 : index
    %331 = vector.load %arg11[%c32_118, %c0_119] : memref<64x512xbf16, #tpu.memory_space<vmem>>, vector<8x512xbf16>
    %332 = arith.extf %331 : vector<8x512xbf16> to vector<8x512xf32>
    %333 = arith.addf %332, %6 : vector<8x512xf32>
    %334 = arith.truncf %302 : vector<8x128xf32> to vector<8x128xbf16>
    %c0_120 = arith.constant 0 : index
    %c0_121 = arith.constant 0 : index
    %335 = vector.load %arg6[%c0_120, %c0_121] : memref<128x512xbf16, #tpu.memory_space<vmem>>, vector<128x512xbf16>
    %cst_122 = arith.constant dense<0.000000e+00> : vector<8x512xf32>
    %336 = tpu.matmul %334, %335, %cst_122 {dimension_numbers = #tpu.dot_dimension_numbers<[1], [0], [0], [1], [0, 0, 1, 1], [], []>} : vector<8x128xbf16>, vector<128x512xbf16>, vector<8x512xf32> -> vector<8x512xf32>
    %337 = arith.addf %333, %336 : vector<8x512xf32>
    %c3_i32 = arith.constant 3 : i32
    %338 = vector.broadcast %c3_i32 : i32 to vector<8x1xi32>
    %339 = arith.cmpi sgt, %0, %338 : vector<8x1xi32>
    %340 = vector.extract_strided_slice %330 {offsets = [0, 0], sizes = [8, 128], strides = [1, 1]} : vector<8x512xf32> to vector<8x128xf32>
    %341 = arith.negf %340 : vector<8x128xf32>
    %342 = math.exp %341 : vector<8x128xf32>
    %cst_123 = arith.constant 1.000000e+00 : f32
    %343 = vector.broadcast %cst_123 : f32 to vector<8x128xf32>
    %344 = arith.addf %343, %342 : vector<8x128xf32>
    %345 = arith.divf %343, %344 : vector<8x128xf32>
    %346 = vector.extract_strided_slice %330 {offsets = [0, 128], sizes = [8, 128], strides = [1, 1]} : vector<8x512xf32> to vector<8x128xf32>
    %347 = arith.negf %346 : vector<8x128xf32>
    %348 = math.exp %347 : vector<8x128xf32>
    %cst_124 = arith.constant 1.000000e+00 : f32
    %349 = vector.broadcast %cst_124 : f32 to vector<8x128xf32>
    %350 = arith.addf %349, %348 : vector<8x128xf32>
    %351 = arith.divf %349, %350 : vector<8x128xf32>
    %352 = vector.extract_strided_slice %330 {offsets = [0, 256], sizes = [8, 128], strides = [1, 1]} : vector<8x512xf32> to vector<8x128xf32>
    %353 = math.tanh %352 : vector<8x128xf32>
    %354 = vector.extract_strided_slice %330 {offsets = [0, 384], sizes = [8, 128], strides = [1, 1]} : vector<8x512xf32> to vector<8x128xf32>
    %355 = arith.negf %354 : vector<8x128xf32>
    %356 = math.exp %355 : vector<8x128xf32>
    %cst_125 = arith.constant 1.000000e+00 : f32
    %357 = vector.broadcast %cst_125 : f32 to vector<8x128xf32>
    %358 = arith.addf %357, %356 : vector<8x128xf32>
    %359 = arith.divf %357, %358 : vector<8x128xf32>
    %360 = arith.mulf %351, %272 : vector<8x128xf32>
    %361 = arith.mulf %345, %353 : vector<8x128xf32>
    %362 = arith.addf %360, %361 : vector<8x128xf32>
    %363 = math.tanh %362 : vector<8x128xf32>
    %364 = arith.mulf %359, %363 : vector<8x128xf32>
    %365 = vector.shape_cast %339 : vector<8x1xi1> to vector<8x1xi1>
    %366 = vector.broadcast %365 : vector<8x1xi1> to vector<8x128xi1>
    %367 = arith.select %366, %364, %269 : vector<8x128xi1>, vector<8x128xf32>
    %368 = vector.shape_cast %339 : vector<8x1xi1> to vector<8x1xi1>
    %369 = vector.broadcast %368 : vector<8x1xi1> to vector<8x128xi1>
    %370 = arith.select %369, %362, %272 : vector<8x128xi1>, vector<8x128xf32>
    %c4_i32 = arith.constant 4 : i32
    %371 = vector.broadcast %c4_i32 : i32 to vector<8x1xi32>
    %372 = arith.cmpi sgt, %0, %371 : vector<8x1xi32>
    %373 = vector.extract_strided_slice %337 {offsets = [0, 0], sizes = [8, 128], strides = [1, 1]} : vector<8x512xf32> to vector<8x128xf32>
    %374 = arith.negf %373 : vector<8x128xf32>
    %375 = math.exp %374 : vector<8x128xf32>
    %cst_126 = arith.constant 1.000000e+00 : f32
    %376 = vector.broadcast %cst_126 : f32 to vector<8x128xf32>
    %377 = arith.addf %376, %375 : vector<8x128xf32>
    %378 = arith.divf %376, %377 : vector<8x128xf32>
    %379 = vector.extract_strided_slice %337 {offsets = [0, 128], sizes = [8, 128], strides = [1, 1]} : vector<8x512xf32> to vector<8x128xf32>
    %380 = arith.negf %379 : vector<8x128xf32>
    %381 = math.exp %380 : vector<8x128xf32>
    %cst_127 = arith.constant 1.000000e+00 : f32
    %382 = vector.broadcast %cst_127 : f32 to vector<8x128xf32>
    %383 = arith.addf %382, %381 : vector<8x128xf32>
    %384 = arith.divf %382, %383 : vector<8x128xf32>
    %385 = vector.extract_strided_slice %337 {offsets = [0, 256], sizes = [8, 128], strides = [1, 1]} : vector<8x512xf32> to vector<8x128xf32>
    %386 = math.tanh %385 : vector<8x128xf32>
    %387 = vector.extract_strided_slice %337 {offsets = [0, 384], sizes = [8, 128], strides = [1, 1]} : vector<8x512xf32> to vector<8x128xf32>
    %388 = arith.negf %387 : vector<8x128xf32>
    %389 = math.exp %388 : vector<8x128xf32>
    %cst_128 = arith.constant 1.000000e+00 : f32
    %390 = vector.broadcast %cst_128 : f32 to vector<8x128xf32>
    %391 = arith.addf %390, %389 : vector<8x128xf32>
    %392 = arith.divf %390, %391 : vector<8x128xf32>
    %393 = arith.mulf %384, %305 : vector<8x128xf32>
    %394 = arith.mulf %378, %386 : vector<8x128xf32>
    %395 = arith.addf %393, %394 : vector<8x128xf32>
    %396 = math.tanh %395 : vector<8x128xf32>
    %397 = arith.mulf %392, %396 : vector<8x128xf32>
    %398 = vector.shape_cast %372 : vector<8x1xi1> to vector<8x1xi1>
    %399 = vector.broadcast %398 : vector<8x1xi1> to vector<8x128xi1>
    %400 = arith.select %399, %397, %302 : vector<8x128xi1>, vector<8x128xf32>
    %401 = vector.shape_cast %372 : vector<8x1xi1> to vector<8x1xi1>
    %402 = vector.broadcast %401 : vector<8x1xi1> to vector<8x128xi1>
    %403 = arith.select %402, %395, %305 : vector<8x128xi1>, vector<8x128xf32>
    %c24_129 = arith.constant 24 : index
    %c0_130 = arith.constant 0 : index
    %404 = vector.load %arg9[%c24_129, %c0_130] : memref<64x128xf32, #tpu.memory_space<vmem>>, vector<8x128xf32>
    %c3_i32_131 = arith.constant 3 : i32
    %405 = vector.broadcast %c3_i32_131 : i32 to vector<8x1xi32>
    %406 = arith.cmpi sgt, %0, %405 : vector<8x1xi32>
    %cst_132 = arith.constant 0.000000e+00 : f32
    %407 = vector.shape_cast %406 : vector<8x1xi1> to vector<8x1xi1>
    %408 = vector.broadcast %407 : vector<8x1xi1> to vector<8x128xi1>
    %409 = vector.broadcast %cst_132 : f32 to vector<8x128xf32>
    %410 = arith.select %408, %367, %409 : vector<8x128xi1>, vector<8x128xf32>
    %411 = arith.addf %404, %410 : vector<8x128xf32>
    %c24_133 = arith.constant 24 : index
    %c0_134 = arith.constant 0 : index
    %412 = vector.load %arg9[%c24_133, %c0_134] : memref<64x128xf32, #tpu.memory_space<vmem>>, vector<8x128xf32>
    tpu.vector_store %arg9[%c24_133, %c0_134], %411 {strides = array<i32>} : memref<64x128xf32, #tpu.memory_space<vmem>>, vector<8x128xf32>,
    %c32_135 = arith.constant 32 : index
    %c0_136 = arith.constant 0 : index
    %413 = vector.load %arg9[%c32_135, %c0_136] : memref<64x128xf32, #tpu.memory_space<vmem>>, vector<8x128xf32>
    %c4_i32_137 = arith.constant 4 : i32
    %414 = vector.broadcast %c4_i32_137 : i32 to vector<8x1xi32>
    %415 = arith.cmpi sgt, %0, %414 : vector<8x1xi32>
    %cst_138 = arith.constant 0.000000e+00 : f32
    %416 = vector.shape_cast %415 : vector<8x1xi1> to vector<8x1xi1>
    %417 = vector.broadcast %416 : vector<8x1xi1> to vector<8x128xi1>
    %418 = vector.broadcast %cst_138 : f32 to vector<8x128xf32>
    %419 = arith.select %417, %400, %418 : vector<8x128xi1>, vector<8x128xf32>
    %420 = arith.addf %413, %419 : vector<8x128xf32>
    %c32_139 = arith.constant 32 : index
    %c0_140 = arith.constant 0 : index
    %421 = vector.load %arg9[%c32_139, %c0_140] : memref<64x128xf32, #tpu.memory_space<vmem>>, vector<8x128xf32>
    tpu.vector_store %arg9[%c32_139, %c0_140], %420 {strides = array<i32>} : memref<64x128xf32, #tpu.memory_space<vmem>>, vector<8x128xf32>,
    %c32_141 = arith.constant 32 : index
    %c0_142 = arith.constant 0 : index
    %422 = vector.load %arg10[%c32_141, %c0_142] : memref<64x512xbf16, #tpu.memory_space<vmem>>, vector<8x512xbf16>
    %423 = arith.extf %422 : vector<8x512xbf16> to vector<8x512xf32>
    %424 = arith.addf %423, %3 : vector<8x512xf32>
    %425 = arith.truncf %367 : vector<8x128xf32> to vector<8x128xbf16>
    %c0_143 = arith.constant 0 : index
    %c0_144 = arith.constant 0 : index
    %426 = vector.load %arg5[%c0_143, %c0_144] : memref<128x512xbf16, #tpu.memory_space<vmem>>, vector<128x512xbf16>
    %cst_145 = arith.constant dense<0.000000e+00> : vector<8x512xf32>
    %427 = tpu.matmul %425, %426, %cst_145 {dimension_numbers = #tpu.dot_dimension_numbers<[1], [0], [0], [1], [0, 0, 1, 1], [], []>} : vector<8x128xbf16>, vector<128x512xbf16>, vector<8x512xf32> -> vector<8x512xf32>
    %428 = arith.addf %424, %427 : vector<8x512xf32>
    %c24_146 = arith.constant 24 : index
    %c0_147 = arith.constant 0 : index
    %429 = vector.load %arg11[%c24_146, %c0_147] : memref<64x512xbf16, #tpu.memory_space<vmem>>, vector<8x512xbf16>
    %430 = arith.extf %429 : vector<8x512xbf16> to vector<8x512xf32>
    %431 = arith.addf %430, %6 : vector<8x512xf32>
    %432 = arith.truncf %400 : vector<8x128xf32> to vector<8x128xbf16>
    %c0_148 = arith.constant 0 : index
    %c0_149 = arith.constant 0 : index
    %433 = vector.load %arg6[%c0_148, %c0_149] : memref<128x512xbf16, #tpu.memory_space<vmem>>, vector<128x512xbf16>
    %cst_150 = arith.constant dense<0.000000e+00> : vector<8x512xf32>
    %434 = tpu.matmul %432, %433, %cst_150 {dimension_numbers = #tpu.dot_dimension_numbers<[1], [0], [0], [1], [0, 0, 1, 1], [], []>} : vector<8x128xbf16>, vector<128x512xbf16>, vector<8x512xf32> -> vector<8x512xf32>
    %435 = arith.addf %431, %434 : vector<8x512xf32>
    %c4_i32_151 = arith.constant 4 : i32
    %436 = vector.broadcast %c4_i32_151 : i32 to vector<8x1xi32>
    %437 = arith.cmpi sgt, %0, %436 : vector<8x1xi32>
    %438 = vector.extract_strided_slice %428 {offsets = [0, 0], sizes = [8, 128], strides = [1, 1]} : vector<8x512xf32> to vector<8x128xf32>
    %439 = arith.negf %438 : vector<8x128xf32>
    %440 = math.exp %439 : vector<8x128xf32>
    %cst_152 = arith.constant 1.000000e+00 : f32
    %441 = vector.broadcast %cst_152 : f32 to vector<8x128xf32>
    %442 = arith.addf %441, %440 : vector<8x128xf32>
    %443 = arith.divf %441, %442 : vector<8x128xf32>
    %444 = vector.extract_strided_slice %428 {offsets = [0, 128], sizes = [8, 128], strides = [1, 1]} : vector<8x512xf32> to vector<8x128xf32>
    %445 = arith.negf %444 : vector<8x128xf32>
    %446 = math.exp %445 : vector<8x128xf32>
    %cst_153 = arith.constant 1.000000e+00 : f32
    %447 = vector.broadcast %cst_153 : f32 to vector<8x128xf32>
    %448 = arith.addf %447, %446 : vector<8x128xf32>
    %449 = arith.divf %447, %448 : vector<8x128xf32>
    %450 = vector.extract_strided_slice %428 {offsets = [0, 256], sizes = [8, 128], strides = [1, 1]} : vector<8x512xf32> to vector<8x128xf32>
    %451 = math.tanh %450 : vector<8x128xf32>
    %452 = vector.extract_strided_slice %428 {offsets = [0, 384], sizes = [8, 128], strides = [1, 1]} : vector<8x512xf32> to vector<8x128xf32>
    %453 = arith.negf %452 : vector<8x128xf32>
    %454 = math.exp %453 : vector<8x128xf32>
    %cst_154 = arith.constant 1.000000e+00 : f32
    %455 = vector.broadcast %cst_154 : f32 to vector<8x128xf32>
    %456 = arith.addf %455, %454 : vector<8x128xf32>
    %457 = arith.divf %455, %456 : vector<8x128xf32>
    %458 = arith.mulf %449, %370 : vector<8x128xf32>
    %459 = arith.mulf %443, %451 : vector<8x128xf32>
    %460 = arith.addf %458, %459 : vector<8x128xf32>
    %461 = math.tanh %460 : vector<8x128xf32>
    %462 = arith.mulf %457, %461 : vector<8x128xf32>
    %463 = vector.shape_cast %437 : vector<8x1xi1> to vector<8x1xi1>
    %464 = vector.broadcast %463 : vector<8x1xi1> to vector<8x128xi1>
    %465 = arith.select %464, %462, %367 : vector<8x128xi1>, vector<8x128xf32>
    %466 = vector.shape_cast %437 : vector<8x1xi1> to vector<8x1xi1>
    %467 = vector.broadcast %466 : vector<8x1xi1> to vector<8x128xi1>
    %468 = arith.select %467, %460, %370 : vector<8x128xi1>, vector<8x128xf32>
    %c3_i32_155 = arith.constant 3 : i32
    %469 = vector.broadcast %c3_i32_155 : i32 to vector<8x1xi32>
    %470 = arith.cmpi sgt, %0, %469 : vector<8x1xi32>
    %471 = vector.extract_strided_slice %435 {offsets = [0, 0], sizes = [8, 128], strides = [1, 1]} : vector<8x512xf32> to vector<8x128xf32>
    %472 = arith.negf %471 : vector<8x128xf32>
    %473 = math.exp %472 : vector<8x128xf32>
    %cst_156 = arith.constant 1.000000e+00 : f32
    %474 = vector.broadcast %cst_156 : f32 to vector<8x128xf32>
    %475 = arith.addf %474, %473 : vector<8x128xf32>
    %476 = arith.divf %474, %475 : vector<8x128xf32>
    %477 = vector.extract_strided_slice %435 {offsets = [0, 128], sizes = [8, 128], strides = [1, 1]} : vector<8x512xf32> to vector<8x128xf32>
    %478 = arith.negf %477 : vector<8x128xf32>
    %479 = math.exp %478 : vector<8x128xf32>
    %cst_157 = arith.constant 1.000000e+00 : f32
    %480 = vector.broadcast %cst_157 : f32 to vector<8x128xf32>
    %481 = arith.addf %480, %479 : vector<8x128xf32>
    %482 = arith.divf %480, %481 : vector<8x128xf32>
    %483 = vector.extract_strided_slice %435 {offsets = [0, 256], sizes = [8, 128], strides = [1, 1]} : vector<8x512xf32> to vector<8x128xf32>
    %484 = math.tanh %483 : vector<8x128xf32>
    %485 = vector.extract_strided_slice %435 {offsets = [0, 384], sizes = [8, 128], strides = [1, 1]} : vector<8x512xf32> to vector<8x128xf32>
    %486 = arith.negf %485 : vector<8x128xf32>
    %487 = math.exp %486 : vector<8x128xf32>
    %cst_158 = arith.constant 1.000000e+00 : f32
    %488 = vector.broadcast %cst_158 : f32 to vector<8x128xf32>
    %489 = arith.addf %488, %487 : vector<8x128xf32>
    %490 = arith.divf %488, %489 : vector<8x128xf32>
    %491 = arith.mulf %482, %403 : vector<8x128xf32>
    %492 = arith.mulf %476, %484 : vector<8x128xf32>
    %493 = arith.addf %491, %492 : vector<8x128xf32>
    %494 = math.tanh %493 : vector<8x128xf32>
    %495 = arith.mulf %490, %494 : vector<8x128xf32>
    %496 = vector.shape_cast %470 : vector<8x1xi1> to vector<8x1xi1>
    %497 = vector.broadcast %496 : vector<8x1xi1> to vector<8x128xi1>
    %498 = arith.select %497, %495, %400 : vector<8x128xi1>, vector<8x128xf32>
    %499 = vector.shape_cast %470 : vector<8x1xi1> to vector<8x1xi1>
    %500 = vector.broadcast %499 : vector<8x1xi1> to vector<8x128xi1>
    %501 = arith.select %500, %493, %403 : vector<8x128xi1>, vector<8x128xf32>
    %c32_159 = arith.constant 32 : index
    %c0_160 = arith.constant 0 : index
    %502 = vector.load %arg9[%c32_159, %c0_160] : memref<64x128xf32, #tpu.memory_space<vmem>>, vector<8x128xf32>
    %c4_i32_161 = arith.constant 4 : i32
    %503 = vector.broadcast %c4_i32_161 : i32 to vector<8x1xi32>
    %504 = arith.cmpi sgt, %0, %503 : vector<8x1xi32>
    %cst_162 = arith.constant 0.000000e+00 : f32
    %505 = vector.shape_cast %504 : vector<8x1xi1> to vector<8x1xi1>
    %506 = vector.broadcast %505 : vector<8x1xi1> to vector<8x128xi1>
    %507 = vector.broadcast %cst_162 : f32 to vector<8x128xf32>
    %508 = arith.select %506, %465, %507 : vector<8x128xi1>, vector<8x128xf32>
    %509 = arith.addf %502, %508 : vector<8x128xf32>
    %c32_163 = arith.constant 32 : index
    %c0_164 = arith.constant 0 : index
    %510 = vector.load %arg9[%c32_163, %c0_164] : memref<64x128xf32, #tpu.memory_space<vmem>>, vector<8x128xf32>
    tpu.vector_store %arg9[%c32_163, %c0_164], %509 {strides = array<i32>} : memref<64x128xf32, #tpu.memory_space<vmem>>, vector<8x128xf32>,
    %c24_165 = arith.constant 24 : index
    %c0_166 = arith.constant 0 : index
    %511 = vector.load %arg9[%c24_165, %c0_166] : memref<64x128xf32, #tpu.memory_space<vmem>>, vector<8x128xf32>
    %c3_i32_167 = arith.constant 3 : i32
    %512 = vector.broadcast %c3_i32_167 : i32 to vector<8x1xi32>
    %513 = arith.cmpi sgt, %0, %512 : vector<8x1xi32>
    %cst_168 = arith.constant 0.000000e+00 : f32
    %514 = vector.shape_cast %513 : vector<8x1xi1> to vector<8x1xi1>
    %515 = vector.broadcast %514 : vector<8x1xi1> to vector<8x128xi1>
    %516 = vector.broadcast %cst_168 : f32 to vector<8x128xf32>
    %517 = arith.select %515, %498, %516 : vector<8x128xi1>, vector<8x128xf32>
    %518 = arith.addf %511, %517 : vector<8x128xf32>
    %c24_169 = arith.constant 24 : index
    %c0_170 = arith.constant 0 : index
    %519 = vector.load %arg9[%c24_169, %c0_170] : memref<64x128xf32, #tpu.memory_space<vmem>>, vector<8x128xf32>
    tpu.vector_store %arg9[%c24_169, %c0_170], %518 {strides = array<i32>} : memref<64x128xf32, #tpu.memory_space<vmem>>, vector<8x128xf32>,
    %c40_171 = arith.constant 40 : index
    %c0_172 = arith.constant 0 : index
    %520 = vector.load %arg10[%c40_171, %c0_172] : memref<64x512xbf16, #tpu.memory_space<vmem>>, vector<8x512xbf16>
    %521 = arith.extf %520 : vector<8x512xbf16> to vector<8x512xf32>
    %522 = arith.addf %521, %3 : vector<8x512xf32>
    %523 = arith.truncf %465 : vector<8x128xf32> to vector<8x128xbf16>
    %c0_173 = arith.constant 0 : index
    %c0_174 = arith.constant 0 : index
    %524 = vector.load %arg5[%c0_173, %c0_174] : memref<128x512xbf16, #tpu.memory_space<vmem>>, vector<128x512xbf16>
    %cst_175 = arith.constant dense<0.000000e+00> : vector<8x512xf32>
    %525 = tpu.matmul %523, %524, %cst_175 {dimension_numbers = #tpu.dot_dimension_numbers<[1], [0], [0], [1], [0, 0, 1, 1], [], []>} : vector<8x128xbf16>, vector<128x512xbf16>, vector<8x512xf32> -> vector<8x512xf32>
    %526 = arith.addf %522, %525 : vector<8x512xf32>
    %c16_176 = arith.constant 16 : index
    %c0_177 = arith.constant 0 : index
    %527 = vector.load %arg11[%c16_176, %c0_177] : memref<64x512xbf16, #tpu.memory_space<vmem>>, vector<8x512xbf16>
    %528 = arith.extf %527 : vector<8x512xbf16> to vector<8x512xf32>
    %529 = arith.addf %528, %6 : vector<8x512xf32>
    %530 = arith.truncf %498 : vector<8x128xf32> to vector<8x128xbf16>
    %c0_178 = arith.constant 0 : index
    %c0_179 = arith.constant 0 : index
    %531 = vector.load %arg6[%c0_178, %c0_179] : memref<128x512xbf16, #tpu.memory_space<vmem>>, vector<128x512xbf16>
    %cst_180 = arith.constant dense<0.000000e+00> : vector<8x512xf32>
    %532 = tpu.matmul %530, %531, %cst_180 {dimension_numbers = #tpu.dot_dimension_numbers<[1], [0], [0], [1], [0, 0, 1, 1], [], []>} : vector<8x128xbf16>, vector<128x512xbf16>, vector<8x512xf32> -> vector<8x512xf32>
    %533 = arith.addf %529, %532 : vector<8x512xf32>
    %c5_i32_181 = arith.constant 5 : i32
    %534 = vector.broadcast %c5_i32_181 : i32 to vector<8x1xi32>
    %535 = arith.cmpi sgt, %0, %534 : vector<8x1xi32>
    %536 = vector.extract_strided_slice %526 {offsets = [0, 0], sizes = [8, 128], strides = [1, 1]} : vector<8x512xf32> to vector<8x128xf32>
    %537 = arith.negf %536 : vector<8x128xf32>
    %538 = math.exp %537 : vector<8x128xf32>
    %cst_182 = arith.constant 1.000000e+00 : f32
    %539 = vector.broadcast %cst_182 : f32 to vector<8x128xf32>
    %540 = arith.addf %539, %538 : vector<8x128xf32>
    %541 = arith.divf %539, %540 : vector<8x128xf32>
    %542 = vector.extract_strided_slice %526 {offsets = [0, 128], sizes = [8, 128], strides = [1, 1]} : vector<8x512xf32> to vector<8x128xf32>
    %543 = arith.negf %542 : vector<8x128xf32>
    %544 = math.exp %543 : vector<8x128xf32>
    %cst_183 = arith.constant 1.000000e+00 : f32
    %545 = vector.broadcast %cst_183 : f32 to vector<8x128xf32>
    %546 = arith.addf %545, %544 : vector<8x128xf32>
    %547 = arith.divf %545, %546 : vector<8x128xf32>
    %548 = vector.extract_strided_slice %526 {offsets = [0, 256], sizes = [8, 128], strides = [1, 1]} : vector<8x512xf32> to vector<8x128xf32>
    %549 = math.tanh %548 : vector<8x128xf32>
    %550 = vector.extract_strided_slice %526 {offsets = [0, 384], sizes = [8, 128], strides = [1, 1]} : vector<8x512xf32> to vector<8x128xf32>
    %551 = arith.negf %550 : vector<8x128xf32>
    %552 = math.exp %551 : vector<8x128xf32>
    %cst_184 = arith.constant 1.000000e+00 : f32
    %553 = vector.broadcast %cst_184 : f32 to vector<8x128xf32>
    %554 = arith.addf %553, %552 : vector<8x128xf32>
    %555 = arith.divf %553, %554 : vector<8x128xf32>
    %556 = arith.mulf %547, %468 : vector<8x128xf32>
    %557 = arith.mulf %541, %549 : vector<8x128xf32>
    %558 = arith.addf %556, %557 : vector<8x128xf32>
    %559 = math.tanh %558 : vector<8x128xf32>
    %560 = arith.mulf %555, %559 : vector<8x128xf32>
    %561 = vector.shape_cast %535 : vector<8x1xi1> to vector<8x1xi1>
    %562 = vector.broadcast %561 : vector<8x1xi1> to vector<8x128xi1>
    %563 = arith.select %562, %560, %465 : vector<8x128xi1>, vector<8x128xf32>
    %564 = vector.shape_cast %535 : vector<8x1xi1> to vector<8x1xi1>
    %565 = vector.broadcast %564 : vector<8x1xi1> to vector<8x128xi1>
    %566 = arith.select %565, %558, %468 : vector<8x128xi1>, vector<8x128xf32>
    %c2_i32_185 = arith.constant 2 : i32
    %567 = vector.broadcast %c2_i32_185 : i32 to vector<8x1xi32>
    %568 = arith.cmpi sgt, %0, %567 : vector<8x1xi32>
    %569 = vector.extract_strided_slice %533 {offsets = [0, 0], sizes = [8, 128], strides = [1, 1]} : vector<8x512xf32> to vector<8x128xf32>
    %570 = arith.negf %569 : vector<8x128xf32>
    %571 = math.exp %570 : vector<8x128xf32>
    %cst_186 = arith.constant 1.000000e+00 : f32
    %572 = vector.broadcast %cst_186 : f32 to vector<8x128xf32>
    %573 = arith.addf %572, %571 : vector<8x128xf32>
    %574 = arith.divf %572, %573 : vector<8x128xf32>
    %575 = vector.extract_strided_slice %533 {offsets = [0, 128], sizes = [8, 128], strides = [1, 1]} : vector<8x512xf32> to vector<8x128xf32>
    %576 = arith.negf %575 : vector<8x128xf32>
    %577 = math.exp %576 : vector<8x128xf32>
    %cst_187 = arith.constant 1.000000e+00 : f32
    %578 = vector.broadcast %cst_187 : f32 to vector<8x128xf32>
    %579 = arith.addf %578, %577 : vector<8x128xf32>
    %580 = arith.divf %578, %579 : vector<8x128xf32>
    %581 = vector.extract_strided_slice %533 {offsets = [0, 256], sizes = [8, 128], strides = [1, 1]} : vector<8x512xf32> to vector<8x128xf32>
    %582 = math.tanh %581 : vector<8x128xf32>
    %583 = vector.extract_strided_slice %533 {offsets = [0, 384], sizes = [8, 128], strides = [1, 1]} : vector<8x512xf32> to vector<8x128xf32>
    %584 = arith.negf %583 : vector<8x128xf32>
    %585 = math.exp %584 : vector<8x128xf32>
    %cst_188 = arith.constant 1.000000e+00 : f32
    %586 = vector.broadcast %cst_188 : f32 to vector<8x128xf32>
    %587 = arith.addf %586, %585 : vector<8x128xf32>
    %588 = arith.divf %586, %587 : vector<8x128xf32>
    %589 = arith.mulf %580, %501 : vector<8x128xf32>
    %590 = arith.mulf %574, %582 : vector<8x128xf32>
    %591 = arith.addf %589, %590 : vector<8x128xf32>
    %592 = math.tanh %591 : vector<8x128xf32>
    %593 = arith.mulf %588, %592 : vector<8x128xf32>
    %594 = vector.shape_cast %568 : vector<8x1xi1> to vector<8x1xi1>
    %595 = vector.broadcast %594 : vector<8x1xi1> to vector<8x128xi1>
    %596 = arith.select %595, %593, %498 : vector<8x128xi1>, vector<8x128xf32>
    %597 = vector.shape_cast %568 : vector<8x1xi1> to vector<8x1xi1>
    %598 = vector.broadcast %597 : vector<8x1xi1> to vector<8x128xi1>
    %599 = arith.select %598, %591, %501 : vector<8x128xi1>, vector<8x128xf32>
    %c40_189 = arith.constant 40 : index
    %c0_190 = arith.constant 0 : index
    %600 = vector.load %arg9[%c40_189, %c0_190] : memref<64x128xf32, #tpu.memory_space<vmem>>, vector<8x128xf32>
    %c5_i32_191 = arith.constant 5 : i32
    %601 = vector.broadcast %c5_i32_191 : i32 to vector<8x1xi32>
    %602 = arith.cmpi sgt, %0, %601 : vector<8x1xi32>
    %cst_192 = arith.constant 0.000000e+00 : f32
    %603 = vector.shape_cast %602 : vector<8x1xi1> to vector<8x1xi1>
    %604 = vector.broadcast %603 : vector<8x1xi1> to vector<8x128xi1>
    %605 = vector.broadcast %cst_192 : f32 to vector<8x128xf32>
    %606 = arith.select %604, %563, %605 : vector<8x128xi1>, vector<8x128xf32>
    %607 = arith.addf %600, %606 : vector<8x128xf32>
    %c40_193 = arith.constant 40 : index
    %c0_194 = arith.constant 0 : index
    %608 = vector.load %arg9[%c40_193, %c0_194] : memref<64x128xf32, #tpu.memory_space<vmem>>, vector<8x128xf32>
    tpu.vector_store %arg9[%c40_193, %c0_194], %607 {strides = array<i32>} : memref<64x128xf32, #tpu.memory_space<vmem>>, vector<8x128xf32>,
    %c16_195 = arith.constant 16 : index
    %c0_196 = arith.constant 0 : index
    %609 = vector.load %arg9[%c16_195, %c0_196] : memref<64x128xf32, #tpu.memory_space<vmem>>, vector<8x128xf32>
    %c2_i32_197 = arith.constant 2 : i32
    %610 = vector.broadcast %c2_i32_197 : i32 to vector<8x1xi32>
    %611 = arith.cmpi sgt, %0, %610 : vector<8x1xi32>
    %cst_198 = arith.constant 0.000000e+00 : f32
    %612 = vector.shape_cast %611 : vector<8x1xi1> to vector<8x1xi1>
    %613 = vector.broadcast %612 : vector<8x1xi1> to vector<8x128xi1>
    %614 = vector.broadcast %cst_198 : f32 to vector<8x128xf32>
    %615 = arith.select %613, %596, %614 : vector<8x128xi1>, vector<8x128xf32>
    %616 = arith.addf %609, %615 : vector<8x128xf32>
    %c16_199 = arith.constant 16 : index
    %c0_200 = arith.constant 0 : index
    %617 = vector.load %arg9[%c16_199, %c0_200] : memref<64x128xf32, #tpu.memory_space<vmem>>, vector<8x128xf32>
    tpu.vector_store %arg9[%c16_199, %c0_200], %616 {strides = array<i32>} : memref<64x128xf32, #tpu.memory_space<vmem>>, vector<8x128xf32>,
    %c48_201 = arith.constant 48 : index
    %c0_202 = arith.constant 0 : index
    %618 = vector.load %arg10[%c48_201, %c0_202] : memref<64x512xbf16, #tpu.memory_space<vmem>>, vector<8x512xbf16>
    %619 = arith.extf %618 : vector<8x512xbf16> to vector<8x512xf32>
    %620 = arith.addf %619, %3 : vector<8x512xf32>
    %621 = arith.truncf %563 : vector<8x128xf32> to vector<8x128xbf16>
    %c0_203 = arith.constant 0 : index
    %c0_204 = arith.constant 0 : index
    %622 = vector.load %arg5[%c0_203, %c0_204] : memref<128x512xbf16, #tpu.memory_space<vmem>>, vector<128x512xbf16>
    %cst_205 = arith.constant dense<0.000000e+00> : vector<8x512xf32>
    %623 = tpu.matmul %621, %622, %cst_205 {dimension_numbers = #tpu.dot_dimension_numbers<[1], [0], [0], [1], [0, 0, 1, 1], [], []>} : vector<8x128xbf16>, vector<128x512xbf16>, vector<8x512xf32> -> vector<8x512xf32>
    %624 = arith.addf %620, %623 : vector<8x512xf32>
    %c8_206 = arith.constant 8 : index
    %c0_207 = arith.constant 0 : index
    %625 = vector.load %arg11[%c8_206, %c0_207] : memref<64x512xbf16, #tpu.memory_space<vmem>>, vector<8x512xbf16>
    %626 = arith.extf %625 : vector<8x512xbf16> to vector<8x512xf32>
    %627 = arith.addf %626, %6 : vector<8x512xf32>
    %628 = arith.truncf %596 : vector<8x128xf32> to vector<8x128xbf16>
    %c0_208 = arith.constant 0 : index
    %c0_209 = arith.constant 0 : index
    %629 = vector.load %arg6[%c0_208, %c0_209] : memref<128x512xbf16, #tpu.memory_space<vmem>>, vector<128x512xbf16>
    %cst_210 = arith.constant dense<0.000000e+00> : vector<8x512xf32>
    %630 = tpu.matmul %628, %629, %cst_210 {dimension_numbers = #tpu.dot_dimension_numbers<[1], [0], [0], [1], [0, 0, 1, 1], [], []>} : vector<8x128xbf16>, vector<128x512xbf16>, vector<8x512xf32> -> vector<8x512xf32>
    %631 = arith.addf %627, %630 : vector<8x512xf32>
    %c6_i32_211 = arith.constant 6 : i32
    %632 = vector.broadcast %c6_i32_211 : i32 to vector<8x1xi32>
    %633 = arith.cmpi sgt, %0, %632 : vector<8x1xi32>
    %634 = vector.extract_strided_slice %624 {offsets = [0, 0], sizes = [8, 128], strides = [1, 1]} : vector<8x512xf32> to vector<8x128xf32>
    %635 = arith.negf %634 : vector<8x128xf32>
    %636 = math.exp %635 : vector<8x128xf32>
    %cst_212 = arith.constant 1.000000e+00 : f32
    %637 = vector.broadcast %cst_212 : f32 to vector<8x128xf32>
    %638 = arith.addf %637, %636 : vector<8x128xf32>
    %639 = arith.divf %637, %638 : vector<8x128xf32>
    %640 = vector.extract_strided_slice %624 {offsets = [0, 128], sizes = [8, 128], strides = [1, 1]} : vector<8x512xf32> to vector<8x128xf32>
    %641 = arith.negf %640 : vector<8x128xf32>
    %642 = math.exp %641 : vector<8x128xf32>
    %cst_213 = arith.constant 1.000000e+00 : f32
    %643 = vector.broadcast %cst_213 : f32 to vector<8x128xf32>
    %644 = arith.addf %643, %642 : vector<8x128xf32>
    %645 = arith.divf %643, %644 : vector<8x128xf32>
    %646 = vector.extract_strided_slice %624 {offsets = [0, 256], sizes = [8, 128], strides = [1, 1]} : vector<8x512xf32> to vector<8x128xf32>
    %647 = math.tanh %646 : vector<8x128xf32>
    %648 = vector.extract_strided_slice %624 {offsets = [0, 384], sizes = [8, 128], strides = [1, 1]} : vector<8x512xf32> to vector<8x128xf32>
    %649 = arith.negf %648 : vector<8x128xf32>
    %650 = math.exp %649 : vector<8x128xf32>
    %cst_214 = arith.constant 1.000000e+00 : f32
    %651 = vector.broadcast %cst_214 : f32 to vector<8x128xf32>
    %652 = arith.addf %651, %650 : vector<8x128xf32>
    %653 = arith.divf %651, %652 : vector<8x128xf32>
    %654 = arith.mulf %645, %566 : vector<8x128xf32>
    %655 = arith.mulf %639, %647 : vector<8x128xf32>
    %656 = arith.addf %654, %655 : vector<8x128xf32>
    %657 = math.tanh %656 : vector<8x128xf32>
    %658 = arith.mulf %653, %657 : vector<8x128xf32>
    %659 = vector.shape_cast %633 : vector<8x1xi1> to vector<8x1xi1>
    %660 = vector.broadcast %659 : vector<8x1xi1> to vector<8x128xi1>
    %661 = arith.select %660, %658, %563 : vector<8x128xi1>, vector<8x128xf32>
    %662 = vector.shape_cast %633 : vector<8x1xi1> to vector<8x1xi1>
    %663 = vector.broadcast %662 : vector<8x1xi1> to vector<8x128xi1>
    %664 = arith.select %663, %656, %566 : vector<8x128xi1>, vector<8x128xf32>
    %c1_i32_215 = arith.constant 1 : i32
    %665 = vector.broadcast %c1_i32_215 : i32 to vector<8x1xi32>
    %666 = arith.cmpi sgt, %0, %665 : vector<8x1xi32>
    %667 = vector.extract_strided_slice %631 {offsets = [0, 0], sizes = [8, 128], strides = [1, 1]} : vector<8x512xf32> to vector<8x128xf32>
    %668 = arith.negf %667 : vector<8x128xf32>
    %669 = math.exp %668 : vector<8x128xf32>
    %cst_216 = arith.constant 1.000000e+00 : f32
    %670 = vector.broadcast %cst_216 : f32 to vector<8x128xf32>
    %671 = arith.addf %670, %669 : vector<8x128xf32>
    %672 = arith.divf %670, %671 : vector<8x128xf32>
    %673 = vector.extract_strided_slice %631 {offsets = [0, 128], sizes = [8, 128], strides = [1, 1]} : vector<8x512xf32> to vector<8x128xf32>
    %674 = arith.negf %673 : vector<8x128xf32>
    %675 = math.exp %674 : vector<8x128xf32>
    %cst_217 = arith.constant 1.000000e+00 : f32
    %676 = vector.broadcast %cst_217 : f32 to vector<8x128xf32>
    %677 = arith.addf %676, %675 : vector<8x128xf32>
    %678 = arith.divf %676, %677 : vector<8x128xf32>
    %679 = vector.extract_strided_slice %631 {offsets = [0, 256], sizes = [8, 128], strides = [1, 1]} : vector<8x512xf32> to vector<8x128xf32>
    %680 = math.tanh %679 : vector<8x128xf32>
    %681 = vector.extract_strided_slice %631 {offsets = [0, 384], sizes = [8, 128], strides = [1, 1]} : vector<8x512xf32> to vector<8x128xf32>
    %682 = arith.negf %681 : vector<8x128xf32>
    %683 = math.exp %682 : vector<8x128xf32>
    %cst_218 = arith.constant 1.000000e+00 : f32
    %684 = vector.broadcast %cst_218 : f32 to vector<8x128xf32>
    %685 = arith.addf %684, %683 : vector<8x128xf32>
    %686 = arith.divf %684, %685 : vector<8x128xf32>
    %687 = arith.mulf %678, %599 : vector<8x128xf32>
    %688 = arith.mulf %672, %680 : vector<8x128xf32>
    %689 = arith.addf %687, %688 : vector<8x128xf32>
    %690 = math.tanh %689 : vector<8x128xf32>
    %691 = arith.mulf %686, %690 : vector<8x128xf32>
    %692 = vector.shape_cast %666 : vector<8x1xi1> to vector<8x1xi1>
    %693 = vector.broadcast %692 : vector<8x1xi1> to vector<8x128xi1>
    %694 = arith.select %693, %691, %596 : vector<8x128xi1>, vector<8x128xf32>
    %695 = vector.shape_cast %666 : vector<8x1xi1> to vector<8x1xi1>
    %696 = vector.broadcast %695 : vector<8x1xi1> to vector<8x128xi1>
    %697 = arith.select %696, %689, %599 : vector<8x128xi1>, vector<8x128xf32>
    %c48_219 = arith.constant 48 : index
    %c0_220 = arith.constant 0 : index
    %698 = vector.load %arg9[%c48_219, %c0_220] : memref<64x128xf32, #tpu.memory_space<vmem>>, vector<8x128xf32>
    %c6_i32_221 = arith.constant 6 : i32
    %699 = vector.broadcast %c6_i32_221 : i32 to vector<8x1xi32>
    %700 = arith.cmpi sgt, %0, %699 : vector<8x1xi32>
    %cst_222 = arith.constant 0.000000e+00 : f32
    %701 = vector.shape_cast %700 : vector<8x1xi1> to vector<8x1xi1>
    %702 = vector.broadcast %701 : vector<8x1xi1> to vector<8x128xi1>
    %703 = vector.broadcast %cst_222 : f32 to vector<8x128xf32>
    %704 = arith.select %702, %661, %703 : vector<8x128xi1>, vector<8x128xf32>
    %705 = arith.addf %698, %704 : vector<8x128xf32>
    %c48_223 = arith.constant 48 : index
    %c0_224 = arith.constant 0 : index
    %706 = vector.load %arg9[%c48_223, %c0_224] : memref<64x128xf32, #tpu.memory_space<vmem>>, vector<8x128xf32>
    tpu.vector_store %arg9[%c48_223, %c0_224], %705 {strides = array<i32>} : memref<64x128xf32, #tpu.memory_space<vmem>>, vector<8x128xf32>,
    %c8_225 = arith.constant 8 : index
    %c0_226 = arith.constant 0 : index
    %707 = vector.load %arg9[%c8_225, %c0_226] : memref<64x128xf32, #tpu.memory_space<vmem>>, vector<8x128xf32>
    %c1_i32_227 = arith.constant 1 : i32
    %708 = vector.broadcast %c1_i32_227 : i32 to vector<8x1xi32>
    %709 = arith.cmpi sgt, %0, %708 : vector<8x1xi32>
    %cst_228 = arith.constant 0.000000e+00 : f32
    %710 = vector.shape_cast %709 : vector<8x1xi1> to vector<8x1xi1>
    %711 = vector.broadcast %710 : vector<8x1xi1> to vector<8x128xi1>
    %712 = vector.broadcast %cst_228 : f32 to vector<8x128xf32>
    %713 = arith.select %711, %694, %712 : vector<8x128xi1>, vector<8x128xf32>
    %714 = arith.addf %707, %713 : vector<8x128xf32>
    %c8_229 = arith.constant 8 : index
    %c0_230 = arith.constant 0 : index
    %715 = vector.load %arg9[%c8_229, %c0_230] : memref<64x128xf32, #tpu.memory_space<vmem>>, vector<8x128xf32>
    tpu.vector_store %arg9[%c8_229, %c0_230], %714 {strides = array<i32>} : memref<64x128xf32, #tpu.memory_space<vmem>>, vector<8x128xf32>,
    %c56_231 = arith.constant 56 : index
    %c0_232 = arith.constant 0 : index
    %716 = vector.load %arg10[%c56_231, %c0_232] : memref<64x512xbf16, #tpu.memory_space<vmem>>, vector<8x512xbf16>
    %717 = arith.extf %716 : vector<8x512xbf16> to vector<8x512xf32>
    %718 = arith.addf %717, %3 : vector<8x512xf32>
    %719 = arith.truncf %661 : vector<8x128xf32> to vector<8x128xbf16>
    %c0_233 = arith.constant 0 : index
    %c0_234 = arith.constant 0 : index
    %720 = vector.load %arg5[%c0_233, %c0_234] : memref<128x512xbf16, #tpu.memory_space<vmem>>, vector<128x512xbf16>
    %cst_235 = arith.constant dense<0.000000e+00> : vector<8x512xf32>
    %721 = tpu.matmul %719, %720, %cst_235 {dimension_numbers = #tpu.dot_dimension_numbers<[1], [0], [0], [1], [0, 0, 1, 1], [], []>} : vector<8x128xbf16>, vector<128x512xbf16>, vector<8x512xf32> -> vector<8x512xf32>
    %722 = arith.addf %718, %721 : vector<8x512xf32>
    %c0_236 = arith.constant 0 : index
    %c0_237 = arith.constant 0 : index
    %723 = vector.load %arg11[%c0_236, %c0_237] : memref<64x512xbf16, #tpu.memory_space<vmem>>, vector<8x512xbf16>
    %724 = arith.extf %723 : vector<8x512xbf16> to vector<8x512xf32>
    %725 = arith.addf %724, %6 : vector<8x512xf32>
    %726 = arith.truncf %694 : vector<8x128xf32> to vector<8x128xbf16>
    %c0_238 = arith.constant 0 : index
    %c0_239 = arith.constant 0 : index
    %727 = vector.load %arg6[%c0_238, %c0_239] : memref<128x512xbf16, #tpu.memory_space<vmem>>, vector<128x512xbf16>
    %cst_240 = arith.constant dense<0.000000e+00> : vector<8x512xf32>
    %728 = tpu.matmul %726, %727, %cst_240 {dimension_numbers = #tpu.dot_dimension_numbers<[1], [0], [0], [1], [0, 0, 1, 1], [], []>} : vector<8x128xbf16>, vector<128x512xbf16>, vector<8x512xf32> -> vector<8x512xf32>
    %729 = arith.addf %725, %728 : vector<8x512xf32>
    %c7_i32_241 = arith.constant 7 : i32
    %730 = vector.broadcast %c7_i32_241 : i32 to vector<8x1xi32>
    %731 = arith.cmpi sgt, %0, %730 : vector<8x1xi32>
    %732 = vector.extract_strided_slice %722 {offsets = [0, 0], sizes = [8, 128], strides = [1, 1]} : vector<8x512xf32> to vector<8x128xf32>
    %733 = arith.negf %732 : vector<8x128xf32>
    %734 = math.exp %733 : vector<8x128xf32>
    %cst_242 = arith.constant 1.000000e+00 : f32
    %735 = vector.broadcast %cst_242 : f32 to vector<8x128xf32>
    %736 = arith.addf %735, %734 : vector<8x128xf32>
    %737 = arith.divf %735, %736 : vector<8x128xf32>
    %738 = vector.extract_strided_slice %722 {offsets = [0, 128], sizes = [8, 128], strides = [1, 1]} : vector<8x512xf32> to vector<8x128xf32>
    %739 = arith.negf %738 : vector<8x128xf32>
    %740 = math.exp %739 : vector<8x128xf32>
    %cst_243 = arith.constant 1.000000e+00 : f32
    %741 = vector.broadcast %cst_243 : f32 to vector<8x128xf32>
    %742 = arith.addf %741, %740 : vector<8x128xf32>
    %743 = arith.divf %741, %742 : vector<8x128xf32>
    %744 = vector.extract_strided_slice %722 {offsets = [0, 256], sizes = [8, 128], strides = [1, 1]} : vector<8x512xf32> to vector<8x128xf32>
    %745 = math.tanh %744 : vector<8x128xf32>
    %746 = vector.extract_strided_slice %722 {offsets = [0, 384], sizes = [8, 128], strides = [1, 1]} : vector<8x512xf32> to vector<8x128xf32>
    %747 = arith.negf %746 : vector<8x128xf32>
    %748 = math.exp %747 : vector<8x128xf32>
    %cst_244 = arith.constant 1.000000e+00 : f32
    %749 = vector.broadcast %cst_244 : f32 to vector<8x128xf32>
    %750 = arith.addf %749, %748 : vector<8x128xf32>
    %751 = arith.divf %749, %750 : vector<8x128xf32>
    %752 = arith.mulf %743, %664 : vector<8x128xf32>
    %753 = arith.mulf %737, %745 : vector<8x128xf32>
    %754 = arith.addf %752, %753 : vector<8x128xf32>
    %755 = math.tanh %754 : vector<8x128xf32>
    %756 = arith.mulf %751, %755 : vector<8x128xf32>
    %757 = vector.shape_cast %731 : vector<8x1xi1> to vector<8x1xi1>
    %758 = vector.broadcast %757 : vector<8x1xi1> to vector<8x128xi1>
    %759 = arith.select %758, %756, %661 : vector<8x128xi1>, vector<8x128xf32>
    %c0_i32_245 = arith.constant 0 : i32
    %760 = vector.broadcast %c0_i32_245 : i32 to vector<8x1xi32>
    %761 = arith.cmpi sgt, %0, %760 : vector<8x1xi32>
    %762 = vector.extract_strided_slice %729 {offsets = [0, 0], sizes = [8, 128], strides = [1, 1]} : vector<8x512xf32> to vector<8x128xf32>
    %763 = arith.negf %762 : vector<8x128xf32>
    %764 = math.exp %763 : vector<8x128xf32>
    %cst_246 = arith.constant 1.000000e+00 : f32
    %765 = vector.broadcast %cst_246 : f32 to vector<8x128xf32>
    %766 = arith.addf %765, %764 : vector<8x128xf32>
    %767 = arith.divf %765, %766 : vector<8x128xf32>
    %768 = vector.extract_strided_slice %729 {offsets = [0, 128], sizes = [8, 128], strides = [1, 1]} : vector<8x512xf32> to vector<8x128xf32>
    %769 = arith.negf %768 : vector<8x128xf32>
    %770 = math.exp %769 : vector<8x128xf32>
    %cst_247 = arith.constant 1.000000e+00 : f32
    %771 = vector.broadcast %cst_247 : f32 to vector<8x128xf32>
    %772 = arith.addf %771, %770 : vector<8x128xf32>
    %773 = arith.divf %771, %772 : vector<8x128xf32>
    %774 = vector.extract_strided_slice %729 {offsets = [0, 256], sizes = [8, 128], strides = [1, 1]} : vector<8x512xf32> to vector<8x128xf32>
    %775 = math.tanh %774 : vector<8x128xf32>
    %776 = vector.extract_strided_slice %729 {offsets = [0, 384], sizes = [8, 128], strides = [1, 1]} : vector<8x512xf32> to vector<8x128xf32>
    %777 = arith.negf %776 : vector<8x128xf32>
    %778 = math.exp %777 : vector<8x128xf32>
    %cst_248 = arith.constant 1.000000e+00 : f32
    %779 = vector.broadcast %cst_248 : f32 to vector<8x128xf32>
    %780 = arith.addf %779, %778 : vector<8x128xf32>
    %781 = arith.divf %779, %780 : vector<8x128xf32>
    %782 = arith.mulf %773, %697 : vector<8x128xf32>
    %783 = arith.mulf %767, %775 : vector<8x128xf32>
    %784 = arith.addf %782, %783 : vector<8x128xf32>
    %785 = math.tanh %784 : vector<8x128xf32>
    %786 = arith.mulf %781, %785 : vector<8x128xf32>
    %787 = vector.shape_cast %761 : vector<8x1xi1> to vector<8x1xi1>
    %788 = vector.broadcast %787 : vector<8x1xi1> to vector<8x128xi1>
    %789 = arith.select %788, %786, %694 : vector<8x128xi1>, vector<8x128xf32>
    %c56_249 = arith.constant 56 : index
    %c0_250 = arith.constant 0 : index
    %790 = vector.load %arg9[%c56_249, %c0_250] : memref<64x128xf32, #tpu.memory_space<vmem>>, vector<8x128xf32>
    %c7_i32_251 = arith.constant 7 : i32
    %791 = vector.broadcast %c7_i32_251 : i32 to vector<8x1xi32>
    %792 = arith.cmpi sgt, %0, %791 : vector<8x1xi32>
    %cst_252 = arith.constant 0.000000e+00 : f32
    %793 = vector.shape_cast %792 : vector<8x1xi1> to vector<8x1xi1>
    %794 = vector.broadcast %793 : vector<8x1xi1> to vector<8x128xi1>
    %795 = vector.broadcast %cst_252 : f32 to vector<8x128xf32>
    %796 = arith.select %794, %759, %795 : vector<8x128xi1>, vector<8x128xf32>
    %797 = arith.addf %790, %796 : vector<8x128xf32>
    %c56_253 = arith.constant 56 : index
    %c0_254 = arith.constant 0 : index
    %798 = vector.load %arg9[%c56_253, %c0_254] : memref<64x128xf32, #tpu.memory_space<vmem>>, vector<8x128xf32>
    tpu.vector_store %arg9[%c56_253, %c0_254], %797 {strides = array<i32>} : memref<64x128xf32, #tpu.memory_space<vmem>>, vector<8x128xf32>,
    %c0_255 = arith.constant 0 : index
    %c0_256 = arith.constant 0 : index
    %799 = vector.load %arg9[%c0_255, %c0_256] : memref<64x128xf32, #tpu.memory_space<vmem>>, vector<8x128xf32>
    %c0_i32_257 = arith.constant 0 : i32
    %800 = vector.broadcast %c0_i32_257 : i32 to vector<8x1xi32>
    %801 = arith.cmpi sgt, %0, %800 : vector<8x1xi32>
    %cst_258 = arith.constant 0.000000e+00 : f32
    %802 = vector.shape_cast %801 : vector<8x1xi1> to vector<8x1xi1>
    %803 = vector.broadcast %802 : vector<8x1xi1> to vector<8x128xi1>
    %804 = vector.broadcast %cst_258 : f32 to vector<8x128xf32>
    %805 = arith.select %803, %789, %804 : vector<8x128xi1>, vector<8x128xf32>
    %806 = arith.addf %799, %805 : vector<8x128xf32>
    %c0_259 = arith.constant 0 : index
    %c0_260 = arith.constant 0 : index
    %807 = vector.load %arg9[%c0_259, %c0_260] : memref<64x128xf32, #tpu.memory_space<vmem>>, vector<8x128xf32>
    tpu.vector_store %arg9[%c0_259, %c0_260], %806 {strides = array<i32>} : memref<64x128xf32, #tpu.memory_space<vmem>>, vector<8x128xf32>,
    return
  }
  func.func @transform_0(%arg0: i32) -> (i32, i32) {
    %c0_i32 = arith.constant 0 : i32
    %c0_i32_0 = arith.constant 0 : i32
    %c0_i32_1 = arith.constant 0 : i32
    return %c0_i32, %c0_i32_0 : i32, i32
  }
  func.func @transform_1(%arg0: i32) -> (i32, i32) {
    %c0_i32 = arith.constant 0 : i32
    %c0_i32_0 = arith.constant 0 : i32
    %c0_i32_1 = arith.constant 0 : i32
    return %c0_i32, %c0_i32_0 : i32, i32
  }
  func.func @transform_2(%arg0: i32) -> (i32, i32) {
    %c0_i32 = arith.constant 0 : i32
    %c0_i32_0 = arith.constant 0 : i32
    %c0_i32_1 = arith.constant 0 : i32
    return %c0_i32, %c0_i32_0 : i32, i32
  }
  func.func @transform_3(%arg0: i32) -> (i32, i32) {
    %c0_i32 = arith.constant 0 : i32
    %c0_i32_0 = arith.constant 0 : i32
    %c0_i32_1 = arith.constant 0 : i32
    return %c0_i32, %c0_i32_0 : i32, i32
  }
  func.func @transform_4(%arg0: i32) -> (i32, i32) {
    %c0_i32 = arith.constant 0 : i32
    %c0_i32_0 = arith.constant 0 : i32
    %c0_i32_1 = arith.constant 0 : i32
    return %c0_i32, %c0_i32_0 : i32, i32
  }
  func.func @transform_5(%arg0: i32) -> (i32, i32) {
    %c0_i32 = arith.constant 0 : i32
    %c0_i32_0 = arith.constant 0 : i32
    %c0_i32_1 = arith.constant 0 : i32
    return %c0_i32, %c0_i32_0 : i32, i32
  }
  func.func @transform_6(%arg0: i32) -> (i32, i32) {
    %c0_i32 = arith.constant 0 : i32
    %c0_i32_0 = arith.constant 0 : i32
    %c0_i32_1 = arith.constant 0 : i32
    return %c0_i32, %c0_i32_0 : i32, i32
  }
  func.func @transform_7(%arg0: i32) -> (i32, i32) {
    %c0_i32 = arith.constant 0 : i32
    %c0_i32_0 = arith.constant 0 : i32
    %c0_i32_1 = arith.constant 0 : i32
    return %c0_i32, %c0_i32_0 : i32, i32
  }
  func.func @transform_8(%arg0: i32) -> (i32, i32) {
    %c0_i32 = arith.constant 0 : i32
    %c0_i32_0 = arith.constant 0 : i32
    %c0_i32_1 = arith.constant 0 : i32
    return %c0_i32, %c0_i32_0 : i32, i32
  }
}

</mosaic_0001>

<llo_original>
// kernel: tpu_custom_call.1
$region0: #{tpu_custom_call.1}
  #allocation0 [shape = 'u32[]', space=smem, size = 0x4, offset = 0x4, fixed_abs, tag = 'smem constant byte address 0x4 - core index']
  #allocation1 [shape = 'u32[144,128]{1,0:T(1,128)}', space=vmem, size = 0x12000, scoped, tag = 'internal scratch']
  #allocation2 [shape = 'bf16[64,512]{1,0:T(16,128)(2,1)}', space=vmem, size = 0x10000, scoped, tag = 'scratch operand']
  #allocation3 [shape = 'bf16[64,512]{1,0:T(16,128)(2,1)}', space=vmem, size = 0x10000, scoped, tag = 'scratch operand']
  %s0 = inlined_call_operand.vmem [shape: s32[8,1], index: 0, kind: input, shape index: {}]
  %s1 = inlined_call_operand.vmem [shape: bf16[64,16], index: 1, kind: input, shape index: {}]
  %s2 = inlined_call_operand.vmem [shape: bf16[16,512], index: 2, kind: input, shape index: {}]
  %s3 = inlined_call_operand.hbm [shape: bf16[16,512], index: 3, kind: input, shape index: {}]
  %s4 = inlined_call_operand.hbm [shape: bf16[128,512], index: 4, kind: input, shape index: {}]
  %s5 = inlined_call_operand.hbm [shape: bf16[128,512], index: 5, kind: input, shape index: {}]
  %s6 = inlined_call_operand.vmem [shape: f32[1,512], index: 6, kind: input, shape index: {}]
  %s7 = inlined_call_operand.vmem [shape: f32[1,512], index: 7, kind: input, shape index: {}]
  %s8 = inlined_call_operand.hbm [shape: f32[64,128], index: 8, kind: output, shape index: {}]
  %s9 = sld [smem:[#allocation0]]
  $region54: #{tpu_custom_call.1} parent=0
    _
  %s11 = ssub.s32 1, %s9
  %s12 = scalar_select 0, %s11, %s9
  $region1: #{tpu_custom_call.1} parent=0
    #allocation4 [shape = 'u8[16384]{0}', space=vmem, size = 0x4000, scoped, tag = 'input window, operand 3, single buffered']
    #allocation5 [shape = 's32[1]{0}', space=sflag, size = 0x4, scoped, tag = 'scoped memory for tpu_custom_call.1']
    #allocation6 [shape = 's32[1]{0}', space=sflag, size = 0x4, scoped, tag = 'scoped memory for tpu_custom_call.1']
    #allocation7 [shape = 'u8[131072]{0}', space=vmem, size = 0x20000, scoped, tag = 'input window, operand 4, single buffered']
    #allocation8 [shape = 's32[1]{0}', space=sflag, size = 0x4, scoped, tag = 'scoped memory for tpu_custom_call.1']
    #allocation9 [shape = 'u8[131072]{0}', space=vmem, size = 0x20000, scoped, tag = 'input window, operand 5, single buffered']
    #allocation10 [shape = 'u8[32768]{0}', space=vmem, size = 0x8000, scoped, tag = 'output window, operand 0, single buffered']
    %13 = vsyncpa [#allocation5], 0
    %14 = vsyncpa [#allocation8], 0
    %15 = vsyncpa [#allocation6], 0
    // Predicated region
    $region2: #{tpu_custom_call.1} parent=1 // pred_check
      _
    $region3: #{tpu_custom_call.1} parent=1 // pred_check_branch
      %17 = sbr.rel (0) target = $region5
    $region4: #{tpu_custom_call.1} parent=1 // pred_region
      _
    $region5: #{tpu_custom_call.1} parent=1 // pred_fallthru
      _
    // Predicated region
    $region6: #{tpu_custom_call.1} parent=1 // pred_check
      _
    $region7: #{tpu_custom_call.1} parent=1 // pred_check_branch
      %19 = sbr.rel (0) target = $region9
    $region8: #{tpu_custom_call.1} parent=1 // pred_region
      _
    $region9: #{tpu_custom_call.1} parent=1 // pred_fallthru
      _
    // Predicated region
    $region10: #{tpu_custom_call.1} parent=1 // pred_check
      _
    $region11: #{tpu_custom_call.1} parent=1 // pred_check_branch
      %21 = sbr.rel (0) target = $region13
    $region12: #{tpu_custom_call.1} parent=1 // pred_region
      _
    $region13: #{tpu_custom_call.1} parent=1 // pred_fallthru
      _
    // Predicated region
    $region14: #{tpu_custom_call.1} parent=1 // pred_check
      _
    $region15: #{tpu_custom_call.1} parent=1 // pred_check_branch
      %23 = sbr.rel (0) target = $region17
    $region16: #{tpu_custom_call.1} parent=1 // pred_region
      %s25 = ssub.s32 512, 512
      %26 = vsyncadd [#allocation5], %s25
      %s27 = sshll.u32 [#allocation4], 4
      %s28 = int_to_ptr.vmem [resolvable:$true] %s27
      %33 = dma.hbm_to_vmem [thread:$0]  %s3, 512, %s28, [#allocation5], 256, 256, 16
    $region17: #{tpu_custom_call.1} parent=1 // pred_fallthru
      _
    // Predicated region
    $region18: #{tpu_custom_call.1} parent=1 // pred_check
      _
    $region19: #{tpu_custom_call.1} parent=1 // pred_check_branch
      %35 = sbr.rel (0) target = $region21
    $region20: #{tpu_custom_call.1} parent=1 // pred_region
      %s37 = ssub.s32 4096, 4096
      %38 = vsyncadd [#allocation8], %s37
      %s39 = sshll.u32 [#allocation7], 4
      %s40 = int_to_ptr.vmem [resolvable:$true] %s39
      %45 = dma.hbm_to_vmem [thread:$0]  %s4, 4096, %s40, [#allocation8], 256, 256, 16
    $region21: #{tpu_custom_call.1} parent=1 // pred_fallthru
      _
    // Predicated region
    $region22: #{tpu_custom_call.1} parent=1 // pred_check
      _
    $region23: #{tpu_custom_call.1} parent=1 // pred_check_branch
      %47 = sbr.rel (0) target = $region25
    $region24: #{tpu_custom_call.1} parent=1 // pred_region
      %s49 = ssub.s32 4096, 4096
      %50 = vsyncadd [#allocation8], %s49
      %s51 = sshll.u32 [#allocation9], 4
      %s52 = int_to_ptr.vmem [resolvable:$true] %s51
      %57 = dma.hbm_to_vmem [thread:$0]  %s5, 4096, %s52, [#allocation8], 256, 256, 16
    $region25: #{tpu_custom_call.1} parent=1 // pred_fallthru
      _
    // Predicated region
    $region26: #{tpu_custom_call.1} parent=1 // pred_check
      _
    $region27: #{tpu_custom_call.1} parent=1 // pred_check_branch
      %59 = sbr.rel (0) target = $region29
    $region28: #{tpu_custom_call.1} parent=1 // pred_region
      _
    $region29: #{tpu_custom_call.1} parent=1 // pred_fallthru
      _
    // Predicated region
    $region30: #{tpu_custom_call.1} parent=1 // pred_check
      _
    $region31: #{tpu_custom_call.1} parent=1 // pred_check_branch
      %61 = sbr.rel (0) target = $region33
    $region32: #{tpu_custom_call.1} parent=1 // pred_region
      _
    $region33: #{tpu_custom_call.1} parent=1 // pred_fallthru
      _
    // Predicated region
    $region34: #{tpu_custom_call.1} parent=1 // pred_check
      _
    $region35: #{tpu_custom_call.1} parent=1 // pred_check_branch
      %63 = sbr.rel (0) target = $region37
    $region36: #{tpu_custom_call.1} parent=1 // pred_region
      %64 = dma.done [#allocation5], 512
    $region37: #{tpu_custom_call.1} parent=1 // pred_fallthru
      _
    // Predicated region
    $region38: #{tpu_custom_call.1} parent=1 // pred_check
      _
    $region39: #{tpu_custom_call.1} parent=1 // pred_check_branch
      %66 = sbr.rel (0) target = $region41
    $region40: #{tpu_custom_call.1} parent=1 // pred_region
      %67 = dma.done [#allocation8], 4096
    $region41: #{tpu_custom_call.1} parent=1 // pred_fallthru
      _
    // Predicated region
    $region42: #{tpu_custom_call.1} parent=1 // pred_check
      _
    $region43: #{tpu_custom_call.1} parent=1 // pred_check_branch
      %69 = sbr.rel (0) target = $region45
    $region44: #{tpu_custom_call.1} parent=1 // pred_region
      %70 = dma.done [#allocation8], 4096
    $region45: #{tpu_custom_call.1} parent=1 // pred_fallthru
      _
    %v72 = vld [vmem:[%s0] sm:$0xff]
    %v73 = vld [vmem:[%s6] sm:$0xf]
    %v75 = vlaneseq
    %v76 = vshrl.u32 %v75, 7
    %v77 = vsub.s32 0, %v76
    %v78 = vrot.slane %v73, %v77
    %v79 = vlaneseq
    %v80 = vshrl.u32 %v79, 7
    %v81 = vsub.s32 1, %v80
    %v82 = vrot.slane %v73, %v81
    %v83 = vlaneseq
    %v84 = vshrl.u32 %v83, 7
    %v85 = vsub.s32 2, %v84
    %v86 = vrot.slane %v73, %v85
    %v87 = vlaneseq
    %v88 = vshrl.u32 %v87, 7
    %v89 = vsub.s32 3, %v88
    %v90 = vrot.slane %v73, %v89
    %v95 = vld [vmem:[%s7] sm:$0xf]
    %v97 = vlaneseq
    %v98 = vshrl.u32 %v97, 7
    %v99 = vsub.s32 0, %v98
    %v100 = vrot.slane %v95, %v99
    %v101 = vlaneseq
    %v102 = vshrl.u32 %v101, 7
    %v103 = vsub.s32 1, %v102
    %v104 = vrot.slane %v95, %v103
    %v105 = vlaneseq
    %v106 = vshrl.u32 %v105, 7
    %v107 = vsub.s32 2, %v106
    %v108 = vrot.slane %v95, %v107
    %v109 = vlaneseq
    %v110 = vshrl.u32 %v109, 7
    %v111 = vsub.s32 3, %v110
    %v112 = vrot.slane %v95, %v111
    %117 = vst [vmem:[#allocation10] sm:$0xff] 0.0
    %118 = vst [vmem:[#allocation10 + $0x8] sm:$0xff] 0.0
    %119 = vst [vmem:[#allocation10 + $0x10] sm:$0xff] 0.0
    %120 = vst [vmem:[#allocation10 + $0x18] sm:$0xff] 0.0
    %121 = vst [vmem:[#allocation10 + $0x20] sm:$0xff] 0.0
    %122 = vst [vmem:[#allocation10 + $0x28] sm:$0xff] 0.0
    %123 = vst [vmem:[#allocation10 + $0x30] sm:$0xff] 0.0
    %124 = vst [vmem:[#allocation10 + $0x38] sm:$0xff] 0.0
    %v125 = vld [vmem:[%s1] sm:$0xf]
    %v126 = vld [vmem:[%s1 + $0x4] sm:$0xf]
    %v127 = vld [vmem:[%s1 + $0x8] sm:$0xf]
    %v128 = vld [vmem:[%s1 + $0xc] sm:$0xf]
    %v129 = vld [vmem:[%s2] sm:$0xff]
    %v130 = vld [vmem:[%s2 + $0x8] sm:$0xff]
    %v131 = vld [vmem:[%s2 + $0x10] sm:$0xff]
    %v132 = vld [vmem:[%s2 + $0x18] sm:$0xff]
    %v137 = vunpack.c.l.b16 %v125
    %v138 = vunpack.c.l.b16 %v126
    %v139 = vunpack.c.l.b16 %v127
    %v140 = vunpack.c.l.b16 %v128
    %v141 = vpack.c.b16 %v138, %v137
    %v142 = vpack.c.b16 %v140, %v139
    %v147 = vunpack.c.l.b16 %v129
    %v148 = vunpack.c.h.b16 %v129
    %v149 = vunpack.c.l.b16 %v130
    %v150 = vunpack.c.h.b16 %v130
    %v151 = vunpack.c.l.b16 %v131
    %v152 = vunpack.c.h.b16 %v131
    %v153 = vunpack.c.l.b16 %v132
    %v154 = vunpack.c.h.b16 %v132
    %v155 = vpack.c.b16 %v151, %v147
    %v156 = vpack.c.b16 %v152, %v148
    %v157 = vpack.c.b16 %v153, %v149
    %v158 = vpack.c.b16 %v154, %v150
    %vm163 = vcmask 130048
    %v165 = vsel %vm163, %v141, 0
    %v168 = vsel %vm163, %v142, 0
    %170 = vmatprep.subr.bf16.mxu0 %v156
    %171 = vmatpush1.bf16.msra.mxu0 %v155
    %172 = vmatprep.subr.bf16.mxu0 0
    %173 = vmatpush1.bf16.msra.mxu0 0
    %174 = vmatprep.subr.bf16.mxu0 0
    %175 = vmatpush1.bf16.msra.mxu0 0
    %176 = vmatprep.subr.bf16.mxu0 0
    %177 = vmatpush1.bf16.msra.mxu0 0
    %178 = vmatprep.subr.bf16.mxu0 0
    %179 = vmatpush1.bf16.msra.mxu0 0
    %180 = vmatprep.subr.bf16.mxu0 0
    %181 = vmatpush1.bf16.msra.mxu0 0
    %182 = vmatprep.subr.bf16.mxu0 0
    %183 = vmatpush1.bf16.msra.mxu0 0
    %184 = vmatprep.subr.bf16.mxu0 0
    %185 = vmatpush1.bf16.msra.mxu0 0
    %186 = vmatprep.subr.bf16.mxu0 0
    %187 = vmatpush1.bf16.msra.mxu0 0
    %188 = vmatprep.subr.bf16.mxu0 0
    %189 = vmatpush1.bf16.msra.mxu0 0
    %190 = vmatprep.subr.bf16.mxu0 0
    %191 = vmatpush1.bf16.msra.mxu0 0
    %192 = vmatprep.subr.bf16.mxu0 0
    %193 = vmatpush1.bf16.msra.mxu0 0
    %194 = vmatprep.subr.bf16.mxu0 0
    %195 = vmatpush1.bf16.msra.mxu0 0
    %196 = vmatprep.subr.bf16.mxu0 0
    %197 = vmatpush1.bf16.msra.mxu0 0
    %198 = vmatprep.subr.bf16.mxu0 0
    %199 = vmatpush1.bf16.msra.mxu0 0
    %200 = vmatprep.subr.bf16.mxu0 0
    %201 = vmatpush1.bf16.msra.mxu0 0
    %202 = vmatprep.mubr.bf16.mxu0 0
    %203 = vmatmul.mubr.bf16.gmra.mrb[0].mxu0 %v165
    %v204 = vpop.f32.mrb[0].mxu0
    %v205 = vadd.f32 0.0, %v204
    %v206 = vpop.f32.mrb[0].mxu0
    %v207 = vadd.f32 0.0, %v206
    %v208 = vpop.f32.mrb[0].mxu0
    %v209 = vadd.f32 0.0, %v208
    %v210 = vpop.f32.mrb[0].mxu0
    %v211 = vadd.f32 0.0, %v210
    %212 = vmatprep.mubr.bf16.mxu0 0
    %213 = vmatmul.mubr.bf16.gmra.mrb[0].mxu0 %v168
    %v214 = vpop.f32.mrb[0].mxu0
    %v215 = vadd.f32 0.0, %v214
    %v216 = vpop.f32.mrb[0].mxu0
    %v217 = vadd.f32 0.0, %v216
    %v218 = vpop.f32.mrb[0].mxu0
    %v219 = vadd.f32 0.0, %v218
    %v220 = vpop.f32.mrb[0].mxu0
    %v221 = vadd.f32 0.0, %v220
    %222 = vdwg.mxu0
    %223 = vmatprep.subr.bf16.mxu0 %v158
    %224 = vmatpush1.bf16.msra.mxu0 %v157
    %225 = vmatprep.subr.bf16.mxu0 0
    %226 = vmatpush1.bf16.msra.mxu0 0
    %227 = vmatprep.subr.bf16.mxu0 0
    %228 = vmatpush1.bf16.msra.mxu0 0
    %229 = vmatprep.subr.bf16.mxu0 0
    %230 = vmatpush1.bf16.msra.mxu0 0
    %231 = vmatprep.subr.bf16.mxu0 0
    %232 = vmatpush1.bf16.msra.mxu0 0
    %233 = vmatprep.subr.bf16.mxu0 0
    %234 = vmatpush1.bf16.msra.mxu0 0
    %235 = vmatprep.subr.bf16.mxu0 0
    %236 = vmatpush1.bf16.msra.mxu0 0
    %237 = vmatprep.subr.bf16.mxu0 0
    %238 = vmatpush1.bf16.msra.mxu0 0
    %239 = vmatprep.subr.bf16.mxu0 0
    %240 = vmatpush1.bf16.msra.mxu0 0
    %241 = vmatprep.subr.bf16.mxu0 0
    %242 = vmatpush1.bf16.msra.mxu0 0
    %243 = vmatprep.subr.bf16.mxu0 0
    %244 = vmatpush1.bf16.msra.mxu0 0
    %245 = vmatprep.subr.bf16.mxu0 0
    %246 = vmatpush1.bf16.msra.mxu0 0
    %247 = vmatprep.subr.bf16.mxu0 0
    %248 = vmatpush1.bf16.msra.mxu0 0
    %249 = vmatprep.subr.bf16.mxu0 0
    %250 = vmatpush1.bf16.msra.mxu0 0
    %251 = vmatprep.subr.bf16.mxu0 0
    %252 = vmatpush1.bf16.msra.mxu0 0
    %253 = vmatprep.subr.bf16.mxu0 0
    %254 = vmatpush1.bf16.msra.mxu0 0
    %255 = vmatprep.mubr.bf16.mxu0 0
    %256 = vmatmul.mubr.bf16.gmra.mrb[0].mxu0 %v165
    %v257 = vpop.f32.mrb[0].mxu0
    %v258 = vadd.f32 0.0, %v257
    %v259 = vpop.f32.mrb[0].mxu0
    %v260 = vadd.f32 0.0, %v259
    %v261 = vpop.f32.mrb[0].mxu0
    %v262 = vadd.f32 0.0, %v261
    %v263 = vpop.f32.mrb[0].mxu0
    %v264 = vadd.f32 0.0, %v263
    %265 = vmatprep.mubr.bf16.mxu0 0
    %266 = vmatmul.mubr.bf16.gmra.mrb[0].mxu0 %v168
    %v267 = vpop.f32.mrb[0].mxu0
    %v268 = vadd.f32 0.0, %v267
    %v269 = vpop.f32.mrb[0].mxu0
    %v270 = vadd.f32 0.0, %v269
    %v271 = vpop.f32.mrb[0].mxu0
    %v272 = vadd.f32 0.0, %v271
    %v273 = vpop.f32.mrb[0].mxu0
    %v274 = vadd.f32 0.0, %v273
    %275 = vdwg.mxu0
    %v276 = vpack.c.bf16 %v209, %v205
    %v277 = vpack.c.bf16 %v211, %v207
    %v278 = vpack.c.bf16 %v262, %v258
    %v279 = vpack.c.bf16 %v264, %v260
    %v280 = vpack.c.bf16 %v219, %v215
    %v281 = vpack.c.bf16 %v221, %v217
    %v282 = vpack.c.bf16 %v272, %v268
    %v283 = vpack.c.bf16 %v274, %v270
    %284 = vst [vmem:[#allocation2] sm:$0xff] %v276
    %285 = vst [vmem:[#allocation2 + $0x8] sm:$0xff] %v277
    %286 = vst [vmem:[#allocation2 + $0x10] sm:$0xff] %v278
    %287 = vst [vmem:[#allocation2 + $0x18] sm:$0xff] %v279
    %288 = vst [vmem:[#allocation2 + $0x20] sm:$0xff] %v280
    %289 = vst [vmem:[#allocation2 + $0x28] sm:$0xff] %v281
    %290 = vst [vmem:[#allocation2 + $0x30] sm:$0xff] %v282
    %291 = vst [vmem:[#allocation2 + $0x38] sm:$0xff] %v283
    %v292 = vld [vmem:[%s1 + $0x10] sm:$0xf]
    %v293 = vld [vmem:[%s1 + $0x14] sm:$0xf]
    %v294 = vld [vmem:[%s1 + $0x18] sm:$0xf]
    %v295 = vld [vmem:[%s1 + $0x1c] sm:$0xf]
    %v296 = vld [vmem:[#allocation4] sm:$0xff]
    %v297 = vld [vmem:[#allocation4 + $0x8] sm:$0xff]
    %v298 = vld [vmem:[#allocation4 + $0x10] sm:$0xff]
    %v299 = vld [vmem:[#allocation4 + $0x18] sm:$0xff]
    %v304 = vunpack.c.l.b16 %v292
    %v305 = vunpack.c.l.b16 %v293
    %v306 = vunpack.c.l.b16 %v294
    %v307 = vunpack.c.l.b16 %v295
    %v308 = vpack.c.b16 %v305, %v304
    %v309 = vpack.c.b16 %v307, %v306
    %v314 = vunpack.c.l.b16 %v296
    %v315 = vunpack.c.h.b16 %v296
    %v316 = vunpack.c.l.b16 %v297
    %v317 = vunpack.c.h.b16 %v297
    %v318 = vunpack.c.l.b16 %v298
    %v319 = vunpack.c.h.b16 %v298
    %v320 = vunpack.c.l.b16 %v299
    %v321 = vunpack.c.h.b16 %v299
    %v322 = vpack.c.b16 %v318, %v314
    %v323 = vpack.c.b16 %v319, %v315
    %v324 = vpack.c.b16 %v320, %v316
    %v325 = vpack.c.b16 %v321, %v317
    %v331 = vsel %vm163, %v308, 0
    %v334 = vsel %vm163, %v309, 0
    %336 = vmatprep.subr.bf16.mxu0 %v323
    %337 = vmatpush1.bf16.msra.mxu0 %v322
    %338 = vmatprep.subr.bf16.mxu0 0
    %339 = vmatpush1.bf16.msra.mxu0 0
    %340 = vmatprep.subr.bf16.mxu0 0
    %341 = vmatpush1.bf16.msra.mxu0 0
    %342 = vmatprep.subr.bf16.mxu0 0
    %343 = vmatpush1.bf16.msra.mxu0 0
    %344 = vmatprep.subr.bf16.mxu0 0
    %345 = vmatpush1.bf16.msra.mxu0 0
    %346 = vmatprep.subr.bf16.mxu0 0
    %347 = vmatpush1.bf16.msra.mxu0 0
    %348 = vmatprep.subr.bf16.mxu0 0
    %349 = vmatpush1.bf16.msra.mxu0 0
    %350 = vmatprep.subr.bf16.mxu0 0
    %351 = vmatpush1.bf16.msra.mxu0 0
    %352 = vmatprep.subr.bf16.mxu0 0
    %353 = vmatpush1.bf16.msra.mxu0 0
    %354 = vmatprep.subr.bf16.mxu0 0
    %355 = vmatpush1.bf16.msra.mxu0 0
    %356 = vmatprep.subr.bf16.mxu0 0
    %357 = vmatpush1.bf16.msra.mxu0 0
    %358 = vmatprep.subr.bf16.mxu0 0
    %359 = vmatpush1.bf16.msra.mxu0 0
    %360 = vmatprep.subr.bf16.mxu0 0
    %361 = vmatpush1.bf16.msra.mxu0 0
    %362 = vmatprep.subr.bf16.mxu0 0
    %363 = vmatpush1.bf16.msra.mxu0 0
    %364 = vmatprep.subr.bf16.mxu0 0
    %365 = vmatpush1.bf16.msra.mxu0 0
    %366 = vmatprep.subr.bf16.mxu0 0
    %367 = vmatpush1.bf16.msra.mxu0 0
    %368 = vmatprep.mubr.bf16.mxu0 0
    %369 = vmatmul.mubr.bf16.gmra.mrb[0].mxu0 %v331
    %v370 = vpop.f32.mrb[0].mxu0
    %v371 = vadd.f32 0.0, %v370
    %v372 = vpop.f32.mrb[0].mxu0
    %v373 = vadd.f32 0.0, %v372
    %v374 = vpop.f32.mrb[0].mxu0
    %v375 = vadd.f32 0.0, %v374
    %v376 = vpop.f32.mrb[0].mxu0
    %v377 = vadd.f32 0.0, %v376
    %378 = vmatprep.mubr.bf16.mxu0 0
    %379 = vmatmul.mubr.bf16.gmra.mrb[0].mxu0 %v334
    %v380 = vpop.f32.mrb[0].mxu0
    %v381 = vadd.f32 0.0, %v380
    %v382 = vpop.f32.mrb[0].mxu0
    %v383 = vadd.f32 0.0, %v382
    %v384 = vpop.f32.mrb[0].mxu0
    %v385 = vadd.f32 0.0, %v384
    %v386 = vpop.f32.mrb[0].mxu0
    %v387 = vadd.f32 0.0, %v386
    %388 = vdwg.mxu0
    %389 = vmatprep.subr.bf16.mxu0 %v325
    %390 = vmatpush1.bf16.msra.mxu0 %v324
    %391 = vmatprep.subr.bf16.mxu0 0
    %392 = vmatpush1.bf16.msra.mxu0 0
    %393 = vmatprep.subr.bf16.mxu0 0
    %394 = vmatpush1.bf16.msra.mxu0 0
    %395 = vmatprep.subr.bf16.mxu0 0
    %396 = vmatpush1.bf16.msra.mxu0 0
    %397 = vmatprep.subr.bf16.mxu0 0
    %398 = vmatpush1.bf16.msra.mxu0 0
    %399 = vmatprep.subr.bf16.mxu0 0
    %400 = vmatpush1.bf16.msra.mxu0 0
    %401 = vmatprep.subr.bf16.mxu0 0
    %402 = vmatpush1.bf16.msra.mxu0 0
    %403 = vmatprep.subr.bf16.mxu0 0
    %404 = vmatpush1.bf16.msra.mxu0 0
    %405 = vmatprep.subr.bf16.mxu0 0
    %406 = vmatpush1.bf16.msra.mxu0 0
    %407 = vmatprep.subr.bf16.mxu0 0
    %408 = vmatpush1.bf16.msra.mxu0 0
    %409 = vmatprep.subr.bf16.mxu0 0
    %410 = vmatpush1.bf16.msra.mxu0 0
    %411 = vmatprep.subr.bf16.mxu0 0
    %412 = vmatpush1.bf16.msra.mxu0 0
    %413 = vmatprep.subr.bf16.mxu0 0
    %414 = vmatpush1.bf16.msra.mxu0 0
    %415 = vmatprep.subr.bf16.mxu0 0
    %416 = vmatpush1.bf16.msra.mxu0 0
    %417 = vmatprep.subr.bf16.mxu0 0
    %418 = vmatpush1.bf16.msra.mxu0 0
    %419 = vmatprep.subr.bf16.mxu0 0
    %420 = vmatpush1.bf16.msra.mxu0 0
    %421 = vmatprep.mubr.bf16.mxu0 0
    %422 = vmatmul.mubr.bf16.gmra.mrb[0].mxu0 %v331
    %v423 = vpop.f32.mrb[0].mxu0
    %v424 = vadd.f32 0.0, %v423
    %v425 = vpop.f32.mrb[0].mxu0
    %v426 = vadd.f32 0.0, %v425
    %v427 = vpop.f32.mrb[0].mxu0
    %v428 = vadd.f32 0.0, %v427
    %v429 = vpop.f32.mrb[0].mxu0
    %v430 = vadd.f32 0.0, %v429
    %431 = vmatprep.mubr.bf16.mxu0 0
    %432 = vmatmul.mubr.bf16.gmra.mrb[0].mxu0 %v334
    %v433 = vpop.f32.mrb[0].mxu0
    %v434 = vadd.f32 0.0, %v433
    %v435 = vpop.f32.mrb[0].mxu0
    %v436 = vadd.f32 0.0, %v435
    %v437 = vpop.f32.mrb[0].mxu0
    %v438 = vadd.f32 0.0, %v437
    %v439 = vpop.f32.mrb[0].mxu0
    %v440 = vadd.f32 0.0, %v439
    %441 = vdwg.mxu0
    %v442 = vpack.c.bf16 %v375, %v371
    %v443 = vpack.c.bf16 %v377, %v373
    %v444 = vpack.c.bf16 %v428, %v424
    %v445 = vpack.c.bf16 %v430, %v426
    %v446 = vpack.c.bf16 %v385, %v381
    %v447 = vpack.c.bf16 %v387, %v383
    %v448 = vpack.c.bf16 %v438, %v434
    %v449 = vpack.c.bf16 %v440, %v436
    %450 = vst [vmem:[#allocation3 + $0x40] sm:$0xff] %v442
    %451 = vst [vmem:[#allocation3 + $0x48] sm:$0xff] %v443
    %452 = vst [vmem:[#allocation3 + $0x50] sm:$0xff] %v444
    %453 = vst [vmem:[#allocation3 + $0x58] sm:$0xff] %v445
    %454 = vst [vmem:[#allocation3 + $0x60] sm:$0xff] %v446
    %455 = vst [vmem:[#allocation3 + $0x68] sm:$0xff] %v447
    %456 = vst [vmem:[#allocation3 + $0x70] sm:$0xff] %v448
    %457 = vst [vmem:[#allocation3 + $0x78] sm:$0xff] %v449
    %v458 = vld [vmem:[%s1 + $0x10] sm:$0xf]
    %v459 = vld [vmem:[%s1 + $0x14] sm:$0xf]
    %v460 = vld [vmem:[%s1 + $0x18] sm:$0xf]
    %v461 = vld [vmem:[%s1 + $0x1c] sm:$0xf]
    %v462 = vld [vmem:[%s2] sm:$0xff]
    %v463 = vld [vmem:[%s2 + $0x8] sm:$0xff]
    %v464 = vld [vmem:[%s2 + $0x10] sm:$0xff]
    %v465 = vld [vmem:[%s2 + $0x18] sm:$0xff]
    %v470 = vunpack.c.l.b16 %v458
    %v471 = vunpack.c.l.b16 %v459
    %v472 = vunpack.c.l.b16 %v460
    %v473 = vunpack.c.l.b16 %v461
    %v474 = vpack.c.b16 %v471, %v470
    %v475 = vpack.c.b16 %v473, %v472
    %v480 = vunpack.c.l.b16 %v462
    %v481 = vunpack.c.h.b16 %v462
    %v482 = vunpack.c.l.b16 %v463
    %v483 = vunpack.c.h.b16 %v463
    %v484 = vunpack.c.l.b16 %v464
    %v485 = vunpack.c.h.b16 %v464
    %v486 = vunpack.c.l.b16 %v465
    %v487 = vunpack.c.h.b16 %v465
    %v488 = vpack.c.b16 %v484, %v480
    %v489 = vpack.c.b16 %v485, %v481
    %v490 = vpack.c.b16 %v486, %v482
    %v491 = vpack.c.b16 %v487, %v483
    %v497 = vsel %vm163, %v474, 0
    %v500 = vsel %vm163, %v475, 0
    %502 = vmatprep.subr.bf16.mxu0 %v489
    %503 = vmatpush1.bf16.msra.mxu0 %v488
    %504 = vmatprep.subr.bf16.mxu0 0
    %505 = vmatpush1.bf16.msra.mxu0 0
    %506 = vmatprep.subr.bf16.mxu0 0
    %507 = vmatpush1.bf16.msra.mxu0 0
    %508 = vmatprep.subr.bf16.mxu0 0
    %509 = vmatpush1.bf16.msra.mxu0 0
    %510 = vmatprep.subr.bf16.mxu0 0
    %511 = vmatpush1.bf16.msra.mxu0 0
    %512 = vmatprep.subr.bf16.mxu0 0
    %513 = vmatpush1.bf16.msra.mxu0 0
    %514 = vmatprep.subr.bf16.mxu0 0
    %515 = vmatpush1.bf16.msra.mxu0 0
    %516 = vmatprep.subr.bf16.mxu0 0
    %517 = vmatpush1.bf16.msra.mxu0 0
    %518 = vmatprep.subr.bf16.mxu0 0
    %519 = vmatpush1.bf16.msra.mxu0 0
    %520 = vmatprep.subr.bf16.mxu0 0
    %521 = vmatpush1.bf16.msra.mxu0 0
    %522 = vmatprep.subr.bf16.mxu0 0
    %523 = vmatpush1.bf16.msra.mxu0 0
    %524 = vmatprep.subr.bf16.mxu0 0
    %525 = vmatpush1.bf16.msra.mxu0 0
    %526 = vmatprep.subr.bf16.mxu0 0
    %527 = vmatpush1.bf16.msra.mxu0 0
    %528 = vmatprep.subr.bf16.mxu0 0
    %529 = vmatpush1.bf16.msra.mxu0 0
    %530 = vmatprep.subr.bf16.mxu0 0
    %531 = vmatpush1.bf16.msra.mxu0 0
    %532 = vmatprep.subr.bf16.mxu0 0
    %533 = vmatpush1.bf16.msra.mxu0 0
    %534 = vmatprep.mubr.bf16.mxu0 0
    %535 = vmatmul.mubr.bf16.gmra.mrb[0].mxu0 %v497
    %v536 = vpop.f32.mrb[0].mxu0
    %v537 = vadd.f32 0.0, %v536
    %v538 = vpop.f32.mrb[0].mxu0
    %v539 = vadd.f32 0.0, %v538
    %v540 = vpop.f32.mrb[0].mxu0
    %v541 = vadd.f32 0.0, %v540
    %v542 = vpop.f32.mrb[0].mxu0
    %v543 = vadd.f32 0.0, %v542
    %544 = vmatprep.mubr.bf16.mxu0 0
    %545 = vmatmul.mubr.bf16.gmra.mrb[0].mxu0 %v500
    %v546 = vpop.f32.mrb[0].mxu0
    %v547 = vadd.f32 0.0, %v546
    %v548 = vpop.f32.mrb[0].mxu0
    %v549 = vadd.f32 0.0, %v548
    %v550 = vpop.f32.mrb[0].mxu0
    %v551 = vadd.f32 0.0, %v550
    %v552 = vpop.f32.mrb[0].mxu0
    %v553 = vadd.f32 0.0, %v552
    %554 = vdwg.mxu0
    %555 = vmatprep.subr.bf16.mxu0 %v491
    %556 = vmatpush1.bf16.msra.mxu0 %v490
    %557 = vmatprep.subr.bf16.mxu0 0
    %558 = vmatpush1.bf16.msra.mxu0 0
    %559 = vmatprep.subr.bf16.mxu0 0
    %560 = vmatpush1.bf16.msra.mxu0 0
    %561 = vmatprep.subr.bf16.mxu0 0
    %562 = vmatpush1.bf16.msra.mxu0 0
    %563 = vmatprep.subr.bf16.mxu0 0
    %564 = vmatpush1.bf16.msra.mxu0 0
    %565 = vmatprep.subr.bf16.mxu0 0
    %566 = vmatpush1.bf16.msra.mxu0 0
    %567 = vmatprep.subr.bf16.mxu0 0
    %568 = vmatpush1.bf16.msra.mxu0 0
    %569 = vmatprep.subr.bf16.mxu0 0
    %570 = vmatpush1.bf16.msra.mxu0 0
    %571 = vmatprep.subr.bf16.mxu0 0
    %572 = vmatpush1.bf16.msra.mxu0 0
    %573 = vmatprep.subr.bf16.mxu0 0
    %574 = vmatpush1.bf16.msra.mxu0 0
    %575 = vmatprep.subr.bf16.mxu0 0
    %576 = vmatpush1.bf16.msra.mxu0 0
    %577 = vmatprep.subr.bf16.mxu0 0
    %578 = vmatpush1.bf16.msra.mxu0 0
    %579 = vmatprep.subr.bf16.mxu0 0
    %580 = vmatpush1.bf16.msra.mxu0 0
    %581 = vmatprep.subr.bf16.mxu0 0
    %582 = vmatpush1.bf16.msra.mxu0 0
    %583 = vmatprep.subr.bf16.mxu0 0
    %584 = vmatpush1.bf16.msra.mxu0 0
    %585 = vmatprep.subr.bf16.mxu0 0
    %586 = vmatpush1.bf16.msra.mxu0 0
    %587 = vmatprep.mubr.bf16.mxu0 0
    %588 = vmatmul.mubr.bf16.gmra.mrb[0].mxu0 %v497
    %v589 = vpop.f32.mrb[0].mxu0
    %v590 = vadd.f32 0.0, %v589
    %v591 = vpop.f32.mrb[0].mxu0
    %v592 = vadd.f32 0.0, %v591
    %v593 = vpop.f32.mrb[0].mxu0
    %v594 = vadd.f32 0.0, %v593
    %v595 = vpop.f32.mrb[0].mxu0
    %v596 = vadd.f32 0.0, %v595
    %597 = vmatprep.mubr.bf16.mxu0 0
    %598 = vmatmul.mubr.bf16.gmra.mrb[0].mxu0 %v500
    %v599 = vpop.f32.mrb[0].mxu0
    %v600 = vadd.f32 0.0, %v599
    %v601 = vpop.f32.mrb[0].mxu0
    %v602 = vadd.f32 0.0, %v601
    %v603 = vpop.f32.mrb[0].mxu0
    %v604 = vadd.f32 0.0, %v603
    %v605 = vpop.f32.mrb[0].mxu0
    %v606 = vadd.f32 0.0, %v605
    %607 = vdwg.mxu0
    %v608 = vpack.c.bf16 %v541, %v537
    %v609 = vpack.c.bf16 %v543, %v539
    %v610 = vpack.c.bf16 %v594, %v590
    %v611 = vpack.c.bf16 %v596, %v592
    %v612 = vpack.c.bf16 %v551, %v547
    %v613 = vpack.c.bf16 %v553, %v549
    %v614 = vpack.c.bf16 %v604, %v600
    %v615 = vpack.c.bf16 %v606, %v602
    %616 = vst [vmem:[#allocation2 + $0x40] sm:$0xff] %v608
    %617 = vst [vmem:[#allocation2 + $0x48] sm:$0xff] %v609
    %618 = vst [vmem:[#allocation2 + $0x50] sm:$0xff] %v610
    %619 = vst [vmem:[#allocation2 + $0x58] sm:$0xff] %v611
    %620 = vst [vmem:[#allocation2 + $0x60] sm:$0xff] %v612
    %621 = vst [vmem:[#allocation2 + $0x68] sm:$0xff] %v613
    %622 = vst [vmem:[#allocation2 + $0x70] sm:$0xff] %v614
    %623 = vst [vmem:[#allocation2 + $0x78] sm:$0xff] %v615
    %v624 = vld [vmem:[%s1] sm:$0xf]
    %v625 = vld [vmem:[%s1 + $0x4] sm:$0xf]
    %v626 = vld [vmem:[%s1 + $0x8] sm:$0xf]
    %v627 = vld [vmem:[%s1 + $0xc] sm:$0xf]
    %v628 = vld [vmem:[#allocation4] sm:$0xff]
    %v629 = vld [vmem:[#allocation4 + $0x8] sm:$0xff]
    %v630 = vld [vmem:[#allocation4 + $0x10] sm:$0xff]
    %v631 = vld [vmem:[#allocation4 + $0x18] sm:$0xff]
    %v636 = vunpack.c.l.b16 %v624
    %v637 = vunpack.c.l.b16 %v625
    %v638 = vunpack.c.l.b16 %v626
    %v639 = vunpack.c.l.b16 %v627
    %v640 = vpack.c.b16 %v637, %v636
    %v641 = vpack.c.b16 %v639, %v638
    %v646 = vunpack.c.l.b16 %v628
    %v647 = vunpack.c.h.b16 %v628
    %v648 = vunpack.c.l.b16 %v629
    %v649 = vunpack.c.h.b16 %v629
    %v650 = vunpack.c.l.b16 %v630
    %v651 = vunpack.c.h.b16 %v630
    %v652 = vunpack.c.l.b16 %v631
    %v653 = vunpack.c.h.b16 %v631
    %v654 = vpack.c.b16 %v650, %v646
    %v655 = vpack.c.b16 %v651, %v647
    %v656 = vpack.c.b16 %v652, %v648
    %v657 = vpack.c.b16 %v653, %v649
    %v663 = vsel %vm163, %v640, 0
    %v666 = vsel %vm163, %v641, 0
    %668 = vmatprep.subr.bf16.mxu0 %v655
    %669 = vmatpush1.bf16.msra.mxu0 %v654
    %670 = vmatprep.subr.bf16.mxu0 0
    %671 = vmatpush1.bf16.msra.mxu0 0
    %672 = vmatprep.subr.bf16.mxu0 0
    %673 = vmatpush1.bf16.msra.mxu0 0
    %674 = vmatprep.subr.bf16.mxu0 0
    %675 = vmatpush1.bf16.msra.mxu0 0
    %676 = vmatprep.subr.bf16.mxu0 0
    %677 = vmatpush1.bf16.msra.mxu0 0
    %678 = vmatprep.subr.bf16.mxu0 0
    %679 = vmatpush1.bf16.msra.mxu0 0
    %680 = vmatprep.subr.bf16.mxu0 0
    %681 = vmatpush1.bf16.msra.mxu0 0
    %682 = vmatprep.subr.bf16.mxu0 0
    %683 = vmatpush1.bf16.msra.mxu0 0
    %684 = vmatprep.subr.bf16.mxu0 0
    %685 = vmatpush1.bf16.msra.mxu0 0
    %686 = vmatprep.subr.bf16.mxu0 0
    %687 = vmatpush1.bf16.msra.mxu0 0
    %688 = vmatprep.subr.bf16.mxu0 0
    %689 = vmatpush1.bf16.msra.mxu0 0
    %690 = vmatprep.subr.bf16.mxu0 0
    %691 = vmatpush1.bf16.msra.mxu0 0
    %692 = vmatprep.subr.bf16.mxu0 0
    %693 = vmatpush1.bf16.msra.mxu0 0
    %694 = vmatprep.subr.bf16.mxu0 0
    %695 = vmatpush1.bf16.msra.mxu0 0
    %696 = vmatprep.subr.bf16.mxu0 0
    %697 = vmatpush1.bf16.msra.mxu0 0
    %698 = vmatprep.subr.bf16.mxu0 0
    %699 = vmatpush1.bf16.msra.mxu0 0
    %700 = vmatprep.mubr.bf16.mxu0 0
    %701 = vmatmul.mubr.bf16.gmra.mrb[0].mxu0 %v663
    %v702 = vpop.f32.mrb[0].mxu0
    %v703 = vadd.f32 0.0, %v702
    %v704 = vpop.f32.mrb[0].mxu0
    %v705 = vadd.f32 0.0, %v704
    %v706 = vpop.f32.mrb[0].mxu0
    %v707 = vadd.f32 0.0, %v706
    %v708 = vpop.f32.mrb[0].mxu0
    %v709 = vadd.f32 0.0, %v708
    %710 = vmatprep.mubr.bf16.mxu0 0
    %711 = vmatmul.mubr.bf16.gmra.mrb[0].mxu0 %v666
    %v712 = vpop.f32.mrb[0].mxu0
    %v713 = vadd.f32 0.0, %v712
    %v714 = vpop.f32.mrb[0].mxu0
    %v715 = vadd.f32 0.0, %v714
    %v716 = vpop.f32.mrb[0].mxu0
    %v717 = vadd.f32 0.0, %v716
    %v718 = vpop.f32.mrb[0].mxu0
    %v719 = vadd.f32 0.0, %v718
    %720 = vdwg.mxu0
    %721 = vmatprep.subr.bf16.mxu0 %v657
    %722 = vmatpush1.bf16.msra.mxu0 %v656
    %723 = vmatprep.subr.bf16.mxu0 0
    %724 = vmatpush1.bf16.msra.mxu0 0
    %725 = vmatprep.subr.bf16.mxu0 0
    %726 = vmatpush1.bf16.msra.mxu0 0
    %727 = vmatprep.subr.bf16.mxu0 0
    %728 = vmatpush1.bf16.msra.mxu0 0
    %729 = vmatprep.subr.bf16.mxu0 0
    %730 = vmatpush1.bf16.msra.mxu0 0
    %731 = vmatprep.subr.bf16.mxu0 0
    %732 = vmatpush1.bf16.msra.mxu0 0
    %733 = vmatprep.subr.bf16.mxu0 0
    %734 = vmatpush1.bf16.msra.mxu0 0
    %735 = vmatprep.subr.bf16.mxu0 0
    %736 = vmatpush1.bf16.msra.mxu0 0
    %737 = vmatprep.subr.bf16.mxu0 0
    %738 = vmatpush1.bf16.msra.mxu0 0
    %739 = vmatprep.subr.bf16.mxu0 0
    %740 = vmatpush1.bf16.msra.mxu0 0
    %741 = vmatprep.subr.bf16.mxu0 0
    %742 = vmatpush1.bf16.msra.mxu0 0
    %743 = vmatprep.subr.bf16.mxu0 0
    %744 = vmatpush1.bf16.msra.mxu0 0
    %745 = vmatprep.subr.bf16.mxu0 0
    %746 = vmatpush1.bf16.msra.mxu0 0
    %747 = vmatprep.subr.bf16.mxu0 0
    %748 = vmatpush1.bf16.msra.mxu0 0
    %749 = vmatprep.subr.bf16.mxu0 0
    %750 = vmatpush1.bf16.msra.mxu0 0
    %751 = vmatprep.subr.bf16.mxu0 0
    %752 = vmatpush1.bf16.msra.mxu0 0
    %753 = vmatprep.mubr.bf16.mxu0 0
    %754 = vmatmul.mubr.bf16.gmra.mrb[0].mxu0 %v663
    %v755 = vpop.f32.mrb[0].mxu0
    %v756 = vadd.f32 0.0, %v755
    %v757 = vpop.f32.mrb[0].mxu0
    %v758 = vadd.f32 0.0, %v757
    %v759 = vpop.f32.mrb[0].mxu0
    %v760 = vadd.f32 0.0, %v759
    %v761 = vpop.f32.mrb[0].mxu0
    %v762 = vadd.f32 0.0, %v761
    %763 = vmatprep.mubr.bf16.mxu0 0
    %764 = vmatmul.mubr.bf16.gmra.mrb[0].mxu0 %v666
    %v765 = vpop.f32.mrb[0].mxu0
    %v766 = vadd.f32 0.0, %v765
    %v767 = vpop.f32.mrb[0].mxu0
    %v768 = vadd.f32 0.0, %v767
    %v769 = vpop.f32.mrb[0].mxu0
    %v770 = vadd.f32 0.0, %v769
    %v771 = vpop.f32.mrb[0].mxu0
    %v772 = vadd.f32 0.0, %v771
    %773 = vdwg.mxu0
    %v774 = vpack.c.bf16 %v707, %v703
    %v775 = vpack.c.bf16 %v709, %v705
    %v776 = vpack.c.bf16 %v760, %v756
    %v777 = vpack.c.bf16 %v762, %v758
    %v778 = vpack.c.bf16 %v717, %v713
    %v779 = vpack.c.bf16 %v719, %v715
    %v780 = vpack.c.bf16 %v770, %v766
    %v781 = vpack.c.bf16 %v772, %v768
    %782 = vst [vmem:[#allocation3] sm:$0xff] %v774
    %783 = vst [vmem:[#allocation3 + $0x8] sm:$0xff] %v775
    %784 = vst [vmem:[#allocation3 + $0x10] sm:$0xff] %v776
    %785 = vst [vmem:[#allocation3 + $0x18] sm:$0xff] %v777
    %786 = vst [vmem:[#allocation3 + $0x20] sm:$0xff] %v778
    %787 = vst [vmem:[#allocation3 + $0x28] sm:$0xff] %v779
    %788 = vst [vmem:[#allocation3 + $0x30] sm:$0xff] %v780
    %789 = vst [vmem:[#allocation3 + $0x38] sm:$0xff] %v781
    %v790 = vld [vmem:[#allocation2] sm:$0xf]
    %v791 = vld [vmem:[#allocation2 + $0x8] sm:$0xf]
    %v792 = vld [vmem:[#allocation2 + $0x10] sm:$0xf]
    %v793 = vld [vmem:[#allocation2 + $0x18] sm:$0xf]
    %v794 = vunpack.c.l.bf16 %v790
    %v795 = vunpack.c.l.bf16 %v791
    %v796 = vunpack.c.l.bf16 %v792
    %v797 = vunpack.c.l.bf16 %v793
    %v798 = vadd.f32 %v794, %v78
    %v799 = vadd.f32 %v795, %v82
    %v800 = vadd.f32 %v796, %v86
    %v801 = vadd.f32 %v797, %v90
    %v802 = vld [vmem:[#allocation7] sm:$0xff]
    %v803 = vld [vmem:[#allocation7 + $0x8] sm:$0xff]
    %v804 = vld [vmem:[#allocation7 + $0x10] sm:$0xff]
    %v805 = vld [vmem:[#allocation7 + $0x18] sm:$0xff]
    %v806 = vld [vmem:[#allocation7 + $0x20] sm:$0xff]
    %v807 = vld [vmem:[#allocation7 + $0x28] sm:$0xff]
    %v808 = vld [vmem:[#allocation7 + $0x30] sm:$0xff]
    %v809 = vld [vmem:[#allocation7 + $0x38] sm:$0xff]
    %v810 = vld [vmem:[#allocation7 + $0x40] sm:$0xff]
    %v811 = vld [vmem:[#allocation7 + $0x48] sm:$0xff]
    %v812 = vld [vmem:[#allocation7 + $0x50] sm:$0xff]
    %v813 = vld [vmem:[#allocation7 + $0x58] sm:$0xff]
    %v814 = vld [vmem:[#allocation7 + $0x60] sm:$0xff]
    %v815 = vld [vmem:[#allocation7 + $0x68] sm:$0xff]
    %v816 = vld [vmem:[#allocation7 + $0x70] sm:$0xff]
    %v817 = vld [vmem:[#allocation7 + $0x78] sm:$0xff]
    %v818 = vld [vmem:[#allocation7 + $0x80] sm:$0xff]
    %v819 = vld [vmem:[#allocation7 + $0x88] sm:$0xff]
    %v820 = vld [vmem:[#allocation7 + $0x90] sm:$0xff]
    %v821 = vld [vmem:[#allocation7 + $0x98] sm:$0xff]
    %v822 = vld [vmem:[#allocation7 + $0xa0] sm:$0xff]
    %v823 = vld [vmem:[#allocation7 + $0xa8] sm:$0xff]
    %v824 = vld [vmem:[#allocation7 + $0xb0] sm:$0xff]
    %v825 = vld [vmem:[#allocation7 + $0xb8] sm:$0xff]
    %v826 = vld [vmem:[#allocation7 + $0xc0] sm:$0xff]
    %v827 = vld [vmem:[#allocation7 + $0xc8] sm:$0xff]
    %v828 = vld [vmem:[#allocation7 + $0xd0] sm:$0xff]
    %v829 = vld [vmem:[#allocation7 + $0xd8] sm:$0xff]
    %v830 = vld [vmem:[#allocation7 + $0xe0] sm:$0xff]
    %v831 = vld [vmem:[#allocation7 + $0xe8] sm:$0xff]
    %v832 = vld [vmem:[#allocation7 + $0xf0] sm:$0xff]
    %v833 = vld [vmem:[#allocation7 + $0xf8] sm:$0xff]
    %v866 = vunpack.c.l.b16 %v802
    %v867 = vunpack.c.h.b16 %v802
    %v868 = vunpack.c.l.b16 %v803
    %v869 = vunpack.c.h.b16 %v803
    %v870 = vunpack.c.l.b16 %v804
    %v871 = vunpack.c.h.b16 %v804
    %v872 = vunpack.c.l.b16 %v805
    %v873 = vunpack.c.h.b16 %v805
    %v874 = vunpack.c.l.b16 %v806
    %v875 = vunpack.c.h.b16 %v806
    %v876 = vunpack.c.l.b16 %v807
    %v877 = vunpack.c.h.b16 %v807
    %v878 = vunpack.c.l.b16 %v808
    %v879 = vunpack.c.h.b16 %v808
    %v880 = vunpack.c.l.b16 %v809
    %v881 = vunpack.c.h.b16 %v809
    %v882 = vunpack.c.l.b16 %v810
    %v883 = vunpack.c.h.b16 %v810
    %v884 = vunpack.c.l.b16 %v811
    %v885 = vunpack.c.h.b16 %v811
    %v886 = vunpack.c.l.b16 %v812
    %v887 = vunpack.c.h.b16 %v812
    %v888 = vunpack.c.l.b16 %v813
    %v889 = vunpack.c.h.b16 %v813
    %v890 = vunpack.c.l.b16 %v814
    %v891 = vunpack.c.h.b16 %v814
    %v892 = vunpack.c.l.b16 %v815
    %v893 = vunpack.c.h.b16 %v815
    %v894 = vunpack.c.l.b16 %v816
    %v895 = vunpack.c.h.b16 %v816
    %v896 = vunpack.c.l.b16 %v817
    %v897 = vunpack.c.h.b16 %v817
    %v898 = vunpack.c.l.b16 %v818
    %v899 = vunpack.c.h.b16 %v818
    %v900 = vunpack.c.l.b16 %v819
    %v901 = vunpack.c.h.b16 %v819
    %v902 = vunpack.c.l.b16 %v820
    %v903 = vunpack.c.h.b16 %v820
    %v904 = vunpack.c.l.b16 %v821
    %v905 = vunpack.c.h.b16 %v821
    %v906 = vunpack.c.l.b16 %v822
    %v907 = vunpack.c.h.b16 %v822
    %v908 = vunpack.c.l.b16 %v823
    %v909 = vunpack.c.h.b16 %v823
    %v910 = vunpack.c.l.b16 %v824
    %v911 = vunpack.c.h.b16 %v824
    %v912 = vunpack.c.l.b16 %v825
    %v913 = vunpack.c.h.b16 %v825
    %v914 = vunpack.c.l.b16 %v826
    %v915 = vunpack.c.h.b16 %v826
    %v916 = vunpack.c.l.b16 %v827
    %v917 = vunpack.c.h.b16 %v827
    %v918 = vunpack.c.l.b16 %v828
    %v919 = vunpack.c.h.b16 %v828
    %v920 = vunpack.c.l.b16 %v829
    %v921 = vunpack.c.h.b16 %v829
    %v922 = vunpack.c.l.b16 %v830
    %v923 = vunpack.c.h.b16 %v830
    %v924 = vunpack.c.l.b16 %v831
    %v925 = vunpack.c.h.b16 %v831
    %v926 = vunpack.c.l.b16 %v832
    %v927 = vunpack.c.h.b16 %v832
    %v928 = vunpack.c.l.b16 %v833
    %v929 = vunpack.c.h.b16 %v833
    %v930 = vpack.c.b16 %v870, %v866
    %v931 = vpack.c.b16 %v871, %v867
    %v932 = vpack.c.b16 %v872, %v868
    %v933 = vpack.c.b16 %v873, %v869
    %v934 = vpack.c.b16 %v878, %v874
    %v935 = vpack.c.b16 %v879, %v875
    %v936 = vpack.c.b16 %v880, %v876
    %v937 = vpack.c.b16 %v881, %v877
    %v938 = vpack.c.b16 %v886, %v882
    %v939 = vpack.c.b16 %v887, %v883
    %v940 = vpack.c.b16 %v888, %v884
    %v941 = vpack.c.b16 %v889, %v885
    %v942 = vpack.c.b16 %v894, %v890
    %v943 = vpack.c.b16 %v895, %v891
    %v944 = vpack.c.b16 %v896, %v892
    %v945 = vpack.c.b16 %v897, %v893
    %v946 = vpack.c.b16 %v902, %v898
    %v947 = vpack.c.b16 %v903, %v899
    %v948 = vpack.c.b16 %v904, %v900
    %v949 = vpack.c.b16 %v905, %v901
    %v950 = vpack.c.b16 %v910, %v906
    %v951 = vpack.c.b16 %v911, %v907
    %v952 = vpack.c.b16 %v912, %v908
    %v953 = vpack.c.b16 %v913, %v909
    %v954 = vpack.c.b16 %v918, %v914
    %v955 = vpack.c.b16 %v919, %v915
    %v956 = vpack.c.b16 %v920, %v916
    %v957 = vpack.c.b16 %v921, %v917
    %v958 = vpack.c.b16 %v926, %v922
    %v959 = vpack.c.b16 %v927, %v923
    %v960 = vpack.c.b16 %v928, %v924
    %v961 = vpack.c.b16 %v929, %v925
    %994 = vmatprep.subr.bf16.mxu0 %v931
    %995 = vmatpush1.bf16.msra.mxu0 %v930
    %996 = vmatprep.subr.bf16.mxu0 %v935
    %997 = vmatpush1.bf16.msra.mxu0 %v934
    %998 = vmatprep.subr.bf16.mxu0 %v939
    %999 = vmatpush1.bf16.msra.mxu0 %v938
    %1000 = vmatprep.subr.bf16.mxu0 %v943
    %1001 = vmatpush1.bf16.msra.mxu0 %v942
    %1002 = vmatprep.subr.bf16.mxu0 %v947
    %1003 = vmatpush1.bf16.msra.mxu0 %v946
    %1004 = vmatprep.subr.bf16.mxu0 %v951
    %1005 = vmatpush1.bf16.msra.mxu0 %v950
    %1006 = vmatprep.subr.bf16.mxu0 %v955
    %1007 = vmatpush1.bf16.msra.mxu0 %v954
    %1008 = vmatprep.subr.bf16.mxu0 %v959
    %1009 = vmatpush1.bf16.msra.mxu0 %v958
    %1010 = vmatprep.subr.bf16.mxu0 0
    %1011 = vmatpush1.bf16.msra.mxu0 0
    %1012 = vmatprep.subr.bf16.mxu0 0
    %1013 = vmatpush1.bf16.msra.mxu0 0
    %1014 = vmatprep.subr.bf16.mxu0 0
    %1015 = vmatpush1.bf16.msra.mxu0 0
    %1016 = vmatprep.subr.bf16.mxu0 0
    %1017 = vmatpush1.bf16.msra.mxu0 0
    %1018 = vmatprep.subr.bf16.mxu0 0
    %1019 = vmatpush1.bf16.msra.mxu0 0
    %1020 = vmatprep.subr.bf16.mxu0 0
    %1021 = vmatpush1.bf16.msra.mxu0 0
    %1022 = vmatprep.subr.bf16.mxu0 0
    %1023 = vmatpush1.bf16.msra.mxu0 0
    %1024 = vmatprep.subr.bf16.mxu0 0
    %1025 = vmatpush1.bf16.msra.mxu0 0
    %1026 = vmatprep.mubr.bf16.mxu0 0
    %1027 = vmatmul.mubr.bf16.gmra.mrb[0].mxu0 0
    %v1028 = vpop.f32.mrb[0].mxu0
    %v1029 = vadd.f32 0.0, %v1028
    %v1030 = vpop.f32.mrb[0].mxu0
    %v1031 = vadd.f32 0.0, %v1030
    %v1032 = vpop.f32.mrb[0].mxu0
    %v1033 = vpop.f32.mrb[0].mxu0
    %1034 = vdwg.mxu0
    %1035 = vmatprep.subr.bf16.mxu0 %v933
    %1036 = vmatpush1.bf16.msra.mxu0 %v932
    %1037 = vmatprep.subr.bf16.mxu0 %v937
    %1038 = vmatpush1.bf16.msra.mxu0 %v936
    %1039 = vmatprep.subr.bf16.mxu0 %v941
    %1040 = vmatpush1.bf16.msra.mxu0 %v940
    %1041 = vmatprep.subr.bf16.mxu0 %v945
    %1042 = vmatpush1.bf16.msra.mxu0 %v944
    %1043 = vmatprep.subr.bf16.mxu0 %v949
    %1044 = vmatpush1.bf16.msra.mxu0 %v948
    %1045 = vmatprep.subr.bf16.mxu0 %v953
    %1046 = vmatpush1.bf16.msra.mxu0 %v952
    %1047 = vmatprep.subr.bf16.mxu0 %v957
    %1048 = vmatpush1.bf16.msra.mxu0 %v956
    %1049 = vmatprep.subr.bf16.mxu0 %v961
    %1050 = vmatpush1.bf16.msra.mxu0 %v960
    %1051 = vmatprep.subr.bf16.mxu0 0
    %1052 = vmatpush1.bf16.msra.mxu0 0
    %1053 = vmatprep.subr.bf16.mxu0 0
    %1054 = vmatpush1.bf16.msra.mxu0 0
    %1055 = vmatprep.subr.bf16.mxu0 0
    %1056 = vmatpush1.bf16.msra.mxu0 0
    %1057 = vmatprep.subr.bf16.mxu0 0
    %1058 = vmatpush1.bf16.msra.mxu0 0
    %1059 = vmatprep.subr.bf16.mxu0 0
    %1060 = vmatpush1.bf16.msra.mxu0 0
    %1061 = vmatprep.subr.bf16.mxu0 0
    %1062 = vmatpush1.bf16.msra.mxu0 0
    %1063 = vmatprep.subr.bf16.mxu0 0
    %1064 = vmatpush1.bf16.msra.mxu0 0
    %1065 = vmatprep.subr.bf16.mxu0 0
    %1066 = vmatpush1.bf16.msra.mxu0 0
    %1067 = vmatprep.mubr.bf16.mxu0 0
    %1068 = vmatmul.mubr.bf16.gmra.mrb[0].mxu0 0
    %v1069 = vpop.f32.mrb[0].mxu0
    %v1070 = vadd.f32 0.0, %v1069
    %v1071 = vpop.f32.mrb[0].mxu0
    %v1072 = vadd.f32 0.0, %v1071
    %v1073 = vpop.f32.mrb[0].mxu0
    %v1074 = vpop.f32.mrb[0].mxu0
    %1075 = vdwg.mxu0
    %v1076 = vadd.f32 %v798, %v1029
    %v1077 = vadd.f32 %v799, %v1031
    %v1078 = vadd.f32 %v800, %v1070
    %v1079 = vadd.f32 %v801, %v1072
    %v1080 = vld [vmem:[#allocation3 + $0x60] sm:$0xf0]
    %v1081 = vld [vmem:[#allocation3 + $0x68] sm:$0xf0]
    %v1082 = vld [vmem:[#allocation3 + $0x70] sm:$0xf0]
    %v1083 = vld [vmem:[#allocation3 + $0x78] sm:$0xf0]
    %v1088 = vrot.slane %v1080, 4
    %v1089 = vrot.slane %v1081, 4
    %v1090 = vrot.slane %v1082, 4
    %v1091 = vrot.slane %v1083, 4
    %v1096 = vunpack.c.l.bf16 %v1088
    %v1097 = vunpack.c.l.bf16 %v1089
    %v1098 = vunpack.c.l.bf16 %v1090
    %v1099 = vunpack.c.l.bf16 %v1091
    %v1100 = vadd.f32 %v1096, %v100
    %v1101 = vadd.f32 %v1097, %v104
    %v1102 = vadd.f32 %v1098, %v108
    %v1103 = vadd.f32 %v1099, %v112
    %v1104 = vld [vmem:[#allocation9] sm:$0xff]
    %v1105 = vld [vmem:[#allocation9 + $0x8] sm:$0xff]
    %v1106 = vld [vmem:[#allocation9 + $0x10] sm:$0xff]
    %v1107 = vld [vmem:[#allocation9 + $0x18] sm:$0xff]
    %v1108 = vld [vmem:[#allocation9 + $0x20] sm:$0xff]
    %v1109 = vld [vmem:[#allocation9 + $0x28] sm:$0xff]
    %v1110 = vld [vmem:[#allocation9 + $0x30] sm:$0xff]
    %v1111 = vld [vmem:[#allocation9 + $0x38] sm:$0xff]
    %v1112 = vld [vmem:[#allocation9 + $0x40] sm:$0xff]
    %v1113 = vld [vmem:[#allocation9 + $0x48] sm:$0xff]
    %v1114 = vld [vmem:[#allocation9 + $0x50] sm:$0xff]
    %v1115 = vld [vmem:[#allocation9 + $0x58] sm:$0xff]
    %v1116 = vld [vmem:[#allocation9 + $0x60] sm:$0xff]
    %v1117 = vld [vmem:[#allocation9 + $0x68] sm:$0xff]
    %v1118 = vld [vmem:[#allocation9 + $0x70] sm:$0xff]
    %v1119 = vld [vmem:[#allocation9 + $0x78] sm:$0xff]
    %v1120 = vld [vmem:[#allocation9 + $0x80] sm:$0xff]
    %v1121 = vld [vmem:[#allocation9 + $0x88] sm:$0xff]
    %v1122 = vld [vmem:[#allocation9 + $0x90] sm:$0xff]
    %v1123 = vld [vmem:[#allocation9 + $0x98] sm:$0xff]
    %v1124 = vld [vmem:[#allocation9 + $0xa0] sm:$0xff]
    %v1125 = vld [vmem:[#allocation9 + $0xa8] sm:$0xff]
    %v1126 = vld [vmem:[#allocation9 + $0xb0] sm:$0xff]
    %v1127 = vld [vmem:[#allocation9 + $0xb8] sm:$0xff]
    %v1128 = vld [vmem:[#allocation9 + $0xc0] sm:$0xff]
    %v1129 = vld [vmem:[#allocation9 + $0xc8] sm:$0xff]
    %v1130 = vld [vmem:[#allocation9 + $0xd0] sm:$0xff]
    %v1131 = vld [vmem:[#allocation9 + $0xd8] sm:$0xff]
    %v1132 = vld [vmem:[#allocation9 + $0xe0] sm:$0xff]
    %v1133 = vld [vmem:[#allocation9 + $0xe8] sm:$0xff]
    %v1134 = vld [vmem:[#allocation9 + $0xf0] sm:$0xff]
    %v1135 = vld [vmem:[#allocation9 + $0xf8] sm:$0xff]
    %v1168 = vunpack.c.l.b16 %v1104
    %v1169 = vunpack.c.h.b16 %v1104
    %v1170 = vunpack.c.l.b16 %v1105
    %v1171 = vunpack.c.h.b16 %v1105
    %v1172 = vunpack.c.l.b16 %v1106
    %v1173 = vunpack.c.h.b16 %v1106
    %v1174 = vunpack.c.l.b16 %v1107
    %v1175 = vunpack.c.h.b16 %v1107
    %v1176 = vunpack.c.l.b16 %v1108
    %v1177 = vunpack.c.h.b16 %v1108
    %v1178 = vunpack.c.l.b16 %v1109
    %v1179 = vunpack.c.h.b16 %v1109
    %v1180 = vunpack.c.l.b16 %v1110
    %v1181 = vunpack.c.h.b16 %v1110
    %v1182 = vunpack.c.l.b16 %v1111
    %v1183 = vunpack.c.h.b16 %v1111
    %v1184 = vunpack.c.l.b16 %v1112
    %v1185 = vunpack.c.h.b16 %v1112
    %v1186 = vunpack.c.l.b16 %v1113
    %v1187 = vunpack.c.h.b16 %v1113
    %v1188 = vunpack.c.l.b16 %v1114
    %v1189 = vunpack.c.h.b16 %v1114
    %v1190 = vunpack.c.l.b16 %v1115
    %v1191 = vunpack.c.h.b16 %v1115
    %v1192 = vunpack.c.l.b16 %v1116
    %v1193 = vunpack.c.h.b16 %v1116
    %v1194 = vunpack.c.l.b16 %v1117
    %v1195 = vunpack.c.h.b16 %v1117
    %v1196 = vunpack.c.l.b16 %v1118
    %v1197 = vunpack.c.h.b16 %v1118
    %v1198 = vunpack.c.l.b16 %v1119
    %v1199 = vunpack.c.h.b16 %v1119
    %v1200 = vunpack.c.l.b16 %v1120
    %v1201 = vunpack.c.h.b16 %v1120
    %v1202 = vunpack.c.l.b16 %v1121
    %v1203 = vunpack.c.h.b16 %v1121
    %v1204 = vunpack.c.l.b16 %v1122
    %v1205 = vunpack.c.h.b16 %v1122
    %v1206 = vunpack.c.l.b16 %v1123
    %v1207 = vunpack.c.h.b16 %v1123
    %v1208 = vunpack.c.l.b16 %v1124
    %v1209 = vunpack.c.h.b16 %v1124
    %v1210 = vunpack.c.l.b16 %v1125
    %v1211 = vunpack.c.h.b16 %v1125
    %v1212 = vunpack.c.l.b16 %v1126
    %v1213 = vunpack.c.h.b16 %v1126
    %v1214 = vunpack.c.l.b16 %v1127
    %v1215 = vunpack.c.h.b16 %v1127
    %v1216 = vunpack.c.l.b16 %v1128
    %v1217 = vunpack.c.h.b16 %v1128
    %v1218 = vunpack.c.l.b16 %v1129
    %v1219 = vunpack.c.h.b16 %v1129
    %v1220 = vunpack.c.l.b16 %v1130
    %v1221 = vunpack.c.h.b16 %v1130
    %v1222 = vunpack.c.l.b16 %v1131
    %v1223 = vunpack.c.h.b16 %v1131
    %v1224 = vunpack.c.l.b16 %v1132
    %v1225 = vunpack.c.h.b16 %v1132
    %v1226 = vunpack.c.l.b16 %v1133
    %v1227 = vunpack.c.h.b16 %v1133
    %v1228 = vunpack.c.l.b16 %v1134
    %v1229 = vunpack.c.h.b16 %v1134
    %v1230 = vunpack.c.l.b16 %v1135
    %v1231 = vunpack.c.h.b16 %v1135
    %v1232 = vpack.c.b16 %v1172, %v1168
    %v1233 = vpack.c.b16 %v1173, %v1169
    %v1234 = vpack.c.b16 %v1174, %v1170
    %v1235 = vpack.c.b16 %v1175, %v1171
    %v1236 = vpack.c.b16 %v1180, %v1176
    %v1237 = vpack.c.b16 %v1181, %v1177
    %v1238 = vpack.c.b16 %v1182, %v1178
    %v1239 = vpack.c.b16 %v1183, %v1179
    %v1240 = vpack.c.b16 %v1188, %v1184
    %v1241 = vpack.c.b16 %v1189, %v1185
    %v1242 = vpack.c.b16 %v1190, %v1186
    %v1243 = vpack.c.b16 %v1191, %v1187
    %v1244 = vpack.c.b16 %v1196, %v1192
    %v1245 = vpack.c.b16 %v1197, %v1193
    %v1246 = vpack.c.b16 %v1198, %v1194
    %v1247 = vpack.c.b16 %v1199, %v1195
    %v1248 = vpack.c.b16 %v1204, %v1200
    %v1249 = vpack.c.b16 %v1205, %v1201
    %v1250 = vpack.c.b16 %v1206, %v1202
    %v1251 = vpack.c.b16 %v1207, %v1203
    %v1252 = vpack.c.b16 %v1212, %v1208
    %v1253 = vpack.c.b16 %v1213, %v1209
    %v1254 = vpack.c.b16 %v1214, %v1210
    %v1255 = vpack.c.b16 %v1215, %v1211
    %v1256 = vpack.c.b16 %v1220, %v1216
    %v1257 = vpack.c.b16 %v1221, %v1217
    %v1258 = vpack.c.b16 %v1222, %v1218
    %v1259 = vpack.c.b16 %v1223, %v1219
    %v1260 = vpack.c.b16 %v1228, %v1224
    %v1261 = vpack.c.b16 %v1229, %v1225
    %v1262 = vpack.c.b16 %v1230, %v1226
    %v1263 = vpack.c.b16 %v1231, %v1227
    %1296 = vmatprep.subr.bf16.mxu0 %v1233
    %1297 = vmatpush1.bf16.msra.mxu0 %v1232
    %1298 = vmatprep.subr.bf16.mxu0 %v1237
    %1299 = vmatpush1.bf16.msra.mxu0 %v1236
    %1300 = vmatprep.subr.bf16.mxu0 %v1241
    %1301 = vmatpush1.bf16.msra.mxu0 %v1240
    %1302 = vmatprep.subr.bf16.mxu0 %v1245
    %1303 = vmatpush1.bf16.msra.mxu0 %v1244
    %1304 = vmatprep.subr.bf16.mxu0 %v1249
    %1305 = vmatpush1.bf16.msra.mxu0 %v1248
    %1306 = vmatprep.subr.bf16.mxu0 %v1253
    %1307 = vmatpush1.bf16.msra.mxu0 %v1252
    %1308 = vmatprep.subr.bf16.mxu0 %v1257
    %1309 = vmatpush1.bf16.msra.mxu0 %v1256
    %1310 = vmatprep.subr.bf16.mxu0 %v1261
    %1311 = vmatpush1.bf16.msra.mxu0 %v1260
    %1312 = vmatprep.subr.bf16.mxu0 0
    %1313 = vmatpush1.bf16.msra.mxu0 0
    %1314 = vmatprep.subr.bf16.mxu0 0
    %1315 = vmatpush1.bf16.msra.mxu0 0
    %1316 = vmatprep.subr.bf16.mxu0 0
    %1317 = vmatpush1.bf16.msra.mxu0 0
    %1318 = vmatprep.subr.bf16.mxu0 0
    %1319 = vmatpush1.bf16.msra.mxu0 0
    %1320 = vmatprep.subr.bf16.mxu0 0
    %1321 = vmatpush1.bf16.msra.mxu0 0
    %1322 = vmatprep.subr.bf16.mxu0 0
    %1323 = vmatpush1.bf16.msra.mxu0 0
    %1324 = vmatprep.subr.bf16.mxu0 0
    %1325 = vmatpush1.bf16.msra.mxu0 0
    %1326 = vmatprep.subr.bf16.mxu0 0
    %1327 = vmatpush1.bf16.msra.mxu0 0
    %1328 = vmatprep.mubr.bf16.mxu0 0
    %1329 = vmatmul.mubr.bf16.gmra.mrb[0].mxu0 0
    %v1330 = vpop.f32.mrb[0].mxu0
    %v1331 = vadd.f32 0.0, %v1330
    %v1332 = vpop.f32.mrb[0].mxu0
    %v1333 = vadd.f32 0.0, %v1332
    %v1334 = vpop.f32.mrb[0].mxu0
    %v1335 = vpop.f32.mrb[0].mxu0
    %1336 = vdwg.mxu0
    %1337 = vmatprep.subr.bf16.mxu0 %v1235
    %1338 = vmatpush1.bf16.msra.mxu0 %v1234
    %1339 = vmatprep.subr.bf16.mxu0 %v1239
    %1340 = vmatpush1.bf16.msra.mxu0 %v1238
    %1341 = vmatprep.subr.bf16.mxu0 %v1243
    %1342 = vmatpush1.bf16.msra.mxu0 %v1242
    %1343 = vmatprep.subr.bf16.mxu0 %v1247
    %1344 = vmatpush1.bf16.msra.mxu0 %v1246
    %1345 = vmatprep.subr.bf16.mxu0 %v1251
    %1346 = vmatpush1.bf16.msra.mxu0 %v1250
    %1347 = vmatprep.subr.bf16.mxu0 %v1255
    %1348 = vmatpush1.bf16.msra.mxu0 %v1254
    %1349 = vmatprep.subr.bf16.mxu0 %v1259
    %1350 = vmatpush1.bf16.msra.mxu0 %v1258
    %1351 = vmatprep.subr.bf16.mxu0 %v1263
    %1352 = vmatpush1.bf16.msra.mxu0 %v1262
    %1353 = vmatprep.subr.bf16.mxu0 0
    %1354 = vmatpush1.bf16.msra.mxu0 0
    %1355 = vmatprep.subr.bf16.mxu0 0
    %1356 = vmatpush1.bf16.msra.mxu0 0
    %1357 = vmatprep.subr.bf16.mxu0 0
    %1358 = vmatpush1.bf16.msra.mxu0 0
    %1359 = vmatprep.subr.bf16.mxu0 0
    %1360 = vmatpush1.bf16.msra.mxu0 0
    %1361 = vmatprep.subr.bf16.mxu0 0
    %1362 = vmatpush1.bf16.msra.mxu0 0
    %1363 = vmatprep.subr.bf16.mxu0 0
    %1364 = vmatpush1.bf16.msra.mxu0 0
    %1365 = vmatprep.subr.bf16.mxu0 0
    %1366 = vmatpush1.bf16.msra.mxu0 0
    %1367 = vmatprep.subr.bf16.mxu0 0
    %1368 = vmatpush1.bf16.msra.mxu0 0
    %1369 = vmatprep.mubr.bf16.mxu0 0
    %1370 = vmatmul.mubr.bf16.gmra.mrb[0].mxu0 0
    %v1371 = vpop.f32.mrb[0].mxu0
    %v1372 = vadd.f32 0.0, %v1371
    %v1373 = vpop.f32.mrb[0].mxu0
    %v1374 = vadd.f32 0.0, %v1373
    %v1375 = vpop.f32.mrb[0].mxu0
    %v1376 = vpop.f32.mrb[0].mxu0
    %1377 = vdwg.mxu0
    %v1378 = vadd.f32 %v1100, %v1331
    %v1379 = vadd.f32 %v1101, %v1333
    %v1380 = vadd.f32 %v1102, %v1372
    %v1381 = vadd.f32 %v1103, %v1374
    %vm1382 = vcmp.gt.s32.totalorder %v72, 0
    %v1383 = vxor.u32 %v1076, 2147483648
    %v1384 = vmul.f32 %v1383, 1.442695
    %v1385 = vpow.pop %v1384
    %v1386 = vadd.f32 %v1385, 1.0
    %v1387 = vrcp.pop %v1386
    %v1388 = vmul.f32 1.0, %v1387
    %v1389 = vxor.u32 %v1077, 2147483648
    %v1390 = vmul.f32 %v1389, 1.442695
    %v1391 = vpow.pop %v1390
    %v1392 = vadd.f32 %v1391, 1.0
    %v1393 = vrcp.pop %v1392
    %v1394 = vmul.f32 1.0, %v1393
    %v1395 = vtanh.pop %v1078
    %v1396 = vxor.u32 %v1079, 2147483648
    %v1397 = vmul.f32 %v1396, 1.442695
    %v1398 = vpow.pop %v1397
    %v1399 = vadd.f32 %v1398, 1.0
    %v1400 = vrcp.pop %v1399
    %v1401 = vmul.f32 1.0, %v1400
    %v1402 = vmul.f32 %v1394, 0.0
    %v1403 = vmul.f32 %v1388, %v1395
    %v1404 = vadd.f32 %v1402, %v1403
    %v1405 = vtanh.pop %v1404
    %v1406 = vmul.f32 %v1401, %v1405
    %v1407 = vsel %vm1382, 1, 0
    %1408 = vset.pattern.permute.xlu0 0
    %1409 = vperm.xlu0 %1408, %v1407
    %v1410 = vpop.permute.xlu0 %1409
    %vm1411 = vcmp.eq.s32.totalorder %v1410, 1
    %v1412 = vsel %vm1411, %v1406, 0.0
    %v1413 = vsel %vm1411, %v1404, 0.0
    %vm1414 = vcmp.gt.s32.totalorder %v72, 7
    %v1415 = vxor.u32 %v1378, 2147483648
    %v1416 = vmul.f32 %v1415, 1.442695
    %v1417 = vpow.pop %v1416
    %v1418 = vadd.f32 %v1417, 1.0
    %v1419 = vrcp.pop %v1418
    %v1420 = vmul.f32 1.0, %v1419
    %v1421 = vxor.u32 %v1379, 2147483648
    %v1422 = vmul.f32 %v1421, 1.442695
    %v1423 = vpow.pop %v1422
    %v1424 = vadd.f32 %v1423, 1.0
    %v1425 = vrcp.pop %v1424
    %v1426 = vmul.f32 1.0, %v1425
    %v1427 = vtanh.pop %v1380
    %v1428 = vxor.u32 %v1381, 2147483648
    %v1429 = vmul.f32 %v1428, 1.442695
    %v1430 = vpow.pop %v1429
    %v1431 = vadd.f32 %v1430, 1.0
    %v1432 = vrcp.pop %v1431
    %v1433 = vmul.f32 1.0, %v1432
    %v1434 = vmul.f32 %v1426, 0.0
    %v1435 = vmul.f32 %v1420, %v1427
    %v1436 = vadd.f32 %v1434, %v1435
    %v1437 = vtanh.pop %v1436
    %v1438 = vmul.f32 %v1433, %v1437
    %v1439 = vsel %vm1414, 1, 0
    %1440 = vset.pattern.permute.xlu0 0
    %1441 = vperm.xlu0 %1440, %v1439
    %v1442 = vpop.permute.xlu0 %1441
    %vm1443 = vcmp.eq.s32.totalorder %v1442, 1
    %v1444 = vsel %vm1443, %v1438, 0.0
    %v1445 = vsel %vm1443, %v1436, 0.0
    %v1446 = vld [vmem:[#allocation10] sm:$0xff]
    %v1447 = vadd.f32 %v1446, %v1412
    %1448 = vst [vmem:[#allocation10] sm:$0xff] %v1447
    %v1449 = vld [vmem:[#allocation10 + $0x38] sm:$0xff]
    %v1450 = vadd.f32 %v1449, %v1444
    %1451 = vst [vmem:[#allocation10 + $0x38] sm:$0xff] %v1450
    %v1452 = vld [vmem:[#allocation2] sm:$0xf0]
    %v1453 = vld [vmem:[#allocation2 + $0x8] sm:$0xf0]
    %v1454 = vld [vmem:[#allocation2 + $0x10] sm:$0xf0]
    %v1455 = vld [vmem:[#allocation2 + $0x18] sm:$0xf0]
    %v1460 = vrot.slane %v1452, 4
    %v1461 = vrot.slane %v1453, 4
    %v1462 = vrot.slane %v1454, 4
    %v1463 = vrot.slane %v1455, 4
    %v1468 = vunpack.c.l.bf16 %v1460
    %v1469 = vunpack.c.l.bf16 %v1461
    %v1470 = vunpack.c.l.bf16 %v1462
    %v1471 = vunpack.c.l.bf16 %v1463
    %v1472 = vadd.f32 %v1468, %v78
    %v1473 = vadd.f32 %v1469, %v82
    %v1474 = vadd.f32 %v1470, %v86
    %v1475 = vadd.f32 %v1471, %v90
    %v1476 = vpack.c.bf16 %v1412, %v1412
    %v1477 = vld [vmem:[#allocation7] sm:$0xff]
    %v1478 = vld [vmem:[#allocation7 + $0x8] sm:$0xff]
    %v1479 = vld [vmem:[#allocation7 + $0x10] sm:$0xff]
    %v1480 = vld [vmem:[#allocation7 + $0x18] sm:$0xff]
    %v1481 = vld [vmem:[#allocation7 + $0x20] sm:$0xff]
    %v1482 = vld [vmem:[#allocation7 + $0x28] sm:$0xff]
    %v1483 = vld [vmem:[#allocation7 + $0x30] sm:$0xff]
    %v1484 = vld [vmem:[#allocation7 + $0x38] sm:$0xff]
    %v1485 = vld [vmem:[#allocation7 + $0x40] sm:$0xff]
    %v1486 = vld [vmem:[#allocation7 + $0x48] sm:$0xff]
    %v1487 = vld [vmem:[#allocation7 + $0x50] sm:$0xff]
    %v1488 = vld [vmem:[#allocation7 + $0x58] sm:$0xff]
    %v1489 = vld [vmem:[#allocation7 + $0x60] sm:$0xff]
    %v1490 = vld [vmem:[#allocation7 + $0x68] sm:$0xff]
    %v1491 = vld [vmem:[#allocation7 + $0x70] sm:$0xff]
    %v1492 = vld [vmem:[#allocation7 + $0x78] sm:$0xff]
    %v1493 = vld [vmem:[#allocation7 + $0x80] sm:$0xff]
    %v1494 = vld [vmem:[#allocation7 + $0x88] sm:$0xff]
    %v1495 = vld [vmem:[#allocation7 + $0x90] sm:$0xff]
    %v1496 = vld [vmem:[#allocation7 + $0x98] sm:$0xff]
    %v1497 = vld [vmem:[#allocation7 + $0xa0] sm:$0xff]
    %v1498 = vld [vmem:[#allocation7 + $0xa8] sm:$0xff]
    %v1499 = vld [vmem:[#allocation7 + $0xb0] sm:$0xff]
    %v1500 = vld [vmem:[#allocation7 + $0xb8] sm:$0xff]
    %v1501 = vld [vmem:[#allocation7 + $0xc0] sm:$0xff]
    %v1502 = vld [vmem:[#allocation7 + $0xc8] sm:$0xff]
    %v1503 = vld [vmem:[#allocation7 + $0xd0] sm:$0xff]
    %v1504 = vld [vmem:[#allocation7 + $0xd8] sm:$0xff]
    %v1505 = vld [vmem:[#allocation7 + $0xe0] sm:$0xff]
    %v1506 = vld [vmem:[#allocation7 + $0xe8] sm:$0xff]
    %v1507 = vld [vmem:[#allocation7 + $0xf0] sm:$0xff]
    %v1508 = vld [vmem:[#allocation7 + $0xf8] sm:$0xff]
    %v1541 = vunpack.c.l.b16 %v1477
    %v1542 = vunpack.c.h.b16 %v1477
    %v1543 = vunpack.c.l.b16 %v1478
    %v1544 = vunpack.c.h.b16 %v1478
    %v1545 = vunpack.c.l.b16 %v1479
    %v1546 = vunpack.c.h.b16 %v1479
    %v1547 = vunpack.c.l.b16 %v1480
    %v1548 = vunpack.c.h.b16 %v1480
    %v1549 = vunpack.c.l.b16 %v1481
    %v1550 = vunpack.c.h.b16 %v1481
    %v1551 = vunpack.c.l.b16 %v1482
    %v1552 = vunpack.c.h.b16 %v1482
    %v1553 = vunpack.c.l.b16 %v1483
    %v1554 = vunpack.c.h.b16 %v1483
    %v1555 = vunpack.c.l.b16 %v1484
    %v1556 = vunpack.c.h.b16 %v1484
    %v1557 = vunpack.c.l.b16 %v1485
    %v1558 = vunpack.c.h.b16 %v1485
    %v1559 = vunpack.c.l.b16 %v1486
    %v1560 = vunpack.c.h.b16 %v1486
    %v1561 = vunpack.c.l.b16 %v1487
    %v1562 = vunpack.c.h.b16 %v1487
    %v1563 = vunpack.c.l.b16 %v1488
    %v1564 = vunpack.c.h.b16 %v1488
    %v1565 = vunpack.c.l.b16 %v1489
    %v1566 = vunpack.c.h.b16 %v1489
    %v1567 = vunpack.c.l.b16 %v1490
    %v1568 = vunpack.c.h.b16 %v1490
    %v1569 = vunpack.c.l.b16 %v1491
    %v1570 = vunpack.c.h.b16 %v1491
    %v1571 = vunpack.c.l.b16 %v1492
    %v1572 = vunpack.c.h.b16 %v1492
    %v1573 = vunpack.c.l.b16 %v1493
    %v1574 = vunpack.c.h.b16 %v1493
    %v1575 = vunpack.c.l.b16 %v1494
    %v1576 = vunpack.c.h.b16 %v1494
    %v1577 = vunpack.c.l.b16 %v1495
    %v1578 = vunpack.c.h.b16 %v1495
    %v1579 = vunpack.c.l.b16 %v1496
    %v1580 = vunpack.c.h.b16 %v1496
    %v1581 = vunpack.c.l.b16 %v1497
    %v1582 = vunpack.c.h.b16 %v1497
    %v1583 = vunpack.c.l.b16 %v1498
    %v1584 = vunpack.c.h.b16 %v1498
    %v1585 = vunpack.c.l.b16 %v1499
    %v1586 = vunpack.c.h.b16 %v1499
    %v1587 = vunpack.c.l.b16 %v1500
    %v1588 = vunpack.c.h.b16 %v1500
    %v1589 = vunpack.c.l.b16 %v1501
    %v1590 = vunpack.c.h.b16 %v1501
    %v1591 = vunpack.c.l.b16 %v1502
    %v1592 = vunpack.c.h.b16 %v1502
    %v1593 = vunpack.c.l.b16 %v1503
    %v1594 = vunpack.c.h.b16 %v1503
    %v1595 = vunpack.c.l.b16 %v1504
    %v1596 = vunpack.c.h.b16 %v1504
    %v1597 = vunpack.c.l.b16 %v1505
    %v1598 = vunpack.c.h.b16 %v1505
    %v1599 = vunpack.c.l.b16 %v1506
    %v1600 = vunpack.c.h.b16 %v1506
    %v1601 = vunpack.c.l.b16 %v1507
    %v1602 = vunpack.c.h.b16 %v1507
    %v1603 = vunpack.c.l.b16 %v1508
    %v1604 = vunpack.c.h.b16 %v1508
    %v1605 = vpack.c.b16 %v1545, %v1541
    %v1606 = vpack.c.b16 %v1546, %v1542
    %v1607 = vpack.c.b16 %v1547, %v1543
    %v1608 = vpack.c.b16 %v1548, %v1544
    %v1609 = vpack.c.b16 %v1553, %v1549
    %v1610 = vpack.c.b16 %v1554, %v1550
    %v1611 = vpack.c.b16 %v1555, %v1551
    %v1612 = vpack.c.b16 %v1556, %v1552
    %v1613 = vpack.c.b16 %v1561, %v1557
    %v1614 = vpack.c.b16 %v1562, %v1558
    %v1615 = vpack.c.b16 %v1563, %v1559
    %v1616 = vpack.c.b16 %v1564, %v1560
    %v1617 = vpack.c.b16 %v1569, %v1565
    %v1618 = vpack.c.b16 %v1570, %v1566
    %v1619 = vpack.c.b16 %v1571, %v1567
    %v1620 = vpack.c.b16 %v1572, %v1568
    %v1621 = vpack.c.b16 %v1577, %v1573
    %v1622 = vpack.c.b16 %v1578, %v1574
    %v1623 = vpack.c.b16 %v1579, %v1575
    %v1624 = vpack.c.b16 %v1580, %v1576
    %v1625 = vpack.c.b16 %v1585, %v1581
    %v1626 = vpack.c.b16 %v1586, %v1582
    %v1627 = vpack.c.b16 %v1587, %v1583
    %v1628 = vpack.c.b16 %v1588, %v1584
    %v1629 = vpack.c.b16 %v1593, %v1589
    %v1630 = vpack.c.b16 %v1594, %v1590
    %v1631 = vpack.c.b16 %v1595, %v1591
    %v1632 = vpack.c.b16 %v1596, %v1592
    %v1633 = vpack.c.b16 %v1601, %v1597
    %v1634 = vpack.c.b16 %v1602, %v1598
    %v1635 = vpack.c.b16 %v1603, %v1599
    %v1636 = vpack.c.b16 %v1604, %v1600
    %1669 = vmatprep.subr.bf16.mxu0 %v1606
    %1670 = vmatpush1.bf16.msra.mxu0 %v1605
    %1671 = vmatprep.subr.bf16.mxu0 %v1610
    %1672 = vmatpush1.bf16.msra.mxu0 %v1609
    %1673 = vmatprep.subr.bf16.mxu0 %v1614
    %1674 = vmatpush1.bf16.msra.mxu0 %v1613
    %1675 = vmatprep.subr.bf16.mxu0 %v1618
    %1676 = vmatpush1.bf16.msra.mxu0 %v1617
    %1677 = vmatprep.subr.bf16.mxu0 %v1622
    %1678 = vmatpush1.bf16.msra.mxu0 %v1621
    %1679 = vmatprep.subr.bf16.mxu0 %v1626
    %1680 = vmatpush1.bf16.msra.mxu0 %v1625
    %1681 = vmatprep.subr.bf16.mxu0 %v1630
    %1682 = vmatpush1.bf16.msra.mxu0 %v1629
    %1683 = vmatprep.subr.bf16.mxu0 %v1634
    %1684 = vmatpush1.bf16.msra.mxu0 %v1633
    %1685 = vmatprep.subr.bf16.mxu0 0
    %1686 = vmatpush1.bf16.msra.mxu0 0
    %1687 = vmatprep.subr.bf16.mxu0 0
    %1688 = vmatpush1.bf16.msra.mxu0 0
    %1689 = vmatprep.subr.bf16.mxu0 0
    %1690 = vmatpush1.bf16.msra.mxu0 0
    %1691 = vmatprep.subr.bf16.mxu0 0
    %1692 = vmatpush1.bf16.msra.mxu0 0
    %1693 = vmatprep.subr.bf16.mxu0 0
    %1694 = vmatpush1.bf16.msra.mxu0 0
    %1695 = vmatprep.subr.bf16.mxu0 0
    %1696 = vmatpush1.bf16.msra.mxu0 0
    %1697 = vmatprep.subr.bf16.mxu0 0
    %1698 = vmatpush1.bf16.msra.mxu0 0
    %1699 = vmatprep.subr.bf16.mxu0 0
    %1700 = vmatpush1.bf16.msra.mxu0 0
    %1701 = vmatprep.mubr.bf16.mxu0 0
    %1702 = vmatmul.mubr.bf16.gmra.mrb[0].mxu0 %v1476
    %v1703 = vpop.f32.mrb[0].mxu0
    %v1704 = vadd.f32 0.0, %v1703
    %v1705 = vpop.f32.mrb[0].mxu0
    %v1706 = vadd.f32 0.0, %v1705
    %v1707 = vpop.f32.mrb[0].mxu0
    %v1708 = vpop.f32.mrb[0].mxu0
    %1709 = vdwg.mxu0
    %1710 = vmatprep.subr.bf16.mxu0 %v1608
    %1711 = vmatpush1.bf16.msra.mxu0 %v1607
    %1712 = vmatprep.subr.bf16.mxu0 %v1612
    %1713 = vmatpush1.bf16.msra.mxu0 %v1611
    %1714 = vmatprep.subr.bf16.mxu0 %v1616
    %1715 = vmatpush1.bf16.msra.mxu0 %v1615
    %1716 = vmatprep.subr.bf16.mxu0 %v1620
    %1717 = vmatpush1.bf16.msra.mxu0 %v1619
    %1718 = vmatprep.subr.bf16.mxu0 %v1624
    %1719 = vmatpush1.bf16.msra.mxu0 %v1623
    %1720 = vmatprep.subr.bf16.mxu0 %v1628
    %1721 = vmatpush1.bf16.msra.mxu0 %v1627
    %1722 = vmatprep.subr.bf16.mxu0 %v1632
    %1723 = vmatpush1.bf16.msra.mxu0 %v1631
    %1724 = vmatprep.subr.bf16.mxu0 %v1636
    %1725 = vmatpush1.bf16.msra.mxu0 %v1635
    %1726 = vmatprep.subr.bf16.mxu0 0
    %1727 = vmatpush1.bf16.msra.mxu0 0
    %1728 = vmatprep.subr.bf16.mxu0 0
    %1729 = vmatpush1.bf16.msra.mxu0 0
    %1730 = vmatprep.subr.bf16.mxu0 0
    %1731 = vmatpush1.bf16.msra.mxu0 0
    %1732 = vmatprep.subr.bf16.mxu0 0
    %1733 = vmatpush1.bf16.msra.mxu0 0
    %1734 = vmatprep.subr.bf16.mxu0 0
    %1735 = vmatpush1.bf16.msra.mxu0 0
    %1736 = vmatprep.subr.bf16.mxu0 0
    %1737 = vmatpush1.bf16.msra.mxu0 0
    %1738 = vmatprep.subr.bf16.mxu0 0
    %1739 = vmatpush1.bf16.msra.mxu0 0
    %1740 = vmatprep.subr.bf16.mxu0 0
    %1741 = vmatpush1.bf16.msra.mxu0 0
    %1742 = vmatprep.mubr.bf16.mxu0 0
    %1743 = vmatmul.mubr.bf16.gmra.mrb[0].mxu0 %v1476
    %v1744 = vpop.f32.mrb[0].mxu0
    %v1745 = vadd.f32 0.0, %v1744
    %v1746 = vpop.f32.mrb[0].mxu0
    %v1747 = vadd.f32 0.0, %v1746
    %v1748 = vpop.f32.mrb[0].mxu0
    %v1749 = vpop.f32.mrb[0].mxu0
    %1750 = vdwg.mxu0
    %v1751 = vadd.f32 %v1472, %v1704
    %v1752 = vadd.f32 %v1473, %v1706
    %v1753 = vadd.f32 %v1474, %v1745
    %v1754 = vadd.f32 %v1475, %v1747
    %v1755 = vld [vmem:[#allocation3 + $0x60] sm:$0xf]
    %v1756 = vld [vmem:[#allocation3 + $0x68] sm:$0xf]
    %v1757 = vld [vmem:[#allocation3 + $0x70] sm:$0xf]
    %v1758 = vld [vmem:[#allocation3 + $0x78] sm:$0xf]
    %v1759 = vunpack.c.l.bf16 %v1755
    %v1760 = vunpack.c.l.bf16 %v1756
    %v1761 = vunpack.c.l.bf16 %v1757
    %v1762 = vunpack.c.l.bf16 %v1758
    %v1763 = vadd.f32 %v1759, %v100
    %v1764 = vadd.f32 %v1760, %v104
    %v1765 = vadd.f32 %v1761, %v108
    %v1766 = vadd.f32 %v1762, %v112
    %v1767 = vpack.c.bf16 %v1444, %v1444
    %v1768 = vld [vmem:[#allocation9] sm:$0xff]
    %v1769 = vld [vmem:[#allocation9 + $0x8] sm:$0xff]
    %v1770 = vld [vmem:[#allocation9 + $0x10] sm:$0xff]
    %v1771 = vld [vmem:[#allocation9 + $0x18] sm:$0xff]
    %v1772 = vld [vmem:[#allocation9 + $0x20] sm:$0xff]
    %v1773 = vld [vmem:[#allocation9 + $0x28] sm:$0xff]
    %v1774 = vld [vmem:[#allocation9 + $0x30] sm:$0xff]
    %v1775 = vld [vmem:[#allocation9 + $0x38] sm:$0xff]
    %v1776 = vld [vmem:[#allocation9 + $0x40] sm:$0xff]
    %v1777 = vld [vmem:[#allocation9 + $0x48] sm:$0xff]
    %v1778 = vld [vmem:[#allocation9 + $0x50] sm:$0xff]
    %v1779 = vld [vmem:[#allocation9 + $0x58] sm:$0xff]
    %v1780 = vld [vmem:[#allocation9 + $0x60] sm:$0xff]
    %v1781 = vld [vmem:[#allocation9 + $0x68] sm:$0xff]
    %v1782 = vld [vmem:[#allocation9 + $0x70] sm:$0xff]
    %v1783 = vld [vmem:[#allocation9 + $0x78] sm:$0xff]
    %v1784 = vld [vmem:[#allocation9 + $0x80] sm:$0xff]
    %v1785 = vld [vmem:[#allocation9 + $0x88] sm:$0xff]
    %v1786 = vld [vmem:[#allocation9 + $0x90] sm:$0xff]
    %v1787 = vld [vmem:[#allocation9 + $0x98] sm:$0xff]
    %v1788 = vld [vmem:[#allocation9 + $0xa0] sm:$0xff]
    %v1789 = vld [vmem:[#allocation9 + $0xa8] sm:$0xff]
    %v1790 = vld [vmem:[#allocation9 + $0xb0] sm:$0xff]
    %v1791 = vld [vmem:[#allocation9 + $0xb8] sm:$0xff]
    %v1792 = vld [vmem:[#allocation9 + $0xc0] sm:$0xff]
    %v1793 = vld [vmem:[#allocation9 + $0xc8] sm:$0xff]
    %v1794 = vld [vmem:[#allocation9 + $0xd0] sm:$0xff]
    %v1795 = vld [vmem:[#allocation9 + $0xd8] sm:$0xff]
    %v1796 = vld [vmem:[#allocation9 + $0xe0] sm:$0xff]
    %v1797 = vld [vmem:[#allocation9 + $0xe8] sm:$0xff]
    %v1798 = vld [vmem:[#allocation9 + $0xf0] sm:$0xff]
    %v1799 = vld [vmem:[#allocation9 + $0xf8] sm:$0xff]
    %v1832 = vunpack.c.l.b16 %v1768
    %v1833 = vunpack.c.h.b16 %v1768
    %v1834 = vunpack.c.l.b16 %v1769
    %v1835 = vunpack.c.h.b16 %v1769
    %v1836 = vunpack.c.l.b16 %v1770
    %v1837 = vunpack.c.h.b16 %v1770
    %v1838 = vunpack.c.l.b16 %v1771
    %v1839 = vunpack.c.h.b16 %v1771
    %v1840 = vunpack.c.l.b16 %v1772
    %v1841 = vunpack.c.h.b16 %v1772
    %v1842 = vunpack.c.l.b16 %v1773
    %v1843 = vunpack.c.h.b16 %v1773
    %v1844 = vunpack.c.l.b16 %v1774
    %v1845 = vunpack.c.h.b16 %v1774
    %v1846 = vunpack.c.l.b16 %v1775
    %v1847 = vunpack.c.h.b16 %v1775
    %v1848 = vunpack.c.l.b16 %v1776
    %v1849 = vunpack.c.h.b16 %v1776
    %v1850 = vunpack.c.l.b16 %v1777
    %v1851 = vunpack.c.h.b16 %v1777
    %v1852 = vunpack.c.l.b16 %v1778
    %v1853 = vunpack.c.h.b16 %v1778
    %v1854 = vunpack.c.l.b16 %v1779
    %v1855 = vunpack.c.h.b16 %v1779
    %v1856 = vunpack.c.l.b16 %v1780
    %v1857 = vunpack.c.h.b16 %v1780
    %v1858 = vunpack.c.l.b16 %v1781
    %v1859 = vunpack.c.h.b16 %v1781
    %v1860 = vunpack.c.l.b16 %v1782
    %v1861 = vunpack.c.h.b16 %v1782
    %v1862 = vunpack.c.l.b16 %v1783
    %v1863 = vunpack.c.h.b16 %v1783
    %v1864 = vunpack.c.l.b16 %v1784
    %v1865 = vunpack.c.h.b16 %v1784
    %v1866 = vunpack.c.l.b16 %v1785
    %v1867 = vunpack.c.h.b16 %v1785
    %v1868 = vunpack.c.l.b16 %v1786
    %v1869 = vunpack.c.h.b16 %v1786
    %v1870 = vunpack.c.l.b16 %v1787
    %v1871 = vunpack.c.h.b16 %v1787
    %v1872 = vunpack.c.l.b16 %v1788
    %v1873 = vunpack.c.h.b16 %v1788
    %v1874 = vunpack.c.l.b16 %v1789
    %v1875 = vunpack.c.h.b16 %v1789
    %v1876 = vunpack.c.l.b16 %v1790
    %v1877 = vunpack.c.h.b16 %v1790
    %v1878 = vunpack.c.l.b16 %v1791
    %v1879 = vunpack.c.h.b16 %v1791
    %v1880 = vunpack.c.l.b16 %v1792
    %v1881 = vunpack.c.h.b16 %v1792
    %v1882 = vunpack.c.l.b16 %v1793
    %v1883 = vunpack.c.h.b16 %v1793
    %v1884 = vunpack.c.l.b16 %v1794
    %v1885 = vunpack.c.h.b16 %v1794
    %v1886 = vunpack.c.l.b16 %v1795
    %v1887 = vunpack.c.h.b16 %v1795
    %v1888 = vunpack.c.l.b16 %v1796
    %v1889 = vunpack.c.h.b16 %v1796
    %v1890 = vunpack.c.l.b16 %v1797
    %v1891 = vunpack.c.h.b16 %v1797
    %v1892 = vunpack.c.l.b16 %v1798
    %v1893 = vunpack.c.h.b16 %v1798
    %v1894 = vunpack.c.l.b16 %v1799
    %v1895 = vunpack.c.h.b16 %v1799
    %v1896 = vpack.c.b16 %v1836, %v1832
    %v1897 = vpack.c.b16 %v1837, %v1833
    %v1898 = vpack.c.b16 %v1838, %v1834
    %v1899 = vpack.c.b16 %v1839, %v1835
    %v1900 = vpack.c.b16 %v1844, %v1840
    %v1901 = vpack.c.b16 %v1845, %v1841
    %v1902 = vpack.c.b16 %v1846, %v1842
    %v1903 = vpack.c.b16 %v1847, %v1843
    %v1904 = vpack.c.b16 %v1852, %v1848
    %v1905 = vpack.c.b16 %v1853, %v1849
    %v1906 = vpack.c.b16 %v1854, %v1850
    %v1907 = vpack.c.b16 %v1855, %v1851
    %v1908 = vpack.c.b16 %v1860, %v1856
    %v1909 = vpack.c.b16 %v1861, %v1857
    %v1910 = vpack.c.b16 %v1862, %v1858
    %v1911 = vpack.c.b16 %v1863, %v1859
    %v1912 = vpack.c.b16 %v1868, %v1864
    %v1913 = vpack.c.b16 %v1869, %v1865
    %v1914 = vpack.c.b16 %v1870, %v1866
    %v1915 = vpack.c.b16 %v1871, %v1867
    %v1916 = vpack.c.b16 %v1876, %v1872
    %v1917 = vpack.c.b16 %v1877, %v1873
    %v1918 = vpack.c.b16 %v1878, %v1874
    %v1919 = vpack.c.b16 %v1879, %v1875
    %v1920 = vpack.c.b16 %v1884, %v1880
    %v1921 = vpack.c.b16 %v1885, %v1881
    %v1922 = vpack.c.b16 %v1886, %v1882
    %v1923 = vpack.c.b16 %v1887, %v1883
    %v1924 = vpack.c.b16 %v1892, %v1888
    %v1925 = vpack.c.b16 %v1893, %v1889
    %v1926 = vpack.c.b16 %v1894, %v1890
    %v1927 = vpack.c.b16 %v1895, %v1891
    %1960 = vmatprep.subr.bf16.mxu0 %v1897
    %1961 = vmatpush1.bf16.msra.mxu0 %v1896
    %1962 = vmatprep.subr.bf16.mxu0 %v1901
    %1963 = vmatpush1.bf16.msra.mxu0 %v1900
    %1964 = vmatprep.subr.bf16.mxu0 %v1905
    %1965 = vmatpush1.bf16.msra.mxu0 %v1904
    %1966 = vmatprep.subr.bf16.mxu0 %v1909
    %1967 = vmatpush1.bf16.msra.mxu0 %v1908
    %1968 = vmatprep.subr.bf16.mxu0 %v1913
    %1969 = vmatpush1.bf16.msra.mxu0 %v1912
    %1970 = vmatprep.subr.bf16.mxu0 %v1917
    %1971 = vmatpush1.bf16.msra.mxu0 %v1916
    %1972 = vmatprep.subr.bf16.mxu0 %v1921
    %1973 = vmatpush1.bf16.msra.mxu0 %v1920
    %1974 = vmatprep.subr.bf16.mxu0 %v1925
    %1975 = vmatpush1.bf16.msra.mxu0 %v1924
    %1976 = vmatprep.subr.bf16.mxu0 0
    %1977 = vmatpush1.bf16.msra.mxu0 0
    %1978 = vmatprep.subr.bf16.mxu0 0
    %1979 = vmatpush1.bf16.msra.mxu0 0
    %1980 = vmatprep.subr.bf16.mxu0 0
    %1981 = vmatpush1.bf16.msra.mxu0 0
    %1982 = vmatprep.subr.bf16.mxu0 0
    %1983 = vmatpush1.bf16.msra.mxu0 0
    %1984 = vmatprep.subr.bf16.mxu0 0
    %1985 = vmatpush1.bf16.msra.mxu0 0
    %1986 = vmatprep.subr.bf16.mxu0 0
    %1987 = vmatpush1.bf16.msra.mxu0 0
    %1988 = vmatprep.subr.bf16.mxu0 0
    %1989 = vmatpush1.bf16.msra.mxu0 0
    %1990 = vmatprep.subr.bf16.mxu0 0
    %1991 = vmatpush1.bf16.msra.mxu0 0
    %1992 = vmatprep.mubr.bf16.mxu0 0
    %1993 = vmatmul.mubr.bf16.gmra.mrb[0].mxu0 %v1767
    %v1994 = vpop.f32.mrb[0].mxu0
    %v1995 = vadd.f32 0.0, %v1994
    %v1996 = vpop.f32.mrb[0].mxu0
    %v1997 = vadd.f32 0.0, %v1996
    %v1998 = vpop.f32.mrb[0].mxu0
    %v1999 = vpop.f32.mrb[0].mxu0
    %2000 = vdwg.mxu0
    %2001 = vmatprep.subr.bf16.mxu0 %v1899
    %2002 = vmatpush1.bf16.msra.mxu0 %v1898
    %2003 = vmatprep.subr.bf16.mxu0 %v1903
    %2004 = vmatpush1.bf16.msra.mxu0 %v1902
    %2005 = vmatprep.subr.bf16.mxu0 %v1907
    %2006 = vmatpush1.bf16.msra.mxu0 %v1906
    %2007 = vmatprep.subr.bf16.mxu0 %v1911
    %2008 = vmatpush1.bf16.msra.mxu0 %v1910
    %2009 = vmatprep.subr.bf16.mxu0 %v1915
    %2010 = vmatpush1.bf16.msra.mxu0 %v1914
    %2011 = vmatprep.subr.bf16.mxu0 %v1919
    %2012 = vmatpush1.bf16.msra.mxu0 %v1918
    %2013 = vmatprep.subr.bf16.mxu0 %v1923
    %2014 = vmatpush1.bf16.msra.mxu0 %v1922
    %2015 = vmatprep.subr.bf16.mxu0 %v1927
    %2016 = vmatpush1.bf16.msra.mxu0 %v1926
    %2017 = vmatprep.subr.bf16.mxu0 0
    %2018 = vmatpush1.bf16.msra.mxu0 0
    %2019 = vmatprep.subr.bf16.mxu0 0
    %2020 = vmatpush1.bf16.msra.mxu0 0
    %2021 = vmatprep.subr.bf16.mxu0 0
    %2022 = vmatpush1.bf16.msra.mxu0 0
    %2023 = vmatprep.subr.bf16.mxu0 0
    %2024 = vmatpush1.bf16.msra.mxu0 0
    %2025 = vmatprep.subr.bf16.mxu0 0
    %2026 = vmatpush1.bf16.msra.mxu0 0
    %2027 = vmatprep.subr.bf16.mxu0 0
    %2028 = vmatpush1.bf16.msra.mxu0 0
    %2029 = vmatprep.subr.bf16.mxu0 0
    %2030 = vmatpush1.bf16.msra.mxu0 0
    %2031 = vmatprep.subr.bf16.mxu0 0
    %2032 = vmatpush1.bf16.msra.mxu0 0
    %2033 = vmatprep.mubr.bf16.mxu0 0
    %2034 = vmatmul.mubr.bf16.gmra.mrb[0].mxu0 %v1767
    %v2035 = vpop.f32.mrb[0].mxu0
    %v2036 = vadd.f32 0.0, %v2035
    %v2037 = vpop.f32.mrb[0].mxu0
    %v2038 = vadd.f32 0.0, %v2037
    %v2039 = vpop.f32.mrb[0].mxu0
    %v2040 = vpop.f32.mrb[0].mxu0
    %2041 = vdwg.mxu0
    %v2042 = vadd.f32 %v1763, %v1995
    %v2043 = vadd.f32 %v1764, %v1997
    %v2044 = vadd.f32 %v1765, %v2036
    %v2045 = vadd.f32 %v1766, %v2038
    %vm2046 = vcmp.gt.s32.totalorder %v72, 1
    %v2047 = vxor.u32 %v1751, 2147483648
    %v2048 = vmul.f32 %v2047, 1.442695
    %v2049 = vpow.pop %v2048
    %v2050 = vadd.f32 %v2049, 1.0
    %v2051 = vrcp.pop %v2050
    %v2052 = vmul.f32 1.0, %v2051
    %v2053 = vxor.u32 %v1752, 2147483648
    %v2054 = vmul.f32 %v2053, 1.442695
    %v2055 = vpow.pop %v2054
    %v2056 = vadd.f32 %v2055, 1.0
    %v2057 = vrcp.pop %v2056
    %v2058 = vmul.f32 1.0, %v2057
    %v2059 = vtanh.pop %v1753
    %v2060 = vxor.u32 %v1754, 2147483648
    %v2061 = vmul.f32 %v2060, 1.442695
    %v2062 = vpow.pop %v2061
    %v2063 = vadd.f32 %v2062, 1.0
    %v2064 = vrcp.pop %v2063
    %v2065 = vmul.f32 1.0, %v2064
    %v2066 = vmul.f32 %v2058, %v1413
    %v2067 = vmul.f32 %v2052, %v2059
    %v2068 = vadd.f32 %v2066, %v2067
    %v2069 = vtanh.pop %v2068
    %v2070 = vmul.f32 %v2065, %v2069
    %v2071 = vsel %vm2046, 1, 0
    %2072 = vset.pattern.permute.xlu0 0
    %2073 = vperm.xlu0 %2072, %v2071
    %v2074 = vpop.permute.xlu0 %2073
    %vm2075 = vcmp.eq.s32.totalorder %v2074, 1
    %v2076 = vsel %vm2075, %v2070, %v1412
    %v2077 = vsel %vm2075, %v2068, %v1413
    %vm2078 = vcmp.gt.s32.totalorder %v72, 6
    %v2079 = vxor.u32 %v2042, 2147483648
    %v2080 = vmul.f32 %v2079, 1.442695
    %v2081 = vpow.pop %v2080
    %v2082 = vadd.f32 %v2081, 1.0
    %v2083 = vrcp.pop %v2082
    %v2084 = vmul.f32 1.0, %v2083
    %v2085 = vxor.u32 %v2043, 2147483648
    %v2086 = vmul.f32 %v2085, 1.442695
    %v2087 = vpow.pop %v2086
    %v2088 = vadd.f32 %v2087, 1.0
    %v2089 = vrcp.pop %v2088
    %v2090 = vmul.f32 1.0, %v2089
    %v2091 = vtanh.pop %v2044
    %v2092 = vxor.u32 %v2045, 2147483648
    %v2093 = vmul.f32 %v2092, 1.442695
    %v2094 = vpow.pop %v2093
    %v2095 = vadd.f32 %v2094, 1.0
    %v2096 = vrcp.pop %v2095
    %v2097 = vmul.f32 1.0, %v2096
    %v2098 = vmul.f32 %v2090, %v1445
    %v2099 = vmul.f32 %v2084, %v2091
    %v2100 = vadd.f32 %v2098, %v2099
    %v2101 = vtanh.pop %v2100
    %v2102 = vmul.f32 %v2097, %v2101
    %v2103 = vsel %vm2078, 1, 0
    %2104 = vset.pattern.permute.xlu0 0
    %2105 = vperm.xlu0 %2104, %v2103
    %v2106 = vpop.permute.xlu0 %2105
    %vm2107 = vcmp.eq.s32.totalorder %v2106, 1
    %v2108 = vsel %vm2107, %v2102, %v1444
    %v2109 = vsel %vm2107, %v2100, %v1445
    %v2110 = vld [vmem:[#allocation10 + $0x8] sm:$0xff]
    %v2111 = vsel %vm2075, %v2070, 0.0
    %v2112 = vadd.f32 %v2110, %v2111
    %2113 = vst [vmem:[#allocation10 + $0x8] sm:$0xff] %v2112
    %v2114 = vld [vmem:[#allocation10 + $0x30] sm:$0xff]
    %v2115 = vsel %vm2107, %v2102, 0.0
    %v2116 = vadd.f32 %v2114, %v2115
    %2117 = vst [vmem:[#allocation10 + $0x30] sm:$0xff] %v2116
    %v2118 = vld [vmem:[#allocation2 + $0x20] sm:$0xf]
    %v2119 = vld [vmem:[#allocation2 + $0x28] sm:$0xf]
    %v2120 = vld [vmem:[#allocation2 + $0x30] sm:$0xf]
    %v2121 = vld [vmem:[#allocation2 + $0x38] sm:$0xf]
    %v2122 = vunpack.c.l.bf16 %v2118
    %v2123 = vunpack.c.l.bf16 %v2119
    %v2124 = vunpack.c.l.bf16 %v2120
    %v2125 = vunpack.c.l.bf16 %v2121
    %v2126 = vadd.f32 %v2122, %v78
    %v2127 = vadd.f32 %v2123, %v82
    %v2128 = vadd.f32 %v2124, %v86
    %v2129 = vadd.f32 %v2125, %v90
    %v2130 = vpack.c.bf16 %v2076, %v2076
    %v2131 = vld [vmem:[#allocation7] sm:$0xff]
    %v2132 = vld [vmem:[#allocation7 + $0x8] sm:$0xff]
    %v2133 = vld [vmem:[#allocation7 + $0x10] sm:$0xff]
    %v2134 = vld [vmem:[#allocation7 + $0x18] sm:$0xff]
    %v2135 = vld [vmem:[#allocation7 + $0x20] sm:$0xff]
    %v2136 = vld [vmem:[#allocation7 + $0x28] sm:$0xff]
    %v2137 = vld [vmem:[#allocation7 + $0x30] sm:$0xff]
    %v2138 = vld [vmem:[#allocation7 + $0x38] sm:$0xff]
    %v2139 = vld [vmem:[#allocation7 + $0x40] sm:$0xff]
    %v2140 = vld [vmem:[#allocation7 + $0x48] sm:$0xff]
    %v2141 = vld [vmem:[#allocation7 + $0x50] sm:$0xff]
    %v2142 = vld [vmem:[#allocation7 + $0x58] sm:$0xff]
    %v2143 = vld [vmem:[#allocation7 + $0x60] sm:$0xff]
    %v2144 = vld [vmem:[#allocation7 + $0x68] sm:$0xff]
    %v2145 = vld [vmem:[#allocation7 + $0x70] sm:$0xff]
    %v2146 = vld [vmem:[#allocation7 + $0x78] sm:$0xff]
    %v2147 = vld [vmem:[#allocation7 + $0x80] sm:$0xff]
    %v2148 = vld [vmem:[#allocation7 + $0x88] sm:$0xff]
    %v2149 = vld [vmem:[#allocation7 + $0x90] sm:$0xff]
    %v2150 = vld [vmem:[#allocation7 + $0x98] sm:$0xff]
    %v2151 = vld [vmem:[#allocation7 + $0xa0] sm:$0xff]
    %v2152 = vld [vmem:[#allocation7 + $0xa8] sm:$0xff]
    %v2153 = vld [vmem:[#allocation7 + $0xb0] sm:$0xff]
    %v2154 = vld [vmem:[#allocation7 + $0xb8] sm:$0xff]
    %v2155 = vld [vmem:[#allocation7 + $0xc0] sm:$0xff]
    %v2156 = vld [vmem:[#allocation7 + $0xc8] sm:$0xff]
    %v2157 = vld [vmem:[#allocation7 + $0xd0] sm:$0xff]
    %v2158 = vld [vmem:[#allocation7 + $0xd8] sm:$0xff]
    %v2159 = vld [vmem:[#allocation7 + $0xe0] sm:$0xff]
    %v2160 = vld [vmem:[#allocation7 + $0xe8] sm:$0xff]
    %v2161 = vld [vmem:[#allocation7 + $0xf0] sm:$0xff]
    %v2162 = vld [vmem:[#allocation7 + $0xf8] sm:$0xff]
    %v2195 = vunpack.c.l.b16 %v2131
    %v2196 = vunpack.c.h.b16 %v2131
    %v2197 = vunpack.c.l.b16 %v2132
    %v2198 = vunpack.c.h.b16 %v2132
    %v2199 = vunpack.c.l.b16 %v2133
    %v2200 = vunpack.c.h.b16 %v2133
    %v2201 = vunpack.c.l.b16 %v2134
    %v2202 = vunpack.c.h.b16 %v2134
    %v2203 = vunpack.c.l.b16 %v2135
    %v2204 = vunpack.c.h.b16 %v2135
    %v2205 = vunpack.c.l.b16 %v2136
    %v2206 = vunpack.c.h.b16 %v2136
    %v2207 = vunpack.c.l.b16 %v2137
    %v2208 = vunpack.c.h.b16 %v2137
    %v2209 = vunpack.c.l.b16 %v2138
    %v2210 = vunpack.c.h.b16 %v2138
    %v2211 = vunpack.c.l.b16 %v2139
    %v2212 = vunpack.c.h.b16 %v2139
    %v2213 = vunpack.c.l.b16 %v2140
    %v2214 = vunpack.c.h.b16 %v2140
    %v2215 = vunpack.c.l.b16 %v2141
    %v2216 = vunpack.c.h.b16 %v2141
    %v2217 = vunpack.c.l.b16 %v2142
    %v2218 = vunpack.c.h.b16 %v2142
    %v2219 = vunpack.c.l.b16 %v2143
    %v2220 = vunpack.c.h.b16 %v2143
    %v2221 = vunpack.c.l.b16 %v2144
    %v2222 = vunpack.c.h.b16 %v2144
    %v2223 = vunpack.c.l.b16 %v2145
    %v2224 = vunpack.c.h.b16 %v2145
    %v2225 = vunpack.c.l.b16 %v2146
    %v2226 = vunpack.c.h.b16 %v2146
    %v2227 = vunpack.c.l.b16 %v2147
    %v2228 = vunpack.c.h.b16 %v2147
    %v2229 = vunpack.c.l.b16 %v2148
    %v2230 = vunpack.c.h.b16 %v2148
    %v2231 = vunpack.c.l.b16 %v2149
    %v2232 = vunpack.c.h.b16 %v2149
    %v2233 = vunpack.c.l.b16 %v2150
    %v2234 = vunpack.c.h.b16 %v2150
    %v2235 = vunpack.c.l.b16 %v2151
    %v2236 = vunpack.c.h.b16 %v2151
    %v2237 = vunpack.c.l.b16 %v2152
    %v2238 = vunpack.c.h.b16 %v2152
    %v2239 = vunpack.c.l.b16 %v2153
    %v2240 = vunpack.c.h.b16 %v2153
    %v2241 = vunpack.c.l.b16 %v2154
    %v2242 = vunpack.c.h.b16 %v2154
    %v2243 = vunpack.c.l.b16 %v2155
    %v2244 = vunpack.c.h.b16 %v2155
    %v2245 = vunpack.c.l.b16 %v2156
    %v2246 = vunpack.c.h.b16 %v2156
    %v2247 = vunpack.c.l.b16 %v2157
    %v2248 = vunpack.c.h.b16 %v2157
    %v2249 = vunpack.c.l.b16 %v2158
    %v2250 = vunpack.c.h.b16 %v2158
    %v2251 = vunpack.c.l.b16 %v2159
    %v2252 = vunpack.c.h.b16 %v2159
    %v2253 = vunpack.c.l.b16 %v2160
    %v2254 = vunpack.c.h.b16 %v2160
    %v2255 = vunpack.c.l.b16 %v2161
    %v2256 = vunpack.c.h.b16 %v2161
    %v2257 = vunpack.c.l.b16 %v2162
    %v2258 = vunpack.c.h.b16 %v2162
    %v2259 = vpack.c.b16 %v2199, %v2195
    %v2260 = vpack.c.b16 %v2200, %v2196
    %v2261 = vpack.c.b16 %v2201, %v2197
    %v2262 = vpack.c.b16 %v2202, %v2198
    %v2263 = vpack.c.b16 %v2207, %v2203
    %v2264 = vpack.c.b16 %v2208, %v2204
    %v2265 = vpack.c.b16 %v2209, %v2205
    %v2266 = vpack.c.b16 %v2210, %v2206
    %v2267 = vpack.c.b16 %v2215, %v2211
    %v2268 = vpack.c.b16 %v2216, %v2212
    %v2269 = vpack.c.b16 %v2217, %v2213
    %v2270 = vpack.c.b16 %v2218, %v2214
    %v2271 = vpack.c.b16 %v2223, %v2219
    %v2272 = vpack.c.b16 %v2224, %v2220
    %v2273 = vpack.c.b16 %v2225, %v2221
    %v2274 = vpack.c.b16 %v2226, %v2222
    %v2275 = vpack.c.b16 %v2231, %v2227
    %v2276 = vpack.c.b16 %v2232, %v2228
    %v2277 = vpack.c.b16 %v2233, %v2229
    %v2278 = vpack.c.b16 %v2234, %v2230
    %v2279 = vpack.c.b16 %v2239, %v2235
    %v2280 = vpack.c.b16 %v2240, %v2236
    %v2281 = vpack.c.b16 %v2241, %v2237
    %v2282 = vpack.c.b16 %v2242, %v2238
    %v2283 = vpack.c.b16 %v2247, %v2243
    %v2284 = vpack.c.b16 %v2248, %v2244
    %v2285 = vpack.c.b16 %v2249, %v2245
    %v2286 = vpack.c.b16 %v2250, %v2246
    %v2287 = vpack.c.b16 %v2255, %v2251
    %v2288 = vpack.c.b16 %v2256, %v2252
    %v2289 = vpack.c.b16 %v2257, %v2253
    %v2290 = vpack.c.b16 %v2258, %v2254
    %2323 = vmatprep.subr.bf16.mxu0 %v2260
    %2324 = vmatpush1.bf16.msra.mxu0 %v2259
    %2325 = vmatprep.subr.bf16.mxu0 %v2264
    %2326 = vmatpush1.bf16.msra.mxu0 %v2263
    %2327 = vmatprep.subr.bf16.mxu0 %v2268
    %2328 = vmatpush1.bf16.msra.mxu0 %v2267
    %2329 = vmatprep.subr.bf16.mxu0 %v2272
    %2330 = vmatpush1.bf16.msra.mxu0 %v2271
    %2331 = vmatprep.subr.bf16.mxu0 %v2276
    %2332 = vmatpush1.bf16.msra.mxu0 %v2275
    %2333 = vmatprep.subr.bf16.mxu0 %v2280
    %2334 = vmatpush1.bf16.msra.mxu0 %v2279
    %2335 = vmatprep.subr.bf16.mxu0 %v2284
    %2336 = vmatpush1.bf16.msra.mxu0 %v2283
    %2337 = vmatprep.subr.bf16.mxu0 %v2288
    %2338 = vmatpush1.bf16.msra.mxu0 %v2287
    %2339 = vmatprep.subr.bf16.mxu0 0
    %2340 = vmatpush1.bf16.msra.mxu0 0
    %2341 = vmatprep.subr.bf16.mxu0 0
    %2342 = vmatpush1.bf16.msra.mxu0 0
    %2343 = vmatprep.subr.bf16.mxu0 0
    %2344 = vmatpush1.bf16.msra.mxu0 0
    %2345 = vmatprep.subr.bf16.mxu0 0
    %2346 = vmatpush1.bf16.msra.mxu0 0
    %2347 = vmatprep.subr.bf16.mxu0 0
    %2348 = vmatpush1.bf16.msra.mxu0 0
    %2349 = vmatprep.subr.bf16.mxu0 0
    %2350 = vmatpush1.bf16.msra.mxu0 0
    %2351 = vmatprep.subr.bf16.mxu0 0
    %2352 = vmatpush1.bf16.msra.mxu0 0
    %2353 = vmatprep.subr.bf16.mxu0 0
    %2354 = vmatpush1.bf16.msra.mxu0 0
    %2355 = vmatprep.mubr.bf16.mxu0 0
    %2356 = vmatmul.mubr.bf16.gmra.mrb[0].mxu0 %v2130
    %v2357 = vpop.f32.mrb[0].mxu0
    %v2358 = vadd.f32 0.0, %v2357
    %v2359 = vpop.f32.mrb[0].mxu0
    %v2360 = vadd.f32 0.0, %v2359
    %v2361 = vpop.f32.mrb[0].mxu0
    %v2362 = vpop.f32.mrb[0].mxu0
    %2363 = vdwg.mxu0
    %2364 = vmatprep.subr.bf16.mxu0 %v2262
    %2365 = vmatpush1.bf16.msra.mxu0 %v2261
    %2366 = vmatprep.subr.bf16.mxu0 %v2266
    %2367 = vmatpush1.bf16.msra.mxu0 %v2265
    %2368 = vmatprep.subr.bf16.mxu0 %v2270
    %2369 = vmatpush1.bf16.msra.mxu0 %v2269
    %2370 = vmatprep.subr.bf16.mxu0 %v2274
    %2371 = vmatpush1.bf16.msra.mxu0 %v2273
    %2372 = vmatprep.subr.bf16.mxu0 %v2278
    %2373 = vmatpush1.bf16.msra.mxu0 %v2277
    %2374 = vmatprep.subr.bf16.mxu0 %v2282
    %2375 = vmatpush1.bf16.msra.mxu0 %v2281
    %2376 = vmatprep.subr.bf16.mxu0 %v2286
    %2377 = vmatpush1.bf16.msra.mxu0 %v2285
    %2378 = vmatprep.subr.bf16.mxu0 %v2290
    %2379 = vmatpush1.bf16.msra.mxu0 %v2289
    %2380 = vmatprep.subr.bf16.mxu0 0
    %2381 = vmatpush1.bf16.msra.mxu0 0
    %2382 = vmatprep.subr.bf16.mxu0 0
    %2383 = vmatpush1.bf16.msra.mxu0 0
    %2384 = vmatprep.subr.bf16.mxu0 0
    %2385 = vmatpush1.bf16.msra.mxu0 0
    %2386 = vmatprep.subr.bf16.mxu0 0
    %2387 = vmatpush1.bf16.msra.mxu0 0
    %2388 = vmatprep.subr.bf16.mxu0 0
    %2389 = vmatpush1.bf16.msra.mxu0 0
    %2390 = vmatprep.subr.bf16.mxu0 0
    %2391 = vmatpush1.bf16.msra.mxu0 0
    %2392 = vmatprep.subr.bf16.mxu0 0
    %2393 = vmatpush1.bf16.msra.mxu0 0
    %2394 = vmatprep.subr.bf16.mxu0 0
    %2395 = vmatpush1.bf16.msra.mxu0 0
    %2396 = vmatprep.mubr.bf16.mxu0 0
    %2397 = vmatmul.mubr.bf16.gmra.mrb[0].mxu0 %v2130
    %v2398 = vpop.f32.mrb[0].mxu0
    %v2399 = vadd.f32 0.0, %v2398
    %v2400 = vpop.f32.mrb[0].mxu0
    %v2401 = vadd.f32 0.0, %v2400
    %v2402 = vpop.f32.mrb[0].mxu0
    %v2403 = vpop.f32.mrb[0].mxu0
    %2404 = vdwg.mxu0
    %v2405 = vadd.f32 %v2126, %v2358
    %v2406 = vadd.f32 %v2127, %v2360
    %v2407 = vadd.f32 %v2128, %v2399
    %v2408 = vadd.f32 %v2129, %v2401
    %v2409 = vld [vmem:[#allocation3 + $0x40] sm:$0xf0]
    %v2410 = vld [vmem:[#allocation3 + $0x48] sm:$0xf0]
    %v2411 = vld [vmem:[#allocation3 + $0x50] sm:$0xf0]
    %v2412 = vld [vmem:[#allocation3 + $0x58] sm:$0xf0]
    %v2417 = vrot.slane %v2409, 4
    %v2418 = vrot.slane %v2410, 4
    %v2419 = vrot.slane %v2411, 4
    %v2420 = vrot.slane %v2412, 4
    %v2425 = vunpack.c.l.bf16 %v2417
    %v2426 = vunpack.c.l.bf16 %v2418
    %v2427 = vunpack.c.l.bf16 %v2419
    %v2428 = vunpack.c.l.bf16 %v2420
    %v2429 = vadd.f32 %v2425, %v100
    %v2430 = vadd.f32 %v2426, %v104
    %v2431 = vadd.f32 %v2427, %v108
    %v2432 = vadd.f32 %v2428, %v112
    %v2433 = vpack.c.bf16 %v2108, %v2108
    %v2434 = vld [vmem:[#allocation9] sm:$0xff]
    %v2435 = vld [vmem:[#allocation9 + $0x8] sm:$0xff]
    %v2436 = vld [vmem:[#allocation9 + $0x10] sm:$0xff]
    %v2437 = vld [vmem:[#allocation9 + $0x18] sm:$0xff]
    %v2438 = vld [vmem:[#allocation9 + $0x20] sm:$0xff]
    %v2439 = vld [vmem:[#allocation9 + $0x28] sm:$0xff]
    %v2440 = vld [vmem:[#allocation9 + $0x30] sm:$0xff]
    %v2441 = vld [vmem:[#allocation9 + $0x38] sm:$0xff]
    %v2442 = vld [vmem:[#allocation9 + $0x40] sm:$0xff]
    %v2443 = vld [vmem:[#allocation9 + $0x48] sm:$0xff]
    %v2444 = vld [vmem:[#allocation9 + $0x50] sm:$0xff]
    %v2445 = vld [vmem:[#allocation9 + $0x58] sm:$0xff]
    %v2446 = vld [vmem:[#allocation9 + $0x60] sm:$0xff]
    %v2447 = vld [vmem:[#allocation9 + $0x68] sm:$0xff]
    %v2448 = vld [vmem:[#allocation9 + $0x70] sm:$0xff]
    %v2449 = vld [vmem:[#allocation9 + $0x78] sm:$0xff]
    %v2450 = vld [vmem:[#allocation9 + $0x80] sm:$0xff]
    %v2451 = vld [vmem:[#allocation9 + $0x88] sm:$0xff]
    %v2452 = vld [vmem:[#allocation9 + $0x90] sm:$0xff]
    %v2453 = vld [vmem:[#allocation9 + $0x98] sm:$0xff]
    %v2454 = vld [vmem:[#allocation9 + $0xa0] sm:$0xff]
    %v2455 = vld [vmem:[#allocation9 + $0xa8] sm:$0xff]
    %v2456 = vld [vmem:[#allocation9 + $0xb0] sm:$0xff]
    %v2457 = vld [vmem:[#allocation9 + $0xb8] sm:$0xff]
    %v2458 = vld [vmem:[#allocation9 + $0xc0] sm:$0xff]
    %v2459 = vld [vmem:[#allocation9 + $0xc8] sm:$0xff]
    %v2460 = vld [vmem:[#allocation9 + $0xd0] sm:$0xff]
    %v2461 = vld [vmem:[#allocation9 + $0xd8] sm:$0xff]
    %v2462 = vld [vmem:[#allocation9 + $0xe0] sm:$0xff]
    %v2463 = vld [vmem:[#allocation9 + $0xe8] sm:$0xff]
    %v2464 = vld [vmem:[#allocation9 + $0xf0] sm:$0xff]
    %v2465 = vld [vmem:[#allocation9 + $0xf8] sm:$0xff]
    %v2498 = vunpack.c.l.b16 %v2434
    %v2499 = vunpack.c.h.b16 %v2434
    %v2500 = vunpack.c.l.b16 %v2435
    %v2501 = vunpack.c.h.b16 %v2435
    %v2502 = vunpack.c.l.b16 %v2436
    %v2503 = vunpack.c.h.b16 %v2436
    %v2504 = vunpack.c.l.b16 %v2437
    %v2505 = vunpack.c.h.b16 %v2437
    %v2506 = vunpack.c.l.b16 %v2438
    %v2507 = vunpack.c.h.b16 %v2438
    %v2508 = vunpack.c.l.b16 %v2439
    %v2509 = vunpack.c.h.b16 %v2439
    %v2510 = vunpack.c.l.b16 %v2440
    %v2511 = vunpack.c.h.b16 %v2440
    %v2512 = vunpack.c.l.b16 %v2441
    %v2513 = vunpack.c.h.b16 %v2441
    %v2514 = vunpack.c.l.b16 %v2442
    %v2515 = vunpack.c.h.b16 %v2442
    %v2516 = vunpack.c.l.b16 %v2443
    %v2517 = vunpack.c.h.b16 %v2443
    %v2518 = vunpack.c.l.b16 %v2444
    %v2519 = vunpack.c.h.b16 %v2444
    %v2520 = vunpack.c.l.b16 %v2445
    %v2521 = vunpack.c.h.b16 %v2445
    %v2522 = vunpack.c.l.b16 %v2446
    %v2523 = vunpack.c.h.b16 %v2446
    %v2524 = vunpack.c.l.b16 %v2447
    %v2525 = vunpack.c.h.b16 %v2447
    %v2526 = vunpack.c.l.b16 %v2448
    %v2527 = vunpack.c.h.b16 %v2448
    %v2528 = vunpack.c.l.b16 %v2449
    %v2529 = vunpack.c.h.b16 %v2449
    %v2530 = vunpack.c.l.b16 %v2450
    %v2531 = vunpack.c.h.b16 %v2450
    %v2532 = vunpack.c.l.b16 %v2451
    %v2533 = vunpack.c.h.b16 %v2451
    %v2534 = vunpack.c.l.b16 %v2452
    %v2535 = vunpack.c.h.b16 %v2452
    %v2536 = vunpack.c.l.b16 %v2453
    %v2537 = vunpack.c.h.b16 %v2453
    %v2538 = vunpack.c.l.b16 %v2454
    %v2539 = vunpack.c.h.b16 %v2454
    %v2540 = vunpack.c.l.b16 %v2455
    %v2541 = vunpack.c.h.b16 %v2455
    %v2542 = vunpack.c.l.b16 %v2456
    %v2543 = vunpack.c.h.b16 %v2456
    %v2544 = vunpack.c.l.b16 %v2457
    %v2545 = vunpack.c.h.b16 %v2457
    %v2546 = vunpack.c.l.b16 %v2458
    %v2547 = vunpack.c.h.b16 %v2458
    %v2548 = vunpack.c.l.b16 %v2459
    %v2549 = vunpack.c.h.b16 %v2459
    %v2550 = vunpack.c.l.b16 %v2460
    %v2551 = vunpack.c.h.b16 %v2460
    %v2552 = vunpack.c.l.b16 %v2461
    %v2553 = vunpack.c.h.b16 %v2461
    %v2554 = vunpack.c.l.b16 %v2462
    %v2555 = vunpack.c.h.b16 %v2462
    %v2556 = vunpack.c.l.b16 %v2463
    %v2557 = vunpack.c.h.b16 %v2463
    %v2558 = vunpack.c.l.b16 %v2464
    %v2559 = vunpack.c.h.b16 %v2464
    %v2560 = vunpack.c.l.b16 %v2465
    %v2561 = vunpack.c.h.b16 %v2465
    %v2562 = vpack.c.b16 %v2502, %v2498
    %v2563 = vpack.c.b16 %v2503, %v2499
    %v2564 = vpack.c.b16 %v2504, %v2500
    %v2565 = vpack.c.b16 %v2505, %v2501
    %v2566 = vpack.c.b16 %v2510, %v2506
    %v2567 = vpack.c.b16 %v2511, %v2507
    %v2568 = vpack.c.b16 %v2512, %v2508
    %v2569 = vpack.c.b16 %v2513, %v2509
    %v2570 = vpack.c.b16 %v2518, %v2514
    %v2571 = vpack.c.b16 %v2519, %v2515
    %v2572 = vpack.c.b16 %v2520, %v2516
    %v2573 = vpack.c.b16 %v2521, %v2517
    %v2574 = vpack.c.b16 %v2526, %v2522
    %v2575 = vpack.c.b16 %v2527, %v2523
    %v2576 = vpack.c.b16 %v2528, %v2524
    %v2577 = vpack.c.b16 %v2529, %v2525
    %v2578 = vpack.c.b16 %v2534, %v2530
    %v2579 = vpack.c.b16 %v2535, %v2531
    %v2580 = vpack.c.b16 %v2536, %v2532
    %v2581 = vpack.c.b16 %v2537, %v2533
    %v2582 = vpack.c.b16 %v2542, %v2538
    %v2583 = vpack.c.b16 %v2543, %v2539
    %v2584 = vpack.c.b16 %v2544, %v2540
    %v2585 = vpack.c.b16 %v2545, %v2541
    %v2586 = vpack.c.b16 %v2550, %v2546
    %v2587 = vpack.c.b16 %v2551, %v2547
    %v2588 = vpack.c.b16 %v2552, %v2548
    %v2589 = vpack.c.b16 %v2553, %v2549
    %v2590 = vpack.c.b16 %v2558, %v2554
    %v2591 = vpack.c.b16 %v2559, %v2555
    %v2592 = vpack.c.b16 %v2560, %v2556
    %v2593 = vpack.c.b16 %v2561, %v2557
    %2626 = vmatprep.subr.bf16.mxu0 %v2563
    %2627 = vmatpush1.bf16.msra.mxu0 %v2562
    %2628 = vmatprep.subr.bf16.mxu0 %v2567
    %2629 = vmatpush1.bf16.msra.mxu0 %v2566
    %2630 = vmatprep.subr.bf16.mxu0 %v2571
    %2631 = vmatpush1.bf16.msra.mxu0 %v2570
    %2632 = vmatprep.subr.bf16.mxu0 %v2575
    %2633 = vmatpush1.bf16.msra.mxu0 %v2574
    %2634 = vmatprep.subr.bf16.mxu0 %v2579
    %2635 = vmatpush1.bf16.msra.mxu0 %v2578
    %2636 = vmatprep.subr.bf16.mxu0 %v2583
    %2637 = vmatpush1.bf16.msra.mxu0 %v2582
    %2638 = vmatprep.subr.bf16.mxu0 %v2587
    %2639 = vmatpush1.bf16.msra.mxu0 %v2586
    %2640 = vmatprep.subr.bf16.mxu0 %v2591
    %2641 = vmatpush1.bf16.msra.mxu0 %v2590
    %2642 = vmatprep.subr.bf16.mxu0 0
    %2643 = vmatpush1.bf16.msra.mxu0 0
    %2644 = vmatprep.subr.bf16.mxu0 0
    %2645 = vmatpush1.bf16.msra.mxu0 0
    %2646 = vmatprep.subr.bf16.mxu0 0
    %2647 = vmatpush1.bf16.msra.mxu0 0
    %2648 = vmatprep.subr.bf16.mxu0 0
    %2649 = vmatpush1.bf16.msra.mxu0 0
    %2650 = vmatprep.subr.bf16.mxu0 0
    %2651 = vmatpush1.bf16.msra.mxu0 0
    %2652 = vmatprep.subr.bf16.mxu0 0
    %2653 = vmatpush1.bf16.msra.mxu0 0
    %2654 = vmatprep.subr.bf16.mxu0 0
    %2655 = vmatpush1.bf16.msra.mxu0 0
    %2656 = vmatprep.subr.bf16.mxu0 0
    %2657 = vmatpush1.bf16.msra.mxu0 0
    %2658 = vmatprep.mubr.bf16.mxu0 0
    %2659 = vmatmul.mubr.bf16.gmra.mrb[0].mxu0 %v2433
    %v2660 = vpop.f32.mrb[0].mxu0
    %v2661 = vadd.f32 0.0, %v2660
    %v2662 = vpop.f32.mrb[0].mxu0
    %v2663 = vadd.f32 0.0, %v2662
    %v2664 = vpop.f32.mrb[0].mxu0
    %v2665 = vpop.f32.mrb[0].mxu0
    %2666 = vdwg.mxu0
    %2667 = vmatprep.subr.bf16.mxu0 %v2565
    %2668 = vmatpush1.bf16.msra.mxu0 %v2564
    %2669 = vmatprep.subr.bf16.mxu0 %v2569
    %2670 = vmatpush1.bf16.msra.mxu0 %v2568
    %2671 = vmatprep.subr.bf16.mxu0 %v2573
    %2672 = vmatpush1.bf16.msra.mxu0 %v2572
    %2673 = vmatprep.subr.bf16.mxu0 %v2577
    %2674 = vmatpush1.bf16.msra.mxu0 %v2576
    %2675 = vmatprep.subr.bf16.mxu0 %v2581
    %2676 = vmatpush1.bf16.msra.mxu0 %v2580
    %2677 = vmatprep.subr.bf16.mxu0 %v2585
    %2678 = vmatpush1.bf16.msra.mxu0 %v2584
    %2679 = vmatprep.subr.bf16.mxu0 %v2589
    %2680 = vmatpush1.bf16.msra.mxu0 %v2588
    %2681 = vmatprep.subr.bf16.mxu0 %v2593
    %2682 = vmatpush1.bf16.msra.mxu0 %v2592
    %2683 = vmatprep.subr.bf16.mxu0 0
    %2684 = vmatpush1.bf16.msra.mxu0 0
    %2685 = vmatprep.subr.bf16.mxu0 0
    %2686 = vmatpush1.bf16.msra.mxu0 0
    %2687 = vmatprep.subr.bf16.mxu0 0
    %2688 = vmatpush1.bf16.msra.mxu0 0
    %2689 = vmatprep.subr.bf16.mxu0 0
    %2690 = vmatpush1.bf16.msra.mxu0 0
    %2691 = vmatprep.subr.bf16.mxu0 0
    %2692 = vmatpush1.bf16.msra.mxu0 0
    %2693 = vmatprep.subr.bf16.mxu0 0
    %2694 = vmatpush1.bf16.msra.mxu0 0
    %2695 = vmatprep.subr.bf16.mxu0 0
    %2696 = vmatpush1.bf16.msra.mxu0 0
    %2697 = vmatprep.subr.bf16.mxu0 0
    %2698 = vmatpush1.bf16.msra.mxu0 0
    %2699 = vmatprep.mubr.bf16.mxu0 0
    %2700 = vmatmul.mubr.bf16.gmra.mrb[0].mxu0 %v2433
    %v2701 = vpop.f32.mrb[0].mxu0
    %v2702 = vadd.f32 0.0, %v2701
    %v2703 = vpop.f32.mrb[0].mxu0
    %v2704 = vadd.f32 0.0, %v2703
    %v2705 = vpop.f32.mrb[0].mxu0
    %v2706 = vpop.f32.mrb[0].mxu0
    %2707 = vdwg.mxu0
    %v2708 = vadd.f32 %v2429, %v2661
    %v2709 = vadd.f32 %v2430, %v2663
    %v2710 = vadd.f32 %v2431, %v2702
    %v2711 = vadd.f32 %v2432, %v2704
    %vm2712 = vcmp.gt.s32.totalorder %v72, 2
    %v2713 = vxor.u32 %v2405, 2147483648
    %v2714 = vmul.f32 %v2713, 1.442695
    %v2715 = vpow.pop %v2714
    %v2716 = vadd.f32 %v2715, 1.0
    %v2717 = vrcp.pop %v2716
    %v2718 = vmul.f32 1.0, %v2717
    %v2719 = vxor.u32 %v2406, 2147483648
    %v2720 = vmul.f32 %v2719, 1.442695
    %v2721 = vpow.pop %v2720
    %v2722 = vadd.f32 %v2721, 1.0
    %v2723 = vrcp.pop %v2722
    %v2724 = vmul.f32 1.0, %v2723
    %v2725 = vtanh.pop %v2407
    %v2726 = vxor.u32 %v2408, 2147483648
    %v2727 = vmul.f32 %v2726, 1.442695
    %v2728 = vpow.pop %v2727
    %v2729 = vadd.f32 %v2728, 1.0
    %v2730 = vrcp.pop %v2729
    %v2731 = vmul.f32 1.0, %v2730
    %v2732 = vmul.f32 %v2724, %v2077
    %v2733 = vmul.f32 %v2718, %v2725
    %v2734 = vadd.f32 %v2732, %v2733
    %v2735 = vtanh.pop %v2734
    %v2736 = vmul.f32 %v2731, %v2735
    %v2737 = vsel %vm2712, 1, 0
    %2738 = vset.pattern.permute.xlu0 0
    %2739 = vperm.xlu0 %2738, %v2737
    %v2740 = vpop.permute.xlu0 %2739
    %vm2741 = vcmp.eq.s32.totalorder %v2740, 1
    %v2742 = vsel %vm2741, %v2736, %v2076
    %v2743 = vsel %vm2741, %v2734, %v2077
    %vm2744 = vcmp.gt.s32.totalorder %v72, 5
    %v2745 = vxor.u32 %v2708, 2147483648
    %v2746 = vmul.f32 %v2745, 1.442695
    %v2747 = vpow.pop %v2746
    %v2748 = vadd.f32 %v2747, 1.0
    %v2749 = vrcp.pop %v2748
    %v2750 = vmul.f32 1.0, %v2749
    %v2751 = vxor.u32 %v2709, 2147483648
    %v2752 = vmul.f32 %v2751, 1.442695
    %v2753 = vpow.pop %v2752
    %v2754 = vadd.f32 %v2753, 1.0
    %v2755 = vrcp.pop %v2754
    %v2756 = vmul.f32 1.0, %v2755
    %v2757 = vtanh.pop %v2710
    %v2758 = vxor.u32 %v2711, 2147483648
    %v2759 = vmul.f32 %v2758, 1.442695
    %v2760 = vpow.pop %v2759
    %v2761 = vadd.f32 %v2760, 1.0
    %v2762 = vrcp.pop %v2761
    %v2763 = vmul.f32 1.0, %v2762
    %v2764 = vmul.f32 %v2756, %v2109
    %v2765 = vmul.f32 %v2750, %v2757
    %v2766 = vadd.f32 %v2764, %v2765
    %v2767 = vtanh.pop %v2766
    %v2768 = vmul.f32 %v2763, %v2767
    %v2769 = vsel %vm2744, 1, 0
    %2770 = vset.pattern.permute.xlu0 0
    %2771 = vperm.xlu0 %2770, %v2769
    %v2772 = vpop.permute.xlu0 %2771
    %vm2773 = vcmp.eq.s32.totalorder %v2772, 1
    %v2774 = vsel %vm2773, %v2768, %v2108
    %v2775 = vsel %vm2773, %v2766, %v2109
    %v2776 = vld [vmem:[#allocation10 + $0x10] sm:$0xff]
    %v2777 = vsel %vm2741, %v2736, 0.0
    %v2778 = vadd.f32 %v2776, %v2777
    %2779 = vst [vmem:[#allocation10 + $0x10] sm:$0xff] %v2778
    %v2780 = vld [vmem:[#allocation10 + $0x28] sm:$0xff]
    %v2781 = vsel %vm2773, %v2768, 0.0
    %v2782 = vadd.f32 %v2780, %v2781
    %2783 = vst [vmem:[#allocation10 + $0x28] sm:$0xff] %v2782
    %v2784 = vld [vmem:[#allocation2 + $0x20] sm:$0xf0]
    %v2785 = vld [vmem:[#allocation2 + $0x28] sm:$0xf0]
    %v2786 = vld [vmem:[#allocation2 + $0x30] sm:$0xf0]
    %v2787 = vld [vmem:[#allocation2 + $0x38] sm:$0xf0]
    %v2792 = vrot.slane %v2784, 4
    %v2793 = vrot.slane %v2785, 4
    %v2794 = vrot.slane %v2786, 4
    %v2795 = vrot.slane %v2787, 4
    %v2800 = vunpack.c.l.bf16 %v2792
    %v2801 = vunpack.c.l.bf16 %v2793
    %v2802 = vunpack.c.l.bf16 %v2794
    %v2803 = vunpack.c.l.bf16 %v2795
    %v2804 = vadd.f32 %v2800, %v78
    %v2805 = vadd.f32 %v2801, %v82
    %v2806 = vadd.f32 %v2802, %v86
    %v2807 = vadd.f32 %v2803, %v90
    %v2808 = vpack.c.bf16 %v2742, %v2742
    %v2809 = vld [vmem:[#allocation7] sm:$0xff]
    %v2810 = vld [vmem:[#allocation7 + $0x8] sm:$0xff]
    %v2811 = vld [vmem:[#allocation7 + $0x10] sm:$0xff]
    %v2812 = vld [vmem:[#allocation7 + $0x18] sm:$0xff]
    %v2813 = vld [vmem:[#allocation7 + $0x20] sm:$0xff]
    %v2814 = vld [vmem:[#allocation7 + $0x28] sm:$0xff]
    %v2815 = vld [vmem:[#allocation7 + $0x30] sm:$0xff]
    %v2816 = vld [vmem:[#allocation7 + $0x38] sm:$0xff]
    %v2817 = vld [vmem:[#allocation7 + $0x40] sm:$0xff]
    %v2818 = vld [vmem:[#allocation7 + $0x48] sm:$0xff]
    %v2819 = vld [vmem:[#allocation7 + $0x50] sm:$0xff]
    %v2820 = vld [vmem:[#allocation7 + $0x58] sm:$0xff]
    %v2821 = vld [vmem:[#allocation7 + $0x60] sm:$0xff]
    %v2822 = vld [vmem:[#allocation7 + $0x68] sm:$0xff]
    %v2823 = vld [vmem:[#allocation7 + $0x70] sm:$0xff]
    %v2824 = vld [vmem:[#allocation7 + $0x78] sm:$0xff]
    %v2825 = vld [vmem:[#allocation7 + $0x80] sm:$0xff]
    %v2826 = vld [vmem:[#allocation7 + $0x88] sm:$0xff]
    %v2827 = vld [vmem:[#allocation7 + $0x90] sm:$0xff]
    %v2828 = vld [vmem:[#allocation7 + $0x98] sm:$0xff]
    %v2829 = vld [vmem:[#allocation7 + $0xa0] sm:$0xff]
    %v2830 = vld [vmem:[#allocation7 + $0xa8] sm:$0xff]
    %v2831 = vld [vmem:[#allocation7 + $0xb0] sm:$0xff]
    %v2832 = vld [vmem:[#allocation7 + $0xb8] sm:$0xff]
    %v2833 = vld [vmem:[#allocation7 + $0xc0] sm:$0xff]
    %v2834 = vld [vmem:[#allocation7 + $0xc8] sm:$0xff]
    %v2835 = vld [vmem:[#allocation7 + $0xd0] sm:$0xff]
    %v2836 = vld [vmem:[#allocation7 + $0xd8] sm:$0xff]
    %v2837 = vld [vmem:[#allocation7 + $0xe0] sm:$0xff]
    %v2838 = vld [vmem:[#allocation7 + $0xe8] sm:$0xff]
    %v2839 = vld [vmem:[#allocation7 + $0xf0] sm:$0xff]
    %v2840 = vld [vmem:[#allocation7 + $0xf8] sm:$0xff]
    %v2873 = vunpack.c.l.b16 %v2809
    %v2874 = vunpack.c.h.b16 %v2809
    %v2875 = vunpack.c.l.b16 %v2810
    %v2876 = vunpack.c.h.b16 %v2810
    %v2877 = vunpack.c.l.b16 %v2811
    %v2878 = vunpack.c.h.b16 %v2811
    %v2879 = vunpack.c.l.b16 %v2812
    %v2880 = vunpack.c.h.b16 %v2812
    %v2881 = vunpack.c.l.b16 %v2813
    %v2882 = vunpack.c.h.b16 %v2813
    %v2883 = vunpack.c.l.b16 %v2814
    %v2884 = vunpack.c.h.b16 %v2814
    %v2885 = vunpack.c.l.b16 %v2815
    %v2886 = vunpack.c.h.b16 %v2815
    %v2887 = vunpack.c.l.b16 %v2816
    %v2888 = vunpack.c.h.b16 %v2816
    %v2889 = vunpack.c.l.b16 %v2817
    %v2890 = vunpack.c.h.b16 %v2817
    %v2891 = vunpack.c.l.b16 %v2818
    %v2892 = vunpack.c.h.b16 %v2818
    %v2893 = vunpack.c.l.b16 %v2819
    %v2894 = vunpack.c.h.b16 %v2819
    %v2895 = vunpack.c.l.b16 %v2820
    %v2896 = vunpack.c.h.b16 %v2820
    %v2897 = vunpack.c.l.b16 %v2821
    %v2898 = vunpack.c.h.b16 %v2821
    %v2899 = vunpack.c.l.b16 %v2822
    %v2900 = vunpack.c.h.b16 %v2822
    %v2901 = vunpack.c.l.b16 %v2823
    %v2902 = vunpack.c.h.b16 %v2823
    %v2903 = vunpack.c.l.b16 %v2824
    %v2904 = vunpack.c.h.b16 %v2824
    %v2905 = vunpack.c.l.b16 %v2825
    %v2906 = vunpack.c.h.b16 %v2825
    %v2907 = vunpack.c.l.b16 %v2826
    %v2908 = vunpack.c.h.b16 %v2826
    %v2909 = vunpack.c.l.b16 %v2827
    %v2910 = vunpack.c.h.b16 %v2827
    %v2911 = vunpack.c.l.b16 %v2828
    %v2912 = vunpack.c.h.b16 %v2828
    %v2913 = vunpack.c.l.b16 %v2829
    %v2914 = vunpack.c.h.b16 %v2829
    %v2915 = vunpack.c.l.b16 %v2830
    %v2916 = vunpack.c.h.b16 %v2830
    %v2917 = vunpack.c.l.b16 %v2831
    %v2918 = vunpack.c.h.b16 %v2831
    %v2919 = vunpack.c.l.b16 %v2832
    %v2920 = vunpack.c.h.b16 %v2832
    %v2921 = vunpack.c.l.b16 %v2833
    %v2922 = vunpack.c.h.b16 %v2833
    %v2923 = vunpack.c.l.b16 %v2834
    %v2924 = vunpack.c.h.b16 %v2834
    %v2925 = vunpack.c.l.b16 %v2835
    %v2926 = vunpack.c.h.b16 %v2835
    %v2927 = vunpack.c.l.b16 %v2836
    %v2928 = vunpack.c.h.b16 %v2836
    %v2929 = vunpack.c.l.b16 %v2837
    %v2930 = vunpack.c.h.b16 %v2837
    %v2931 = vunpack.c.l.b16 %v2838
    %v2932 = vunpack.c.h.b16 %v2838
    %v2933 = vunpack.c.l.b16 %v2839
    %v2934 = vunpack.c.h.b16 %v2839
    %v2935 = vunpack.c.l.b16 %v2840
    %v2936 = vunpack.c.h.b16 %v2840
    %v2937 = vpack.c.b16 %v2877, %v2873
    %v2938 = vpack.c.b16 %v2878, %v2874
    %v2939 = vpack.c.b16 %v2879, %v2875
    %v2940 = vpack.c.b16 %v2880, %v2876
    %v2941 = vpack.c.b16 %v2885, %v2881
    %v2942 = vpack.c.b16 %v2886, %v2882
    %v2943 = vpack.c.b16 %v2887, %v2883
    %v2944 = vpack.c.b16 %v2888, %v2884
    %v2945 = vpack.c.b16 %v2893, %v2889
    %v2946 = vpack.c.b16 %v2894, %v2890
    %v2947 = vpack.c.b16 %v2895, %v2891
    %v2948 = vpack.c.b16 %v2896, %v2892
    %v2949 = vpack.c.b16 %v2901, %v2897
    %v2950 = vpack.c.b16 %v2902, %v2898
    %v2951 = vpack.c.b16 %v2903, %v2899
    %v2952 = vpack.c.b16 %v2904, %v2900
    %v2953 = vpack.c.b16 %v2909, %v2905
    %v2954 = vpack.c.b16 %v2910, %v2906
    %v2955 = vpack.c.b16 %v2911, %v2907
    %v2956 = vpack.c.b16 %v2912, %v2908
    %v2957 = vpack.c.b16 %v2917, %v2913
    %v2958 = vpack.c.b16 %v2918, %v2914
    %v2959 = vpack.c.b16 %v2919, %v2915
    %v2960 = vpack.c.b16 %v2920, %v2916
    %v2961 = vpack.c.b16 %v2925, %v2921
    %v2962 = vpack.c.b16 %v2926, %v2922
    %v2963 = vpack.c.b16 %v2927, %v2923
    %v2964 = vpack.c.b16 %v2928, %v2924
    %v2965 = vpack.c.b16 %v2933, %v2929
    %v2966 = vpack.c.b16 %v2934, %v2930
    %v2967 = vpack.c.b16 %v2935, %v2931
    %v2968 = vpack.c.b16 %v2936, %v2932
    %3001 = vmatprep.subr.bf16.mxu0 %v2938
    %3002 = vmatpush1.bf16.msra.mxu0 %v2937
    %3003 = vmatprep.subr.bf16.mxu0 %v2942
    %3004 = vmatpush1.bf16.msra.mxu0 %v2941
    %3005 = vmatprep.subr.bf16.mxu0 %v2946
    %3006 = vmatpush1.bf16.msra.mxu0 %v2945
    %3007 = vmatprep.subr.bf16.mxu0 %v2950
    %3008 = vmatpush1.bf16.msra.mxu0 %v2949
    %3009 = vmatprep.subr.bf16.mxu0 %v2954
    %3010 = vmatpush1.bf16.msra.mxu0 %v2953
    %3011 = vmatprep.subr.bf16.mxu0 %v2958
    %3012 = vmatpush1.bf16.msra.mxu0 %v2957
    %3013 = vmatprep.subr.bf16.mxu0 %v2962
    %3014 = vmatpush1.bf16.msra.mxu0 %v2961
    %3015 = vmatprep.subr.bf16.mxu0 %v2966
    %3016 = vmatpush1.bf16.msra.mxu0 %v2965
    %3017 = vmatprep.subr.bf16.mxu0 0
    %3018 = vmatpush1.bf16.msra.mxu0 0
    %3019 = vmatprep.subr.bf16.mxu0 0
    %3020 = vmatpush1.bf16.msra.mxu0 0
    %3021 = vmatprep.subr.bf16.mxu0 0
    %3022 = vmatpush1.bf16.msra.mxu0 0
    %3023 = vmatprep.subr.bf16.mxu0 0
    %3024 = vmatpush1.bf16.msra.mxu0 0
    %3025 = vmatprep.subr.bf16.mxu0 0
    %3026 = vmatpush1.bf16.msra.mxu0 0
    %3027 = vmatprep.subr.bf16.mxu0 0
    %3028 = vmatpush1.bf16.msra.mxu0 0
    %3029 = vmatprep.subr.bf16.mxu0 0
    %3030 = vmatpush1.bf16.msra.mxu0 0
    %3031 = vmatprep.subr.bf16.mxu0 0
    %3032 = vmatpush1.bf16.msra.mxu0 0
    %3033 = vmatprep.mubr.bf16.mxu0 0
    %3034 = vmatmul.mubr.bf16.gmra.mrb[0].mxu0 %v2808
    %v3035 = vpop.f32.mrb[0].mxu0
    %v3036 = vadd.f32 0.0, %v3035
    %v3037 = vpop.f32.mrb[0].mxu0
    %v3038 = vadd.f32 0.0, %v3037
    %v3039 = vpop.f32.mrb[0].mxu0
    %v3040 = vpop.f32.mrb[0].mxu0
    %3041 = vdwg.mxu0
    %3042 = vmatprep.subr.bf16.mxu0 %v2940
    %3043 = vmatpush1.bf16.msra.mxu0 %v2939
    %3044 = vmatprep.subr.bf16.mxu0 %v2944
    %3045 = vmatpush1.bf16.msra.mxu0 %v2943
    %3046 = vmatprep.subr.bf16.mxu0 %v2948
    %3047 = vmatpush1.bf16.msra.mxu0 %v2947
    %3048 = vmatprep.subr.bf16.mxu0 %v2952
    %3049 = vmatpush1.bf16.msra.mxu0 %v2951
    %3050 = vmatprep.subr.bf16.mxu0 %v2956
    %3051 = vmatpush1.bf16.msra.mxu0 %v2955
    %3052 = vmatprep.subr.bf16.mxu0 %v2960
    %3053 = vmatpush1.bf16.msra.mxu0 %v2959
    %3054 = vmatprep.subr.bf16.mxu0 %v2964
    %3055 = vmatpush1.bf16.msra.mxu0 %v2963
    %3056 = vmatprep.subr.bf16.mxu0 %v2968
    %3057 = vmatpush1.bf16.msra.mxu0 %v2967
    %3058 = vmatprep.subr.bf16.mxu0 0
    %3059 = vmatpush1.bf16.msra.mxu0 0
    %3060 = vmatprep.subr.bf16.mxu0 0
    %3061 = vmatpush1.bf16.msra.mxu0 0
    %3062 = vmatprep.subr.bf16.mxu0 0
    %3063 = vmatpush1.bf16.msra.mxu0 0
    %3064 = vmatprep.subr.bf16.mxu0 0
    %3065 = vmatpush1.bf16.msra.mxu0 0
    %3066 = vmatprep.subr.bf16.mxu0 0
    %3067 = vmatpush1.bf16.msra.mxu0 0
    %3068 = vmatprep.subr.bf16.mxu0 0
    %3069 = vmatpush1.bf16.msra.mxu0 0
    %3070 = vmatprep.subr.bf16.mxu0 0
    %3071 = vmatpush1.bf16.msra.mxu0 0
    %3072 = vmatprep.subr.bf16.mxu0 0
    %3073 = vmatpush1.bf16.msra.mxu0 0
    %3074 = vmatprep.mubr.bf16.mxu0 0
    %3075 = vmatmul.mubr.bf16.gmra.mrb[0].mxu0 %v2808
    %v3076 = vpop.f32.mrb[0].mxu0
    %v3077 = vadd.f32 0.0, %v3076
    %v3078 = vpop.f32.mrb[0].mxu0
    %v3079 = vadd.f32 0.0, %v3078
    %v3080 = vpop.f32.mrb[0].mxu0
    %v3081 = vpop.f32.mrb[0].mxu0
    %3082 = vdwg.mxu0
    %v3083 = vadd.f32 %v2804, %v3036
    %v3084 = vadd.f32 %v2805, %v3038
    %v3085 = vadd.f32 %v2806, %v3077
    %v3086 = vadd.f32 %v2807, %v3079
    %v3087 = vld [vmem:[#allocation3 + $0x40] sm:$0xf]
    %v3088 = vld [vmem:[#allocation3 + $0x48] sm:$0xf]
    %v3089 = vld [vmem:[#allocation3 + $0x50] sm:$0xf]
    %v3090 = vld [vmem:[#allocation3 + $0x58] sm:$0xf]
    %v3091 = vunpack.c.l.bf16 %v3087
    %v3092 = vunpack.c.l.bf16 %v3088
    %v3093 = vunpack.c.l.bf16 %v3089
    %v3094 = vunpack.c.l.bf16 %v3090
    %v3095 = vadd.f32 %v3091, %v100
    %v3096 = vadd.f32 %v3092, %v104
    %v3097 = vadd.f32 %v3093, %v108
    %v3098 = vadd.f32 %v3094, %v112
    %v3099 = vpack.c.bf16 %v2774, %v2774
    %v3100 = vld [vmem:[#allocation9] sm:$0xff]
    %v3101 = vld [vmem:[#allocation9 + $0x8] sm:$0xff]
    %v3102 = vld [vmem:[#allocation9 + $0x10] sm:$0xff]
    %v3103 = vld [vmem:[#allocation9 + $0x18] sm:$0xff]
    %v3104 = vld [vmem:[#allocation9 + $0x20] sm:$0xff]
    %v3105 = vld [vmem:[#allocation9 + $0x28] sm:$0xff]
    %v3106 = vld [vmem:[#allocation9 + $0x30] sm:$0xff]
    %v3107 = vld [vmem:[#allocation9 + $0x38] sm:$0xff]
    %v3108 = vld [vmem:[#allocation9 + $0x40] sm:$0xff]
    %v3109 = vld [vmem:[#allocation9 + $0x48] sm:$0xff]
    %v3110 = vld [vmem:[#allocation9 + $0x50] sm:$0xff]
    %v3111 = vld [vmem:[#allocation9 + $0x58] sm:$0xff]
    %v3112 = vld [vmem:[#allocation9 + $0x60] sm:$0xff]
    %v3113 = vld [vmem:[#allocation9 + $0x68] sm:$0xff]
    %v3114 = vld [vmem:[#allocation9 + $0x70] sm:$0xff]
    %v3115 = vld [vmem:[#allocation9 + $0x78] sm:$0xff]
    %v3116 = vld [vmem:[#allocation9 + $0x80] sm:$0xff]
    %v3117 = vld [vmem:[#allocation9 + $0x88] sm:$0xff]
    %v3118 = vld [vmem:[#allocation9 + $0x90] sm:$0xff]
    %v3119 = vld [vmem:[#allocation9 + $0x98] sm:$0xff]
    %v3120 = vld [vmem:[#allocation9 + $0xa0] sm:$0xff]
    %v3121 = vld [vmem:[#allocation9 + $0xa8] sm:$0xff]
    %v3122 = vld [vmem:[#allocation9 + $0xb0] sm:$0xff]
    %v3123 = vld [vmem:[#allocation9 + $0xb8] sm:$0xff]
    %v3124 = vld [vmem:[#allocation9 + $0xc0] sm:$0xff]
    %v3125 = vld [vmem:[#allocation9 + $0xc8] sm:$0xff]
    %v3126 = vld [vmem:[#allocation9 + $0xd0] sm:$0xff]
    %v3127 = vld [vmem:[#allocation9 + $0xd8] sm:$0xff]
    %v3128 = vld [vmem:[#allocation9 + $0xe0] sm:$0xff]
    %v3129 = vld [vmem:[#allocation9 + $0xe8] sm:$0xff]
    %v3130 = vld [vmem:[#allocation9 + $0xf0] sm:$0xff]
    %v3131 = vld [vmem:[#allocation9 + $0xf8] sm:$0xff]
    %v3164 = vunpack.c.l.b16 %v3100
    %v3165 = vunpack.c.h.b16 %v3100
    %v3166 = vunpack.c.l.b16 %v3101
    %v3167 = vunpack.c.h.b16 %v3101
    %v3168 = vunpack.c.l.b16 %v3102
    %v3169 = vunpack.c.h.b16 %v3102
    %v3170 = vunpack.c.l.b16 %v3103
    %v3171 = vunpack.c.h.b16 %v3103
    %v3172 = vunpack.c.l.b16 %v3104
    %v3173 = vunpack.c.h.b16 %v3104
    %v3174 = vunpack.c.l.b16 %v3105
    %v3175 = vunpack.c.h.b16 %v3105
    %v3176 = vunpack.c.l.b16 %v3106
    %v3177 = vunpack.c.h.b16 %v3106
    %v3178 = vunpack.c.l.b16 %v3107
    %v3179 = vunpack.c.h.b16 %v3107
    %v3180 = vunpack.c.l.b16 %v3108
    %v3181 = vunpack.c.h.b16 %v3108
    %v3182 = vunpack.c.l.b16 %v3109
    %v3183 = vunpack.c.h.b16 %v3109
    %v3184 = vunpack.c.l.b16 %v3110
    %v3185 = vunpack.c.h.b16 %v3110
    %v3186 = vunpack.c.l.b16 %v3111
    %v3187 = vunpack.c.h.b16 %v3111
    %v3188 = vunpack.c.l.b16 %v3112
    %v3189 = vunpack.c.h.b16 %v3112
    %v3190 = vunpack.c.l.b16 %v3113
    %v3191 = vunpack.c.h.b16 %v3113
    %v3192 = vunpack.c.l.b16 %v3114
    %v3193 = vunpack.c.h.b16 %v3114
    %v3194 = vunpack.c.l.b16 %v3115
    %v3195 = vunpack.c.h.b16 %v3115
    %v3196 = vunpack.c.l.b16 %v3116
    %v3197 = vunpack.c.h.b16 %v3116
    %v3198 = vunpack.c.l.b16 %v3117
    %v3199 = vunpack.c.h.b16 %v3117
    %v3200 = vunpack.c.l.b16 %v3118
    %v3201 = vunpack.c.h.b16 %v3118
    %v3202 = vunpack.c.l.b16 %v3119
    %v3203 = vunpack.c.h.b16 %v3119
    %v3204 = vunpack.c.l.b16 %v3120
    %v3205 = vunpack.c.h.b16 %v3120
    %v3206 = vunpack.c.l.b16 %v3121
    %v3207 = vunpack.c.h.b16 %v3121
    %v3208 = vunpack.c.l.b16 %v3122
    %v3209 = vunpack.c.h.b16 %v3122
    %v3210 = vunpack.c.l.b16 %v3123
    %v3211 = vunpack.c.h.b16 %v3123
    %v3212 = vunpack.c.l.b16 %v3124
    %v3213 = vunpack.c.h.b16 %v3124
    %v3214 = vunpack.c.l.b16 %v3125
    %v3215 = vunpack.c.h.b16 %v3125
    %v3216 = vunpack.c.l.b16 %v3126
    %v3217 = vunpack.c.h.b16 %v3126
    %v3218 = vunpack.c.l.b16 %v3127
    %v3219 = vunpack.c.h.b16 %v3127
    %v3220 = vunpack.c.l.b16 %v3128
    %v3221 = vunpack.c.h.b16 %v3128
    %v3222 = vunpack.c.l.b16 %v3129
    %v3223 = vunpack.c.h.b16 %v3129
    %v3224 = vunpack.c.l.b16 %v3130
    %v3225 = vunpack.c.h.b16 %v3130
    %v3226 = vunpack.c.l.b16 %v3131
    %v3227 = vunpack.c.h.b16 %v3131
    %v3228 = vpack.c.b16 %v3168, %v3164
    %v3229 = vpack.c.b16 %v3169, %v3165
    %v3230 = vpack.c.b16 %v3170, %v3166
    %v3231 = vpack.c.b16 %v3171, %v3167
    %v3232 = vpack.c.b16 %v3176, %v3172
    %v3233 = vpack.c.b16 %v3177, %v3173
    %v3234 = vpack.c.b16 %v3178, %v3174
    %v3235 = vpack.c.b16 %v3179, %v3175
    %v3236 = vpack.c.b16 %v3184, %v3180
    %v3237 = vpack.c.b16 %v3185, %v3181
    %v3238 = vpack.c.b16 %v3186, %v3182
    %v3239 = vpack.c.b16 %v3187, %v3183
    %v3240 = vpack.c.b16 %v3192, %v3188
    %v3241 = vpack.c.b16 %v3193, %v3189
    %v3242 = vpack.c.b16 %v3194, %v3190
    %v3243 = vpack.c.b16 %v3195, %v3191
    %v3244 = vpack.c.b16 %v3200, %v3196
    %v3245 = vpack.c.b16 %v3201, %v3197
    %v3246 = vpack.c.b16 %v3202, %v3198
    %v3247 = vpack.c.b16 %v3203, %v3199
    %v3248 = vpack.c.b16 %v3208, %v3204
    %v3249 = vpack.c.b16 %v3209, %v3205
    %v3250 = vpack.c.b16 %v3210, %v3206
    %v3251 = vpack.c.b16 %v3211, %v3207
    %v3252 = vpack.c.b16 %v3216, %v3212
    %v3253 = vpack.c.b16 %v3217, %v3213
    %v3254 = vpack.c.b16 %v3218, %v3214
    %v3255 = vpack.c.b16 %v3219, %v3215
    %v3256 = vpack.c.b16 %v3224, %v3220
    %v3257 = vpack.c.b16 %v3225, %v3221
    %v3258 = vpack.c.b16 %v3226, %v3222
    %v3259 = vpack.c.b16 %v3227, %v3223
    %3292 = vmatprep.subr.bf16.mxu0 %v3229
    %3293 = vmatpush1.bf16.msra.mxu0 %v3228
    %3294 = vmatprep.subr.bf16.mxu0 %v3233
    %3295 = vmatpush1.bf16.msra.mxu0 %v3232
    %3296 = vmatprep.subr.bf16.mxu0 %v3237
    %3297 = vmatpush1.bf16.msra.mxu0 %v3236
    %3298 = vmatprep.subr.bf16.mxu0 %v3241
    %3299 = vmatpush1.bf16.msra.mxu0 %v3240
    %3300 = vmatprep.subr.bf16.mxu0 %v3245
    %3301 = vmatpush1.bf16.msra.mxu0 %v3244
    %3302 = vmatprep.subr.bf16.mxu0 %v3249
    %3303 = vmatpush1.bf16.msra.mxu0 %v3248
    %3304 = vmatprep.subr.bf16.mxu0 %v3253
    %3305 = vmatpush1.bf16.msra.mxu0 %v3252
    %3306 = vmatprep.subr.bf16.mxu0 %v3257
    %3307 = vmatpush1.bf16.msra.mxu0 %v3256
    %3308 = vmatprep.subr.bf16.mxu0 0
    %3309 = vmatpush1.bf16.msra.mxu0 0
    %3310 = vmatprep.subr.bf16.mxu0 0
    %3311 = vmatpush1.bf16.msra.mxu0 0
    %3312 = vmatprep.subr.bf16.mxu0 0
    %3313 = vmatpush1.bf16.msra.mxu0 0
    %3314 = vmatprep.subr.bf16.mxu0 0
    %3315 = vmatpush1.bf16.msra.mxu0 0
    %3316 = vmatprep.subr.bf16.mxu0 0
    %3317 = vmatpush1.bf16.msra.mxu0 0
    %3318 = vmatprep.subr.bf16.mxu0 0
    %3319 = vmatpush1.bf16.msra.mxu0 0
    %3320 = vmatprep.subr.bf16.mxu0 0
    %3321 = vmatpush1.bf16.msra.mxu0 0
    %3322 = vmatprep.subr.bf16.mxu0 0
    %3323 = vmatpush1.bf16.msra.mxu0 0
    %3324 = vmatprep.mubr.bf16.mxu0 0
    %3325 = vmatmul.mubr.bf16.gmra.mrb[0].mxu0 %v3099
    %v3326 = vpop.f32.mrb[0].mxu0
    %v3327 = vadd.f32 0.0, %v3326
    %v3328 = vpop.f32.mrb[0].mxu0
    %v3329 = vadd.f32 0.0, %v3328
    %v3330 = vpop.f32.mrb[0].mxu0
    %v3331 = vpop.f32.mrb[0].mxu0
    %3332 = vdwg.mxu0
    %3333 = vmatprep.subr.bf16.mxu0 %v3231
    %3334 = vmatpush1.bf16.msra.mxu0 %v3230
    %3335 = vmatprep.subr.bf16.mxu0 %v3235
    %3336 = vmatpush1.bf16.msra.mxu0 %v3234
    %3337 = vmatprep.subr.bf16.mxu0 %v3239
    %3338 = vmatpush1.bf16.msra.mxu0 %v3238
    %3339 = vmatprep.subr.bf16.mxu0 %v3243
    %3340 = vmatpush1.bf16.msra.mxu0 %v3242
    %3341 = vmatprep.subr.bf16.mxu0 %v3247
    %3342 = vmatpush1.bf16.msra.mxu0 %v3246
    %3343 = vmatprep.subr.bf16.mxu0 %v3251
    %3344 = vmatpush1.bf16.msra.mxu0 %v3250
    %3345 = vmatprep.subr.bf16.mxu0 %v3255
    %3346 = vmatpush1.bf16.msra.mxu0 %v3254
    %3347 = vmatprep.subr.bf16.mxu0 %v3259
    %3348 = vmatpush1.bf16.msra.mxu0 %v3258
    %3349 = vmatprep.subr.bf16.mxu0 0
    %3350 = vmatpush1.bf16.msra.mxu0 0
    %3351 = vmatprep.subr.bf16.mxu0 0
    %3352 = vmatpush1.bf16.msra.mxu0 0
    %3353 = vmatprep.subr.bf16.mxu0 0
    %3354 = vmatpush1.bf16.msra.mxu0 0
    %3355 = vmatprep.subr.bf16.mxu0 0
    %3356 = vmatpush1.bf16.msra.mxu0 0
    %3357 = vmatprep.subr.bf16.mxu0 0
    %3358 = vmatpush1.bf16.msra.mxu0 0
    %3359 = vmatprep.subr.bf16.mxu0 0
    %3360 = vmatpush1.bf16.msra.mxu0 0
    %3361 = vmatprep.subr.bf16.mxu0 0
    %3362 = vmatpush1.bf16.msra.mxu0 0
    %3363 = vmatprep.subr.bf16.mxu0 0
    %3364 = vmatpush1.bf16.msra.mxu0 0
    %3365 = vmatprep.mubr.bf16.mxu0 0
    %3366 = vmatmul.mubr.bf16.gmra.mrb[0].mxu0 %v3099
    %v3367 = vpop.f32.mrb[0].mxu0
    %v3368 = vadd.f32 0.0, %v3367
    %v3369 = vpop.f32.mrb[0].mxu0
    %v3370 = vadd.f32 0.0, %v3369
    %v3371 = vpop.f32.mrb[0].mxu0
    %v3372 = vpop.f32.mrb[0].mxu0
    %3373 = vdwg.mxu0
    %v3374 = vadd.f32 %v3095, %v3327
    %v3375 = vadd.f32 %v3096, %v3329
    %v3376 = vadd.f32 %v3097, %v3368
    %v3377 = vadd.f32 %v3098, %v3370
    %vm3378 = vcmp.gt.s32.totalorder %v72, 3
    %v3379 = vxor.u32 %v3083, 2147483648
    %v3380 = vmul.f32 %v3379, 1.442695
    %v3381 = vpow.pop %v3380
    %v3382 = vadd.f32 %v3381, 1.0
    %v3383 = vrcp.pop %v3382
    %v3384 = vmul.f32 1.0, %v3383
    %v3385 = vxor.u32 %v3084, 2147483648
    %v3386 = vmul.f32 %v3385, 1.442695
    %v3387 = vpow.pop %v3386
    %v3388 = vadd.f32 %v3387, 1.0
    %v3389 = vrcp.pop %v3388
    %v3390 = vmul.f32 1.0, %v3389
    %v3391 = vtanh.pop %v3085
    %v3392 = vxor.u32 %v3086, 2147483648
    %v3393 = vmul.f32 %v3392, 1.442695
    %v3394 = vpow.pop %v3393
    %v3395 = vadd.f32 %v3394, 1.0
    %v3396 = vrcp.pop %v3395
    %v3397 = vmul.f32 1.0, %v3396
    %v3398 = vmul.f32 %v3390, %v2743
    %v3399 = vmul.f32 %v3384, %v3391
    %v3400 = vadd.f32 %v3398, %v3399
    %v3401 = vtanh.pop %v3400
    %v3402 = vmul.f32 %v3397, %v3401
    %v3403 = vsel %vm3378, 1, 0
    %3404 = vset.pattern.permute.xlu0 0
    %3405 = vperm.xlu0 %3404, %v3403
    %v3406 = vpop.permute.xlu0 %3405
    %vm3407 = vcmp.eq.s32.totalorder %v3406, 1
    %v3408 = vsel %vm3407, %v3402, %v2742
    %v3409 = vsel %vm3407, %v3400, %v2743
    %vm3410 = vcmp.gt.s32.totalorder %v72, 4
    %v3411 = vxor.u32 %v3374, 2147483648
    %v3412 = vmul.f32 %v3411, 1.442695
    %v3413 = vpow.pop %v3412
    %v3414 = vadd.f32 %v3413, 1.0
    %v3415 = vrcp.pop %v3414
    %v3416 = vmul.f32 1.0, %v3415
    %v3417 = vxor.u32 %v3375, 2147483648
    %v3418 = vmul.f32 %v3417, 1.442695
    %v3419 = vpow.pop %v3418
    %v3420 = vadd.f32 %v3419, 1.0
    %v3421 = vrcp.pop %v3420
    %v3422 = vmul.f32 1.0, %v3421
    %v3423 = vtanh.pop %v3376
    %v3424 = vxor.u32 %v3377, 2147483648
    %v3425 = vmul.f32 %v3424, 1.442695
    %v3426 = vpow.pop %v3425
    %v3427 = vadd.f32 %v3426, 1.0
    %v3428 = vrcp.pop %v3427
    %v3429 = vmul.f32 1.0, %v3428
    %v3430 = vmul.f32 %v3422, %v2775
    %v3431 = vmul.f32 %v3416, %v3423
    %v3432 = vadd.f32 %v3430, %v3431
    %v3433 = vtanh.pop %v3432
    %v3434 = vmul.f32 %v3429, %v3433
    %v3435 = vsel %vm3410, 1, 0
    %3436 = vset.pattern.permute.xlu0 0
    %3437 = vperm.xlu0 %3436, %v3435
    %v3438 = vpop.permute.xlu0 %3437
    %vm3439 = vcmp.eq.s32.totalorder %v3438, 1
    %v3440 = vsel %vm3439, %v3434, %v2774
    %v3441 = vsel %vm3439, %v3432, %v2775
    %v3442 = vld [vmem:[#allocation10 + $0x18] sm:$0xff]
    %v3443 = vsel %vm3407, %v3402, 0.0
    %v3444 = vadd.f32 %v3442, %v3443
    %3445 = vst [vmem:[#allocation10 + $0x18] sm:$0xff] %v3444
    %v3446 = vld [vmem:[#allocation10 + $0x20] sm:$0xff]
    %v3447 = vsel %vm3439, %v3434, 0.0
    %v3448 = vadd.f32 %v3446, %v3447
    %3449 = vst [vmem:[#allocation10 + $0x20] sm:$0xff] %v3448
    %v3450 = vld [vmem:[#allocation2 + $0x40] sm:$0xf]
    %v3451 = vld [vmem:[#allocation2 + $0x48] sm:$0xf]
    %v3452 = vld [vmem:[#allocation2 + $0x50] sm:$0xf]
    %v3453 = vld [vmem:[#allocation2 + $0x58] sm:$0xf]
    %v3454 = vunpack.c.l.bf16 %v3450
    %v3455 = vunpack.c.l.bf16 %v3451
    %v3456 = vunpack.c.l.bf16 %v3452
    %v3457 = vunpack.c.l.bf16 %v3453
    %v3458 = vadd.f32 %v3454, %v78
    %v3459 = vadd.f32 %v3455, %v82
    %v3460 = vadd.f32 %v3456, %v86
    %v3461 = vadd.f32 %v3457, %v90
    %v3462 = vpack.c.bf16 %v3408, %v3408
    %v3463 = vld [vmem:[#allocation7] sm:$0xff]
    %v3464 = vld [vmem:[#allocation7 + $0x8] sm:$0xff]
    %v3465 = vld [vmem:[#allocation7 + $0x10] sm:$0xff]
    %v3466 = vld [vmem:[#allocation7 + $0x18] sm:$0xff]
    %v3467 = vld [vmem:[#allocation7 + $0x20] sm:$0xff]
    %v3468 = vld [vmem:[#allocation7 + $0x28] sm:$0xff]
    %v3469 = vld [vmem:[#allocation7 + $0x30] sm:$0xff]
    %v3470 = vld [vmem:[#allocation7 + $0x38] sm:$0xff]
    %v3471 = vld [vmem:[#allocation7 + $0x40] sm:$0xff]
    %v3472 = vld [vmem:[#allocation7 + $0x48] sm:$0xff]
    %v3473 = vld [vmem:[#allocation7 + $0x50] sm:$0xff]
    %v3474 = vld [vmem:[#allocation7 + $0x58] sm:$0xff]
    %v3475 = vld [vmem:[#allocation7 + $0x60] sm:$0xff]
    %v3476 = vld [vmem:[#allocation7 + $0x68] sm:$0xff]
    %v3477 = vld [vmem:[#allocation7 + $0x70] sm:$0xff]
    %v3478 = vld [vmem:[#allocation7 + $0x78] sm:$0xff]
    %v3479 = vld [vmem:[#allocation7 + $0x80] sm:$0xff]
    %v3480 = vld [vmem:[#allocation7 + $0x88] sm:$0xff]
    %v3481 = vld [vmem:[#allocation7 + $0x90] sm:$0xff]
    %v3482 = vld [vmem:[#allocation7 + $0x98] sm:$0xff]
    %v3483 = vld [vmem:[#allocation7 + $0xa0] sm:$0xff]
    %v3484 = vld [vmem:[#allocation7 + $0xa8] sm:$0xff]
    %v3485 = vld [vmem:[#allocation7 + $0xb0] sm:$0xff]
    %v3486 = vld [vmem:[#allocation7 + $0xb8] sm:$0xff]
    %v3487 = vld [vmem:[#allocation7 + $0xc0] sm:$0xff]
    %v3488 = vld [vmem:[#allocation7 + $0xc8] sm:$0xff]
    %v3489 = vld [vmem:[#allocation7 + $0xd0] sm:$0xff]
    %v3490 = vld [vmem:[#allocation7 + $0xd8] sm:$0xff]
    %v3491 = vld [vmem:[#allocation7 + $0xe0] sm:$0xff]
    %v3492 = vld [vmem:[#allocation7 + $0xe8] sm:$0xff]
    %v3493 = vld [vmem:[#allocation7 + $0xf0] sm:$0xff]
    %v3494 = vld [vmem:[#allocation7 + $0xf8] sm:$0xff]
    %v3527 = vunpack.c.l.b16 %v3463
    %v3528 = vunpack.c.h.b16 %v3463
    %v3529 = vunpack.c.l.b16 %v3464
    %v3530 = vunpack.c.h.b16 %v3464
    %v3531 = vunpack.c.l.b16 %v3465
    %v3532 = vunpack.c.h.b16 %v3465
    %v3533 = vunpack.c.l.b16 %v3466
    %v3534 = vunpack.c.h.b16 %v3466
    %v3535 = vunpack.c.l.b16 %v3467
    %v3536 = vunpack.c.h.b16 %v3467
    %v3537 = vunpack.c.l.b16 %v3468
    %v3538 = vunpack.c.h.b16 %v3468
    %v3539 = vunpack.c.l.b16 %v3469
    %v3540 = vunpack.c.h.b16 %v3469
    %v3541 = vunpack.c.l.b16 %v3470
    %v3542 = vunpack.c.h.b16 %v3470
    %v3543 = vunpack.c.l.b16 %v3471
    %v3544 = vunpack.c.h.b16 %v3471
    %v3545 = vunpack.c.l.b16 %v3472
    %v3546 = vunpack.c.h.b16 %v3472
    %v3547 = vunpack.c.l.b16 %v3473
    %v3548 = vunpack.c.h.b16 %v3473
    %v3549 = vunpack.c.l.b16 %v3474
    %v3550 = vunpack.c.h.b16 %v3474
    %v3551 = vunpack.c.l.b16 %v3475
    %v3552 = vunpack.c.h.b16 %v3475
    %v3553 = vunpack.c.l.b16 %v3476
    %v3554 = vunpack.c.h.b16 %v3476
    %v3555 = vunpack.c.l.b16 %v3477
    %v3556 = vunpack.c.h.b16 %v3477
    %v3557 = vunpack.c.l.b16 %v3478
    %v3558 = vunpack.c.h.b16 %v3478
    %v3559 = vunpack.c.l.b16 %v3479
    %v3560 = vunpack.c.h.b16 %v3479
    %v3561 = vunpack.c.l.b16 %v3480
    %v3562 = vunpack.c.h.b16 %v3480
    %v3563 = vunpack.c.l.b16 %v3481
    %v3564 = vunpack.c.h.b16 %v3481
    %v3565 = vunpack.c.l.b16 %v3482
    %v3566 = vunpack.c.h.b16 %v3482
    %v3567 = vunpack.c.l.b16 %v3483
    %v3568 = vunpack.c.h.b16 %v3483
    %v3569 = vunpack.c.l.b16 %v3484
    %v3570 = vunpack.c.h.b16 %v3484
    %v3571 = vunpack.c.l.b16 %v3485
    %v3572 = vunpack.c.h.b16 %v3485
    %v3573 = vunpack.c.l.b16 %v3486
    %v3574 = vunpack.c.h.b16 %v3486
    %v3575 = vunpack.c.l.b16 %v3487
    %v3576 = vunpack.c.h.b16 %v3487
    %v3577 = vunpack.c.l.b16 %v3488
    %v3578 = vunpack.c.h.b16 %v3488
    %v3579 = vunpack.c.l.b16 %v3489
    %v3580 = vunpack.c.h.b16 %v3489
    %v3581 = vunpack.c.l.b16 %v3490
    %v3582 = vunpack.c.h.b16 %v3490
    %v3583 = vunpack.c.l.b16 %v3491
    %v3584 = vunpack.c.h.b16 %v3491
    %v3585 = vunpack.c.l.b16 %v3492
    %v3586 = vunpack.c.h.b16 %v3492
    %v3587 = vunpack.c.l.b16 %v3493
    %v3588 = vunpack.c.h.b16 %v3493
    %v3589 = vunpack.c.l.b16 %v3494
    %v3590 = vunpack.c.h.b16 %v3494
    %v3591 = vpack.c.b16 %v3531, %v3527
    %v3592 = vpack.c.b16 %v3532, %v3528
    %v3593 = vpack.c.b16 %v3533, %v3529
    %v3594 = vpack.c.b16 %v3534, %v3530
    %v3595 = vpack.c.b16 %v3539, %v3535
    %v3596 = vpack.c.b16 %v3540, %v3536
    %v3597 = vpack.c.b16 %v3541, %v3537
    %v3598 = vpack.c.b16 %v3542, %v3538
    %v3599 = vpack.c.b16 %v3547, %v3543
    %v3600 = vpack.c.b16 %v3548, %v3544
    %v3601 = vpack.c.b16 %v3549, %v3545
    %v3602 = vpack.c.b16 %v3550, %v3546
    %v3603 = vpack.c.b16 %v3555, %v3551
    %v3604 = vpack.c.b16 %v3556, %v3552
    %v3605 = vpack.c.b16 %v3557, %v3553
    %v3606 = vpack.c.b16 %v3558, %v3554
    %v3607 = vpack.c.b16 %v3563, %v3559
    %v3608 = vpack.c.b16 %v3564, %v3560
    %v3609 = vpack.c.b16 %v3565, %v3561
    %v3610 = vpack.c.b16 %v3566, %v3562
    %v3611 = vpack.c.b16 %v3571, %v3567
    %v3612 = vpack.c.b16 %v3572, %v3568
    %v3613 = vpack.c.b16 %v3573, %v3569
    %v3614 = vpack.c.b16 %v3574, %v3570
    %v3615 = vpack.c.b16 %v3579, %v3575
    %v3616 = vpack.c.b16 %v3580, %v3576
    %v3617 = vpack.c.b16 %v3581, %v3577
    %v3618 = vpack.c.b16 %v3582, %v3578
    %v3619 = vpack.c.b16 %v3587, %v3583
    %v3620 = vpack.c.b16 %v3588, %v3584
    %v3621 = vpack.c.b16 %v3589, %v3585
    %v3622 = vpack.c.b16 %v3590, %v3586
    %3655 = vmatprep.subr.bf16.mxu0 %v3592
    %3656 = vmatpush1.bf16.msra.mxu0 %v3591
    %3657 = vmatprep.subr.bf16.mxu0 %v3596
    %3658 = vmatpush1.bf16.msra.mxu0 %v3595
    %3659 = vmatprep.subr.bf16.mxu0 %v3600
    %3660 = vmatpush1.bf16.msra.mxu0 %v3599
    %3661 = vmatprep.subr.bf16.mxu0 %v3604
    %3662 = vmatpush1.bf16.msra.mxu0 %v3603
    %3663 = vmatprep.subr.bf16.mxu0 %v3608
    %3664 = vmatpush1.bf16.msra.mxu0 %v3607
    %3665 = vmatprep.subr.bf16.mxu0 %v3612
    %3666 = vmatpush1.bf16.msra.mxu0 %v3611
    %3667 = vmatprep.subr.bf16.mxu0 %v3616
    %3668 = vmatpush1.bf16.msra.mxu0 %v3615
    %3669 = vmatprep.subr.bf16.mxu0 %v3620
    %3670 = vmatpush1.bf16.msra.mxu0 %v3619
    %3671 = vmatprep.subr.bf16.mxu0 0
    %3672 = vmatpush1.bf16.msra.mxu0 0
    %3673 = vmatprep.subr.bf16.mxu0 0
    %3674 = vmatpush1.bf16.msra.mxu0 0
    %3675 = vmatprep.subr.bf16.mxu0 0
    %3676 = vmatpush1.bf16.msra.mxu0 0
    %3677 = vmatprep.subr.bf16.mxu0 0
    %3678 = vmatpush1.bf16.msra.mxu0 0
    %3679 = vmatprep.subr.bf16.mxu0 0
    %3680 = vmatpush1.bf16.msra.mxu0 0
    %3681 = vmatprep.subr.bf16.mxu0 0
    %3682 = vmatpush1.bf16.msra.mxu0 0
    %3683 = vmatprep.subr.bf16.mxu0 0
    %3684 = vmatpush1.bf16.msra.mxu0 0
    %3685 = vmatprep.subr.bf16.mxu0 0
    %3686 = vmatpush1.bf16.msra.mxu0 0
    %3687 = vmatprep.mubr.bf16.mxu0 0
    %3688 = vmatmul.mubr.bf16.gmra.mrb[0].mxu0 %v3462
    %v3689 = vpop.f32.mrb[0].mxu0
    %v3690 = vadd.f32 0.0, %v3689
    %v3691 = vpop.f32.mrb[0].mxu0
    %v3692 = vadd.f32 0.0, %v3691
    %v3693 = vpop.f32.mrb[0].mxu0
    %v3694 = vpop.f32.mrb[0].mxu0
    %3695 = vdwg.mxu0
    %3696 = vmatprep.subr.bf16.mxu0 %v3594
    %3697 = vmatpush1.bf16.msra.mxu0 %v3593
    %3698 = vmatprep.subr.bf16.mxu0 %v3598
    %3699 = vmatpush1.bf16.msra.mxu0 %v3597
    %3700 = vmatprep.subr.bf16.mxu0 %v3602
    %3701 = vmatpush1.bf16.msra.mxu0 %v3601
    %3702 = vmatprep.subr.bf16.mxu0 %v3606
    %3703 = vmatpush1.bf16.msra.mxu0 %v3605
    %3704 = vmatprep.subr.bf16.mxu0 %v3610
    %3705 = vmatpush1.bf16.msra.mxu0 %v3609
    %3706 = vmatprep.subr.bf16.mxu0 %v3614
    %3707 = vmatpush1.bf16.msra.mxu0 %v3613
    %3708 = vmatprep.subr.bf16.mxu0 %v3618
    %3709 = vmatpush1.bf16.msra.mxu0 %v3617
    %3710 = vmatprep.subr.bf16.mxu0 %v3622
    %3711 = vmatpush1.bf16.msra.mxu0 %v3621
    %3712 = vmatprep.subr.bf16.mxu0 0
    %3713 = vmatpush1.bf16.msra.mxu0 0
    %3714 = vmatprep.subr.bf16.mxu0 0
    %3715 = vmatpush1.bf16.msra.mxu0 0
    %3716 = vmatprep.subr.bf16.mxu0 0
    %3717 = vmatpush1.bf16.msra.mxu0 0
    %3718 = vmatprep.subr.bf16.mxu0 0
    %3719 = vmatpush1.bf16.msra.mxu0 0
    %3720 = vmatprep.subr.bf16.mxu0 0
    %3721 = vmatpush1.bf16.msra.mxu0 0
    %3722 = vmatprep.subr.bf16.mxu0 0
    %3723 = vmatpush1.bf16.msra.mxu0 0
    %3724 = vmatprep.subr.bf16.mxu0 0
    %3725 = vmatpush1.bf16.msra.mxu0 0
    %3726 = vmatprep.subr.bf16.mxu0 0
    %3727 = vmatpush1.bf16.msra.mxu0 0
    %3728 = vmatprep.mubr.bf16.mxu0 0
    %3729 = vmatmul.mubr.bf16.gmra.mrb[0].mxu0 %v3462
    %v3730 = vpop.f32.mrb[0].mxu0
    %v3731 = vadd.f32 0.0, %v3730
    %v3732 = vpop.f32.mrb[0].mxu0
    %v3733 = vadd.f32 0.0, %v3732
    %v3734 = vpop.f32.mrb[0].mxu0
    %v3735 = vpop.f32.mrb[0].mxu0
    %3736 = vdwg.mxu0
    %v3737 = vadd.f32 %v3458, %v3690
    %v3738 = vadd.f32 %v3459, %v3692
    %v3739 = vadd.f32 %v3460, %v3731
    %v3740 = vadd.f32 %v3461, %v3733
    %v3741 = vld [vmem:[#allocation3 + $0x20] sm:$0xf0]
    %v3742 = vld [vmem:[#allocation3 + $0x28] sm:$0xf0]
    %v3743 = vld [vmem:[#allocation3 + $0x30] sm:$0xf0]
    %v3744 = vld [vmem:[#allocation3 + $0x38] sm:$0xf0]
    %v3749 = vrot.slane %v3741, 4
    %v3750 = vrot.slane %v3742, 4
    %v3751 = vrot.slane %v3743, 4
    %v3752 = vrot.slane %v3744, 4
    %v3757 = vunpack.c.l.bf16 %v3749
    %v3758 = vunpack.c.l.bf16 %v3750
    %v3759 = vunpack.c.l.bf16 %v3751
    %v3760 = vunpack.c.l.bf16 %v3752
    %v3761 = vadd.f32 %v3757, %v100
    %v3762 = vadd.f32 %v3758, %v104
    %v3763 = vadd.f32 %v3759, %v108
    %v3764 = vadd.f32 %v3760, %v112
    %v3765 = vpack.c.bf16 %v3440, %v3440
    %v3766 = vld [vmem:[#allocation9] sm:$0xff]
    %v3767 = vld [vmem:[#allocation9 + $0x8] sm:$0xff]
    %v3768 = vld [vmem:[#allocation9 + $0x10] sm:$0xff]
    %v3769 = vld [vmem:[#allocation9 + $0x18] sm:$0xff]
    %v3770 = vld [vmem:[#allocation9 + $0x20] sm:$0xff]
    %v3771 = vld [vmem:[#allocation9 + $0x28] sm:$0xff]
    %v3772 = vld [vmem:[#allocation9 + $0x30] sm:$0xff]
    %v3773 = vld [vmem:[#allocation9 + $0x38] sm:$0xff]
    %v3774 = vld [vmem:[#allocation9 + $0x40] sm:$0xff]
    %v3775 = vld [vmem:[#allocation9 + $0x48] sm:$0xff]
    %v3776 = vld [vmem:[#allocation9 + $0x50] sm:$0xff]
    %v3777 = vld [vmem:[#allocation9 + $0x58] sm:$0xff]
    %v3778 = vld [vmem:[#allocation9 + $0x60] sm:$0xff]
    %v3779 = vld [vmem:[#allocation9 + $0x68] sm:$0xff]
    %v3780 = vld [vmem:[#allocation9 + $0x70] sm:$0xff]
    %v3781 = vld [vmem:[#allocation9 + $0x78] sm:$0xff]
    %v3782 = vld [vmem:[#allocation9 + $0x80] sm:$0xff]
    %v3783 = vld [vmem:[#allocation9 + $0x88] sm:$0xff]
    %v3784 = vld [vmem:[#allocation9 + $0x90] sm:$0xff]
    %v3785 = vld [vmem:[#allocation9 + $0x98] sm:$0xff]
    %v3786 = vld [vmem:[#allocation9 + $0xa0] sm:$0xff]
    %v3787 = vld [vmem:[#allocation9 + $0xa8] sm:$0xff]
    %v3788 = vld [vmem:[#allocation9 + $0xb0] sm:$0xff]
    %v3789 = vld [vmem:[#allocation9 + $0xb8] sm:$0xff]
    %v3790 = vld [vmem:[#allocation9 + $0xc0] sm:$0xff]
    %v3791 = vld [vmem:[#allocation9 + $0xc8] sm:$0xff]
    %v3792 = vld [vmem:[#allocation9 + $0xd0] sm:$0xff]
    %v3793 = vld [vmem:[#allocation9 + $0xd8] sm:$0xff]
    %v3794 = vld [vmem:[#allocation9 + $0xe0] sm:$0xff]
    %v3795 = vld [vmem:[#allocation9 + $0xe8] sm:$0xff]
    %v3796 = vld [vmem:[#allocation9 + $0xf0] sm:$0xff]
    %v3797 = vld [vmem:[#allocation9 + $0xf8] sm:$0xff]
    %v3830 = vunpack.c.l.b16 %v3766
    %v3831 = vunpack.c.h.b16 %v3766
    %v3832 = vunpack.c.l.b16 %v3767
    %v3833 = vunpack.c.h.b16 %v3767
    %v3834 = vunpack.c.l.b16 %v3768
    %v3835 = vunpack.c.h.b16 %v3768
    %v3836 = vunpack.c.l.b16 %v3769
    %v3837 = vunpack.c.h.b16 %v3769
    %v3838 = vunpack.c.l.b16 %v3770
    %v3839 = vunpack.c.h.b16 %v3770
    %v3840 = vunpack.c.l.b16 %v3771
    %v3841 = vunpack.c.h.b16 %v3771
    %v3842 = vunpack.c.l.b16 %v3772
    %v3843 = vunpack.c.h.b16 %v3772
    %v3844 = vunpack.c.l.b16 %v3773
    %v3845 = vunpack.c.h.b16 %v3773
    %v3846 = vunpack.c.l.b16 %v3774
    %v3847 = vunpack.c.h.b16 %v3774
    %v3848 = vunpack.c.l.b16 %v3775
    %v3849 = vunpack.c.h.b16 %v3775
    %v3850 = vunpack.c.l.b16 %v3776
    %v3851 = vunpack.c.h.b16 %v3776
    %v3852 = vunpack.c.l.b16 %v3777
    %v3853 = vunpack.c.h.b16 %v3777
    %v3854 = vunpack.c.l.b16 %v3778
    %v3855 = vunpack.c.h.b16 %v3778
    %v3856 = vunpack.c.l.b16 %v3779
    %v3857 = vunpack.c.h.b16 %v3779
    %v3858 = vunpack.c.l.b16 %v3780
    %v3859 = vunpack.c.h.b16 %v3780
    %v3860 = vunpack.c.l.b16 %v3781
    %v3861 = vunpack.c.h.b16 %v3781
    %v3862 = vunpack.c.l.b16 %v3782
    %v3863 = vunpack.c.h.b16 %v3782
    %v3864 = vunpack.c.l.b16 %v3783
    %v3865 = vunpack.c.h.b16 %v3783
    %v3866 = vunpack.c.l.b16 %v3784
    %v3867 = vunpack.c.h.b16 %v3784
    %v3868 = vunpack.c.l.b16 %v3785
    %v3869 = vunpack.c.h.b16 %v3785
    %v3870 = vunpack.c.l.b16 %v3786
    %v3871 = vunpack.c.h.b16 %v3786
    %v3872 = vunpack.c.l.b16 %v3787
    %v3873 = vunpack.c.h.b16 %v3787
    %v3874 = vunpack.c.l.b16 %v3788
    %v3875 = vunpack.c.h.b16 %v3788
    %v3876 = vunpack.c.l.b16 %v3789
    %v3877 = vunpack.c.h.b16 %v3789
    %v3878 = vunpack.c.l.b16 %v3790
    %v3879 = vunpack.c.h.b16 %v3790
    %v3880 = vunpack.c.l.b16 %v3791
    %v3881 = vunpack.c.h.b16 %v3791
    %v3882 = vunpack.c.l.b16 %v3792
    %v3883 = vunpack.c.h.b16 %v3792
    %v3884 = vunpack.c.l.b16 %v3793
    %v3885 = vunpack.c.h.b16 %v3793
    %v3886 = vunpack.c.l.b16 %v3794
    %v3887 = vunpack.c.h.b16 %v3794
    %v3888 = vunpack.c.l.b16 %v3795
    %v3889 = vunpack.c.h.b16 %v3795
    %v3890 = vunpack.c.l.b16 %v3796
    %v3891 = vunpack.c.h.b16 %v3796
    %v3892 = vunpack.c.l.b16 %v3797
    %v3893 = vunpack.c.h.b16 %v3797
    %v3894 = vpack.c.b16 %v3834, %v3830
    %v3895 = vpack.c.b16 %v3835, %v3831
    %v3896 = vpack.c.b16 %v3836, %v3832
    %v3897 = vpack.c.b16 %v3837, %v3833
    %v3898 = vpack.c.b16 %v3842, %v3838
    %v3899 = vpack.c.b16 %v3843, %v3839
    %v3900 = vpack.c.b16 %v3844, %v3840
    %v3901 = vpack.c.b16 %v3845, %v3841
    %v3902 = vpack.c.b16 %v3850, %v3846
    %v3903 = vpack.c.b16 %v3851, %v3847
    %v3904 = vpack.c.b16 %v3852, %v3848
    %v3905 = vpack.c.b16 %v3853, %v3849
    %v3906 = vpack.c.b16 %v3858, %v3854
    %v3907 = vpack.c.b16 %v3859, %v3855
    %v3908 = vpack.c.b16 %v3860, %v3856
    %v3909 = vpack.c.b16 %v3861, %v3857
    %v3910 = vpack.c.b16 %v3866, %v3862
    %v3911 = vpack.c.b16 %v3867, %v3863
    %v3912 = vpack.c.b16 %v3868, %v3864
    %v3913 = vpack.c.b16 %v3869, %v3865
    %v3914 = vpack.c.b16 %v3874, %v3870
    %v3915 = vpack.c.b16 %v3875, %v3871
    %v3916 = vpack.c.b16 %v3876, %v3872
    %v3917 = vpack.c.b16 %v3877, %v3873
    %v3918 = vpack.c.b16 %v3882, %v3878
    %v3919 = vpack.c.b16 %v3883, %v3879
    %v3920 = vpack.c.b16 %v3884, %v3880
    %v3921 = vpack.c.b16 %v3885, %v3881
    %v3922 = vpack.c.b16 %v3890, %v3886
    %v3923 = vpack.c.b16 %v3891, %v3887
    %v3924 = vpack.c.b16 %v3892, %v3888
    %v3925 = vpack.c.b16 %v3893, %v3889
    %3958 = vmatprep.subr.bf16.mxu0 %v3895
    %3959 = vmatpush1.bf16.msra.mxu0 %v3894
    %3960 = vmatprep.subr.bf16.mxu0 %v3899
    %3961 = vmatpush1.bf16.msra.mxu0 %v3898
    %3962 = vmatprep.subr.bf16.mxu0 %v3903
    %3963 = vmatpush1.bf16.msra.mxu0 %v3902
    %3964 = vmatprep.subr.bf16.mxu0 %v3907
    %3965 = vmatpush1.bf16.msra.mxu0 %v3906
    %3966 = vmatprep.subr.bf16.mxu0 %v3911
    %3967 = vmatpush1.bf16.msra.mxu0 %v3910
    %3968 = vmatprep.subr.bf16.mxu0 %v3915
    %3969 = vmatpush1.bf16.msra.mxu0 %v3914
    %3970 = vmatprep.subr.bf16.mxu0 %v3919
    %3971 = vmatpush1.bf16.msra.mxu0 %v3918
    %3972 = vmatprep.subr.bf16.mxu0 %v3923
    %3973 = vmatpush1.bf16.msra.mxu0 %v3922
    %3974 = vmatprep.subr.bf16.mxu0 0
    %3975 = vmatpush1.bf16.msra.mxu0 0
    %3976 = vmatprep.subr.bf16.mxu0 0
    %3977 = vmatpush1.bf16.msra.mxu0 0
    %3978 = vmatprep.subr.bf16.mxu0 0
    %3979 = vmatpush1.bf16.msra.mxu0 0
    %3980 = vmatprep.subr.bf16.mxu0 0
    %3981 = vmatpush1.bf16.msra.mxu0 0
    %3982 = vmatprep.subr.bf16.mxu0 0
    %3983 = vmatpush1.bf16.msra.mxu0 0
    %3984 = vmatprep.subr.bf16.mxu0 0
    %3985 = vmatpush1.bf16.msra.mxu0 0
    %3986 = vmatprep.subr.bf16.mxu0 0
    %3987 = vmatpush1.bf16.msra.mxu0 0
    %3988 = vmatprep.subr.bf16.mxu0 0
    %3989 = vmatpush1.bf16.msra.mxu0 0
    %3990 = vmatprep.mubr.bf16.mxu0 0
    %3991 = vmatmul.mubr.bf16.gmra.mrb[0].mxu0 %v3765
    %v3992 = vpop.f32.mrb[0].mxu0
    %v3993 = vadd.f32 0.0, %v3992
    %v3994 = vpop.f32.mrb[0].mxu0
    %v3995 = vadd.f32 0.0, %v3994
    %v3996 = vpop.f32.mrb[0].mxu0
    %v3997 = vpop.f32.mrb[0].mxu0
    %3998 = vdwg.mxu0
    %3999 = vmatprep.subr.bf16.mxu0 %v3897
    %4000 = vmatpush1.bf16.msra.mxu0 %v3896
    %4001 = vmatprep.subr.bf16.mxu0 %v3901
    %4002 = vmatpush1.bf16.msra.mxu0 %v3900
    %4003 = vmatprep.subr.bf16.mxu0 %v3905
    %4004 = vmatpush1.bf16.msra.mxu0 %v3904
    %4005 = vmatprep.subr.bf16.mxu0 %v3909
    %4006 = vmatpush1.bf16.msra.mxu0 %v3908
    %4007 = vmatprep.subr.bf16.mxu0 %v3913
    %4008 = vmatpush1.bf16.msra.mxu0 %v3912
    %4009 = vmatprep.subr.bf16.mxu0 %v3917
    %4010 = vmatpush1.bf16.msra.mxu0 %v3916
    %4011 = vmatprep.subr.bf16.mxu0 %v3921
    %4012 = vmatpush1.bf16.msra.mxu0 %v3920
    %4013 = vmatprep.subr.bf16.mxu0 %v3925
    %4014 = vmatpush1.bf16.msra.mxu0 %v3924
    %4015 = vmatprep.subr.bf16.mxu0 0
    %4016 = vmatpush1.bf16.msra.mxu0 0
    %4017 = vmatprep.subr.bf16.mxu0 0
    %4018 = vmatpush1.bf16.msra.mxu0 0
    %4019 = vmatprep.subr.bf16.mxu0 0
    %4020 = vmatpush1.bf16.msra.mxu0 0
    %4021 = vmatprep.subr.bf16.mxu0 0
    %4022 = vmatpush1.bf16.msra.mxu0 0
    %4023 = vmatprep.subr.bf16.mxu0 0
    %4024 = vmatpush1.bf16.msra.mxu0 0
    %4025 = vmatprep.subr.bf16.mxu0 0
    %4026 = vmatpush1.bf16.msra.mxu0 0
    %4027 = vmatprep.subr.bf16.mxu0 0
    %4028 = vmatpush1.bf16.msra.mxu0 0
    %4029 = vmatprep.subr.bf16.mxu0 0
    %4030 = vmatpush1.bf16.msra.mxu0 0
    %4031 = vmatprep.mubr.bf16.mxu0 0
    %4032 = vmatmul.mubr.bf16.gmra.mrb[0].mxu0 %v3765
    %v4033 = vpop.f32.mrb[0].mxu0
    %v4034 = vadd.f32 0.0, %v4033
    %v4035 = vpop.f32.mrb[0].mxu0
    %v4036 = vadd.f32 0.0, %v4035
    %v4037 = vpop.f32.mrb[0].mxu0
    %v4038 = vpop.f32.mrb[0].mxu0
    %4039 = vdwg.mxu0
    %v4040 = vadd.f32 %v3761, %v3993
    %v4041 = vadd.f32 %v3762, %v3995
    %v4042 = vadd.f32 %v3763, %v4034
    %v4043 = vadd.f32 %v3764, %v4036
    %v4044 = vxor.u32 %v3737, 2147483648
    %v4045 = vmul.f32 %v4044, 1.442695
    %v4046 = vpow.pop %v4045
    %v4047 = vadd.f32 %v4046, 1.0
    %v4048 = vrcp.pop %v4047
    %v4049 = vmul.f32 1.0, %v4048
    %v4050 = vxor.u32 %v3738, 2147483648
    %v4051 = vmul.f32 %v4050, 1.442695
    %v4052 = vpow.pop %v4051
    %v4053 = vadd.f32 %v4052, 1.0
    %v4054 = vrcp.pop %v4053
    %v4055 = vmul.f32 1.0, %v4054
    %v4056 = vtanh.pop %v3739
    %v4057 = vxor.u32 %v3740, 2147483648
    %v4058 = vmul.f32 %v4057, 1.442695
    %v4059 = vpow.pop %v4058
    %v4060 = vadd.f32 %v4059, 1.0
    %v4061 = vrcp.pop %v4060
    %v4062 = vmul.f32 1.0, %v4061
    %v4063 = vmul.f32 %v4055, %v3409
    %v4064 = vmul.f32 %v4049, %v4056
    %v4065 = vadd.f32 %v4063, %v4064
    %v4066 = vtanh.pop %v4065
    %v4067 = vmul.f32 %v4062, %v4066
    %v4068 = vsel %vm3439, %v4067, %v3408
    %v4069 = vsel %vm3439, %v4065, %v3409
    %v4070 = vxor.u32 %v4040, 2147483648
    %v4071 = vmul.f32 %v4070, 1.442695
    %v4072 = vpow.pop %v4071
    %v4073 = vadd.f32 %v4072, 1.0
    %v4074 = vrcp.pop %v4073
    %v4075 = vmul.f32 1.0, %v4074
    %v4076 = vxor.u32 %v4041, 2147483648
    %v4077 = vmul.f32 %v4076, 1.442695
    %v4078 = vpow.pop %v4077
    %v4079 = vadd.f32 %v4078, 1.0
    %v4080 = vrcp.pop %v4079
    %v4081 = vmul.f32 1.0, %v4080
    %v4082 = vtanh.pop %v4042
    %v4083 = vxor.u32 %v4043, 2147483648
    %v4084 = vmul.f32 %v4083, 1.442695
    %v4085 = vpow.pop %v4084
    %v4086 = vadd.f32 %v4085, 1.0
    %v4087 = vrcp.pop %v4086
    %v4088 = vmul.f32 1.0, %v4087
    %v4089 = vmul.f32 %v4081, %v3441
    %v4090 = vmul.f32 %v4075, %v4082
    %v4091 = vadd.f32 %v4089, %v4090
    %v4092 = vtanh.pop %v4091
    %v4093 = vmul.f32 %v4088, %v4092
    %v4094 = vsel %vm3407, %v4093, %v3440
    %v4095 = vsel %vm3407, %v4091, %v3441
    %v4096 = vld [vmem:[#allocation10 + $0x20] sm:$0xff]
    %v4097 = vsel %vm3439, %v4067, 0.0
    %v4098 = vadd.f32 %v4096, %v4097
    %4099 = vst [vmem:[#allocation10 + $0x20] sm:$0xff] %v4098
    %v4100 = vld [vmem:[#allocation10 + $0x18] sm:$0xff]
    %v4101 = vsel %vm3407, %v4093, 0.0
    %v4102 = vadd.f32 %v4100, %v4101
    %4103 = vst [vmem:[#allocation10 + $0x18] sm:$0xff] %v4102
    %v4104 = vld [vmem:[#allocation2 + $0x40] sm:$0xf0]
    %v4105 = vld [vmem:[#allocation2 + $0x48] sm:$0xf0]
    %v4106 = vld [vmem:[#allocation2 + $0x50] sm:$0xf0]
    %v4107 = vld [vmem:[#allocation2 + $0x58] sm:$0xf0]
    %v4112 = vrot.slane %v4104, 4
    %v4113 = vrot.slane %v4105, 4
    %v4114 = vrot.slane %v4106, 4
    %v4115 = vrot.slane %v4107, 4
    %v4120 = vunpack.c.l.bf16 %v4112
    %v4121 = vunpack.c.l.bf16 %v4113
    %v4122 = vunpack.c.l.bf16 %v4114
    %v4123 = vunpack.c.l.bf16 %v4115
    %v4124 = vadd.f32 %v4120, %v78
    %v4125 = vadd.f32 %v4121, %v82
    %v4126 = vadd.f32 %v4122, %v86
    %v4127 = vadd.f32 %v4123, %v90
    %v4128 = vpack.c.bf16 %v4068, %v4068
    %v4129 = vld [vmem:[#allocation7] sm:$0xff]
    %v4130 = vld [vmem:[#allocation7 + $0x8] sm:$0xff]
    %v4131 = vld [vmem:[#allocation7 + $0x10] sm:$0xff]
    %v4132 = vld [vmem:[#allocation7 + $0x18] sm:$0xff]
    %v4133 = vld [vmem:[#allocation7 + $0x20] sm:$0xff]
    %v4134 = vld [vmem:[#allocation7 + $0x28] sm:$0xff]
    %v4135 = vld [vmem:[#allocation7 + $0x30] sm:$0xff]
    %v4136 = vld [vmem:[#allocation7 + $0x38] sm:$0xff]
    %v4137 = vld [vmem:[#allocation7 + $0x40] sm:$0xff]
    %v4138 = vld [vmem:[#allocation7 + $0x48] sm:$0xff]
    %v4139 = vld [vmem:[#allocation7 + $0x50] sm:$0xff]
    %v4140 = vld [vmem:[#allocation7 + $0x58] sm:$0xff]
    %v4141 = vld [vmem:[#allocation7 + $0x60] sm:$0xff]
    %v4142 = vld [vmem:[#allocation7 + $0x68] sm:$0xff]
    %v4143 = vld [vmem:[#allocation7 + $0x70] sm:$0xff]
    %v4144 = vld [vmem:[#allocation7 + $0x78] sm:$0xff]
    %v4145 = vld [vmem:[#allocation7 + $0x80] sm:$0xff]
    %v4146 = vld [vmem:[#allocation7 + $0x88] sm:$0xff]
    %v4147 = vld [vmem:[#allocation7 + $0x90] sm:$0xff]
    %v4148 = vld [vmem:[#allocation7 + $0x98] sm:$0xff]
    %v4149 = vld [vmem:[#allocation7 + $0xa0] sm:$0xff]
    %v4150 = vld [vmem:[#allocation7 + $0xa8] sm:$0xff]
    %v4151 = vld [vmem:[#allocation7 + $0xb0] sm:$0xff]
    %v4152 = vld [vmem:[#allocation7 + $0xb8] sm:$0xff]
    %v4153 = vld [vmem:[#allocation7 + $0xc0] sm:$0xff]
    %v4154 = vld [vmem:[#allocation7 + $0xc8] sm:$0xff]
    %v4155 = vld [vmem:[#allocation7 + $0xd0] sm:$0xff]
    %v4156 = vld [vmem:[#allocation7 + $0xd8] sm:$0xff]
    %v4157 = vld [vmem:[#allocation7 + $0xe0] sm:$0xff]
    %v4158 = vld [vmem:[#allocation7 + $0xe8] sm:$0xff]
    %v4159 = vld [vmem:[#allocation7 + $0xf0] sm:$0xff]
    %v4160 = vld [vmem:[#allocation7 + $0xf8] sm:$0xff]
    %v4193 = vunpack.c.l.b16 %v4129
    %v4194 = vunpack.c.h.b16 %v4129
    %v4195 = vunpack.c.l.b16 %v4130
    %v4196 = vunpack.c.h.b16 %v4130
    %v4197 = vunpack.c.l.b16 %v4131
    %v4198 = vunpack.c.h.b16 %v4131
    %v4199 = vunpack.c.l.b16 %v4132
    %v4200 = vunpack.c.h.b16 %v4132
    %v4201 = vunpack.c.l.b16 %v4133
    %v4202 = vunpack.c.h.b16 %v4133
    %v4203 = vunpack.c.l.b16 %v4134
    %v4204 = vunpack.c.h.b16 %v4134
    %v4205 = vunpack.c.l.b16 %v4135
    %v4206 = vunpack.c.h.b16 %v4135
    %v4207 = vunpack.c.l.b16 %v4136
    %v4208 = vunpack.c.h.b16 %v4136
    %v4209 = vunpack.c.l.b16 %v4137
    %v4210 = vunpack.c.h.b16 %v4137
    %v4211 = vunpack.c.l.b16 %v4138
    %v4212 = vunpack.c.h.b16 %v4138
    %v4213 = vunpack.c.l.b16 %v4139
    %v4214 = vunpack.c.h.b16 %v4139
    %v4215 = vunpack.c.l.b16 %v4140
    %v4216 = vunpack.c.h.b16 %v4140
    %v4217 = vunpack.c.l.b16 %v4141
    %v4218 = vunpack.c.h.b16 %v4141
    %v4219 = vunpack.c.l.b16 %v4142
    %v4220 = vunpack.c.h.b16 %v4142
    %v4221 = vunpack.c.l.b16 %v4143
    %v4222 = vunpack.c.h.b16 %v4143
    %v4223 = vunpack.c.l.b16 %v4144
    %v4224 = vunpack.c.h.b16 %v4144
    %v4225 = vunpack.c.l.b16 %v4145
    %v4226 = vunpack.c.h.b16 %v4145
    %v4227 = vunpack.c.l.b16 %v4146
    %v4228 = vunpack.c.h.b16 %v4146
    %v4229 = vunpack.c.l.b16 %v4147
    %v4230 = vunpack.c.h.b16 %v4147
    %v4231 = vunpack.c.l.b16 %v4148
    %v4232 = vunpack.c.h.b16 %v4148
    %v4233 = vunpack.c.l.b16 %v4149
    %v4234 = vunpack.c.h.b16 %v4149
    %v4235 = vunpack.c.l.b16 %v4150
    %v4236 = vunpack.c.h.b16 %v4150
    %v4237 = vunpack.c.l.b16 %v4151
    %v4238 = vunpack.c.h.b16 %v4151
    %v4239 = vunpack.c.l.b16 %v4152
    %v4240 = vunpack.c.h.b16 %v4152
    %v4241 = vunpack.c.l.b16 %v4153
    %v4242 = vunpack.c.h.b16 %v4153
    %v4243 = vunpack.c.l.b16 %v4154
    %v4244 = vunpack.c.h.b16 %v4154
    %v4245 = vunpack.c.l.b16 %v4155
    %v4246 = vunpack.c.h.b16 %v4155
    %v4247 = vunpack.c.l.b16 %v4156
    %v4248 = vunpack.c.h.b16 %v4156
    %v4249 = vunpack.c.l.b16 %v4157
    %v4250 = vunpack.c.h.b16 %v4157
    %v4251 = vunpack.c.l.b16 %v4158
    %v4252 = vunpack.c.h.b16 %v4158
    %v4253 = vunpack.c.l.b16 %v4159
    %v4254 = vunpack.c.h.b16 %v4159
    %v4255 = vunpack.c.l.b16 %v4160
    %v4256 = vunpack.c.h.b16 %v4160
    %v4257 = vpack.c.b16 %v4197, %v4193
    %v4258 = vpack.c.b16 %v4198, %v4194
    %v4259 = vpack.c.b16 %v4199, %v4195
    %v4260 = vpack.c.b16 %v4200, %v4196
    %v4261 = vpack.c.b16 %v4205, %v4201
    %v4262 = vpack.c.b16 %v4206, %v4202
    %v4263 = vpack.c.b16 %v4207, %v4203
    %v4264 = vpack.c.b16 %v4208, %v4204
    %v4265 = vpack.c.b16 %v4213, %v4209
    %v4266 = vpack.c.b16 %v4214, %v4210
    %v4267 = vpack.c.b16 %v4215, %v4211
    %v4268 = vpack.c.b16 %v4216, %v4212
    %v4269 = vpack.c.b16 %v4221, %v4217
    %v4270 = vpack.c.b16 %v4222, %v4218
    %v4271 = vpack.c.b16 %v4223, %v4219
    %v4272 = vpack.c.b16 %v4224, %v4220
    %v4273 = vpack.c.b16 %v4229, %v4225
    %v4274 = vpack.c.b16 %v4230, %v4226
    %v4275 = vpack.c.b16 %v4231, %v4227
    %v4276 = vpack.c.b16 %v4232, %v4228
    %v4277 = vpack.c.b16 %v4237, %v4233
    %v4278 = vpack.c.b16 %v4238, %v4234
    %v4279 = vpack.c.b16 %v4239, %v4235
    %v4280 = vpack.c.b16 %v4240, %v4236
    %v4281 = vpack.c.b16 %v4245, %v4241
    %v4282 = vpack.c.b16 %v4246, %v4242
    %v4283 = vpack.c.b16 %v4247, %v4243
    %v4284 = vpack.c.b16 %v4248, %v4244
    %v4285 = vpack.c.b16 %v4253, %v4249
    %v4286 = vpack.c.b16 %v4254, %v4250
    %v4287 = vpack.c.b16 %v4255, %v4251
    %v4288 = vpack.c.b16 %v4256, %v4252
    %4321 = vmatprep.subr.bf16.mxu0 %v4258
    %4322 = vmatpush1.bf16.msra.mxu0 %v4257
    %4323 = vmatprep.subr.bf16.mxu0 %v4262
    %4324 = vmatpush1.bf16.msra.mxu0 %v4261
    %4325 = vmatprep.subr.bf16.mxu0 %v4266
    %4326 = vmatpush1.bf16.msra.mxu0 %v4265
    %4327 = vmatprep.subr.bf16.mxu0 %v4270
    %4328 = vmatpush1.bf16.msra.mxu0 %v4269
    %4329 = vmatprep.subr.bf16.mxu0 %v4274
    %4330 = vmatpush1.bf16.msra.mxu0 %v4273
    %4331 = vmatprep.subr.bf16.mxu0 %v4278
    %4332 = vmatpush1.bf16.msra.mxu0 %v4277
    %4333 = vmatprep.subr.bf16.mxu0 %v4282
    %4334 = vmatpush1.bf16.msra.mxu0 %v4281
    %4335 = vmatprep.subr.bf16.mxu0 %v4286
    %4336 = vmatpush1.bf16.msra.mxu0 %v4285
    %4337 = vmatprep.subr.bf16.mxu0 0
    %4338 = vmatpush1.bf16.msra.mxu0 0
    %4339 = vmatprep.subr.bf16.mxu0 0
    %4340 = vmatpush1.bf16.msra.mxu0 0
    %4341 = vmatprep.subr.bf16.mxu0 0
    %4342 = vmatpush1.bf16.msra.mxu0 0
    %4343 = vmatprep.subr.bf16.mxu0 0
    %4344 = vmatpush1.bf16.msra.mxu0 0
    %4345 = vmatprep.subr.bf16.mxu0 0
    %4346 = vmatpush1.bf16.msra.mxu0 0
    %4347 = vmatprep.subr.bf16.mxu0 0
    %4348 = vmatpush1.bf16.msra.mxu0 0
    %4349 = vmatprep.subr.bf16.mxu0 0
    %4350 = vmatpush1.bf16.msra.mxu0 0
    %4351 = vmatprep.subr.bf16.mxu0 0
    %4352 = vmatpush1.bf16.msra.mxu0 0
    %4353 = vmatprep.mubr.bf16.mxu0 0
    %4354 = vmatmul.mubr.bf16.gmra.mrb[0].mxu0 %v4128
    %v4355 = vpop.f32.mrb[0].mxu0
    %v4356 = vadd.f32 0.0, %v4355
    %v4357 = vpop.f32.mrb[0].mxu0
    %v4358 = vadd.f32 0.0, %v4357
    %v4359 = vpop.f32.mrb[0].mxu0
    %v4360 = vpop.f32.mrb[0].mxu0
    %4361 = vdwg.mxu0
    %4362 = vmatprep.subr.bf16.mxu0 %v4260
    %4363 = vmatpush1.bf16.msra.mxu0 %v4259
    %4364 = vmatprep.subr.bf16.mxu0 %v4264
    %4365 = vmatpush1.bf16.msra.mxu0 %v4263
    %4366 = vmatprep.subr.bf16.mxu0 %v4268
    %4367 = vmatpush1.bf16.msra.mxu0 %v4267
    %4368 = vmatprep.subr.bf16.mxu0 %v4272
    %4369 = vmatpush1.bf16.msra.mxu0 %v4271
    %4370 = vmatprep.subr.bf16.mxu0 %v4276
    %4371 = vmatpush1.bf16.msra.mxu0 %v4275
    %4372 = vmatprep.subr.bf16.mxu0 %v4280
    %4373 = vmatpush1.bf16.msra.mxu0 %v4279
    %4374 = vmatprep.subr.bf16.mxu0 %v4284
    %4375 = vmatpush1.bf16.msra.mxu0 %v4283
    %4376 = vmatprep.subr.bf16.mxu0 %v4288
    %4377 = vmatpush1.bf16.msra.mxu0 %v4287
    %4378 = vmatprep.subr.bf16.mxu0 0
    %4379 = vmatpush1.bf16.msra.mxu0 0
    %4380 = vmatprep.subr.bf16.mxu0 0
    %4381 = vmatpush1.bf16.msra.mxu0 0
    %4382 = vmatprep.subr.bf16.mxu0 0
    %4383 = vmatpush1.bf16.msra.mxu0 0
    %4384 = vmatprep.subr.bf16.mxu0 0
    %4385 = vmatpush1.bf16.msra.mxu0 0
    %4386 = vmatprep.subr.bf16.mxu0 0
    %4387 = vmatpush1.bf16.msra.mxu0 0
    %4388 = vmatprep.subr.bf16.mxu0 0
    %4389 = vmatpush1.bf16.msra.mxu0 0
    %4390 = vmatprep.subr.bf16.mxu0 0
    %4391 = vmatpush1.bf16.msra.mxu0 0
    %4392 = vmatprep.subr.bf16.mxu0 0
    %4393 = vmatpush1.bf16.msra.mxu0 0
    %4394 = vmatprep.mubr.bf16.mxu0 0
    %4395 = vmatmul.mubr.bf16.gmra.mrb[0].mxu0 %v4128
    %v4396 = vpop.f32.mrb[0].mxu0
    %v4397 = vadd.f32 0.0, %v4396
    %v4398 = vpop.f32.mrb[0].mxu0
    %v4399 = vadd.f32 0.0, %v4398
    %v4400 = vpop.f32.mrb[0].mxu0
    %v4401 = vpop.f32.mrb[0].mxu0
    %4402 = vdwg.mxu0
    %v4403 = vadd.f32 %v4124, %v4356
    %v4404 = vadd.f32 %v4125, %v4358
    %v4405 = vadd.f32 %v4126, %v4397
    %v4406 = vadd.f32 %v4127, %v4399
    %v4407 = vld [vmem:[#allocation3 + $0x20] sm:$0xf]
    %v4408 = vld [vmem:[#allocation3 + $0x28] sm:$0xf]
    %v4409 = vld [vmem:[#allocation3 + $0x30] sm:$0xf]
    %v4410 = vld [vmem:[#allocation3 + $0x38] sm:$0xf]
    %v4411 = vunpack.c.l.bf16 %v4407
    %v4412 = vunpack.c.l.bf16 %v4408
    %v4413 = vunpack.c.l.bf16 %v4409
    %v4414 = vunpack.c.l.bf16 %v4410
    %v4415 = vadd.f32 %v4411, %v100
    %v4416 = vadd.f32 %v4412, %v104
    %v4417 = vadd.f32 %v4413, %v108
    %v4418 = vadd.f32 %v4414, %v112
    %v4419 = vpack.c.bf16 %v4094, %v4094
    %v4420 = vld [vmem:[#allocation9] sm:$0xff]
    %v4421 = vld [vmem:[#allocation9 + $0x8] sm:$0xff]
    %v4422 = vld [vmem:[#allocation9 + $0x10] sm:$0xff]
    %v4423 = vld [vmem:[#allocation9 + $0x18] sm:$0xff]
    %v4424 = vld [vmem:[#allocation9 + $0x20] sm:$0xff]
    %v4425 = vld [vmem:[#allocation9 + $0x28] sm:$0xff]
    %v4426 = vld [vmem:[#allocation9 + $0x30] sm:$0xff]
    %v4427 = vld [vmem:[#allocation9 + $0x38] sm:$0xff]
    %v4428 = vld [vmem:[#allocation9 + $0x40] sm:$0xff]
    %v4429 = vld [vmem:[#allocation9 + $0x48] sm:$0xff]
    %v4430 = vld [vmem:[#allocation9 + $0x50] sm:$0xff]
    %v4431 = vld [vmem:[#allocation9 + $0x58] sm:$0xff]
    %v4432 = vld [vmem:[#allocation9 + $0x60] sm:$0xff]
    %v4433 = vld [vmem:[#allocation9 + $0x68] sm:$0xff]
    %v4434 = vld [vmem:[#allocation9 + $0x70] sm:$0xff]
    %v4435 = vld [vmem:[#allocation9 + $0x78] sm:$0xff]
    %v4436 = vld [vmem:[#allocation9 + $0x80] sm:$0xff]
    %v4437 = vld [vmem:[#allocation9 + $0x88] sm:$0xff]
    %v4438 = vld [vmem:[#allocation9 + $0x90] sm:$0xff]
    %v4439 = vld [vmem:[#allocation9 + $0x98] sm:$0xff]
    %v4440 = vld [vmem:[#allocation9 + $0xa0] sm:$0xff]
    %v4441 = vld [vmem:[#allocation9 + $0xa8] sm:$0xff]
    %v4442 = vld [vmem:[#allocation9 + $0xb0] sm:$0xff]
    %v4443 = vld [vmem:[#allocation9 + $0xb8] sm:$0xff]
    %v4444 = vld [vmem:[#allocation9 + $0xc0] sm:$0xff]
    %v4445 = vld [vmem:[#allocation9 + $0xc8] sm:$0xff]
    %v4446 = vld [vmem:[#allocation9 + $0xd0] sm:$0xff]
    %v4447 = vld [vmem:[#allocation9 + $0xd8] sm:$0xff]
    %v4448 = vld [vmem:[#allocation9 + $0xe0] sm:$0xff]
    %v4449 = vld [vmem:[#allocation9 + $0xe8] sm:$0xff]
    %v4450 = vld [vmem:[#allocation9 + $0xf0] sm:$0xff]
    %v4451 = vld [vmem:[#allocation9 + $0xf8] sm:$0xff]
    %v4484 = vunpack.c.l.b16 %v4420
    %v4485 = vunpack.c.h.b16 %v4420
    %v4486 = vunpack.c.l.b16 %v4421
    %v4487 = vunpack.c.h.b16 %v4421
    %v4488 = vunpack.c.l.b16 %v4422
    %v4489 = vunpack.c.h.b16 %v4422
    %v4490 = vunpack.c.l.b16 %v4423
    %v4491 = vunpack.c.h.b16 %v4423
    %v4492 = vunpack.c.l.b16 %v4424
    %v4493 = vunpack.c.h.b16 %v4424
    %v4494 = vunpack.c.l.b16 %v4425
    %v4495 = vunpack.c.h.b16 %v4425
    %v4496 = vunpack.c.l.b16 %v4426
    %v4497 = vunpack.c.h.b16 %v4426
    %v4498 = vunpack.c.l.b16 %v4427
    %v4499 = vunpack.c.h.b16 %v4427
    %v4500 = vunpack.c.l.b16 %v4428
    %v4501 = vunpack.c.h.b16 %v4428
    %v4502 = vunpack.c.l.b16 %v4429
    %v4503 = vunpack.c.h.b16 %v4429
    %v4504 = vunpack.c.l.b16 %v4430
    %v4505 = vunpack.c.h.b16 %v4430
    %v4506 = vunpack.c.l.b16 %v4431
    %v4507 = vunpack.c.h.b16 %v4431
    %v4508 = vunpack.c.l.b16 %v4432
    %v4509 = vunpack.c.h.b16 %v4432
    %v4510 = vunpack.c.l.b16 %v4433
    %v4511 = vunpack.c.h.b16 %v4433
    %v4512 = vunpack.c.l.b16 %v4434
    %v4513 = vunpack.c.h.b16 %v4434
    %v4514 = vunpack.c.l.b16 %v4435
    %v4515 = vunpack.c.h.b16 %v4435
    %v4516 = vunpack.c.l.b16 %v4436
    %v4517 = vunpack.c.h.b16 %v4436
    %v4518 = vunpack.c.l.b16 %v4437
    %v4519 = vunpack.c.h.b16 %v4437
    %v4520 = vunpack.c.l.b16 %v4438
    %v4521 = vunpack.c.h.b16 %v4438
    %v4522 = vunpack.c.l.b16 %v4439
    %v4523 = vunpack.c.h.b16 %v4439
    %v4524 = vunpack.c.l.b16 %v4440
    %v4525 = vunpack.c.h.b16 %v4440
    %v4526 = vunpack.c.l.b16 %v4441
    %v4527 = vunpack.c.h.b16 %v4441
    %v4528 = vunpack.c.l.b16 %v4442
    %v4529 = vunpack.c.h.b16 %v4442
    %v4530 = vunpack.c.l.b16 %v4443
    %v4531 = vunpack.c.h.b16 %v4443
    %v4532 = vunpack.c.l.b16 %v4444
    %v4533 = vunpack.c.h.b16 %v4444
    %v4534 = vunpack.c.l.b16 %v4445
    %v4535 = vunpack.c.h.b16 %v4445
    %v4536 = vunpack.c.l.b16 %v4446
    %v4537 = vunpack.c.h.b16 %v4446
    %v4538 = vunpack.c.l.b16 %v4447
    %v4539 = vunpack.c.h.b16 %v4447
    %v4540 = vunpack.c.l.b16 %v4448
    %v4541 = vunpack.c.h.b16 %v4448
    %v4542 = vunpack.c.l.b16 %v4449
    %v4543 = vunpack.c.h.b16 %v4449
    %v4544 = vunpack.c.l.b16 %v4450
    %v4545 = vunpack.c.h.b16 %v4450
    %v4546 = vunpack.c.l.b16 %v4451
    %v4547 = vunpack.c.h.b16 %v4451
    %v4548 = vpack.c.b16 %v4488, %v4484
    %v4549 = vpack.c.b16 %v4489, %v4485
    %v4550 = vpack.c.b16 %v4490, %v4486
    %v4551 = vpack.c.b16 %v4491, %v4487
    %v4552 = vpack.c.b16 %v4496, %v4492
    %v4553 = vpack.c.b16 %v4497, %v4493
    %v4554 = vpack.c.b16 %v4498, %v4494
    %v4555 = vpack.c.b16 %v4499, %v4495
    %v4556 = vpack.c.b16 %v4504, %v4500
    %v4557 = vpack.c.b16 %v4505, %v4501
    %v4558 = vpack.c.b16 %v4506, %v4502
    %v4559 = vpack.c.b16 %v4507, %v4503
    %v4560 = vpack.c.b16 %v4512, %v4508
    %v4561 = vpack.c.b16 %v4513, %v4509
    %v4562 = vpack.c.b16 %v4514, %v4510
    %v4563 = vpack.c.b16 %v4515, %v4511
    %v4564 = vpack.c.b16 %v4520, %v4516
    %v4565 = vpack.c.b16 %v4521, %v4517
    %v4566 = vpack.c.b16 %v4522, %v4518
    %v4567 = vpack.c.b16 %v4523, %v4519
    %v4568 = vpack.c.b16 %v4528, %v4524
    %v4569 = vpack.c.b16 %v4529, %v4525
    %v4570 = vpack.c.b16 %v4530, %v4526
    %v4571 = vpack.c.b16 %v4531, %v4527
    %v4572 = vpack.c.b16 %v4536, %v4532
    %v4573 = vpack.c.b16 %v4537, %v4533
    %v4574 = vpack.c.b16 %v4538, %v4534
    %v4575 = vpack.c.b16 %v4539, %v4535
    %v4576 = vpack.c.b16 %v4544, %v4540
    %v4577 = vpack.c.b16 %v4545, %v4541
    %v4578 = vpack.c.b16 %v4546, %v4542
    %v4579 = vpack.c.b16 %v4547, %v4543
    %4612 = vmatprep.subr.bf16.mxu0 %v4549
    %4613 = vmatpush1.bf16.msra.mxu0 %v4548
    %4614 = vmatprep.subr.bf16.mxu0 %v4553
    %4615 = vmatpush1.bf16.msra.mxu0 %v4552
    %4616 = vmatprep.subr.bf16.mxu0 %v4557
    %4617 = vmatpush1.bf16.msra.mxu0 %v4556
    %4618 = vmatprep.subr.bf16.mxu0 %v4561
    %4619 = vmatpush1.bf16.msra.mxu0 %v4560
    %4620 = vmatprep.subr.bf16.mxu0 %v4565
    %4621 = vmatpush1.bf16.msra.mxu0 %v4564
    %4622 = vmatprep.subr.bf16.mxu0 %v4569
    %4623 = vmatpush1.bf16.msra.mxu0 %v4568
    %4624 = vmatprep.subr.bf16.mxu0 %v4573
    %4625 = vmatpush1.bf16.msra.mxu0 %v4572
    %4626 = vmatprep.subr.bf16.mxu0 %v4577
    %4627 = vmatpush1.bf16.msra.mxu0 %v4576
    %4628 = vmatprep.subr.bf16.mxu0 0
    %4629 = vmatpush1.bf16.msra.mxu0 0
    %4630 = vmatprep.subr.bf16.mxu0 0
    %4631 = vmatpush1.bf16.msra.mxu0 0
    %4632 = vmatprep.subr.bf16.mxu0 0
    %4633 = vmatpush1.bf16.msra.mxu0 0
    %4634 = vmatprep.subr.bf16.mxu0 0
    %4635 = vmatpush1.bf16.msra.mxu0 0
    %4636 = vmatprep.subr.bf16.mxu0 0
    %4637 = vmatpush1.bf16.msra.mxu0 0
    %4638 = vmatprep.subr.bf16.mxu0 0
    %4639 = vmatpush1.bf16.msra.mxu0 0
    %4640 = vmatprep.subr.bf16.mxu0 0
    %4641 = vmatpush1.bf16.msra.mxu0 0
    %4642 = vmatprep.subr.bf16.mxu0 0
    %4643 = vmatpush1.bf16.msra.mxu0 0
    %4644 = vmatprep.mubr.bf16.mxu0 0
    %4645 = vmatmul.mubr.bf16.gmra.mrb[0].mxu0 %v4419
    %v4646 = vpop.f32.mrb[0].mxu0
    %v4647 = vadd.f32 0.0, %v4646
    %v4648 = vpop.f32.mrb[0].mxu0
    %v4649 = vadd.f32 0.0, %v4648
    %v4650 = vpop.f32.mrb[0].mxu0
    %v4651 = vpop.f32.mrb[0].mxu0
    %4652 = vdwg.mxu0
    %4653 = vmatprep.subr.bf16.mxu0 %v4551
    %4654 = vmatpush1.bf16.msra.mxu0 %v4550
    %4655 = vmatprep.subr.bf16.mxu0 %v4555
    %4656 = vmatpush1.bf16.msra.mxu0 %v4554
    %4657 = vmatprep.subr.bf16.mxu0 %v4559
    %4658 = vmatpush1.bf16.msra.mxu0 %v4558
    %4659 = vmatprep.subr.bf16.mxu0 %v4563
    %4660 = vmatpush1.bf16.msra.mxu0 %v4562
    %4661 = vmatprep.subr.bf16.mxu0 %v4567
    %4662 = vmatpush1.bf16.msra.mxu0 %v4566
    %4663 = vmatprep.subr.bf16.mxu0 %v4571
    %4664 = vmatpush1.bf16.msra.mxu0 %v4570
    %4665 = vmatprep.subr.bf16.mxu0 %v4575
    %4666 = vmatpush1.bf16.msra.mxu0 %v4574
    %4667 = vmatprep.subr.bf16.mxu0 %v4579
    %4668 = vmatpush1.bf16.msra.mxu0 %v4578
    %4669 = vmatprep.subr.bf16.mxu0 0
    %4670 = vmatpush1.bf16.msra.mxu0 0
    %4671 = vmatprep.subr.bf16.mxu0 0
    %4672 = vmatpush1.bf16.msra.mxu0 0
    %4673 = vmatprep.subr.bf16.mxu0 0
    %4674 = vmatpush1.bf16.msra.mxu0 0
    %4675 = vmatprep.subr.bf16.mxu0 0
    %4676 = vmatpush1.bf16.msra.mxu0 0
    %4677 = vmatprep.subr.bf16.mxu0 0
    %4678 = vmatpush1.bf16.msra.mxu0 0
    %4679 = vmatprep.subr.bf16.mxu0 0
    %4680 = vmatpush1.bf16.msra.mxu0 0
    %4681 = vmatprep.subr.bf16.mxu0 0
    %4682 = vmatpush1.bf16.msra.mxu0 0
    %4683 = vmatprep.subr.bf16.mxu0 0
    %4684 = vmatpush1.bf16.msra.mxu0 0
    %4685 = vmatprep.mubr.bf16.mxu0 0
    %4686 = vmatmul.mubr.bf16.gmra.mrb[0].mxu0 %v4419
    %v4687 = vpop.f32.mrb[0].mxu0
    %v4688 = vadd.f32 0.0, %v4687
    %v4689 = vpop.f32.mrb[0].mxu0
    %v4690 = vadd.f32 0.0, %v4689
    %v4691 = vpop.f32.mrb[0].mxu0
    %v4692 = vpop.f32.mrb[0].mxu0
    %4693 = vdwg.mxu0
    %v4694 = vadd.f32 %v4415, %v4647
    %v4695 = vadd.f32 %v4416, %v4649
    %v4696 = vadd.f32 %v4417, %v4688
    %v4697 = vadd.f32 %v4418, %v4690
    %v4698 = vxor.u32 %v4403, 2147483648
    %v4699 = vmul.f32 %v4698, 1.442695
    %v4700 = vpow.pop %v4699
    %v4701 = vadd.f32 %v4700, 1.0
    %v4702 = vrcp.pop %v4701
    %v4703 = vmul.f32 1.0, %v4702
    %v4704 = vxor.u32 %v4404, 2147483648
    %v4705 = vmul.f32 %v4704, 1.442695
    %v4706 = vpow.pop %v4705
    %v4707 = vadd.f32 %v4706, 1.0
    %v4708 = vrcp.pop %v4707
    %v4709 = vmul.f32 1.0, %v4708
    %v4710 = vtanh.pop %v4405
    %v4711 = vxor.u32 %v4406, 2147483648
    %v4712 = vmul.f32 %v4711, 1.442695
    %v4713 = vpow.pop %v4712
    %v4714 = vadd.f32 %v4713, 1.0
    %v4715 = vrcp.pop %v4714
    %v4716 = vmul.f32 1.0, %v4715
    %v4717 = vmul.f32 %v4709, %v4069
    %v4718 = vmul.f32 %v4703, %v4710
    %v4719 = vadd.f32 %v4717, %v4718
    %v4720 = vtanh.pop %v4719
    %v4721 = vmul.f32 %v4716, %v4720
    %v4722 = vsel %vm2773, %v4721, %v4068
    %v4723 = vsel %vm2773, %v4719, %v4069
    %v4724 = vxor.u32 %v4694, 2147483648
    %v4725 = vmul.f32 %v4724, 1.442695
    %v4726 = vpow.pop %v4725
    %v4727 = vadd.f32 %v4726, 1.0
    %v4728 = vrcp.pop %v4727
    %v4729 = vmul.f32 1.0, %v4728
    %v4730 = vxor.u32 %v4695, 2147483648
    %v4731 = vmul.f32 %v4730, 1.442695
    %v4732 = vpow.pop %v4731
    %v4733 = vadd.f32 %v4732, 1.0
    %v4734 = vrcp.pop %v4733
    %v4735 = vmul.f32 1.0, %v4734
    %v4736 = vtanh.pop %v4696
    %v4737 = vxor.u32 %v4697, 2147483648
    %v4738 = vmul.f32 %v4737, 1.442695
    %v4739 = vpow.pop %v4738
    %v4740 = vadd.f32 %v4739, 1.0
    %v4741 = vrcp.pop %v4740
    %v4742 = vmul.f32 1.0, %v4741
    %v4743 = vmul.f32 %v4735, %v4095
    %v4744 = vmul.f32 %v4729, %v4736
    %v4745 = vadd.f32 %v4743, %v4744
    %v4746 = vtanh.pop %v4745
    %v4747 = vmul.f32 %v4742, %v4746
    %v4748 = vsel %vm2741, %v4747, %v4094
    %v4749 = vsel %vm2741, %v4745, %v4095
    %v4750 = vld [vmem:[#allocation10 + $0x28] sm:$0xff]
    %v4751 = vsel %vm2773, %v4721, 0.0
    %v4752 = vadd.f32 %v4750, %v4751
    %4753 = vst [vmem:[#allocation10 + $0x28] sm:$0xff] %v4752
    %v4754 = vld [vmem:[#allocation10 + $0x10] sm:$0xff]
    %v4755 = vsel %vm2741, %v4747, 0.0
    %v4756 = vadd.f32 %v4754, %v4755
    %4757 = vst [vmem:[#allocation10 + $0x10] sm:$0xff] %v4756
    %v4758 = vld [vmem:[#allocation2 + $0x60] sm:$0xf]
    %v4759 = vld [vmem:[#allocation2 + $0x68] sm:$0xf]
    %v4760 = vld [vmem:[#allocation2 + $0x70] sm:$0xf]
    %v4761 = vld [vmem:[#allocation2 + $0x78] sm:$0xf]
    %v4762 = vunpack.c.l.bf16 %v4758
    %v4763 = vunpack.c.l.bf16 %v4759
    %v4764 = vunpack.c.l.bf16 %v4760
    %v4765 = vunpack.c.l.bf16 %v4761
    %v4766 = vadd.f32 %v4762, %v78
    %v4767 = vadd.f32 %v4763, %v82
    %v4768 = vadd.f32 %v4764, %v86
    %v4769 = vadd.f32 %v4765, %v90
    %v4770 = vpack.c.bf16 %v4722, %v4722
    %v4771 = vld [vmem:[#allocation7] sm:$0xff]
    %v4772 = vld [vmem:[#allocation7 + $0x8] sm:$0xff]
    %v4773 = vld [vmem:[#allocation7 + $0x10] sm:$0xff]
    %v4774 = vld [vmem:[#allocation7 + $0x18] sm:$0xff]
    %v4775 = vld [vmem:[#allocation7 + $0x20] sm:$0xff]
    %v4776 = vld [vmem:[#allocation7 + $0x28] sm:$0xff]
    %v4777 = vld [vmem:[#allocation7 + $0x30] sm:$0xff]
    %v4778 = vld [vmem:[#allocation7 + $0x38] sm:$0xff]
    %v4779 = vld [vmem:[#allocation7 + $0x40] sm:$0xff]
    %v4780 = vld [vmem:[#allocation7 + $0x48] sm:$0xff]
    %v4781 = vld [vmem:[#allocation7 + $0x50] sm:$0xff]
    %v4782 = vld [vmem:[#allocation7 + $0x58] sm:$0xff]
    %v4783 = vld [vmem:[#allocation7 + $0x60] sm:$0xff]
    %v4784 = vld [vmem:[#allocation7 + $0x68] sm:$0xff]
    %v4785 = vld [vmem:[#allocation7 + $0x70] sm:$0xff]
    %v4786 = vld [vmem:[#allocation7 + $0x78] sm:$0xff]
    %v4787 = vld [vmem:[#allocation7 + $0x80] sm:$0xff]
    %v4788 = vld [vmem:[#allocation7 + $0x88] sm:$0xff]
    %v4789 = vld [vmem:[#allocation7 + $0x90] sm:$0xff]
    %v4790 = vld [vmem:[#allocation7 + $0x98] sm:$0xff]
    %v4791 = vld [vmem:[#allocation7 + $0xa0] sm:$0xff]
    %v4792 = vld [vmem:[#allocation7 + $0xa8] sm:$0xff]
    %v4793 = vld [vmem:[#allocation7 + $0xb0] sm:$0xff]
    %v4794 = vld [vmem:[#allocation7 + $0xb8] sm:$0xff]
    %v4795 = vld [vmem:[#allocation7 + $0xc0] sm:$0xff]
    %v4796 = vld [vmem:[#allocation7 + $0xc8] sm:$0xff]
    %v4797 = vld [vmem:[#allocation7 + $0xd0] sm:$0xff]
    %v4798 = vld [vmem:[#allocation7 + $0xd8] sm:$0xff]
    %v4799 = vld [vmem:[#allocation7 + $0xe0] sm:$0xff]
    %v4800 = vld [vmem:[#allocation7 + $0xe8] sm:$0xff]
    %v4801 = vld [vmem:[#allocation7 + $0xf0] sm:$0xff]
    %v4802 = vld [vmem:[#allocation7 + $0xf8] sm:$0xff]
    %v4835 = vunpack.c.l.b16 %v4771
    %v4836 = vunpack.c.h.b16 %v4771
    %v4837 = vunpack.c.l.b16 %v4772
    %v4838 = vunpack.c.h.b16 %v4772
    %v4839 = vunpack.c.l.b16 %v4773
    %v4840 = vunpack.c.h.b16 %v4773
    %v4841 = vunpack.c.l.b16 %v4774
    %v4842 = vunpack.c.h.b16 %v4774
    %v4843 = vunpack.c.l.b16 %v4775
    %v4844 = vunpack.c.h.b16 %v4775
    %v4845 = vunpack.c.l.b16 %v4776
    %v4846 = vunpack.c.h.b16 %v4776
    %v4847 = vunpack.c.l.b16 %v4777
    %v4848 = vunpack.c.h.b16 %v4777
    %v4849 = vunpack.c.l.b16 %v4778
    %v4850 = vunpack.c.h.b16 %v4778
    %v4851 = vunpack.c.l.b16 %v4779
    %v4852 = vunpack.c.h.b16 %v4779
    %v4853 = vunpack.c.l.b16 %v4780
    %v4854 = vunpack.c.h.b16 %v4780
    %v4855 = vunpack.c.l.b16 %v4781
    %v4856 = vunpack.c.h.b16 %v4781
    %v4857 = vunpack.c.l.b16 %v4782
    %v4858 = vunpack.c.h.b16 %v4782
    %v4859 = vunpack.c.l.b16 %v4783
    %v4860 = vunpack.c.h.b16 %v4783
    %v4861 = vunpack.c.l.b16 %v4784
    %v4862 = vunpack.c.h.b16 %v4784
    %v4863 = vunpack.c.l.b16 %v4785
    %v4864 = vunpack.c.h.b16 %v4785
    %v4865 = vunpack.c.l.b16 %v4786
    %v4866 = vunpack.c.h.b16 %v4786
    %v4867 = vunpack.c.l.b16 %v4787
    %v4868 = vunpack.c.h.b16 %v4787
    %v4869 = vunpack.c.l.b16 %v4788
    %v4870 = vunpack.c.h.b16 %v4788
    %v4871 = vunpack.c.l.b16 %v4789
    %v4872 = vunpack.c.h.b16 %v4789
    %v4873 = vunpack.c.l.b16 %v4790
    %v4874 = vunpack.c.h.b16 %v4790
    %v4875 = vunpack.c.l.b16 %v4791
    %v4876 = vunpack.c.h.b16 %v4791
    %v4877 = vunpack.c.l.b16 %v4792
    %v4878 = vunpack.c.h.b16 %v4792
    %v4879 = vunpack.c.l.b16 %v4793
    %v4880 = vunpack.c.h.b16 %v4793
    %v4881 = vunpack.c.l.b16 %v4794
    %v4882 = vunpack.c.h.b16 %v4794
    %v4883 = vunpack.c.l.b16 %v4795
    %v4884 = vunpack.c.h.b16 %v4795
    %v4885 = vunpack.c.l.b16 %v4796
    %v4886 = vunpack.c.h.b16 %v4796
    %v4887 = vunpack.c.l.b16 %v4797
    %v4888 = vunpack.c.h.b16 %v4797
    %v4889 = vunpack.c.l.b16 %v4798
    %v4890 = vunpack.c.h.b16 %v4798
    %v4891 = vunpack.c.l.b16 %v4799
    %v4892 = vunpack.c.h.b16 %v4799
    %v4893 = vunpack.c.l.b16 %v4800
    %v4894 = vunpack.c.h.b16 %v4800
    %v4895 = vunpack.c.l.b16 %v4801
    %v4896 = vunpack.c.h.b16 %v4801
    %v4897 = vunpack.c.l.b16 %v4802
    %v4898 = vunpack.c.h.b16 %v4802
    %v4899 = vpack.c.b16 %v4839, %v4835
    %v4900 = vpack.c.b16 %v4840, %v4836
    %v4901 = vpack.c.b16 %v4841, %v4837
    %v4902 = vpack.c.b16 %v4842, %v4838
    %v4903 = vpack.c.b16 %v4847, %v4843
    %v4904 = vpack.c.b16 %v4848, %v4844
    %v4905 = vpack.c.b16 %v4849, %v4845
    %v4906 = vpack.c.b16 %v4850, %v4846
    %v4907 = vpack.c.b16 %v4855, %v4851
    %v4908 = vpack.c.b16 %v4856, %v4852
    %v4909 = vpack.c.b16 %v4857, %v4853
    %v4910 = vpack.c.b16 %v4858, %v4854
    %v4911 = vpack.c.b16 %v4863, %v4859
    %v4912 = vpack.c.b16 %v4864, %v4860
    %v4913 = vpack.c.b16 %v4865, %v4861
    %v4914 = vpack.c.b16 %v4866, %v4862
    %v4915 = vpack.c.b16 %v4871, %v4867
    %v4916 = vpack.c.b16 %v4872, %v4868
    %v4917 = vpack.c.b16 %v4873, %v4869
    %v4918 = vpack.c.b16 %v4874, %v4870
    %v4919 = vpack.c.b16 %v4879, %v4875
    %v4920 = vpack.c.b16 %v4880, %v4876
    %v4921 = vpack.c.b16 %v4881, %v4877
    %v4922 = vpack.c.b16 %v4882, %v4878
    %v4923 = vpack.c.b16 %v4887, %v4883
    %v4924 = vpack.c.b16 %v4888, %v4884
    %v4925 = vpack.c.b16 %v4889, %v4885
    %v4926 = vpack.c.b16 %v4890, %v4886
    %v4927 = vpack.c.b16 %v4895, %v4891
    %v4928 = vpack.c.b16 %v4896, %v4892
    %v4929 = vpack.c.b16 %v4897, %v4893
    %v4930 = vpack.c.b16 %v4898, %v4894
    %4963 = vmatprep.subr.bf16.mxu0 %v4900
    %4964 = vmatpush1.bf16.msra.mxu0 %v4899
    %4965 = vmatprep.subr.bf16.mxu0 %v4904
    %4966 = vmatpush1.bf16.msra.mxu0 %v4903
    %4967 = vmatprep.subr.bf16.mxu0 %v4908
    %4968 = vmatpush1.bf16.msra.mxu0 %v4907
    %4969 = vmatprep.subr.bf16.mxu0 %v4912
    %4970 = vmatpush1.bf16.msra.mxu0 %v4911
    %4971 = vmatprep.subr.bf16.mxu0 %v4916
    %4972 = vmatpush1.bf16.msra.mxu0 %v4915
    %4973 = vmatprep.subr.bf16.mxu0 %v4920
    %4974 = vmatpush1.bf16.msra.mxu0 %v4919
    %4975 = vmatprep.subr.bf16.mxu0 %v4924
    %4976 = vmatpush1.bf16.msra.mxu0 %v4923
    %4977 = vmatprep.subr.bf16.mxu0 %v4928
    %4978 = vmatpush1.bf16.msra.mxu0 %v4927
    %4979 = vmatprep.subr.bf16.mxu0 0
    %4980 = vmatpush1.bf16.msra.mxu0 0
    %4981 = vmatprep.subr.bf16.mxu0 0
    %4982 = vmatpush1.bf16.msra.mxu0 0
    %4983 = vmatprep.subr.bf16.mxu0 0
    %4984 = vmatpush1.bf16.msra.mxu0 0
    %4985 = vmatprep.subr.bf16.mxu0 0
    %4986 = vmatpush1.bf16.msra.mxu0 0
    %4987 = vmatprep.subr.bf16.mxu0 0
    %4988 = vmatpush1.bf16.msra.mxu0 0
    %4989 = vmatprep.subr.bf16.mxu0 0
    %4990 = vmatpush1.bf16.msra.mxu0 0
    %4991 = vmatprep.subr.bf16.mxu0 0
    %4992 = vmatpush1.bf16.msra.mxu0 0
    %4993 = vmatprep.subr.bf16.mxu0 0
    %4994 = vmatpush1.bf16.msra.mxu0 0
    %4995 = vmatprep.mubr.bf16.mxu0 0
    %4996 = vmatmul.mubr.bf16.gmra.mrb[0].mxu0 %v4770
    %v4997 = vpop.f32.mrb[0].mxu0
    %v4998 = vadd.f32 0.0, %v4997
    %v4999 = vpop.f32.mrb[0].mxu0
    %v5000 = vadd.f32 0.0, %v4999
    %v5001 = vpop.f32.mrb[0].mxu0
    %v5002 = vpop.f32.mrb[0].mxu0
    %5003 = vdwg.mxu0
    %5004 = vmatprep.subr.bf16.mxu0 %v4902
    %5005 = vmatpush1.bf16.msra.mxu0 %v4901
    %5006 = vmatprep.subr.bf16.mxu0 %v4906
    %5007 = vmatpush1.bf16.msra.mxu0 %v4905
    %5008 = vmatprep.subr.bf16.mxu0 %v4910
    %5009 = vmatpush1.bf16.msra.mxu0 %v4909
    %5010 = vmatprep.subr.bf16.mxu0 %v4914
    %5011 = vmatpush1.bf16.msra.mxu0 %v4913
    %5012 = vmatprep.subr.bf16.mxu0 %v4918
    %5013 = vmatpush1.bf16.msra.mxu0 %v4917
    %5014 = vmatprep.subr.bf16.mxu0 %v4922
    %5015 = vmatpush1.bf16.msra.mxu0 %v4921
    %5016 = vmatprep.subr.bf16.mxu0 %v4926
    %5017 = vmatpush1.bf16.msra.mxu0 %v4925
    %5018 = vmatprep.subr.bf16.mxu0 %v4930
    %5019 = vmatpush1.bf16.msra.mxu0 %v4929
    %5020 = vmatprep.subr.bf16.mxu0 0
    %5021 = vmatpush1.bf16.msra.mxu0 0
    %5022 = vmatprep.subr.bf16.mxu0 0
    %5023 = vmatpush1.bf16.msra.mxu0 0
    %5024 = vmatprep.subr.bf16.mxu0 0
    %5025 = vmatpush1.bf16.msra.mxu0 0
    %5026 = vmatprep.subr.bf16.mxu0 0
    %5027 = vmatpush1.bf16.msra.mxu0 0
    %5028 = vmatprep.subr.bf16.mxu0 0
    %5029 = vmatpush1.bf16.msra.mxu0 0
    %5030 = vmatprep.subr.bf16.mxu0 0
    %5031 = vmatpush1.bf16.msra.mxu0 0
    %5032 = vmatprep.subr.bf16.mxu0 0
    %5033 = vmatpush1.bf16.msra.mxu0 0
    %5034 = vmatprep.subr.bf16.mxu0 0
    %5035 = vmatpush1.bf16.msra.mxu0 0
    %5036 = vmatprep.mubr.bf16.mxu0 0
    %5037 = vmatmul.mubr.bf16.gmra.mrb[0].mxu0 %v4770
    %v5038 = vpop.f32.mrb[0].mxu0
    %v5039 = vadd.f32 0.0, %v5038
    %v5040 = vpop.f32.mrb[0].mxu0
    %v5041 = vadd.f32 0.0, %v5040
    %v5042 = vpop.f32.mrb[0].mxu0
    %v5043 = vpop.f32.mrb[0].mxu0
    %5044 = vdwg.mxu0
    %v5045 = vadd.f32 %v4766, %v4998
    %v5046 = vadd.f32 %v4767, %v5000
    %v5047 = vadd.f32 %v4768, %v5039
    %v5048 = vadd.f32 %v4769, %v5041
    %v5049 = vld [vmem:[#allocation3] sm:$0xf0]
    %v5050 = vld [vmem:[#allocation3 + $0x8] sm:$0xf0]
    %v5051 = vld [vmem:[#allocation3 + $0x10] sm:$0xf0]
    %v5052 = vld [vmem:[#allocation3 + $0x18] sm:$0xf0]
    %v5057 = vrot.slane %v5049, 4
    %v5058 = vrot.slane %v5050, 4
    %v5059 = vrot.slane %v5051, 4
    %v5060 = vrot.slane %v5052, 4
    %v5065 = vunpack.c.l.bf16 %v5057
    %v5066 = vunpack.c.l.bf16 %v5058
    %v5067 = vunpack.c.l.bf16 %v5059
    %v5068 = vunpack.c.l.bf16 %v5060
    %v5069 = vadd.f32 %v5065, %v100
    %v5070 = vadd.f32 %v5066, %v104
    %v5071 = vadd.f32 %v5067, %v108
    %v5072 = vadd.f32 %v5068, %v112
    %v5073 = vpack.c.bf16 %v4748, %v4748
    %v5074 = vld [vmem:[#allocation9] sm:$0xff]
    %v5075 = vld [vmem:[#allocation9 + $0x8] sm:$0xff]
    %v5076 = vld [vmem:[#allocation9 + $0x10] sm:$0xff]
    %v5077 = vld [vmem:[#allocation9 + $0x18] sm:$0xff]
    %v5078 = vld [vmem:[#allocation9 + $0x20] sm:$0xff]
    %v5079 = vld [vmem:[#allocation9 + $0x28] sm:$0xff]
    %v5080 = vld [vmem:[#allocation9 + $0x30] sm:$0xff]
    %v5081 = vld [vmem:[#allocation9 + $0x38] sm:$0xff]
    %v5082 = vld [vmem:[#allocation9 + $0x40] sm:$0xff]
    %v5083 = vld [vmem:[#allocation9 + $0x48] sm:$0xff]
    %v5084 = vld [vmem:[#allocation9 + $0x50] sm:$0xff]
    %v5085 = vld [vmem:[#allocation9 + $0x58] sm:$0xff]
    %v5086 = vld [vmem:[#allocation9 + $0x60] sm:$0xff]
    %v5087 = vld [vmem:[#allocation9 + $0x68] sm:$0xff]
    %v5088 = vld [vmem:[#allocation9 + $0x70] sm:$0xff]
    %v5089 = vld [vmem:[#allocation9 + $0x78] sm:$0xff]
    %v5090 = vld [vmem:[#allocation9 + $0x80] sm:$0xff]
    %v5091 = vld [vmem:[#allocation9 + $0x88] sm:$0xff]
    %v5092 = vld [vmem:[#allocation9 + $0x90] sm:$0xff]
    %v5093 = vld [vmem:[#allocation9 + $0x98] sm:$0xff]
    %v5094 = vld [vmem:[#allocation9 + $0xa0] sm:$0xff]
    %v5095 = vld [vmem:[#allocation9 + $0xa8] sm:$0xff]
    %v5096 = vld [vmem:[#allocation9 + $0xb0] sm:$0xff]
    %v5097 = vld [vmem:[#allocation9 + $0xb8] sm:$0xff]
    %v5098 = vld [vmem:[#allocation9 + $0xc0] sm:$0xff]
    %v5099 = vld [vmem:[#allocation9 + $0xc8] sm:$0xff]
    %v5100 = vld [vmem:[#allocation9 + $0xd0] sm:$0xff]
    %v5101 = vld [vmem:[#allocation9 + $0xd8] sm:$0xff]
    %v5102 = vld [vmem:[#allocation9 + $0xe0] sm:$0xff]
    %v5103 = vld [vmem:[#allocation9 + $0xe8] sm:$0xff]
    %v5104 = vld [vmem:[#allocation9 + $0xf0] sm:$0xff]
    %v5105 = vld [vmem:[#allocation9 + $0xf8] sm:$0xff]
    %v5138 = vunpack.c.l.b16 %v5074
    %v5139 = vunpack.c.h.b16 %v5074
    %v5140 = vunpack.c.l.b16 %v5075
    %v5141 = vunpack.c.h.b16 %v5075
    %v5142 = vunpack.c.l.b16 %v5076
    %v5143 = vunpack.c.h.b16 %v5076
    %v5144 = vunpack.c.l.b16 %v5077
    %v5145 = vunpack.c.h.b16 %v5077
    %v5146 = vunpack.c.l.b16 %v5078
    %v5147 = vunpack.c.h.b16 %v5078
    %v5148 = vunpack.c.l.b16 %v5079
    %v5149 = vunpack.c.h.b16 %v5079
    %v5150 = vunpack.c.l.b16 %v5080
    %v5151 = vunpack.c.h.b16 %v5080
    %v5152 = vunpack.c.l.b16 %v5081
    %v5153 = vunpack.c.h.b16 %v5081
    %v5154 = vunpack.c.l.b16 %v5082
    %v5155 = vunpack.c.h.b16 %v5082
    %v5156 = vunpack.c.l.b16 %v5083
    %v5157 = vunpack.c.h.b16 %v5083
    %v5158 = vunpack.c.l.b16 %v5084
    %v5159 = vunpack.c.h.b16 %v5084
    %v5160 = vunpack.c.l.b16 %v5085
    %v5161 = vunpack.c.h.b16 %v5085
    %v5162 = vunpack.c.l.b16 %v5086
    %v5163 = vunpack.c.h.b16 %v5086
    %v5164 = vunpack.c.l.b16 %v5087
    %v5165 = vunpack.c.h.b16 %v5087
    %v5166 = vunpack.c.l.b16 %v5088
    %v5167 = vunpack.c.h.b16 %v5088
    %v5168 = vunpack.c.l.b16 %v5089
    %v5169 = vunpack.c.h.b16 %v5089
    %v5170 = vunpack.c.l.b16 %v5090
    %v5171 = vunpack.c.h.b16 %v5090
    %v5172 = vunpack.c.l.b16 %v5091
    %v5173 = vunpack.c.h.b16 %v5091
    %v5174 = vunpack.c.l.b16 %v5092
    %v5175 = vunpack.c.h.b16 %v5092
    %v5176 = vunpack.c.l.b16 %v5093
    %v5177 = vunpack.c.h.b16 %v5093
    %v5178 = vunpack.c.l.b16 %v5094
    %v5179 = vunpack.c.h.b16 %v5094
    %v5180 = vunpack.c.l.b16 %v5095
    %v5181 = vunpack.c.h.b16 %v5095
    %v5182 = vunpack.c.l.b16 %v5096
    %v5183 = vunpack.c.h.b16 %v5096
    %v5184 = vunpack.c.l.b16 %v5097
    %v5185 = vunpack.c.h.b16 %v5097
    %v5186 = vunpack.c.l.b16 %v5098
    %v5187 = vunpack.c.h.b16 %v5098
    %v5188 = vunpack.c.l.b16 %v5099
    %v5189 = vunpack.c.h.b16 %v5099
    %v5190 = vunpack.c.l.b16 %v5100
    %v5191 = vunpack.c.h.b16 %v5100
    %v5192 = vunpack.c.l.b16 %v5101
    %v5193 = vunpack.c.h.b16 %v5101
    %v5194 = vunpack.c.l.b16 %v5102
    %v5195 = vunpack.c.h.b16 %v5102
    %v5196 = vunpack.c.l.b16 %v5103
    %v5197 = vunpack.c.h.b16 %v5103
    %v5198 = vunpack.c.l.b16 %v5104
    %v5199 = vunpack.c.h.b16 %v5104
    %v5200 = vunpack.c.l.b16 %v5105
    %v5201 = vunpack.c.h.b16 %v5105
    %v5202 = vpack.c.b16 %v5142, %v5138
    %v5203 = vpack.c.b16 %v5143, %v5139
    %v5204 = vpack.c.b16 %v5144, %v5140
    %v5205 = vpack.c.b16 %v5145, %v5141
    %v5206 = vpack.c.b16 %v5150, %v5146
    %v5207 = vpack.c.b16 %v5151, %v5147
    %v5208 = vpack.c.b16 %v5152, %v5148
    %v5209 = vpack.c.b16 %v5153, %v5149
    %v5210 = vpack.c.b16 %v5158, %v5154
    %v5211 = vpack.c.b16 %v5159, %v5155
    %v5212 = vpack.c.b16 %v5160, %v5156
    %v5213 = vpack.c.b16 %v5161, %v5157
    %v5214 = vpack.c.b16 %v5166, %v5162
    %v5215 = vpack.c.b16 %v5167, %v5163
    %v5216 = vpack.c.b16 %v5168, %v5164
    %v5217 = vpack.c.b16 %v5169, %v5165
    %v5218 = vpack.c.b16 %v5174, %v5170
    %v5219 = vpack.c.b16 %v5175, %v5171
    %v5220 = vpack.c.b16 %v5176, %v5172
    %v5221 = vpack.c.b16 %v5177, %v5173
    %v5222 = vpack.c.b16 %v5182, %v5178
    %v5223 = vpack.c.b16 %v5183, %v5179
    %v5224 = vpack.c.b16 %v5184, %v5180
    %v5225 = vpack.c.b16 %v5185, %v5181
    %v5226 = vpack.c.b16 %v5190, %v5186
    %v5227 = vpack.c.b16 %v5191, %v5187
    %v5228 = vpack.c.b16 %v5192, %v5188
    %v5229 = vpack.c.b16 %v5193, %v5189
    %v5230 = vpack.c.b16 %v5198, %v5194
    %v5231 = vpack.c.b16 %v5199, %v5195
    %v5232 = vpack.c.b16 %v5200, %v5196
    %v5233 = vpack.c.b16 %v5201, %v5197
    %5266 = vmatprep.subr.bf16.mxu0 %v5203
    %5267 = vmatpush1.bf16.msra.mxu0 %v5202
    %5268 = vmatprep.subr.bf16.mxu0 %v5207
    %5269 = vmatpush1.bf16.msra.mxu0 %v5206
    %5270 = vmatprep.subr.bf16.mxu0 %v5211
    %5271 = vmatpush1.bf16.msra.mxu0 %v5210
    %5272 = vmatprep.subr.bf16.mxu0 %v5215
    %5273 = vmatpush1.bf16.msra.mxu0 %v5214
    %5274 = vmatprep.subr.bf16.mxu0 %v5219
    %5275 = vmatpush1.bf16.msra.mxu0 %v5218
    %5276 = vmatprep.subr.bf16.mxu0 %v5223
    %5277 = vmatpush1.bf16.msra.mxu0 %v5222
    %5278 = vmatprep.subr.bf16.mxu0 %v5227
    %5279 = vmatpush1.bf16.msra.mxu0 %v5226
    %5280 = vmatprep.subr.bf16.mxu0 %v5231
    %5281 = vmatpush1.bf16.msra.mxu0 %v5230
    %5282 = vmatprep.subr.bf16.mxu0 0
    %5283 = vmatpush1.bf16.msra.mxu0 0
    %5284 = vmatprep.subr.bf16.mxu0 0
    %5285 = vmatpush1.bf16.msra.mxu0 0
    %5286 = vmatprep.subr.bf16.mxu0 0
    %5287 = vmatpush1.bf16.msra.mxu0 0
    %5288 = vmatprep.subr.bf16.mxu0 0
    %5289 = vmatpush1.bf16.msra.mxu0 0
    %5290 = vmatprep.subr.bf16.mxu0 0
    %5291 = vmatpush1.bf16.msra.mxu0 0
    %5292 = vmatprep.subr.bf16.mxu0 0
    %5293 = vmatpush1.bf16.msra.mxu0 0
    %5294 = vmatprep.subr.bf16.mxu0 0
    %5295 = vmatpush1.bf16.msra.mxu0 0
    %5296 = vmatprep.subr.bf16.mxu0 0
    %5297 = vmatpush1.bf16.msra.mxu0 0
    %5298 = vmatprep.mubr.bf16.mxu0 0
    %5299 = vmatmul.mubr.bf16.gmra.mrb[0].mxu0 %v5073
    %v5300 = vpop.f32.mrb[0].mxu0
    %v5301 = vadd.f32 0.0, %v5300
    %v5302 = vpop.f32.mrb[0].mxu0
    %v5303 = vadd.f32 0.0, %v5302
    %v5304 = vpop.f32.mrb[0].mxu0
    %v5305 = vpop.f32.mrb[0].mxu0
    %5306 = vdwg.mxu0
    %5307 = vmatprep.subr.bf16.mxu0 %v5205
    %5308 = vmatpush1.bf16.msra.mxu0 %v5204
    %5309 = vmatprep.subr.bf16.mxu0 %v5209
    %5310 = vmatpush1.bf16.msra.mxu0 %v5208
    %5311 = vmatprep.subr.bf16.mxu0 %v5213
    %5312 = vmatpush1.bf16.msra.mxu0 %v5212
    %5313 = vmatprep.subr.bf16.mxu0 %v5217
    %5314 = vmatpush1.bf16.msra.mxu0 %v5216
    %5315 = vmatprep.subr.bf16.mxu0 %v5221
    %5316 = vmatpush1.bf16.msra.mxu0 %v5220
    %5317 = vmatprep.subr.bf16.mxu0 %v5225
    %5318 = vmatpush1.bf16.msra.mxu0 %v5224
    %5319 = vmatprep.subr.bf16.mxu0 %v5229
    %5320 = vmatpush1.bf16.msra.mxu0 %v5228
    %5321 = vmatprep.subr.bf16.mxu0 %v5233
    %5322 = vmatpush1.bf16.msra.mxu0 %v5232
    %5323 = vmatprep.subr.bf16.mxu0 0
    %5324 = vmatpush1.bf16.msra.mxu0 0
    %5325 = vmatprep.subr.bf16.mxu0 0
    %5326 = vmatpush1.bf16.msra.mxu0 0
    %5327 = vmatprep.subr.bf16.mxu0 0
    %5328 = vmatpush1.bf16.msra.mxu0 0
    %5329 = vmatprep.subr.bf16.mxu0 0
    %5330 = vmatpush1.bf16.msra.mxu0 0
    %5331 = vmatprep.subr.bf16.mxu0 0
    %5332 = vmatpush1.bf16.msra.mxu0 0
    %5333 = vmatprep.subr.bf16.mxu0 0
    %5334 = vmatpush1.bf16.msra.mxu0 0
    %5335 = vmatprep.subr.bf16.mxu0 0
    %5336 = vmatpush1.bf16.msra.mxu0 0
    %5337 = vmatprep.subr.bf16.mxu0 0
    %5338 = vmatpush1.bf16.msra.mxu0 0
    %5339 = vmatprep.mubr.bf16.mxu0 0
    %5340 = vmatmul.mubr.bf16.gmra.mrb[0].mxu0 %v5073
    %v5341 = vpop.f32.mrb[0].mxu0
    %v5342 = vadd.f32 0.0, %v5341
    %v5343 = vpop.f32.mrb[0].mxu0
    %v5344 = vadd.f32 0.0, %v5343
    %v5345 = vpop.f32.mrb[0].mxu0
    %v5346 = vpop.f32.mrb[0].mxu0
    %5347 = vdwg.mxu0
    %v5348 = vadd.f32 %v5069, %v5301
    %v5349 = vadd.f32 %v5070, %v5303
    %v5350 = vadd.f32 %v5071, %v5342
    %v5351 = vadd.f32 %v5072, %v5344
    %v5352 = vxor.u32 %v5045, 2147483648
    %v5353 = vmul.f32 %v5352, 1.442695
    %v5354 = vpow.pop %v5353
    %v5355 = vadd.f32 %v5354, 1.0
    %v5356 = vrcp.pop %v5355
    %v5357 = vmul.f32 1.0, %v5356
    %v5358 = vxor.u32 %v5046, 2147483648
    %v5359 = vmul.f32 %v5358, 1.442695
    %v5360 = vpow.pop %v5359
    %v5361 = vadd.f32 %v5360, 1.0
    %v5362 = vrcp.pop %v5361
    %v5363 = vmul.f32 1.0, %v5362
    %v5364 = vtanh.pop %v5047
    %v5365 = vxor.u32 %v5048, 2147483648
    %v5366 = vmul.f32 %v5365, 1.442695
    %v5367 = vpow.pop %v5366
    %v5368 = vadd.f32 %v5367, 1.0
    %v5369 = vrcp.pop %v5368
    %v5370 = vmul.f32 1.0, %v5369
    %v5371 = vmul.f32 %v5363, %v4723
    %v5372 = vmul.f32 %v5357, %v5364
    %v5373 = vadd.f32 %v5371, %v5372
    %v5374 = vtanh.pop %v5373
    %v5375 = vmul.f32 %v5370, %v5374
    %v5376 = vsel %vm2107, %v5375, %v4722
    %v5377 = vsel %vm2107, %v5373, %v4723
    %v5378 = vxor.u32 %v5348, 2147483648
    %v5379 = vmul.f32 %v5378, 1.442695
    %v5380 = vpow.pop %v5379
    %v5381 = vadd.f32 %v5380, 1.0
    %v5382 = vrcp.pop %v5381
    %v5383 = vmul.f32 1.0, %v5382
    %v5384 = vxor.u32 %v5349, 2147483648
    %v5385 = vmul.f32 %v5384, 1.442695
    %v5386 = vpow.pop %v5385
    %v5387 = vadd.f32 %v5386, 1.0
    %v5388 = vrcp.pop %v5387
    %v5389 = vmul.f32 1.0, %v5388
    %v5390 = vtanh.pop %v5350
    %v5391 = vxor.u32 %v5351, 2147483648
    %v5392 = vmul.f32 %v5391, 1.442695
    %v5393 = vpow.pop %v5392
    %v5394 = vadd.f32 %v5393, 1.0
    %v5395 = vrcp.pop %v5394
    %v5396 = vmul.f32 1.0, %v5395
    %v5397 = vmul.f32 %v5389, %v4749
    %v5398 = vmul.f32 %v5383, %v5390
    %v5399 = vadd.f32 %v5397, %v5398
    %v5400 = vtanh.pop %v5399
    %v5401 = vmul.f32 %v5396, %v5400
    %v5402 = vsel %vm2075, %v5401, %v4748
    %v5403 = vsel %vm2075, %v5399, %v4749
    %v5404 = vld [vmem:[#allocation10 + $0x30] sm:$0xff]
    %v5405 = vsel %vm2107, %v5375, 0.0
    %v5406 = vadd.f32 %v5404, %v5405
    %5407 = vst [vmem:[#allocation10 + $0x30] sm:$0xff] %v5406
    %v5408 = vld [vmem:[#allocation10 + $0x8] sm:$0xff]
    %v5409 = vsel %vm2075, %v5401, 0.0
    %v5410 = vadd.f32 %v5408, %v5409
    %5411 = vst [vmem:[#allocation10 + $0x8] sm:$0xff] %v5410
    %v5412 = vld [vmem:[#allocation2 + $0x60] sm:$0xf0]
    %v5413 = vld [vmem:[#allocation2 + $0x68] sm:$0xf0]
    %v5414 = vld [vmem:[#allocation2 + $0x70] sm:$0xf0]
    %v5415 = vld [vmem:[#allocation2 + $0x78] sm:$0xf0]
    %v5420 = vrot.slane %v5412, 4
    %v5421 = vrot.slane %v5413, 4
    %v5422 = vrot.slane %v5414, 4
    %v5423 = vrot.slane %v5415, 4
    %v5428 = vunpack.c.l.bf16 %v5420
    %v5429 = vunpack.c.l.bf16 %v5421
    %v5430 = vunpack.c.l.bf16 %v5422
    %v5431 = vunpack.c.l.bf16 %v5423
    %v5432 = vadd.f32 %v5428, %v78
    %v5433 = vadd.f32 %v5429, %v82
    %v5434 = vadd.f32 %v5430, %v86
    %v5435 = vadd.f32 %v5431, %v90
    %v5436 = vpack.c.bf16 %v5376, %v5376
    %v5437 = vld [vmem:[#allocation7] sm:$0xff]
    %v5438 = vld [vmem:[#allocation7 + $0x8] sm:$0xff]
    %v5439 = vld [vmem:[#allocation7 + $0x10] sm:$0xff]
    %v5440 = vld [vmem:[#allocation7 + $0x18] sm:$0xff]
    %v5441 = vld [vmem:[#allocation7 + $0x20] sm:$0xff]
    %v5442 = vld [vmem:[#allocation7 + $0x28] sm:$0xff]
    %v5443 = vld [vmem:[#allocation7 + $0x30] sm:$0xff]
    %v5444 = vld [vmem:[#allocation7 + $0x38] sm:$0xff]
    %v5445 = vld [vmem:[#allocation7 + $0x40] sm:$0xff]
    %v5446 = vld [vmem:[#allocation7 + $0x48] sm:$0xff]
    %v5447 = vld [vmem:[#allocation7 + $0x50] sm:$0xff]
    %v5448 = vld [vmem:[#allocation7 + $0x58] sm:$0xff]
    %v5449 = vld [vmem:[#allocation7 + $0x60] sm:$0xff]
    %v5450 = vld [vmem:[#allocation7 + $0x68] sm:$0xff]
    %v5451 = vld [vmem:[#allocation7 + $0x70] sm:$0xff]
    %v5452 = vld [vmem:[#allocation7 + $0x78] sm:$0xff]
    %v5453 = vld [vmem:[#allocation7 + $0x80] sm:$0xff]
    %v5454 = vld [vmem:[#allocation7 + $0x88] sm:$0xff]
    %v5455 = vld [vmem:[#allocation7 + $0x90] sm:$0xff]
    %v5456 = vld [vmem:[#allocation7 + $0x98] sm:$0xff]
    %v5457 = vld [vmem:[#allocation7 + $0xa0] sm:$0xff]
    %v5458 = vld [vmem:[#allocation7 + $0xa8] sm:$0xff]
    %v5459 = vld [vmem:[#allocation7 + $0xb0] sm:$0xff]
    %v5460 = vld [vmem:[#allocation7 + $0xb8] sm:$0xff]
    %v5461 = vld [vmem:[#allocation7 + $0xc0] sm:$0xff]
    %v5462 = vld [vmem:[#allocation7 + $0xc8] sm:$0xff]
    %v5463 = vld [vmem:[#allocation7 + $0xd0] sm:$0xff]
    %v5464 = vld [vmem:[#allocation7 + $0xd8] sm:$0xff]
    %v5465 = vld [vmem:[#allocation7 + $0xe0] sm:$0xff]
    %v5466 = vld [vmem:[#allocation7 + $0xe8] sm:$0xff]
    %v5467 = vld [vmem:[#allocation7 + $0xf0] sm:$0xff]
    %v5468 = vld [vmem:[#allocation7 + $0xf8] sm:$0xff]
    %v5501 = vunpack.c.l.b16 %v5437
    %v5502 = vunpack.c.h.b16 %v5437
    %v5503 = vunpack.c.l.b16 %v5438
    %v5504 = vunpack.c.h.b16 %v5438
    %v5505 = vunpack.c.l.b16 %v5439
    %v5506 = vunpack.c.h.b16 %v5439
    %v5507 = vunpack.c.l.b16 %v5440
    %v5508 = vunpack.c.h.b16 %v5440
    %v5509 = vunpack.c.l.b16 %v5441
    %v5510 = vunpack.c.h.b16 %v5441
    %v5511 = vunpack.c.l.b16 %v5442
    %v5512 = vunpack.c.h.b16 %v5442
    %v5513 = vunpack.c.l.b16 %v5443
    %v5514 = vunpack.c.h.b16 %v5443
    %v5515 = vunpack.c.l.b16 %v5444
    %v5516 = vunpack.c.h.b16 %v5444
    %v5517 = vunpack.c.l.b16 %v5445
    %v5518 = vunpack.c.h.b16 %v5445
    %v5519 = vunpack.c.l.b16 %v5446
    %v5520 = vunpack.c.h.b16 %v5446
    %v5521 = vunpack.c.l.b16 %v5447
    %v5522 = vunpack.c.h.b16 %v5447
    %v5523 = vunpack.c.l.b16 %v5448
    %v5524 = vunpack.c.h.b16 %v5448
    %v5525 = vunpack.c.l.b16 %v5449
    %v5526 = vunpack.c.h.b16 %v5449
    %v5527 = vunpack.c.l.b16 %v5450
    %v5528 = vunpack.c.h.b16 %v5450
    %v5529 = vunpack.c.l.b16 %v5451
    %v5530 = vunpack.c.h.b16 %v5451
    %v5531 = vunpack.c.l.b16 %v5452
    %v5532 = vunpack.c.h.b16 %v5452
    %v5533 = vunpack.c.l.b16 %v5453
    %v5534 = vunpack.c.h.b16 %v5453
    %v5535 = vunpack.c.l.b16 %v5454
    %v5536 = vunpack.c.h.b16 %v5454
    %v5537 = vunpack.c.l.b16 %v5455
    %v5538 = vunpack.c.h.b16 %v5455
    %v5539 = vunpack.c.l.b16 %v5456
    %v5540 = vunpack.c.h.b16 %v5456
    %v5541 = vunpack.c.l.b16 %v5457
    %v5542 = vunpack.c.h.b16 %v5457
    %v5543 = vunpack.c.l.b16 %v5458
    %v5544 = vunpack.c.h.b16 %v5458
    %v5545 = vunpack.c.l.b16 %v5459
    %v5546 = vunpack.c.h.b16 %v5459
    %v5547 = vunpack.c.l.b16 %v5460
    %v5548 = vunpack.c.h.b16 %v5460
    %v5549 = vunpack.c.l.b16 %v5461
    %v5550 = vunpack.c.h.b16 %v5461
    %v5551 = vunpack.c.l.b16 %v5462
    %v5552 = vunpack.c.h.b16 %v5462
    %v5553 = vunpack.c.l.b16 %v5463
    %v5554 = vunpack.c.h.b16 %v5463
    %v5555 = vunpack.c.l.b16 %v5464
    %v5556 = vunpack.c.h.b16 %v5464
    %v5557 = vunpack.c.l.b16 %v5465
    %v5558 = vunpack.c.h.b16 %v5465
    %v5559 = vunpack.c.l.b16 %v5466
    %v5560 = vunpack.c.h.b16 %v5466
    %v5561 = vunpack.c.l.b16 %v5467
    %v5562 = vunpack.c.h.b16 %v5467
    %v5563 = vunpack.c.l.b16 %v5468
    %v5564 = vunpack.c.h.b16 %v5468
    %v5565 = vpack.c.b16 %v5505, %v5501
    %v5566 = vpack.c.b16 %v5506, %v5502
    %v5567 = vpack.c.b16 %v5507, %v5503
    %v5568 = vpack.c.b16 %v5508, %v5504
    %v5569 = vpack.c.b16 %v5513, %v5509
    %v5570 = vpack.c.b16 %v5514, %v5510
    %v5571 = vpack.c.b16 %v5515, %v5511
    %v5572 = vpack.c.b16 %v5516, %v5512
    %v5573 = vpack.c.b16 %v5521, %v5517
    %v5574 = vpack.c.b16 %v5522, %v5518
    %v5575 = vpack.c.b16 %v5523, %v5519
    %v5576 = vpack.c.b16 %v5524, %v5520
    %v5577 = vpack.c.b16 %v5529, %v5525
    %v5578 = vpack.c.b16 %v5530, %v5526
    %v5579 = vpack.c.b16 %v5531, %v5527
    %v5580 = vpack.c.b16 %v5532, %v5528
    %v5581 = vpack.c.b16 %v5537, %v5533
    %v5582 = vpack.c.b16 %v5538, %v5534
    %v5583 = vpack.c.b16 %v5539, %v5535
    %v5584 = vpack.c.b16 %v5540, %v5536
    %v5585 = vpack.c.b16 %v5545, %v5541
    %v5586 = vpack.c.b16 %v5546, %v5542
    %v5587 = vpack.c.b16 %v5547, %v5543
    %v5588 = vpack.c.b16 %v5548, %v5544
    %v5589 = vpack.c.b16 %v5553, %v5549
    %v5590 = vpack.c.b16 %v5554, %v5550
    %v5591 = vpack.c.b16 %v5555, %v5551
    %v5592 = vpack.c.b16 %v5556, %v5552
    %v5593 = vpack.c.b16 %v5561, %v5557
    %v5594 = vpack.c.b16 %v5562, %v5558
    %v5595 = vpack.c.b16 %v5563, %v5559
    %v5596 = vpack.c.b16 %v5564, %v5560
    %5629 = vmatprep.subr.bf16.mxu0 %v5566
    %5630 = vmatpush1.bf16.msra.mxu0 %v5565
    %5631 = vmatprep.subr.bf16.mxu0 %v5570
    %5632 = vmatpush1.bf16.msra.mxu0 %v5569
    %5633 = vmatprep.subr.bf16.mxu0 %v5574
    %5634 = vmatpush1.bf16.msra.mxu0 %v5573
    %5635 = vmatprep.subr.bf16.mxu0 %v5578
    %5636 = vmatpush1.bf16.msra.mxu0 %v5577
    %5637 = vmatprep.subr.bf16.mxu0 %v5582
    %5638 = vmatpush1.bf16.msra.mxu0 %v5581
    %5639 = vmatprep.subr.bf16.mxu0 %v5586
    %5640 = vmatpush1.bf16.msra.mxu0 %v5585
    %5641 = vmatprep.subr.bf16.mxu0 %v5590
    %5642 = vmatpush1.bf16.msra.mxu0 %v5589
    %5643 = vmatprep.subr.bf16.mxu0 %v5594
    %5644 = vmatpush1.bf16.msra.mxu0 %v5593
    %5645 = vmatprep.subr.bf16.mxu0 0
    %5646 = vmatpush1.bf16.msra.mxu0 0
    %5647 = vmatprep.subr.bf16.mxu0 0
    %5648 = vmatpush1.bf16.msra.mxu0 0
    %5649 = vmatprep.subr.bf16.mxu0 0
    %5650 = vmatpush1.bf16.msra.mxu0 0
    %5651 = vmatprep.subr.bf16.mxu0 0
    %5652 = vmatpush1.bf16.msra.mxu0 0
    %5653 = vmatprep.subr.bf16.mxu0 0
    %5654 = vmatpush1.bf16.msra.mxu0 0
    %5655 = vmatprep.subr.bf16.mxu0 0
    %5656 = vmatpush1.bf16.msra.mxu0 0
    %5657 = vmatprep.subr.bf16.mxu0 0
    %5658 = vmatpush1.bf16.msra.mxu0 0
    %5659 = vmatprep.subr.bf16.mxu0 0
    %5660 = vmatpush1.bf16.msra.mxu0 0
    %5661 = vmatprep.mubr.bf16.mxu0 0
    %5662 = vmatmul.mubr.bf16.gmra.mrb[0].mxu0 %v5436
    %v5663 = vpop.f32.mrb[0].mxu0
    %v5664 = vadd.f32 0.0, %v5663
    %v5665 = vpop.f32.mrb[0].mxu0
    %v5666 = vadd.f32 0.0, %v5665
    %v5667 = vpop.f32.mrb[0].mxu0
    %v5668 = vpop.f32.mrb[0].mxu0
    %5669 = vdwg.mxu0
    %5670 = vmatprep.subr.bf16.mxu0 %v5568
    %5671 = vmatpush1.bf16.msra.mxu0 %v5567
    %5672 = vmatprep.subr.bf16.mxu0 %v5572
    %5673 = vmatpush1.bf16.msra.mxu0 %v5571
    %5674 = vmatprep.subr.bf16.mxu0 %v5576
    %5675 = vmatpush1.bf16.msra.mxu0 %v5575
    %5676 = vmatprep.subr.bf16.mxu0 %v5580
    %5677 = vmatpush1.bf16.msra.mxu0 %v5579
    %5678 = vmatprep.subr.bf16.mxu0 %v5584
    %5679 = vmatpush1.bf16.msra.mxu0 %v5583
    %5680 = vmatprep.subr.bf16.mxu0 %v5588
    %5681 = vmatpush1.bf16.msra.mxu0 %v5587
    %5682 = vmatprep.subr.bf16.mxu0 %v5592
    %5683 = vmatpush1.bf16.msra.mxu0 %v5591
    %5684 = vmatprep.subr.bf16.mxu0 %v5596
    %5685 = vmatpush1.bf16.msra.mxu0 %v5595
    %5686 = vmatprep.subr.bf16.mxu0 0
    %5687 = vmatpush1.bf16.msra.mxu0 0
    %5688 = vmatprep.subr.bf16.mxu0 0
    %5689 = vmatpush1.bf16.msra.mxu0 0
    %5690 = vmatprep.subr.bf16.mxu0 0
    %5691 = vmatpush1.bf16.msra.mxu0 0
    %5692 = vmatprep.subr.bf16.mxu0 0
    %5693 = vmatpush1.bf16.msra.mxu0 0
    %5694 = vmatprep.subr.bf16.mxu0 0
    %5695 = vmatpush1.bf16.msra.mxu0 0
    %5696 = vmatprep.subr.bf16.mxu0 0
    %5697 = vmatpush1.bf16.msra.mxu0 0
    %5698 = vmatprep.subr.bf16.mxu0 0
    %5699 = vmatpush1.bf16.msra.mxu0 0
    %5700 = vmatprep.subr.bf16.mxu0 0
    %5701 = vmatpush1.bf16.msra.mxu0 0
    %5702 = vmatprep.mubr.bf16.mxu0 0
    %5703 = vmatmul.mubr.bf16.gmra.mrb[0].mxu0 %v5436
    %v5704 = vpop.f32.mrb[0].mxu0
    %v5705 = vadd.f32 0.0, %v5704
    %v5706 = vpop.f32.mrb[0].mxu0
    %v5707 = vadd.f32 0.0, %v5706
    %v5708 = vpop.f32.mrb[0].mxu0
    %v5709 = vpop.f32.mrb[0].mxu0
    %5710 = vdwg.mxu0
    %v5711 = vadd.f32 %v5432, %v5664
    %v5712 = vadd.f32 %v5433, %v5666
    %v5713 = vadd.f32 %v5434, %v5705
    %v5714 = vadd.f32 %v5435, %v5707
    %v5715 = vld [vmem:[#allocation3] sm:$0xf]
    %v5716 = vld [vmem:[#allocation3 + $0x8] sm:$0xf]
    %v5717 = vld [vmem:[#allocation3 + $0x10] sm:$0xf]
    %v5718 = vld [vmem:[#allocation3 + $0x18] sm:$0xf]
    %v5719 = vunpack.c.l.bf16 %v5715
    %v5720 = vunpack.c.l.bf16 %v5716
    %v5721 = vunpack.c.l.bf16 %v5717
    %v5722 = vunpack.c.l.bf16 %v5718
    %v5723 = vadd.f32 %v5719, %v100
    %v5724 = vadd.f32 %v5720, %v104
    %v5725 = vadd.f32 %v5721, %v108
    %v5726 = vadd.f32 %v5722, %v112
    %v5727 = vpack.c.bf16 %v5402, %v5402
    %v5728 = vld [vmem:[#allocation9] sm:$0xff]
    %v5729 = vld [vmem:[#allocation9 + $0x8] sm:$0xff]
    %v5730 = vld [vmem:[#allocation9 + $0x10] sm:$0xff]
    %v5731 = vld [vmem:[#allocation9 + $0x18] sm:$0xff]
    %v5732 = vld [vmem:[#allocation9 + $0x20] sm:$0xff]
    %v5733 = vld [vmem:[#allocation9 + $0x28] sm:$0xff]
    %v5734 = vld [vmem:[#allocation9 + $0x30] sm:$0xff]
    %v5735 = vld [vmem:[#allocation9 + $0x38] sm:$0xff]
    %v5736 = vld [vmem:[#allocation9 + $0x40] sm:$0xff]
    %v5737 = vld [vmem:[#allocation9 + $0x48] sm:$0xff]
    %v5738 = vld [vmem:[#allocation9 + $0x50] sm:$0xff]
    %v5739 = vld [vmem:[#allocation9 + $0x58] sm:$0xff]
    %v5740 = vld [vmem:[#allocation9 + $0x60] sm:$0xff]
    %v5741 = vld [vmem:[#allocation9 + $0x68] sm:$0xff]
    %v5742 = vld [vmem:[#allocation9 + $0x70] sm:$0xff]
    %v5743 = vld [vmem:[#allocation9 + $0x78] sm:$0xff]
    %v5744 = vld [vmem:[#allocation9 + $0x80] sm:$0xff]
    %v5745 = vld [vmem:[#allocation9 + $0x88] sm:$0xff]
    %v5746 = vld [vmem:[#allocation9 + $0x90] sm:$0xff]
    %v5747 = vld [vmem:[#allocation9 + $0x98] sm:$0xff]
    %v5748 = vld [vmem:[#allocation9 + $0xa0] sm:$0xff]
    %v5749 = vld [vmem:[#allocation9 + $0xa8] sm:$0xff]
    %v5750 = vld [vmem:[#allocation9 + $0xb0] sm:$0xff]
    %v5751 = vld [vmem:[#allocation9 + $0xb8] sm:$0xff]
    %v5752 = vld [vmem:[#allocation9 + $0xc0] sm:$0xff]
    %v5753 = vld [vmem:[#allocation9 + $0xc8] sm:$0xff]
    %v5754 = vld [vmem:[#allocation9 + $0xd0] sm:$0xff]
    %v5755 = vld [vmem:[#allocation9 + $0xd8] sm:$0xff]
    %v5756 = vld [vmem:[#allocation9 + $0xe0] sm:$0xff]
    %v5757 = vld [vmem:[#allocation9 + $0xe8] sm:$0xff]
    %v5758 = vld [vmem:[#allocation9 + $0xf0] sm:$0xff]
    %v5759 = vld [vmem:[#allocation9 + $0xf8] sm:$0xff]
    %v5792 = vunpack.c.l.b16 %v5728
    %v5793 = vunpack.c.h.b16 %v5728
    %v5794 = vunpack.c.l.b16 %v5729
    %v5795 = vunpack.c.h.b16 %v5729
    %v5796 = vunpack.c.l.b16 %v5730
    %v5797 = vunpack.c.h.b16 %v5730
    %v5798 = vunpack.c.l.b16 %v5731
    %v5799 = vunpack.c.h.b16 %v5731
    %v5800 = vunpack.c.l.b16 %v5732
    %v5801 = vunpack.c.h.b16 %v5732
    %v5802 = vunpack.c.l.b16 %v5733
    %v5803 = vunpack.c.h.b16 %v5733
    %v5804 = vunpack.c.l.b16 %v5734
    %v5805 = vunpack.c.h.b16 %v5734
    %v5806 = vunpack.c.l.b16 %v5735
    %v5807 = vunpack.c.h.b16 %v5735
    %v5808 = vunpack.c.l.b16 %v5736
    %v5809 = vunpack.c.h.b16 %v5736
    %v5810 = vunpack.c.l.b16 %v5737
    %v5811 = vunpack.c.h.b16 %v5737
    %v5812 = vunpack.c.l.b16 %v5738
    %v5813 = vunpack.c.h.b16 %v5738
    %v5814 = vunpack.c.l.b16 %v5739
    %v5815 = vunpack.c.h.b16 %v5739
    %v5816 = vunpack.c.l.b16 %v5740
    %v5817 = vunpack.c.h.b16 %v5740
    %v5818 = vunpack.c.l.b16 %v5741
    %v5819 = vunpack.c.h.b16 %v5741
    %v5820 = vunpack.c.l.b16 %v5742
    %v5821 = vunpack.c.h.b16 %v5742
    %v5822 = vunpack.c.l.b16 %v5743
    %v5823 = vunpack.c.h.b16 %v5743
    %v5824 = vunpack.c.l.b16 %v5744
    %v5825 = vunpack.c.h.b16 %v5744
    %v5826 = vunpack.c.l.b16 %v5745
    %v5827 = vunpack.c.h.b16 %v5745
    %v5828 = vunpack.c.l.b16 %v5746
    %v5829 = vunpack.c.h.b16 %v5746
    %v5830 = vunpack.c.l.b16 %v5747
    %v5831 = vunpack.c.h.b16 %v5747
    %v5832 = vunpack.c.l.b16 %v5748
    %v5833 = vunpack.c.h.b16 %v5748
    %v5834 = vunpack.c.l.b16 %v5749
    %v5835 = vunpack.c.h.b16 %v5749
    %v5836 = vunpack.c.l.b16 %v5750
    %v5837 = vunpack.c.h.b16 %v5750
    %v5838 = vunpack.c.l.b16 %v5751
    %v5839 = vunpack.c.h.b16 %v5751
    %v5840 = vunpack.c.l.b16 %v5752
    %v5841 = vunpack.c.h.b16 %v5752
    %v5842 = vunpack.c.l.b16 %v5753
    %v5843 = vunpack.c.h.b16 %v5753
    %v5844 = vunpack.c.l.b16 %v5754
    %v5845 = vunpack.c.h.b16 %v5754
    %v5846 = vunpack.c.l.b16 %v5755
    %v5847 = vunpack.c.h.b16 %v5755
    %v5848 = vunpack.c.l.b16 %v5756
    %v5849 = vunpack.c.h.b16 %v5756
    %v5850 = vunpack.c.l.b16 %v5757
    %v5851 = vunpack.c.h.b16 %v5757
    %v5852 = vunpack.c.l.b16 %v5758
    %v5853 = vunpack.c.h.b16 %v5758
    %v5854 = vunpack.c.l.b16 %v5759
    %v5855 = vunpack.c.h.b16 %v5759
    %v5856 = vpack.c.b16 %v5796, %v5792
    %v5857 = vpack.c.b16 %v5797, %v5793
    %v5858 = vpack.c.b16 %v5798, %v5794
    %v5859 = vpack.c.b16 %v5799, %v5795
    %v5860 = vpack.c.b16 %v5804, %v5800
    %v5861 = vpack.c.b16 %v5805, %v5801
    %v5862 = vpack.c.b16 %v5806, %v5802
    %v5863 = vpack.c.b16 %v5807, %v5803
    %v5864 = vpack.c.b16 %v5812, %v5808
    %v5865 = vpack.c.b16 %v5813, %v5809
    %v5866 = vpack.c.b16 %v5814, %v5810
    %v5867 = vpack.c.b16 %v5815, %v5811
    %v5868 = vpack.c.b16 %v5820, %v5816
    %v5869 = vpack.c.b16 %v5821, %v5817
    %v5870 = vpack.c.b16 %v5822, %v5818
    %v5871 = vpack.c.b16 %v5823, %v5819
    %v5872 = vpack.c.b16 %v5828, %v5824
    %v5873 = vpack.c.b16 %v5829, %v5825
    %v5874 = vpack.c.b16 %v5830, %v5826
    %v5875 = vpack.c.b16 %v5831, %v5827
    %v5876 = vpack.c.b16 %v5836, %v5832
    %v5877 = vpack.c.b16 %v5837, %v5833
    %v5878 = vpack.c.b16 %v5838, %v5834
    %v5879 = vpack.c.b16 %v5839, %v5835
    %v5880 = vpack.c.b16 %v5844, %v5840
    %v5881 = vpack.c.b16 %v5845, %v5841
    %v5882 = vpack.c.b16 %v5846, %v5842
    %v5883 = vpack.c.b16 %v5847, %v5843
    %v5884 = vpack.c.b16 %v5852, %v5848
    %v5885 = vpack.c.b16 %v5853, %v5849
    %v5886 = vpack.c.b16 %v5854, %v5850
    %v5887 = vpack.c.b16 %v5855, %v5851
    %5920 = vmatprep.subr.bf16.mxu0 %v5857
    %5921 = vmatpush1.bf16.msra.mxu0 %v5856
    %5922 = vmatprep.subr.bf16.mxu0 %v5861
    %5923 = vmatpush1.bf16.msra.mxu0 %v5860
    %5924 = vmatprep.subr.bf16.mxu0 %v5865
    %5925 = vmatpush1.bf16.msra.mxu0 %v5864
    %5926 = vmatprep.subr.bf16.mxu0 %v5869
    %5927 = vmatpush1.bf16.msra.mxu0 %v5868
    %5928 = vmatprep.subr.bf16.mxu0 %v5873
    %5929 = vmatpush1.bf16.msra.mxu0 %v5872
    %5930 = vmatprep.subr.bf16.mxu0 %v5877
    %5931 = vmatpush1.bf16.msra.mxu0 %v5876
    %5932 = vmatprep.subr.bf16.mxu0 %v5881
    %5933 = vmatpush1.bf16.msra.mxu0 %v5880
    %5934 = vmatprep.subr.bf16.mxu0 %v5885
    %5935 = vmatpush1.bf16.msra.mxu0 %v5884
    %5936 = vmatprep.subr.bf16.mxu0 0
    %5937 = vmatpush1.bf16.msra.mxu0 0
    %5938 = vmatprep.subr.bf16.mxu0 0
    %5939 = vmatpush1.bf16.msra.mxu0 0
    %5940 = vmatprep.subr.bf16.mxu0 0
    %5941 = vmatpush1.bf16.msra.mxu0 0
    %5942 = vmatprep.subr.bf16.mxu0 0
    %5943 = vmatpush1.bf16.msra.mxu0 0
    %5944 = vmatprep.subr.bf16.mxu0 0
    %5945 = vmatpush1.bf16.msra.mxu0 0
    %5946 = vmatprep.subr.bf16.mxu0 0
    %5947 = vmatpush1.bf16.msra.mxu0 0
    %5948 = vmatprep.subr.bf16.mxu0 0
    %5949 = vmatpush1.bf16.msra.mxu0 0
    %5950 = vmatprep.subr.bf16.mxu0 0
    %5951 = vmatpush1.bf16.msra.mxu0 0
    %5952 = vmatprep.mubr.bf16.mxu0 0
    %5953 = vmatmul.mubr.bf16.gmra.mrb[0].mxu0 %v5727
    %v5954 = vpop.f32.mrb[0].mxu0
    %v5955 = vadd.f32 0.0, %v5954
    %v5956 = vpop.f32.mrb[0].mxu0
    %v5957 = vadd.f32 0.0, %v5956
    %v5958 = vpop.f32.mrb[0].mxu0
    %v5959 = vpop.f32.mrb[0].mxu0
    %5960 = vdwg.mxu0
    %5961 = vmatprep.subr.bf16.mxu0 %v5859
    %5962 = vmatpush1.bf16.msra.mxu0 %v5858
    %5963 = vmatprep.subr.bf16.mxu0 %v5863
    %5964 = vmatpush1.bf16.msra.mxu0 %v5862
    %5965 = vmatprep.subr.bf16.mxu0 %v5867
    %5966 = vmatpush1.bf16.msra.mxu0 %v5866
    %5967 = vmatprep.subr.bf16.mxu0 %v5871
    %5968 = vmatpush1.bf16.msra.mxu0 %v5870
    %5969 = vmatprep.subr.bf16.mxu0 %v5875
    %5970 = vmatpush1.bf16.msra.mxu0 %v5874
    %5971 = vmatprep.subr.bf16.mxu0 %v5879
    %5972 = vmatpush1.bf16.msra.mxu0 %v5878
    %5973 = vmatprep.subr.bf16.mxu0 %v5883
    %5974 = vmatpush1.bf16.msra.mxu0 %v5882
    %5975 = vmatprep.subr.bf16.mxu0 %v5887
    %5976 = vmatpush1.bf16.msra.mxu0 %v5886
    %5977 = vmatprep.subr.bf16.mxu0 0
    %5978 = vmatpush1.bf16.msra.mxu0 0
    %5979 = vmatprep.subr.bf16.mxu0 0
    %5980 = vmatpush1.bf16.msra.mxu0 0
    %5981 = vmatprep.subr.bf16.mxu0 0
    %5982 = vmatpush1.bf16.msra.mxu0 0
    %5983 = vmatprep.subr.bf16.mxu0 0
    %5984 = vmatpush1.bf16.msra.mxu0 0
    %5985 = vmatprep.subr.bf16.mxu0 0
    %5986 = vmatpush1.bf16.msra.mxu0 0
    %5987 = vmatprep.subr.bf16.mxu0 0
    %5988 = vmatpush1.bf16.msra.mxu0 0
    %5989 = vmatprep.subr.bf16.mxu0 0
    %5990 = vmatpush1.bf16.msra.mxu0 0
    %5991 = vmatprep.subr.bf16.mxu0 0
    %5992 = vmatpush1.bf16.msra.mxu0 0
    %5993 = vmatprep.mubr.bf16.mxu0 0
    %5994 = vmatmul.mubr.bf16.gmra.mrb[0].mxu0 %v5727
    %v5995 = vpop.f32.mrb[0].mxu0
    %v5996 = vadd.f32 0.0, %v5995
    %v5997 = vpop.f32.mrb[0].mxu0
    %v5998 = vadd.f32 0.0, %v5997
    %v5999 = vpop.f32.mrb[0].mxu0
    %v6000 = vpop.f32.mrb[0].mxu0
    %6001 = vdwg.mxu0
    %v6002 = vadd.f32 %v5723, %v5955
    %v6003 = vadd.f32 %v5724, %v5957
    %v6004 = vadd.f32 %v5725, %v5996
    %v6005 = vadd.f32 %v5726, %v5998
    %v6006 = vxor.u32 %v5711, 2147483648
    %v6007 = vmul.f32 %v6006, 1.442695
    %v6008 = vpow.pop %v6007
    %v6009 = vadd.f32 %v6008, 1.0
    %v6010 = vrcp.pop %v6009
    %v6011 = vmul.f32 1.0, %v6010
    %v6012 = vxor.u32 %v5712, 2147483648
    %v6013 = vmul.f32 %v6012, 1.442695
    %v6014 = vpow.pop %v6013
    %v6015 = vadd.f32 %v6014, 1.0
    %v6016 = vrcp.pop %v6015
    %v6017 = vmul.f32 1.0, %v6016
    %v6018 = vtanh.pop %v5713
    %v6019 = vxor.u32 %v5714, 2147483648
    %v6020 = vmul.f32 %v6019, 1.442695
    %v6021 = vpow.pop %v6020
    %v6022 = vadd.f32 %v6021, 1.0
    %v6023 = vrcp.pop %v6022
    %v6024 = vmul.f32 1.0, %v6023
    %v6025 = vmul.f32 %v6017, %v5377
    %v6026 = vmul.f32 %v6011, %v6018
    %v6027 = vadd.f32 %v6025, %v6026
    %v6028 = vtanh.pop %v6027
    %v6029 = vmul.f32 %v6024, %v6028
    %v6030 = vxor.u32 %v6002, 2147483648
    %v6031 = vmul.f32 %v6030, 1.442695
    %v6032 = vpow.pop %v6031
    %v6033 = vadd.f32 %v6032, 1.0
    %v6034 = vrcp.pop %v6033
    %v6035 = vmul.f32 1.0, %v6034
    %v6036 = vxor.u32 %v6003, 2147483648
    %v6037 = vmul.f32 %v6036, 1.442695
    %v6038 = vpow.pop %v6037
    %v6039 = vadd.f32 %v6038, 1.0
    %v6040 = vrcp.pop %v6039
    %v6041 = vmul.f32 1.0, %v6040
    %v6042 = vtanh.pop %v6004
    %v6043 = vxor.u32 %v6005, 2147483648
    %v6044 = vmul.f32 %v6043, 1.442695
    %v6045 = vpow.pop %v6044
    %v6046 = vadd.f32 %v6045, 1.0
    %v6047 = vrcp.pop %v6046
    %v6048 = vmul.f32 1.0, %v6047
    %v6049 = vmul.f32 %v6041, %v5403
    %v6050 = vmul.f32 %v6035, %v6042
    %v6051 = vadd.f32 %v6049, %v6050
    %v6052 = vtanh.pop %v6051
    %v6053 = vmul.f32 %v6048, %v6052
    %v6054 = vld [vmem:[#allocation10 + $0x38] sm:$0xff]
    %v6055 = vsel %vm1443, %v6029, 0.0
    %v6056 = vadd.f32 %v6054, %v6055
    %6057 = vst [vmem:[#allocation10 + $0x38] sm:$0xff] %v6056
    %v6058 = vld [vmem:[#allocation10] sm:$0xff]
    %v6059 = vsel %vm1411, %v6053, 0.0
    %v6060 = vadd.f32 %v6058, %v6059
    %6061 = vst [vmem:[#allocation10] sm:$0xff] %v6060
    // Predicated region
    $region46: #{tpu_custom_call.1} parent=1 // pred_check
      _
    $region47: #{tpu_custom_call.1} parent=1 // pred_check_branch
      %6063 = sbr.rel (0) target = $region49
    $region48: #{tpu_custom_call.1} parent=1 // pred_region
      %s6065 = ssub.s32 1024, 1024
      %6066 = vsyncadd [#allocation6], %s6065
      %s6067 = sshll.u32 [#allocation10], 4
      %s6068 = int_to_ptr.vmem [resolvable:$true] %s6067
      %6073 = dma.vmem_to_hbm [thread:$0]  %s6068, 1024, %s8, [#allocation6], 128, 128, 8
    $region49: #{tpu_custom_call.1} parent=1 // pred_fallthru
      _
    // Predicated region
    $region50: #{tpu_custom_call.1} parent=1 // pred_check
      _
    $region51: #{tpu_custom_call.1} parent=1 // pred_check_branch
      %6075 = sbr.rel (0) target = $region53
    $region52: #{tpu_custom_call.1} parent=1 // pred_region
      %6076 = dma.done [#allocation6], 1024
    $region53: #{tpu_custom_call.1} parent=1 // pred_fallthru
      _
    %6077 = vsyncpa [#allocation5], 1
    %6078 = vsyncpa [#allocation8], 1
    %6079 = vsyncpa [#allocation6], 1

</llo_original>
